<compile_context>
chip_gen: v7x
topology: tpu7x:2x2x1
jax: 0.10.0
libtpu: 0.0.40
codegen_flags: <defaults>
</compile_context>

<pallas_src>
import jax
import jax.numpy as jnp
from jax import lax
from jax.experimental import pallas as pl
from jax.experimental.pallas import tpu as pltpu

# ------------------------- small test configuration -------------------------
BATCH = 2
IN_C = 3
IMG = 16
PATCH = 4                      # patches per spatial dim -> patch**2 = 16 tokens
PATCH_SIZE = IMG // PATCH      # 4
F = PATCH_SIZE ** 2            # 16  (per-patch, per-channel feature size)
N_TOK = PATCH * PATCH + 1      # 17  (cls + patches)
N_PAD = 24                     # token dim padded to a multiple of 8
HIDDEN = 32
MLP_HIDDEN = HIDDEN * 4        # 128
HEADS = 4
HEAD_DIM = HIDDEN // HEADS     # 8
NUM_LAYERS = 2
NUM_CLASSES = 10
LANE = 128                     # lane-dense padding for packed vectors / logits
LN_EPS = 1e-5
ROWS = IN_C * N_PAD            # folded rows per batch element (72)


# ------------------------------- kernel body --------------------------------
def _layer_norm(x, g, b):
    mu = jnp.mean(x, axis=-1, keepdims=True)
    var = jnp.mean(jnp.square(x - mu), axis=-1, keepdims=True)
    return (x - mu) * lax.rsqrt(var + LN_EPS) * g + b


def fused_vit_kernel(words_ref, emb_w_ref, base_ref, mask_ref, vecs_ref,
                     wqkv_ref, wo_ref, w1_ref, w2_ref,
                     head_vecs_ref, fc_w_ref, out_ref):
    # words: (ROWS, F) with zero rows at cls / pad token slots, so ONE matmul
    # plus the precomputed base (cls+pos / emb_b+pos / zeros) builds the whole
    # padded sequence slab for all C channels of this batch element.
    x = jnp.dot(words_ref[...], emb_w_ref[...],
                preferred_element_type=jnp.float32) + base_ref[...]
    mask_bias = mask_ref[...]                       # (ROWS, ROWS) additive mask

    for l in range(NUM_LAYERS):                     # static unroll (2 layers)
        vecs = vecs_ref[l]                          # (8, 128) packed vectors
        g1, be1 = vecs[0:1, :HIDDEN], vecs[1:2, :HIDDEN]
        bqkv = vecs[2:3, :3 * HIDDEN]
        bo = vecs[3:4, :HIDDEN]
        g2, be2 = vecs[4:5, :HIDDEN], vecs[5:6, :HIDDEN]
        bm1 = vecs[6:7, :MLP_HIDDEN]
        bm2 = vecs[7:8, :HIDDEN]

        # --- MSA branch (fused QKV projection, all sequences at once) ---
        # NOTE: the 1/sqrt(hidden) score scaling is pre-folded into wq/bq at
        # pack time, so scores need only the additive mask here.
        xn = _layer_norm(x, g1, be1)
        qkv = jnp.dot(xn, wqkv_ref[l], preferred_element_type=jnp.float32) + bqkv
        q = qkv[:, 0:HIDDEN]
        k = qkv[:, HIDDEN:2 * HIDDEN]
        v = qkv[:, 2 * HIDDEN:3 * HIDDEN]

        parts = []
        for h in range(HEADS):                      # static unroll over heads
            sl = slice(h * HEAD_DIM, (h + 1) * HEAD_DIM)
            qh, kh, vh = q[:, sl], k[:, sl], v[:, sl]
            s = lax.dot_general(qh, kh, (((1,), (1,)), ((), ())),
                                preferred_element_type=jnp.float32)
            s = s + mask_bias                       # block-diag + pad masking
            s = s - jnp.max(s, axis=-1, keepdims=True)
            p = jnp.exp(s)                          # masked entries -> exactly 0
            p = p * pl.reciprocal(jnp.sum(p, axis=-1, keepdims=True), approx=True)
            parts.append(jnp.dot(p, vh, preferred_element_type=jnp.float32))
        attn = jnp.concatenate(parts, axis=-1)      # (ROWS, HIDDEN)
        x = x + jnp.dot(attn, wo_ref[l], preferred_element_type=jnp.float32) + bo

        # --- MLP branch (GELU after BOTH linears, matching the reference) ---
        xn2 = _layer_norm(x, g2, be2)
        h1 = jax.nn.gelu(
            jnp.dot(xn2, w1_ref[l], preferred_element_type=jnp.float32) + bm1,
            approximate=True)
        h2 = jax.nn.gelu(
            jnp.dot(h1, w2_ref[l], preferred_element_type=jnp.float32) + bm2,
            approximate=True)
        x = x + h2

    # --- classifier head on channel-0 sequence (first N_PAD rows) ---
    hv = head_vecs_ref[...]
    fc_g, fc_b, fc_bias = hv[0:1, :HIDDEN], hv[1:2, :HIDDEN], hv[2:3, :]
    xc = x[0:N_PAD, :]                              # literal out[:, 0]: channel 0
    xcn = _layer_norm(xc, fc_g, fc_b)
    out_ref[...] = (jnp.dot(xcn, fc_w_ref[...],
                            preferred_element_type=jnp.float32) + fc_bias)


# --------------------------- parameter repacking -----------------------------
def _row(v, width=LANE):
    v = v.reshape(1, -1)
    return jnp.pad(v, ((0, 0), (0, width - v.shape[1])))


def pack_params(params):
    scale = 1.0 / (HIDDEN ** 0.5)    # omihub MSA scaling: / sqrt(feats)
    vecs, wqkv, wo, w1, w2 = [], [], [], [], []
    for layer in params["layers"]:
        # Fold the attention score scaling into the Q projection (host-side,
        # once) so the kernel skips the per-head score multiply.
        wq_s = layer["wq"] * scale
        bq_s = layer["bq"] * scale
        bqkv = jnp.concatenate([bq_s, layer["bk"], layer["bv"]], axis=-1)
        vecs.append(jnp.concatenate([
            _row(layer["g1"]), _row(layer["be1"]), _row(bqkv), _row(layer["bo"]),
            _row(layer["g2"]), _row(layer["be2"]), _row(layer["bm1"]),
            _row(layer["bm2"])], axis=0))                       # (8, 128)
        wqkv.append(jnp.concatenate([wq_s, layer["wk"], layer["wv"]], axis=1))
        wo.append(layer["wo"])
        w1.append(layer["w1"])
        w2.append(layer["w2"])
    vecs = jnp.stack(vecs)            # (L, 8, 128)
    wqkv = jnp.stack(wqkv)            # (L, H, 3H)
    wo = jnp.stack(wo)                # (L, H, H)
    w1 = jnp.stack(w1)                # (L, H, M)
    w2 = jnp.stack(w2)                # (L, M, H)

    # per-token base: row0 = cls + pos[0]; rows 1..16 = emb_b + pos[1:]; pad = 0
    pos = params["pos_emb"].reshape(N_TOK, HIDDEN)
    base = jnp.concatenate([
        params["cls_token"].reshape(1, HIDDEN) + pos[0:1],
        params["emb_b"].reshape(1, HIDDEN) + pos[1:],
        jnp.zeros((N_PAD - N_TOK, HIDDEN), jnp.float32)], axis=0)
    seq_base = jnp.tile(base, (IN_C, 1))                         # (ROWS, H)

    head_vecs = jnp.concatenate([
        _row(params["fc_g"]), _row(params["fc_b"]), _row(params["fc_bias"]),
        jnp.zeros((5, LANE), jnp.float32)], axis=0)              # (8, 128)
    fc_w = jnp.pad(params["fc_w"], ((0, 0), (0, LANE - NUM_CLASSES)))

    # block-diagonal additive mask: same sequence AND key is a real token
    ri = jnp.arange(ROWS)[:, None]
    ci = jnp.arange(ROWS)[None, :]
    valid = (ri // N_PAD == ci // N_PAD) & ((ci % N_PAD) < N_TOK)
    mask_bias = jnp.where(valid, 0.0, -1e30).astype(jnp.float32)

    return dict(emb_w=params["emb_w"], seq_base=seq_base, mask_bias=mask_bias,
                vecs=vecs, wqkv=wqkv, wo=wo, w1=w1, w2=w2,
                head_vecs=head_vecs, fc_w=fc_w)


# ------------------------------ pallas wrapper -------------------------------
def fused_vit_call(words_pad, kp):
    B = words_pad.shape[0]

    def const_spec(a):
        zeros = (0,) * a.ndim
        return pl.BlockSpec(a.shape, lambda b, _z=zeros: _z)

    in_specs = [pl.BlockSpec((None, ROWS, F), lambda b: (b, 0, 0))] + [
        const_spec(kp[name]) for name in
        ("emb_w", "seq_base", "mask_bias", "vecs", "wqkv", "wo", "w1", "w2",
         "head_vecs", "fc_w")
    ]
    out_specs = pl.BlockSpec((None, N_PAD, LANE), lambda b: (b, 0, 0))

    return pl.pallas_call(
        fused_vit_kernel,
        out_shape=jax.ShapeDtypeStruct((B, N_PAD, LANE), jnp.float32),
        grid=(B,),
        in_specs=in_specs,
        out_specs=out_specs,
        compiler_params=pltpu.CompilerParams(dimension_semantics=("parallel",)),
    )(words_pad, kp["emb_w"], kp["seq_base"], kp["mask_bias"], kp["vecs"],
      kp["wqkv"], kp["wo"], kp["w1"], kp["w2"], kp["head_vecs"], kp["fc_w"])


# -------------------------------- parameters --------------------------------
def init_params(key):
    keys = jax.random.split(key, 4 + NUM_LAYERS)

    def w_init(k, shape, scale=0.02):
        return scale * jax.random.normal(k, shape, jnp.float32)

    params = {
        "emb_w": w_init(keys[0], (F, HIDDEN)),
        "emb_b": jnp.zeros((1, HIDDEN), jnp.float32),
        "cls_token": jax.random.normal(keys[1], (1, 1, 1, HIDDEN), jnp.float32),
        "pos_emb": jax.random.normal(keys[2], (1, 1, N_TOK, HIDDEN), jnp.float32),
        "fc_g": jnp.ones((1, HIDDEN), jnp.float32),
        "fc_b": jnp.zeros((1, HIDDEN), jnp.float32),
        "fc_w": w_init(keys[3], (HIDDEN, NUM_CLASSES)),
        "fc_bias": jnp.zeros((1, NUM_CLASSES), jnp.float32),
    }
    layers = []
    for i in range(NUM_LAYERS):
        lk = jax.random.split(keys[4 + i], 6)
        layers.append(dict(
            g1=jnp.ones((1, HIDDEN), jnp.float32), be1=jnp.zeros((1, HIDDEN), jnp.float32),
            wq=w_init(lk[0], (HIDDEN, HIDDEN)), bq=jnp.zeros((1, HIDDEN), jnp.float32),
            wk=w_init(lk[1], (HIDDEN, HIDDEN)), bk=jnp.zeros((1, HIDDEN), jnp.float32),
            wv=w_init(lk[2], (HIDDEN, HIDDEN)), bv=jnp.zeros((1, HIDDEN), jnp.float32),
            wo=w_init(lk[3], (HIDDEN, HIDDEN)), bo=jnp.zeros((1, HIDDEN), jnp.float32),
            g2=jnp.ones((1, HIDDEN), jnp.float32), be2=jnp.zeros((1, HIDDEN), jnp.float32),
            w1=w_init(lk[4], (HIDDEN, MLP_HIDDEN)), bm1=jnp.zeros((1, MLP_HIDDEN), jnp.float32),
            w2=w_init(lk[5], (MLP_HIDDEN, HIDDEN)), bm2=jnp.zeros((1, HIDDEN), jnp.float32),
        ))
    params["layers"] = layers
    return params


# --------------------------------- forward ----------------------------------
def _to_words(x):
    B, C, _, _ = x.shape
    w = x.reshape(B, C, PATCH, PATCH_SIZE, PATCH, PATCH_SIZE)
    return w.transpose(0, 1, 2, 4, 3, 5).reshape(B, C, PATCH * PATCH, F)


def depthwise_vit_forward(x, params):
    B, C, _, _ = x.shape
    kp = pack_params(params)

    # (b, c, h, w) -> (b, c, patch**2, patch_size**2), then pad token dim so
    # row 0 (cls) and rows 17..23 (alignment pad) are zero; the kernel's single
    # embedding matmul + seq_base add then yields the full padded sequence.
    words = _to_words(x)
    words_pad = jnp.pad(words, ((0, 0), (0, 0),
                                (1, N_PAD - 1 - PATCH * PATCH), (0, 0)))
    words_pad = words_pad.reshape(B, ROWS, F)

    # TODO(synk): the reference torch.cat([...], dim=1) is shape-inconsistent
    # (dim-2 sizes 1 vs patch**2); as before, the intended cls-token concat is
    # implemented along the token dim so pos_emb (1,1,patch**2+1,hidden) applies.
    logits_full = fused_vit_call(words_pad, kp)       # (B, N_PAD, 128)
    return logits_full[:, :N_TOK, :NUM_CLASSES]       # (B, N_TOK, NUM_CLASSES)


# ---------------------- pure-JAX reference (for checking) -------------------
def reference_forward(x, params):
    B, C, _, _ = x.shape
    words = _to_words(x)
    emb = words @ params["emb_w"] + params["emb_b"]
    cls = jnp.broadcast_to(params["cls_token"], (B, C, 1, HIDDEN))
    seq = jnp.concatenate([cls, emb], axis=2) + params["pos_emb"]

    def ln(v, g, b):
        mu = v.mean(-1, keepdims=True)
        var = ((v - mu) ** 2).mean(-1, keepdims=True)
        return (v - mu) * lax.rsqrt(var + LN_EPS) * g + b

    for layer in params["layers"]:
        xn = ln(seq, layer["g1"], layer["be1"])
        q = (xn @ layer["wq"] + layer["bq"]).reshape(B, C, N_TOK, HEADS, HEAD_DIM)
        k = (xn @ layer["wk"] + layer["bk"]).reshape(B, C, N_TOK, HEADS, HEAD_DIM)
        v = (xn @ layer["wv"] + layer["bv"]).reshape(B, C, N_TOK, HEADS, HEAD_DIM)
        s = jnp.einsum("bcqhd,bckhd->bchqk", q, k) / (HIDDEN ** 0.5)
        p = jax.nn.softmax(s, axis=-1)
        o = jnp.einsum("bchqk,bckhd->bcqhd", p, v).reshape(B, C, N_TOK, HIDDEN)
        seq = seq + o @ layer["wo"] + layer["bo"]
        xn2 = ln(seq, layer["g2"], layer["be2"])
        h1 = jax.nn.gelu(xn2 @ layer["w1"] + layer["bm1"], approximate=True)
        h2 = jax.nn.gelu(h1 @ layer["w2"] + layer["bm2"], approximate=True)
        seq = seq + h2

    out = seq[:, 0]                                   # channel 0 -> (B, N_TOK, H)
    return ln(out, params["fc_g"], params["fc_b"]) @ params["fc_w"] + params["fc_bias"]


if __name__ == "__main__":
    key = jax.random.PRNGKey(0)
    kx, kparams = jax.random.split(key)
    x = jax.random.normal(kx, (BATCH, IN_C, IMG, IMG), jnp.float32)
    params = init_params(kparams)

    out = jax.jit(depthwise_vit_forward)(x, params)
    jax.block_until_ready(out)

    assert out.shape == (BATCH, N_TOK, NUM_CLASSES), out.shape
    assert bool(jnp.all(jnp.isfinite(out)))
    ref = reference_forward(x, params)
    assert bool(jnp.allclose(out, ref, rtol=1e-2, atol=1e-2)), \
        float(jnp.max(jnp.abs(out - ref)))
    print("KERNEL_OK")
</pallas_src>

<mosaic_0001>
module attributes {stable_mosaic.version = 11 : i64} {
  func.func @fused_vit_kernel(%arg0: i32, %arg1: memref<1x72x16xf32, #tpu.memory_space<vmem>>, %arg2: memref<16x32xf32, #tpu.memory_space<vmem>>, %arg3: memref<72x32xf32, #tpu.memory_space<vmem>>, %arg4: memref<72x72xf32, #tpu.memory_space<vmem>>, %arg5: memref<2x8x128xf32, #tpu.memory_space<vmem>>, %arg6: memref<2x32x96xf32, #tpu.memory_space<vmem>>, %arg7: memref<2x32x32xf32, #tpu.memory_space<vmem>>, %arg8: memref<2x32x128xf32, #tpu.memory_space<vmem>>, %arg9: memref<2x128x32xf32, #tpu.memory_space<vmem>>, %arg10: memref<8x128xf32, #tpu.memory_space<vmem>>, %arg11: memref<32x128xf32, #tpu.memory_space<vmem>>, %arg12: memref<1x24x128xf32, #tpu.memory_space<vmem>>) attributes {dimension_semantics = [#tpu.dimension_semantics<parallel>], iteration_bounds = array<i64: 2>, scalar_prefetch = 0 : i64, scratch_operands = 0 : i64, tpu.core_type = #tpu.core_type<tc>, window_params = [{transform_indices = @transform_0, window_bounds = array<i64: 1, 72, 16>}, {pipeline_mode = #tpu.pipeline_mode<synchronous>, transform_indices = @transform_1, window_bounds = array<i64: 16, 32>}, {pipeline_mode = #tpu.pipeline_mode<synchronous>, transform_indices = @transform_2, window_bounds = array<i64: 72, 32>}, {pipeline_mode = #tpu.pipeline_mode<synchronous>, transform_indices = @transform_3, window_bounds = array<i64: 72, 72>}, {pipeline_mode = #tpu.pipeline_mode<synchronous>, transform_indices = @transform_4, window_bounds = array<i64: 2, 8, 128>}, {pipeline_mode = #tpu.pipeline_mode<synchronous>, transform_indices = @transform_5, window_bounds = array<i64: 2, 32, 96>}, {pipeline_mode = #tpu.pipeline_mode<synchronous>, transform_indices = @transform_6, window_bounds = array<i64: 2, 32, 32>}, {pipeline_mode = #tpu.pipeline_mode<synchronous>, transform_indices = @transform_7, window_bounds = array<i64: 2, 32, 128>}, {pipeline_mode = #tpu.pipeline_mode<synchronous>, transform_indices = @transform_8, window_bounds = array<i64: 2, 128, 32>}, {pipeline_mode = #tpu.pipeline_mode<synchronous>, transform_indices = @transform_9, window_bounds = array<i64: 8, 128>}, {pipeline_mode = #tpu.pipeline_mode<synchronous>, transform_indices = @transform_10, window_bounds = array<i64: 32, 128>}, {transform_indices = @transform_11, window_bounds = array<i64: 1, 24, 128>}]} {
    %c0 = arith.constant 0 : index
    %c0_0 = arith.constant 0 : index
    %c0_1 = arith.constant 0 : index
    %0 = vector.load %arg1[%c0, %c0_0, %c0_1] : memref<1x72x16xf32, #tpu.memory_space<vmem>>, vector<1x72x16xf32>
    %1 = vector.shape_cast %0 : vector<1x72x16xf32> to vector<72x16xf32>
    %c0_2 = arith.constant 0 : index
    %c0_3 = arith.constant 0 : index
    %2 = vector.load %arg2[%c0_2, %c0_3] : memref<16x32xf32, #tpu.memory_space<vmem>>, vector<16x32xf32>
    %cst = arith.constant dense<0.000000e+00> : vector<72x32xf32>
    %3 = tpu.matmul %1, %2, %cst {dimension_numbers = #tpu.dot_dimension_numbers<[1], [0], [0], [1], [0, 0, 1, 1], [], []>} : vector<72x16xf32>, vector<16x32xf32>, vector<72x32xf32> -> vector<72x32xf32>
    %c0_4 = arith.constant 0 : index
    %c0_5 = arith.constant 0 : index
    %4 = vector.load %arg3[%c0_4, %c0_5] : memref<72x32xf32, #tpu.memory_space<vmem>>, vector<72x32xf32>
    %5 = arith.addf %3, %4 : vector<72x32xf32>
    %c0_6 = arith.constant 0 : index
    %c0_7 = arith.constant 0 : index
    %6 = vector.load %arg4[%c0_6, %c0_7] : memref<72x72xf32, #tpu.memory_space<vmem>>, vector<72x72xf32>
    %c0_8 = arith.constant 0 : index
    %c0_9 = arith.constant 0 : index
    %c0_10 = arith.constant 0 : index
    %7 = vector.load %arg5[%c0_8, %c0_9, %c0_10] : memref<2x8x128xf32, #tpu.memory_space<vmem>>, vector<1x8x128xf32>
    %8 = vector.shape_cast %7 : vector<1x8x128xf32> to vector<8x128xf32>
    %9 = vector.extract_strided_slice %8 {offsets = [0, 0], sizes = [1, 32], strides = [1, 1]} : vector<8x128xf32> to vector<1x32xf32>
    %10 = vector.extract_strided_slice %8 {offsets = [1, 0], sizes = [1, 32], strides = [1, 1]} : vector<8x128xf32> to vector<1x32xf32>
    %11 = vector.extract_strided_slice %8 {offsets = [2, 0], sizes = [1, 96], strides = [1, 1]} : vector<8x128xf32> to vector<1x96xf32>
    %12 = vector.extract_strided_slice %8 {offsets = [3, 0], sizes = [1, 32], strides = [1, 1]} : vector<8x128xf32> to vector<1x32xf32>
    %13 = vector.extract_strided_slice %8 {offsets = [4, 0], sizes = [1, 32], strides = [1, 1]} : vector<8x128xf32> to vector<1x32xf32>
    %14 = vector.extract_strided_slice %8 {offsets = [5, 0], sizes = [1, 32], strides = [1, 1]} : vector<8x128xf32> to vector<1x32xf32>
    %15 = vector.extract_strided_slice %8 {offsets = [6, 0], sizes = [1, 128], strides = [1, 1]} : vector<8x128xf32> to vector<1x128xf32>
    %16 = vector.extract_strided_slice %8 {offsets = [7, 0], sizes = [1, 32], strides = [1, 1]} : vector<8x128xf32> to vector<1x32xf32>
    %cst_11 = arith.constant dense<0.000000e+00> : vector<72xf32>
    %17 = vector.multi_reduction <add>, %5, %cst_11 [1] : vector<72x32xf32> to vector<72xf32>
    %18 = vector.shape_cast %17 : vector<72xf32> to vector<72x1xf32>
    %cst_12 = arith.constant 3.200000e+01 : f32
    %19 = vector.broadcast %cst_12 : f32 to vector<72x1xf32>
    %20 = arith.divf %18, %19 : vector<72x1xf32>
    %21 = vector.broadcast %20 : vector<72x1xf32> to vector<72x32xf32>
    %22 = arith.subf %5, %21 : vector<72x32xf32>
    %23 = arith.mulf %22, %22 : vector<72x32xf32>
    %cst_13 = arith.constant dense<0.000000e+00> : vector<72xf32>
    %24 = vector.multi_reduction <add>, %23, %cst_13 [1] : vector<72x32xf32> to vector<72xf32>
    %25 = vector.shape_cast %24 : vector<72xf32> to vector<72x1xf32>
    %cst_14 = arith.constant 3.200000e+01 : f32
    %26 = vector.broadcast %cst_14 : f32 to vector<72x1xf32>
    %27 = arith.divf %25, %26 : vector<72x1xf32>
    %28 = vector.broadcast %20 : vector<72x1xf32> to vector<72x32xf32>
    %29 = arith.subf %5, %28 : vector<72x32xf32>
    %cst_15 = arith.constant 9.99999974E-6 : f32
    %30 = vector.broadcast %cst_15 : f32 to vector<72x1xf32>
    %31 = arith.addf %27, %30 : vector<72x1xf32>
    %32 = math.rsqrt %31 : vector<72x1xf32>
    %33 = vector.broadcast %32 : vector<72x1xf32> to vector<72x32xf32>
    %34 = arith.mulf %29, %33 : vector<72x32xf32>
    %35 = vector.broadcast %9 : vector<1x32xf32> to vector<72x32xf32>
    %36 = arith.mulf %34, %35 : vector<72x32xf32>
    %37 = vector.broadcast %10 : vector<1x32xf32> to vector<72x32xf32>
    %38 = arith.addf %36, %37 : vector<72x32xf32>
    %c0_16 = arith.constant 0 : index
    %c0_17 = arith.constant 0 : index
    %c0_18 = arith.constant 0 : index
    %39 = vector.load %arg6[%c0_16, %c0_17, %c0_18] : memref<2x32x96xf32, #tpu.memory_space<vmem>>, vector<1x32x96xf32>
    %40 = vector.shape_cast %39 : vector<1x32x96xf32> to vector<32x96xf32>
    %cst_19 = arith.constant dense<0.000000e+00> : vector<72x96xf32>
    %41 = tpu.matmul %38, %40, %cst_19 {dimension_numbers = #tpu.dot_dimension_numbers<[1], [0], [0], [1], [0, 0, 1, 1], [], []>} : vector<72x32xf32>, vector<32x96xf32>, vector<72x96xf32> -> vector<72x96xf32>
    %42 = vector.broadcast %11 : vector<1x96xf32> to vector<72x96xf32>
    %43 = arith.addf %41, %42 : vector<72x96xf32>
    %44 = vector.extract_strided_slice %43 {offsets = [0, 0], sizes = [72, 32], strides = [1, 1]} : vector<72x96xf32> to vector<72x32xf32>
    %45 = vector.extract_strided_slice %43 {offsets = [0, 32], sizes = [72, 32], strides = [1, 1]} : vector<72x96xf32> to vector<72x32xf32>
    %46 = vector.extract_strided_slice %43 {offsets = [0, 64], sizes = [72, 32], strides = [1, 1]} : vector<72x96xf32> to vector<72x32xf32>
    %47 = vector.extract_strided_slice %44 {offsets = [0, 0], sizes = [72, 8], strides = [1, 1]} : vector<72x32xf32> to vector<72x8xf32>
    %48 = vector.extract_strided_slice %45 {offsets = [0, 0], sizes = [72, 8], strides = [1, 1]} : vector<72x32xf32> to vector<72x8xf32>
    %49 = vector.extract_strided_slice %46 {offsets = [0, 0], sizes = [72, 8], strides = [1, 1]} : vector<72x32xf32> to vector<72x8xf32>
    %cst_20 = arith.constant dense<0.000000e+00> : vector<72x72xf32>
    %50 = tpu.matmul %47, %48, %cst_20 {dimension_numbers = #tpu.dot_dimension_numbers<[1], [1], [0], [0], [0, 0, 1, 0], [], []>} : vector<72x8xf32>, vector<72x8xf32>, vector<72x72xf32> -> vector<72x72xf32>
    %51 = arith.addf %50, %6 : vector<72x72xf32>
    %cst_21 = arith.constant dense<0xFF800000> : vector<72xf32>
    %52 = vector.multi_reduction <maximumf>, %51, %cst_21 [1] : vector<72x72xf32> to vector<72xf32>
    %53 = vector.shape_cast %52 : vector<72xf32> to vector<72x1xf32>
    %54 = vector.broadcast %53 : vector<72x1xf32> to vector<72x72xf32>
    %55 = arith.subf %51, %54 : vector<72x72xf32>
    %56 = math.exp %55 : vector<72x72xf32>
    %cst_22 = arith.constant dense<0.000000e+00> : vector<72xf32>
    %57 = vector.multi_reduction <add>, %56, %cst_22 [1] : vector<72x72xf32> to vector<72xf32>
    %58 = vector.shape_cast %57 : vector<72xf32> to vector<72x1xf32>
    %59 = tpu.reciprocal %58 {approx = true} : vector<72x1xf32> -> vector<72x1xf32>
    %60 = vector.broadcast %59 : vector<72x1xf32> to vector<72x72xf32>
    %61 = arith.mulf %56, %60 : vector<72x72xf32>
    %cst_23 = arith.constant dense<0.000000e+00> : vector<72x8xf32>
    %62 = tpu.matmul %61, %49, %cst_23 {dimension_numbers = #tpu.dot_dimension_numbers<[1], [0], [0], [1], [0, 0, 1, 1], [], []>} : vector<72x72xf32>, vector<72x8xf32>, vector<72x8xf32> -> vector<72x8xf32>
    %63 = vector.extract_strided_slice %44 {offsets = [0, 8], sizes = [72, 8], strides = [1, 1]} : vector<72x32xf32> to vector<72x8xf32>
    %64 = vector.extract_strided_slice %45 {offsets = [0, 8], sizes = [72, 8], strides = [1, 1]} : vector<72x32xf32> to vector<72x8xf32>
    %65 = vector.extract_strided_slice %46 {offsets = [0, 8], sizes = [72, 8], strides = [1, 1]} : vector<72x32xf32> to vector<72x8xf32>
    %cst_24 = arith.constant dense<0.000000e+00> : vector<72x72xf32>
    %66 = tpu.matmul %63, %64, %cst_24 {dimension_numbers = #tpu.dot_dimension_numbers<[1], [1], [0], [0], [0, 0, 1, 0], [], []>} : vector<72x8xf32>, vector<72x8xf32>, vector<72x72xf32> -> vector<72x72xf32>
    %67 = arith.addf %66, %6 : vector<72x72xf32>
    %cst_25 = arith.constant dense<0xFF800000> : vector<72xf32>
    %68 = vector.multi_reduction <maximumf>, %67, %cst_25 [1] : vector<72x72xf32> to vector<72xf32>
    %69 = vector.shape_cast %68 : vector<72xf32> to vector<72x1xf32>
    %70 = vector.broadcast %69 : vector<72x1xf32> to vector<72x72xf32>
    %71 = arith.subf %67, %70 : vector<72x72xf32>
    %72 = math.exp %71 : vector<72x72xf32>
    %cst_26 = arith.constant dense<0.000000e+00> : vector<72xf32>
    %73 = vector.multi_reduction <add>, %72, %cst_26 [1] : vector<72x72xf32> to vector<72xf32>
    %74 = vector.shape_cast %73 : vector<72xf32> to vector<72x1xf32>
    %75 = tpu.reciprocal %74 {approx = true} : vector<72x1xf32> -> vector<72x1xf32>
    %76 = vector.broadcast %75 : vector<72x1xf32> to vector<72x72xf32>
    %77 = arith.mulf %72, %76 : vector<72x72xf32>
    %cst_27 = arith.constant dense<0.000000e+00> : vector<72x8xf32>
    %78 = tpu.matmul %77, %65, %cst_27 {dimension_numbers = #tpu.dot_dimension_numbers<[1], [0], [0], [1], [0, 0, 1, 1], [], []>} : vector<72x72xf32>, vector<72x8xf32>, vector<72x8xf32> -> vector<72x8xf32>
    %79 = vector.extract_strided_slice %44 {offsets = [0, 16], sizes = [72, 8], strides = [1, 1]} : vector<72x32xf32> to vector<72x8xf32>
    %80 = vector.extract_strided_slice %45 {offsets = [0, 16], sizes = [72, 8], strides = [1, 1]} : vector<72x32xf32> to vector<72x8xf32>
    %81 = vector.extract_strided_slice %46 {offsets = [0, 16], sizes = [72, 8], strides = [1, 1]} : vector<72x32xf32> to vector<72x8xf32>
    %cst_28 = arith.constant dense<0.000000e+00> : vector<72x72xf32>
    %82 = tpu.matmul %79, %80, %cst_28 {dimension_numbers = #tpu.dot_dimension_numbers<[1], [1], [0], [0], [0, 0, 1, 0], [], []>} : vector<72x8xf32>, vector<72x8xf32>, vector<72x72xf32> -> vector<72x72xf32>
    %83 = arith.addf %82, %6 : vector<72x72xf32>
    %cst_29 = arith.constant dense<0xFF800000> : vector<72xf32>
    %84 = vector.multi_reduction <maximumf>, %83, %cst_29 [1] : vector<72x72xf32> to vector<72xf32>
    %85 = vector.shape_cast %84 : vector<72xf32> to vector<72x1xf32>
    %86 = vector.broadcast %85 : vector<72x1xf32> to vector<72x72xf32>
    %87 = arith.subf %83, %86 : vector<72x72xf32>
    %88 = math.exp %87 : vector<72x72xf32>
    %cst_30 = arith.constant dense<0.000000e+00> : vector<72xf32>
    %89 = vector.multi_reduction <add>, %88, %cst_30 [1] : vector<72x72xf32> to vector<72xf32>
    %90 = vector.shape_cast %89 : vector<72xf32> to vector<72x1xf32>
    %91 = tpu.reciprocal %90 {approx = true} : vector<72x1xf32> -> vector<72x1xf32>
    %92 = vector.broadcast %91 : vector<72x1xf32> to vector<72x72xf32>
    %93 = arith.mulf %88, %92 : vector<72x72xf32>
    %cst_31 = arith.constant dense<0.000000e+00> : vector<72x8xf32>
    %94 = tpu.matmul %93, %81, %cst_31 {dimension_numbers = #tpu.dot_dimension_numbers<[1], [0], [0], [1], [0, 0, 1, 1], [], []>} : vector<72x72xf32>, vector<72x8xf32>, vector<72x8xf32> -> vector<72x8xf32>
    %95 = vector.extract_strided_slice %44 {offsets = [0, 24], sizes = [72, 8], strides = [1, 1]} : vector<72x32xf32> to vector<72x8xf32>
    %96 = vector.extract_strided_slice %45 {offsets = [0, 24], sizes = [72, 8], strides = [1, 1]} : vector<72x32xf32> to vector<72x8xf32>
    %97 = vector.extract_strided_slice %46 {offsets = [0, 24], sizes = [72, 8], strides = [1, 1]} : vector<72x32xf32> to vector<72x8xf32>
    %cst_32 = arith.constant dense<0.000000e+00> : vector<72x72xf32>
    %98 = tpu.matmul %95, %96, %cst_32 {dimension_numbers = #tpu.dot_dimension_numbers<[1], [1], [0], [0], [0, 0, 1, 0], [], []>} : vector<72x8xf32>, vector<72x8xf32>, vector<72x72xf32> -> vector<72x72xf32>
    %99 = arith.addf %98, %6 : vector<72x72xf32>
    %cst_33 = arith.constant dense<0xFF800000> : vector<72xf32>
    %100 = vector.multi_reduction <maximumf>, %99, %cst_33 [1] : vector<72x72xf32> to vector<72xf32>
    %101 = vector.shape_cast %100 : vector<72xf32> to vector<72x1xf32>
    %102 = vector.broadcast %101 : vector<72x1xf32> to vector<72x72xf32>
    %103 = arith.subf %99, %102 : vector<72x72xf32>
    %104 = math.exp %103 : vector<72x72xf32>
    %cst_34 = arith.constant dense<0.000000e+00> : vector<72xf32>
    %105 = vector.multi_reduction <add>, %104, %cst_34 [1] : vector<72x72xf32> to vector<72xf32>
    %106 = vector.shape_cast %105 : vector<72xf32> to vector<72x1xf32>
    %107 = tpu.reciprocal %106 {approx = true} : vector<72x1xf32> -> vector<72x1xf32>
    %108 = vector.broadcast %107 : vector<72x1xf32> to vector<72x72xf32>
    %109 = arith.mulf %104, %108 : vector<72x72xf32>
    %cst_35 = arith.constant dense<0.000000e+00> : vector<72x8xf32>
    %110 = tpu.matmul %109, %97, %cst_35 {dimension_numbers = #tpu.dot_dimension_numbers<[1], [0], [0], [1], [0, 0, 1, 1], [], []>} : vector<72x72xf32>, vector<72x8xf32>, vector<72x8xf32> -> vector<72x8xf32>
    %111 = tpu.concatenate %62, %78, %94, %110 in 1 : vector<72x8xf32>, vector<72x8xf32>, vector<72x8xf32>, vector<72x8xf32> -> vector<72x32xf32>
    %c0_36 = arith.constant 0 : index
    %c0_37 = arith.constant 0 : index
    %c0_38 = arith.constant 0 : index
    %112 = vector.load %arg7[%c0_36, %c0_37, %c0_38] : memref<2x32x32xf32, #tpu.memory_space<vmem>>, vector<1x32x32xf32>
    %113 = vector.shape_cast %112 : vector<1x32x32xf32> to vector<32x32xf32>
    %cst_39 = arith.constant dense<0.000000e+00> : vector<72x32xf32>
    %114 = tpu.matmul %111, %113, %cst_39 {dimension_numbers = #tpu.dot_dimension_numbers<[1], [0], [0], [1], [0, 0, 1, 1], [], []>} : vector<72x32xf32>, vector<32x32xf32>, vector<72x32xf32> -> vector<72x32xf32>
    %115 = arith.addf %5, %114 : vector<72x32xf32>
    %116 = vector.broadcast %12 : vector<1x32xf32> to vector<72x32xf32>
    %117 = arith.addf %115, %116 : vector<72x32xf32>
    %cst_40 = arith.constant dense<0.000000e+00> : vector<72xf32>
    %118 = vector.multi_reduction <add>, %117, %cst_40 [1] : vector<72x32xf32> to vector<72xf32>
    %119 = vector.shape_cast %118 : vector<72xf32> to vector<72x1xf32>
    %cst_41 = arith.constant 3.200000e+01 : f32
    %120 = vector.broadcast %cst_41 : f32 to vector<72x1xf32>
    %121 = arith.divf %119, %120 : vector<72x1xf32>
    %122 = vector.broadcast %121 : vector<72x1xf32> to vector<72x32xf32>
    %123 = arith.subf %117, %122 : vector<72x32xf32>
    %124 = arith.mulf %123, %123 : vector<72x32xf32>
    %cst_42 = arith.constant dense<0.000000e+00> : vector<72xf32>
    %125 = vector.multi_reduction <add>, %124, %cst_42 [1] : vector<72x32xf32> to vector<72xf32>
    %126 = vector.shape_cast %125 : vector<72xf32> to vector<72x1xf32>
    %cst_43 = arith.constant 3.200000e+01 : f32
    %127 = vector.broadcast %cst_43 : f32 to vector<72x1xf32>
    %128 = arith.divf %126, %127 : vector<72x1xf32>
    %129 = vector.broadcast %121 : vector<72x1xf32> to vector<72x32xf32>
    %130 = arith.subf %117, %129 : vector<72x32xf32>
    %cst_44 = arith.constant 9.99999974E-6 : f32
    %131 = vector.broadcast %cst_44 : f32 to vector<72x1xf32>
    %132 = arith.addf %128, %131 : vector<72x1xf32>
    %133 = math.rsqrt %132 : vector<72x1xf32>
    %134 = vector.broadcast %133 : vector<72x1xf32> to vector<72x32xf32>
    %135 = arith.mulf %130, %134 : vector<72x32xf32>
    %136 = vector.broadcast %13 : vector<1x32xf32> to vector<72x32xf32>
    %137 = arith.mulf %135, %136 : vector<72x32xf32>
    %138 = vector.broadcast %14 : vector<1x32xf32> to vector<72x32xf32>
    %139 = arith.addf %137, %138 : vector<72x32xf32>
    %c0_45 = arith.constant 0 : index
    %c0_46 = arith.constant 0 : index
    %c0_47 = arith.constant 0 : index
    %140 = vector.load %arg8[%c0_45, %c0_46, %c0_47] : memref<2x32x128xf32, #tpu.memory_space<vmem>>, vector<1x32x128xf32>
    %141 = vector.shape_cast %140 : vector<1x32x128xf32> to vector<32x128xf32>
    %cst_48 = arith.constant dense<0.000000e+00> : vector<72x128xf32>
    %142 = tpu.matmul %139, %141, %cst_48 {dimension_numbers = #tpu.dot_dimension_numbers<[1], [0], [0], [1], [0, 0, 1, 1], [], []>} : vector<72x32xf32>, vector<32x128xf32>, vector<72x128xf32> -> vector<72x128xf32>
    %143 = vector.broadcast %15 : vector<1x128xf32> to vector<72x128xf32>
    %144 = arith.addf %142, %143 : vector<72x128xf32>
    %145 = arith.mulf %144, %144 : vector<72x128xf32>
    %146 = arith.mulf %144, %145 : vector<72x128xf32>
    %cst_49 = arith.constant 4.471500e-02 : f32
    %147 = vector.broadcast %cst_49 : f32 to vector<72x128xf32>
    %148 = arith.mulf %147, %146 : vector<72x128xf32>
    %149 = arith.addf %144, %148 : vector<72x128xf32>
    %cst_50 = arith.constant 0.797884583 : f32
    %150 = vector.broadcast %cst_50 : f32 to vector<72x128xf32>
    %151 = arith.mulf %150, %149 : vector<72x128xf32>
    %152 = math.tanh %151 : vector<72x128xf32>
    %cst_51 = arith.constant 1.000000e+00 : f32
    %153 = vector.broadcast %cst_51 : f32 to vector<72x128xf32>
    %154 = arith.addf %153, %152 : vector<72x128xf32>
    %cst_52 = arith.constant 5.000000e-01 : f32
    %155 = vector.broadcast %cst_52 : f32 to vector<72x128xf32>
    %156 = arith.mulf %155, %154 : vector<72x128xf32>
    %157 = arith.mulf %144, %156 : vector<72x128xf32>
    %c0_53 = arith.constant 0 : index
    %c0_54 = arith.constant 0 : index
    %c0_55 = arith.constant 0 : index
    %158 = vector.load %arg9[%c0_53, %c0_54, %c0_55] : memref<2x128x32xf32, #tpu.memory_space<vmem>>, vector<1x128x32xf32>
    %159 = vector.shape_cast %158 : vector<1x128x32xf32> to vector<128x32xf32>
    %cst_56 = arith.constant dense<0.000000e+00> : vector<72x32xf32>
    %160 = tpu.matmul %157, %159, %cst_56 {dimension_numbers = #tpu.dot_dimension_numbers<[1], [0], [0], [1], [0, 0, 1, 1], [], []>} : vector<72x128xf32>, vector<128x32xf32>, vector<72x32xf32> -> vector<72x32xf32>
    %161 = vector.broadcast %16 : vector<1x32xf32> to vector<72x32xf32>
    %162 = arith.addf %160, %161 : vector<72x32xf32>
    %163 = arith.mulf %162, %162 : vector<72x32xf32>
    %164 = arith.mulf %162, %163 : vector<72x32xf32>
    %cst_57 = arith.constant 4.471500e-02 : f32
    %165 = vector.broadcast %cst_57 : f32 to vector<72x32xf32>
    %166 = arith.mulf %165, %164 : vector<72x32xf32>
    %167 = arith.addf %162, %166 : vector<72x32xf32>
    %cst_58 = arith.constant 0.797884583 : f32
    %168 = vector.broadcast %cst_58 : f32 to vector<72x32xf32>
    %169 = arith.mulf %168, %167 : vector<72x32xf32>
    %170 = math.tanh %169 : vector<72x32xf32>
    %cst_59 = arith.constant 1.000000e+00 : f32
    %171 = vector.broadcast %cst_59 : f32 to vector<72x32xf32>
    %172 = arith.addf %171, %170 : vector<72x32xf32>
    %cst_60 = arith.constant 5.000000e-01 : f32
    %173 = vector.broadcast %cst_60 : f32 to vector<72x32xf32>
    %174 = arith.mulf %173, %172 : vector<72x32xf32>
    %175 = arith.mulf %162, %174 : vector<72x32xf32>
    %176 = arith.addf %117, %175 : vector<72x32xf32>
    %c1 = arith.constant 1 : index
    %c0_61 = arith.constant 0 : index
    %c0_62 = arith.constant 0 : index
    %177 = vector.load %arg5[%c1, %c0_61, %c0_62] : memref<2x8x128xf32, #tpu.memory_space<vmem>>, vector<1x8x128xf32>
    %178 = vector.shape_cast %177 : vector<1x8x128xf32> to vector<8x128xf32>
    %179 = vector.extract_strided_slice %178 {offsets = [0, 0], sizes = [1, 32], strides = [1, 1]} : vector<8x128xf32> to vector<1x32xf32>
    %180 = vector.extract_strided_slice %178 {offsets = [1, 0], sizes = [1, 32], strides = [1, 1]} : vector<8x128xf32> to vector<1x32xf32>
    %181 = vector.extract_strided_slice %178 {offsets = [2, 0], sizes = [1, 96], strides = [1, 1]} : vector<8x128xf32> to vector<1x96xf32>
    %182 = vector.extract_strided_slice %178 {offsets = [3, 0], sizes = [1, 32], strides = [1, 1]} : vector<8x128xf32> to vector<1x32xf32>
    %183 = vector.extract_strided_slice %178 {offsets = [4, 0], sizes = [1, 32], strides = [1, 1]} : vector<8x128xf32> to vector<1x32xf32>
    %184 = vector.extract_strided_slice %178 {offsets = [5, 0], sizes = [1, 32], strides = [1, 1]} : vector<8x128xf32> to vector<1x32xf32>
    %185 = vector.extract_strided_slice %178 {offsets = [6, 0], sizes = [1, 128], strides = [1, 1]} : vector<8x128xf32> to vector<1x128xf32>
    %186 = vector.extract_strided_slice %178 {offsets = [7, 0], sizes = [1, 32], strides = [1, 1]} : vector<8x128xf32> to vector<1x32xf32>
    %cst_63 = arith.constant dense<0.000000e+00> : vector<72xf32>
    %187 = vector.multi_reduction <add>, %176, %cst_63 [1] : vector<72x32xf32> to vector<72xf32>
    %188 = vector.shape_cast %187 : vector<72xf32> to vector<72x1xf32>
    %cst_64 = arith.constant 3.200000e+01 : f32
    %189 = vector.broadcast %cst_64 : f32 to vector<72x1xf32>
    %190 = arith.divf %188, %189 : vector<72x1xf32>
    %191 = vector.broadcast %190 : vector<72x1xf32> to vector<72x32xf32>
    %192 = arith.subf %176, %191 : vector<72x32xf32>
    %193 = arith.mulf %192, %192 : vector<72x32xf32>
    %cst_65 = arith.constant dense<0.000000e+00> : vector<72xf32>
    %194 = vector.multi_reduction <add>, %193, %cst_65 [1] : vector<72x32xf32> to vector<72xf32>
    %195 = vector.shape_cast %194 : vector<72xf32> to vector<72x1xf32>
    %cst_66 = arith.constant 3.200000e+01 : f32
    %196 = vector.broadcast %cst_66 : f32 to vector<72x1xf32>
    %197 = arith.divf %195, %196 : vector<72x1xf32>
    %198 = vector.broadcast %190 : vector<72x1xf32> to vector<72x32xf32>
    %199 = arith.subf %176, %198 : vector<72x32xf32>
    %cst_67 = arith.constant 9.99999974E-6 : f32
    %200 = vector.broadcast %cst_67 : f32 to vector<72x1xf32>
    %201 = arith.addf %197, %200 : vector<72x1xf32>
    %202 = math.rsqrt %201 : vector<72x1xf32>
    %203 = vector.broadcast %202 : vector<72x1xf32> to vector<72x32xf32>
    %204 = arith.mulf %199, %203 : vector<72x32xf32>
    %205 = vector.broadcast %179 : vector<1x32xf32> to vector<72x32xf32>
    %206 = arith.mulf %204, %205 : vector<72x32xf32>
    %207 = vector.broadcast %180 : vector<1x32xf32> to vector<72x32xf32>
    %208 = arith.addf %206, %207 : vector<72x32xf32>
    %c1_68 = arith.constant 1 : index
    %c0_69 = arith.constant 0 : index
    %c0_70 = arith.constant 0 : index
    %209 = vector.load %arg6[%c1_68, %c0_69, %c0_70] : memref<2x32x96xf32, #tpu.memory_space<vmem>>, vector<1x32x96xf32>
    %210 = vector.shape_cast %209 : vector<1x32x96xf32> to vector<32x96xf32>
    %cst_71 = arith.constant dense<0.000000e+00> : vector<72x96xf32>
    %211 = tpu.matmul %208, %210, %cst_71 {dimension_numbers = #tpu.dot_dimension_numbers<[1], [0], [0], [1], [0, 0, 1, 1], [], []>} : vector<72x32xf32>, vector<32x96xf32>, vector<72x96xf32> -> vector<72x96xf32>
    %212 = vector.broadcast %181 : vector<1x96xf32> to vector<72x96xf32>
    %213 = arith.addf %211, %212 : vector<72x96xf32>
    %214 = vector.extract_strided_slice %213 {offsets = [0, 0], sizes = [72, 32], strides = [1, 1]} : vector<72x96xf32> to vector<72x32xf32>
    %215 = vector.extract_strided_slice %213 {offsets = [0, 32], sizes = [72, 32], strides = [1, 1]} : vector<72x96xf32> to vector<72x32xf32>
    %216 = vector.extract_strided_slice %213 {offsets = [0, 64], sizes = [72, 32], strides = [1, 1]} : vector<72x96xf32> to vector<72x32xf32>
    %217 = vector.extract_strided_slice %214 {offsets = [0, 0], sizes = [72, 8], strides = [1, 1]} : vector<72x32xf32> to vector<72x8xf32>
    %218 = vector.extract_strided_slice %215 {offsets = [0, 0], sizes = [72, 8], strides = [1, 1]} : vector<72x32xf32> to vector<72x8xf32>
    %219 = vector.extract_strided_slice %216 {offsets = [0, 0], sizes = [72, 8], strides = [1, 1]} : vector<72x32xf32> to vector<72x8xf32>
    %cst_72 = arith.constant dense<0.000000e+00> : vector<72x72xf32>
    %220 = tpu.matmul %217, %218, %cst_72 {dimension_numbers = #tpu.dot_dimension_numbers<[1], [1], [0], [0], [0, 0, 1, 0], [], []>} : vector<72x8xf32>, vector<72x8xf32>, vector<72x72xf32> -> vector<72x72xf32>
    %221 = arith.addf %220, %6 : vector<72x72xf32>
    %cst_73 = arith.constant dense<0xFF800000> : vector<72xf32>
    %222 = vector.multi_reduction <maximumf>, %221, %cst_73 [1] : vector<72x72xf32> to vector<72xf32>
    %223 = vector.shape_cast %222 : vector<72xf32> to vector<72x1xf32>
    %224 = vector.broadcast %223 : vector<72x1xf32> to vector<72x72xf32>
    %225 = arith.subf %221, %224 : vector<72x72xf32>
    %226 = math.exp %225 : vector<72x72xf32>
    %cst_74 = arith.constant dense<0.000000e+00> : vector<72xf32>
    %227 = vector.multi_reduction <add>, %226, %cst_74 [1] : vector<72x72xf32> to vector<72xf32>
    %228 = vector.shape_cast %227 : vector<72xf32> to vector<72x1xf32>
    %229 = tpu.reciprocal %228 {approx = true} : vector<72x1xf32> -> vector<72x1xf32>
    %230 = vector.broadcast %229 : vector<72x1xf32> to vector<72x72xf32>
    %231 = arith.mulf %226, %230 : vector<72x72xf32>
    %cst_75 = arith.constant dense<0.000000e+00> : vector<72x8xf32>
    %232 = tpu.matmul %231, %219, %cst_75 {dimension_numbers = #tpu.dot_dimension_numbers<[1], [0], [0], [1], [0, 0, 1, 1], [], []>} : vector<72x72xf32>, vector<72x8xf32>, vector<72x8xf32> -> vector<72x8xf32>
    %233 = vector.extract_strided_slice %214 {offsets = [0, 8], sizes = [72, 8], strides = [1, 1]} : vector<72x32xf32> to vector<72x8xf32>
    %234 = vector.extract_strided_slice %215 {offsets = [0, 8], sizes = [72, 8], strides = [1, 1]} : vector<72x32xf32> to vector<72x8xf32>
    %235 = vector.extract_strided_slice %216 {offsets = [0, 8], sizes = [72, 8], strides = [1, 1]} : vector<72x32xf32> to vector<72x8xf32>
    %cst_76 = arith.constant dense<0.000000e+00> : vector<72x72xf32>
    %236 = tpu.matmul %233, %234, %cst_76 {dimension_numbers = #tpu.dot_dimension_numbers<[1], [1], [0], [0], [0, 0, 1, 0], [], []>} : vector<72x8xf32>, vector<72x8xf32>, vector<72x72xf32> -> vector<72x72xf32>
    %237 = arith.addf %236, %6 : vector<72x72xf32>
    %cst_77 = arith.constant dense<0xFF800000> : vector<72xf32>
    %238 = vector.multi_reduction <maximumf>, %237, %cst_77 [1] : vector<72x72xf32> to vector<72xf32>
    %239 = vector.shape_cast %238 : vector<72xf32> to vector<72x1xf32>
    %240 = vector.broadcast %239 : vector<72x1xf32> to vector<72x72xf32>
    %241 = arith.subf %237, %240 : vector<72x72xf32>
    %242 = math.exp %241 : vector<72x72xf32>
    %cst_78 = arith.constant dense<0.000000e+00> : vector<72xf32>
    %243 = vector.multi_reduction <add>, %242, %cst_78 [1] : vector<72x72xf32> to vector<72xf32>
    %244 = vector.shape_cast %243 : vector<72xf32> to vector<72x1xf32>
    %245 = tpu.reciprocal %244 {approx = true} : vector<72x1xf32> -> vector<72x1xf32>
    %246 = vector.broadcast %245 : vector<72x1xf32> to vector<72x72xf32>
    %247 = arith.mulf %242, %246 : vector<72x72xf32>
    %cst_79 = arith.constant dense<0.000000e+00> : vector<72x8xf32>
    %248 = tpu.matmul %247, %235, %cst_79 {dimension_numbers = #tpu.dot_dimension_numbers<[1], [0], [0], [1], [0, 0, 1, 1], [], []>} : vector<72x72xf32>, vector<72x8xf32>, vector<72x8xf32> -> vector<72x8xf32>
    %249 = vector.extract_strided_slice %214 {offsets = [0, 16], sizes = [72, 8], strides = [1, 1]} : vector<72x32xf32> to vector<72x8xf32>
    %250 = vector.extract_strided_slice %215 {offsets = [0, 16], sizes = [72, 8], strides = [1, 1]} : vector<72x32xf32> to vector<72x8xf32>
    %251 = vector.extract_strided_slice %216 {offsets = [0, 16], sizes = [72, 8], strides = [1, 1]} : vector<72x32xf32> to vector<72x8xf32>
    %cst_80 = arith.constant dense<0.000000e+00> : vector<72x72xf32>
    %252 = tpu.matmul %249, %250, %cst_80 {dimension_numbers = #tpu.dot_dimension_numbers<[1], [1], [0], [0], [0, 0, 1, 0], [], []>} : vector<72x8xf32>, vector<72x8xf32>, vector<72x72xf32> -> vector<72x72xf32>
    %253 = arith.addf %252, %6 : vector<72x72xf32>
    %cst_81 = arith.constant dense<0xFF800000> : vector<72xf32>
    %254 = vector.multi_reduction <maximumf>, %253, %cst_81 [1] : vector<72x72xf32> to vector<72xf32>
    %255 = vector.shape_cast %254 : vector<72xf32> to vector<72x1xf32>
    %256 = vector.broadcast %255 : vector<72x1xf32> to vector<72x72xf32>
    %257 = arith.subf %253, %256 : vector<72x72xf32>
    %258 = math.exp %257 : vector<72x72xf32>
    %cst_82 = arith.constant dense<0.000000e+00> : vector<72xf32>
    %259 = vector.multi_reduction <add>, %258, %cst_82 [1] : vector<72x72xf32> to vector<72xf32>
    %260 = vector.shape_cast %259 : vector<72xf32> to vector<72x1xf32>
    %261 = tpu.reciprocal %260 {approx = true} : vector<72x1xf32> -> vector<72x1xf32>
    %262 = vector.broadcast %261 : vector<72x1xf32> to vector<72x72xf32>
    %263 = arith.mulf %258, %262 : vector<72x72xf32>
    %cst_83 = arith.constant dense<0.000000e+00> : vector<72x8xf32>
    %264 = tpu.matmul %263, %251, %cst_83 {dimension_numbers = #tpu.dot_dimension_numbers<[1], [0], [0], [1], [0, 0, 1, 1], [], []>} : vector<72x72xf32>, vector<72x8xf32>, vector<72x8xf32> -> vector<72x8xf32>
    %265 = vector.extract_strided_slice %214 {offsets = [0, 24], sizes = [72, 8], strides = [1, 1]} : vector<72x32xf32> to vector<72x8xf32>
    %266 = vector.extract_strided_slice %215 {offsets = [0, 24], sizes = [72, 8], strides = [1, 1]} : vector<72x32xf32> to vector<72x8xf32>
    %267 = vector.extract_strided_slice %216 {offsets = [0, 24], sizes = [72, 8], strides = [1, 1]} : vector<72x32xf32> to vector<72x8xf32>
    %cst_84 = arith.constant dense<0.000000e+00> : vector<72x72xf32>
    %268 = tpu.matmul %265, %266, %cst_84 {dimension_numbers = #tpu.dot_dimension_numbers<[1], [1], [0], [0], [0, 0, 1, 0], [], []>} : vector<72x8xf32>, vector<72x8xf32>, vector<72x72xf32> -> vector<72x72xf32>
    %269 = arith.addf %268, %6 : vector<72x72xf32>
    %cst_85 = arith.constant dense<0xFF800000> : vector<72xf32>
    %270 = vector.multi_reduction <maximumf>, %269, %cst_85 [1] : vector<72x72xf32> to vector<72xf32>
    %271 = vector.shape_cast %270 : vector<72xf32> to vector<72x1xf32>
    %272 = vector.broadcast %271 : vector<72x1xf32> to vector<72x72xf32>
    %273 = arith.subf %269, %272 : vector<72x72xf32>
    %274 = math.exp %273 : vector<72x72xf32>
    %cst_86 = arith.constant dense<0.000000e+00> : vector<72xf32>
    %275 = vector.multi_reduction <add>, %274, %cst_86 [1] : vector<72x72xf32> to vector<72xf32>
    %276 = vector.shape_cast %275 : vector<72xf32> to vector<72x1xf32>
    %277 = tpu.reciprocal %276 {approx = true} : vector<72x1xf32> -> vector<72x1xf32>
    %278 = vector.broadcast %277 : vector<72x1xf32> to vector<72x72xf32>
    %279 = arith.mulf %274, %278 : vector<72x72xf32>
    %cst_87 = arith.constant dense<0.000000e+00> : vector<72x8xf32>
    %280 = tpu.matmul %279, %267, %cst_87 {dimension_numbers = #tpu.dot_dimension_numbers<[1], [0], [0], [1], [0, 0, 1, 1], [], []>} : vector<72x72xf32>, vector<72x8xf32>, vector<72x8xf32> -> vector<72x8xf32>
    %281 = tpu.concatenate %232, %248, %264, %280 in 1 : vector<72x8xf32>, vector<72x8xf32>, vector<72x8xf32>, vector<72x8xf32> -> vector<72x32xf32>
    %c1_88 = arith.constant 1 : index
    %c0_89 = arith.constant 0 : index
    %c0_90 = arith.constant 0 : index
    %282 = vector.load %arg7[%c1_88, %c0_89, %c0_90] : memref<2x32x32xf32, #tpu.memory_space<vmem>>, vector<1x32x32xf32>
    %283 = vector.shape_cast %282 : vector<1x32x32xf32> to vector<32x32xf32>
    %cst_91 = arith.constant dense<0.000000e+00> : vector<72x32xf32>
    %284 = tpu.matmul %281, %283, %cst_91 {dimension_numbers = #tpu.dot_dimension_numbers<[1], [0], [0], [1], [0, 0, 1, 1], [], []>} : vector<72x32xf32>, vector<32x32xf32>, vector<72x32xf32> -> vector<72x32xf32>
    %285 = arith.addf %176, %284 : vector<72x32xf32>
    %286 = vector.broadcast %182 : vector<1x32xf32> to vector<72x32xf32>
    %287 = arith.addf %285, %286 : vector<72x32xf32>
    %cst_92 = arith.constant dense<0.000000e+00> : vector<72xf32>
    %288 = vector.multi_reduction <add>, %287, %cst_92 [1] : vector<72x32xf32> to vector<72xf32>
    %289 = vector.shape_cast %288 : vector<72xf32> to vector<72x1xf32>
    %cst_93 = arith.constant 3.200000e+01 : f32
    %290 = vector.broadcast %cst_93 : f32 to vector<72x1xf32>
    %291 = arith.divf %289, %290 : vector<72x1xf32>
    %292 = vector.broadcast %291 : vector<72x1xf32> to vector<72x32xf32>
    %293 = arith.subf %287, %292 : vector<72x32xf32>
    %294 = arith.mulf %293, %293 : vector<72x32xf32>
    %cst_94 = arith.constant dense<0.000000e+00> : vector<72xf32>
    %295 = vector.multi_reduction <add>, %294, %cst_94 [1] : vector<72x32xf32> to vector<72xf32>
    %296 = vector.shape_cast %295 : vector<72xf32> to vector<72x1xf32>
    %cst_95 = arith.constant 3.200000e+01 : f32
    %297 = vector.broadcast %cst_95 : f32 to vector<72x1xf32>
    %298 = arith.divf %296, %297 : vector<72x1xf32>
    %299 = vector.broadcast %291 : vector<72x1xf32> to vector<72x32xf32>
    %300 = arith.subf %287, %299 : vector<72x32xf32>
    %cst_96 = arith.constant 9.99999974E-6 : f32
    %301 = vector.broadcast %cst_96 : f32 to vector<72x1xf32>
    %302 = arith.addf %298, %301 : vector<72x1xf32>
    %303 = math.rsqrt %302 : vector<72x1xf32>
    %304 = vector.broadcast %303 : vector<72x1xf32> to vector<72x32xf32>
    %305 = arith.mulf %300, %304 : vector<72x32xf32>
    %306 = vector.broadcast %183 : vector<1x32xf32> to vector<72x32xf32>
    %307 = arith.mulf %305, %306 : vector<72x32xf32>
    %308 = vector.broadcast %184 : vector<1x32xf32> to vector<72x32xf32>
    %309 = arith.addf %307, %308 : vector<72x32xf32>
    %c1_97 = arith.constant 1 : index
    %c0_98 = arith.constant 0 : index
    %c0_99 = arith.constant 0 : index
    %310 = vector.load %arg8[%c1_97, %c0_98, %c0_99] : memref<2x32x128xf32, #tpu.memory_space<vmem>>, vector<1x32x128xf32>
    %311 = vector.shape_cast %310 : vector<1x32x128xf32> to vector<32x128xf32>
    %cst_100 = arith.constant dense<0.000000e+00> : vector<72x128xf32>
    %312 = tpu.matmul %309, %311, %cst_100 {dimension_numbers = #tpu.dot_dimension_numbers<[1], [0], [0], [1], [0, 0, 1, 1], [], []>} : vector<72x32xf32>, vector<32x128xf32>, vector<72x128xf32> -> vector<72x128xf32>
    %313 = vector.broadcast %185 : vector<1x128xf32> to vector<72x128xf32>
    %314 = arith.addf %312, %313 : vector<72x128xf32>
    %315 = arith.mulf %314, %314 : vector<72x128xf32>
    %316 = arith.mulf %314, %315 : vector<72x128xf32>
    %cst_101 = arith.constant 4.471500e-02 : f32
    %317 = vector.broadcast %cst_101 : f32 to vector<72x128xf32>
    %318 = arith.mulf %317, %316 : vector<72x128xf32>
    %319 = arith.addf %314, %318 : vector<72x128xf32>
    %cst_102 = arith.constant 0.797884583 : f32
    %320 = vector.broadcast %cst_102 : f32 to vector<72x128xf32>
    %321 = arith.mulf %320, %319 : vector<72x128xf32>
    %322 = math.tanh %321 : vector<72x128xf32>
    %cst_103 = arith.constant 1.000000e+00 : f32
    %323 = vector.broadcast %cst_103 : f32 to vector<72x128xf32>
    %324 = arith.addf %323, %322 : vector<72x128xf32>
    %cst_104 = arith.constant 5.000000e-01 : f32
    %325 = vector.broadcast %cst_104 : f32 to vector<72x128xf32>
    %326 = arith.mulf %325, %324 : vector<72x128xf32>
    %327 = arith.mulf %314, %326 : vector<72x128xf32>
    %c1_105 = arith.constant 1 : index
    %c0_106 = arith.constant 0 : index
    %c0_107 = arith.constant 0 : index
    %328 = vector.load %arg9[%c1_105, %c0_106, %c0_107] : memref<2x128x32xf32, #tpu.memory_space<vmem>>, vector<1x128x32xf32>
    %329 = vector.shape_cast %328 : vector<1x128x32xf32> to vector<128x32xf32>
    %cst_108 = arith.constant dense<0.000000e+00> : vector<72x32xf32>
    %330 = tpu.matmul %327, %329, %cst_108 {dimension_numbers = #tpu.dot_dimension_numbers<[1], [0], [0], [1], [0, 0, 1, 1], [], []>} : vector<72x128xf32>, vector<128x32xf32>, vector<72x32xf32> -> vector<72x32xf32>
    %331 = vector.broadcast %186 : vector<1x32xf32> to vector<72x32xf32>
    %332 = arith.addf %330, %331 : vector<72x32xf32>
    %333 = arith.mulf %332, %332 : vector<72x32xf32>
    %334 = arith.mulf %332, %333 : vector<72x32xf32>
    %cst_109 = arith.constant 4.471500e-02 : f32
    %335 = vector.broadcast %cst_109 : f32 to vector<72x32xf32>
    %336 = arith.mulf %335, %334 : vector<72x32xf32>
    %337 = arith.addf %332, %336 : vector<72x32xf32>
    %cst_110 = arith.constant 0.797884583 : f32
    %338 = vector.broadcast %cst_110 : f32 to vector<72x32xf32>
    %339 = arith.mulf %338, %337 : vector<72x32xf32>
    %340 = math.tanh %339 : vector<72x32xf32>
    %cst_111 = arith.constant 1.000000e+00 : f32
    %341 = vector.broadcast %cst_111 : f32 to vector<72x32xf32>
    %342 = arith.addf %341, %340 : vector<72x32xf32>
    %cst_112 = arith.constant 5.000000e-01 : f32
    %343 = vector.broadcast %cst_112 : f32 to vector<72x32xf32>
    %344 = arith.mulf %343, %342 : vector<72x32xf32>
    %345 = arith.mulf %332, %344 : vector<72x32xf32>
    %346 = arith.addf %287, %345 : vector<72x32xf32>
    %c0_113 = arith.constant 0 : index
    %c0_114 = arith.constant 0 : index
    %347 = vector.load %arg10[%c0_113, %c0_114] : memref<8x128xf32, #tpu.memory_space<vmem>>, vector<8x128xf32>
    %348 = vector.extract_strided_slice %347 {offsets = [0, 0], sizes = [1, 32], strides = [1, 1]} : vector<8x128xf32> to vector<1x32xf32>
    %349 = vector.extract_strided_slice %347 {offsets = [1, 0], sizes = [1, 32], strides = [1, 1]} : vector<8x128xf32> to vector<1x32xf32>
    %350 = vector.extract_strided_slice %347 {offsets = [2, 0], sizes = [1, 128], strides = [1, 1]} : vector<8x128xf32> to vector<1x128xf32>
    %351 = vector.extract_strided_slice %346 {offsets = [0, 0], sizes = [24, 32], strides = [1, 1]} : vector<72x32xf32> to vector<24x32xf32>
    %cst_115 = arith.constant dense<0.000000e+00> : vector<24xf32>
    %352 = vector.multi_reduction <add>, %351, %cst_115 [1] : vector<24x32xf32> to vector<24xf32>
    %353 = vector.shape_cast %352 : vector<24xf32> to vector<24x1xf32>
    %cst_116 = arith.constant 3.200000e+01 : f32
    %354 = vector.broadcast %cst_116 : f32 to vector<24x1xf32>
    %355 = arith.divf %353, %354 : vector<24x1xf32>
    %356 = vector.broadcast %355 : vector<24x1xf32> to vector<24x32xf32>
    %357 = arith.subf %351, %356 : vector<24x32xf32>
    %358 = arith.mulf %357, %357 : vector<24x32xf32>
    %cst_117 = arith.constant dense<0.000000e+00> : vector<24xf32>
    %359 = vector.multi_reduction <add>, %358, %cst_117 [1] : vector<24x32xf32> to vector<24xf32>
    %360 = vector.shape_cast %359 : vector<24xf32> to vector<24x1xf32>
    %cst_118 = arith.constant 3.200000e+01 : f32
    %361 = vector.broadcast %cst_118 : f32 to vector<24x1xf32>
    %362 = arith.divf %360, %361 : vector<24x1xf32>
    %363 = vector.broadcast %355 : vector<24x1xf32> to vector<24x32xf32>
    %364 = arith.subf %351, %363 : vector<24x32xf32>
    %cst_119 = arith.constant 9.99999974E-6 : f32
    %365 = vector.broadcast %cst_119 : f32 to vector<24x1xf32>
    %366 = arith.addf %362, %365 : vector<24x1xf32>
    %367 = math.rsqrt %366 : vector<24x1xf32>
    %368 = vector.broadcast %367 : vector<24x1xf32> to vector<24x32xf32>
    %369 = arith.mulf %364, %368 : vector<24x32xf32>
    %370 = vector.broadcast %348 : vector<1x32xf32> to vector<24x32xf32>
    %371 = arith.mulf %369, %370 : vector<24x32xf32>
    %372 = vector.broadcast %349 : vector<1x32xf32> to vector<24x32xf32>
    %373 = arith.addf %371, %372 : vector<24x32xf32>
    %c0_120 = arith.constant 0 : index
    %c0_121 = arith.constant 0 : index
    %374 = vector.load %arg11[%c0_120, %c0_121] : memref<32x128xf32, #tpu.memory_space<vmem>>, vector<32x128xf32>
    %cst_122 = arith.constant dense<0.000000e+00> : vector<24x128xf32>
    %375 = tpu.matmul %373, %374, %cst_122 {dimension_numbers = #tpu.dot_dimension_numbers<[1], [0], [0], [1], [0, 0, 1, 1], [], []>} : vector<24x32xf32>, vector<32x128xf32>, vector<24x128xf32> -> vector<24x128xf32>
    %376 = vector.broadcast %350 : vector<1x128xf32> to vector<24x128xf32>
    %377 = arith.addf %375, %376 : vector<24x128xf32>
    %c0_123 = arith.constant 0 : index
    %c0_124 = arith.constant 0 : index
    %c0_125 = arith.constant 0 : index
    %378 = vector.load %arg12[%c0_123, %c0_124, %c0_125] : memref<1x24x128xf32, #tpu.memory_space<vmem>>, vector<1x24x128xf32>
    %379 = vector.shape_cast %378 : vector<1x24x128xf32> to vector<24x128xf32>
    %380 = vector.shape_cast %377 : vector<24x128xf32> to vector<1x24x128xf32>
    tpu.vector_store %arg12[%c0_123, %c0_124, %c0_125], %380 {strides = array<i32>} : memref<1x24x128xf32, #tpu.memory_space<vmem>>, vector<1x24x128xf32>,
    return
  }
  func.func @transform_0(%arg0: i32) -> (i32, i32, i32) {
    %c0_i32 = arith.constant 0 : i32
    %c0_i32_0 = arith.constant 0 : i32
    %c0_i32_1 = arith.constant 0 : i32
    return %arg0, %c0_i32, %c0_i32_0 : i32, i32, i32
  }
  func.func @transform_1(%arg0: i32) -> (i32, i32) {
    %c0_i32 = arith.constant 0 : i32
    %c0_i32_0 = arith.constant 0 : i32
    %c0_i32_1 = arith.constant 0 : i32
    return %c0_i32, %c0_i32_0 : i32, i32
  }
  func.func @transform_2(%arg0: i32) -> (i32, i32) {
    %c0_i32 = arith.constant 0 : i32
    %c0_i32_0 = arith.constant 0 : i32
    %c0_i32_1 = arith.constant 0 : i32
    return %c0_i32, %c0_i32_0 : i32, i32
  }
  func.func @transform_3(%arg0: i32) -> (i32, i32) {
    %c0_i32 = arith.constant 0 : i32
    %c0_i32_0 = arith.constant 0 : i32
    %c0_i32_1 = arith.constant 0 : i32
    return %c0_i32, %c0_i32_0 : i32, i32
  }
  func.func @transform_4(%arg0: i32) -> (i32, i32, i32) {
    %c0_i32 = arith.constant 0 : i32
    %c0_i32_0 = arith.constant 0 : i32
    %c0_i32_1 = arith.constant 0 : i32
    %c0_i32_2 = arith.constant 0 : i32
    return %c0_i32, %c0_i32_0, %c0_i32_1 : i32, i32, i32
  }
  func.func @transform_5(%arg0: i32) -> (i32, i32, i32) {
    %c0_i32 = arith.constant 0 : i32
    %c0_i32_0 = arith.constant 0 : i32
    %c0_i32_1 = arith.constant 0 : i32
    %c0_i32_2 = arith.constant 0 : i32
    return %c0_i32, %c0_i32_0, %c0_i32_1 : i32, i32, i32
  }
  func.func @transform_6(%arg0: i32) -> (i32, i32, i32) {
    %c0_i32 = arith.constant 0 : i32
    %c0_i32_0 = arith.constant 0 : i32
    %c0_i32_1 = arith.constant 0 : i32
    %c0_i32_2 = arith.constant 0 : i32
    return %c0_i32, %c0_i32_0, %c0_i32_1 : i32, i32, i32
  }
  func.func @transform_7(%arg0: i32) -> (i32, i32, i32) {
    %c0_i32 = arith.constant 0 : i32
    %c0_i32_0 = arith.constant 0 : i32
    %c0_i32_1 = arith.constant 0 : i32
    %c0_i32_2 = arith.constant 0 : i32
    return %c0_i32, %c0_i32_0, %c0_i32_1 : i32, i32, i32
  }
  func.func @transform_8(%arg0: i32) -> (i32, i32, i32) {
    %c0_i32 = arith.constant 0 : i32
    %c0_i32_0 = arith.constant 0 : i32
    %c0_i32_1 = arith.constant 0 : i32
    %c0_i32_2 = arith.constant 0 : i32
    return %c0_i32, %c0_i32_0, %c0_i32_1 : i32, i32, i32
  }
  func.func @transform_9(%arg0: i32) -> (i32, i32) {
    %c0_i32 = arith.constant 0 : i32
    %c0_i32_0 = arith.constant 0 : i32
    %c0_i32_1 = arith.constant 0 : i32
    return %c0_i32, %c0_i32_0 : i32, i32
  }
  func.func @transform_10(%arg0: i32) -> (i32, i32) {
    %c0_i32 = arith.constant 0 : i32
    %c0_i32_0 = arith.constant 0 : i32
    %c0_i32_1 = arith.constant 0 : i32
    return %c0_i32, %c0_i32_0 : i32, i32
  }
  func.func @transform_11(%arg0: i32) -> (i32, i32, i32) {
    %c0_i32 = arith.constant 0 : i32
    %c0_i32_0 = arith.constant 0 : i32
    %c0_i32_1 = arith.constant 0 : i32
    return %arg0, %c0_i32, %c0_i32_0 : i32, i32, i32
  }
}

</mosaic_0001>

<llo_original>
// kernel: depthwise_vit_forward.1
$region0: #{depthwise_vit_forward.1}
  #allocation0 [shape = 'u32[]', space=smem, size = 0x4, offset = 0x4, fixed_abs, tag = 'smem constant byte address 0x4 - core index']
  #allocation1 [shape = 'u32[144,128]{1,0:T(1,128)}', space=vmem, size = 0x12000, scoped, tag = 'internal scratch']
  %s0 = inlined_call_operand.vmem [shape: f32[2,72,16], index: 0, kind: input, shape index: {}]
  %s1 = inlined_call_operand.vmem [shape: f32[16,32], index: 1, kind: input, shape index: {}]
  %s2 = inlined_call_operand.vmem [shape: f32[72,32], index: 2, kind: input, shape index: {}]
  %s3 = inlined_call_operand.vmem [shape: f32[72,72], index: 3, kind: input, shape index: {}]
  %s4 = inlined_call_operand.vmem [shape: f32[2,8,128], index: 4, kind: input, shape index: {}]
  %s5 = inlined_call_operand.vmem [shape: f32[2,32,96], index: 5, kind: input, shape index: {}]
  %s6 = inlined_call_operand.vmem [shape: f32[2,32,32], index: 6, kind: input, shape index: {}]
  %s7 = inlined_call_operand.vmem [shape: f32[2,32,128], index: 7, kind: input, shape index: {}]
  %s8 = inlined_call_operand.vmem [shape: f32[2,128,32], index: 8, kind: input, shape index: {}]
  %s9 = inlined_call_operand.vmem [shape: f32[8,128], index: 9, kind: input, shape index: {}]
  %s10 = inlined_call_operand.vmem [shape: f32[32,128], index: 10, kind: input, shape index: {}]
  %s11 = inlined_call_operand.vmem [shape: f32[2,24,128], index: 11, kind: output, shape index: {}]
  %s12 = sld [smem:[#allocation0]]
  $region77: #{depthwise_vit_forward.1} parent=0
    _
  %s14 = ssub.s32 1, %s12
  %s15 = scalar_select 0, %s14, %s12
  loop: start=0, step=1, limit=4
  $region2: #{depthwise_vit_forward.1} parent=0 // loop_pre_header
    _
  $region3: #{depthwise_vit_forward.1} parent=0 // loop_header
    %s17 = sphi 0, %s21
    %p18 = scmp.ge.s32.totalorder %s17, 4
    %s27 = sphi 0, %s29
    %s30 = sphi 0, %s27
    %s31 = sphi 0, %s30
    %s47 = sphi 0, %s31
    %s51 = sphi 0, %s51
    %s53 = sphi 0, %s51
    %s54 = sphi 0, %s53
    %s68 = sphi 0, %s54
    %s72 = sphi 0, %s72
    %s74 = sphi 0, %s72
    %s75 = sphi 0, %s74
    %s89 = sphi 0, %s75
    %s93 = sphi 0, %s93
    %s95 = sphi 0, %s93
    %s96 = sphi 0, %s95
    %s110 = sphi 0, %s96
    %s114 = sphi 0, %s114
    %s116 = sphi 0, %s114
    %s117 = sphi 0, %s116
    %s131 = sphi 0, %s117
    %s135 = sphi 0, %s135
    %s137 = sphi 0, %s135
    %s138 = sphi 0, %s137
    %s152 = sphi 0, %s138
    %s156 = sphi 0, %s156
    %s158 = sphi 0, %s156
    %s159 = sphi 0, %s158
    %s173 = sphi 0, %s159
    %s177 = sphi 0, %s177
    %s179 = sphi 0, %s177
    %s180 = sphi 0, %s179
    %s194 = sphi 0, %s180
    %s198 = sphi 0, %s198
    %s200 = sphi 0, %s198
    %s201 = sphi 0, %s200
    %s215 = sphi 0, %s201
    %s219 = sphi 0, %s219
    %s221 = sphi 0, %s219
    %s222 = sphi 0, %s221
    %s236 = sphi 0, %s222
    %s240 = sphi 0, %s240
    %s242 = sphi 0, %s240
    %s243 = sphi 0, %s242
    %s257 = sphi 0, %s243
    %s263 = sphi 0, %s265
    %s266 = sphi 0, %s263
    %s267 = sphi 0, %s266
    %s283 = sphi 0, %s267
  $region4: #{depthwise_vit_forward.1} parent=0 // loop_header_branch
    %20 = sbr.rel (%p18) target = $region8
  $region5: #{depthwise_vit_forward.1} parent=0 // loop_body
    %s22 = ssub.s32 %s17, 1
    %s23 = ssub.s32 %s17, 2
    %s24 = sadd.s32 %s17, 1
    %s25 = ssub.s32 %s17, %s24
    %p26 = scmp.eq.s32.totalorder %s25, 0
    %s28 = sadd.s32 %s27, 1
    %s29 = scalar_select %p26, %s27, %s28
    %p32 = pneg %p26
    %p33 = scmp.eq.s32.totalorder %s17, 1
    %p34 = por %p32, %p33
    %p35 = scmp.ne.s32.totalorder %s27, %s30
    %p36 = scmp.eq.s32.totalorder %s17, 0
    %p37 = por %p35, %p36
    %p38 = scmp.ne.s32.totalorder %s27, %s30
    %p39 = scmp.eq.s32.totalorder %s22, 1
    %p40 = por %p38, %p39
    %p41 = scmp.ne.s32.totalorder %s30, %s31
    %p42 = scmp.eq.s32.totalorder %s22, 0
    %p43 = por %p41, %p42
    %p44 = scmp.ne.s32.totalorder %s30, %s31
    %p45 = scmp.eq.s32.totalorder %s23, 1
    %p46 = por %p44, %p45
    %p48 = scmp.ne.s32.totalorder %s31, %s47
    %p49 = scmp.eq.s32.totalorder %s23, 0
    %p50 = por %p48, %p49
    %s52 = sadd.s32 %s51, 1
    %p55 = scmp.eq.s32.totalorder %s17, 1
    %p56 = scmp.ne.s32.totalorder %s51, %s53
    %p57 = scmp.eq.s32.totalorder %s17, 0
    %p58 = por %p56, %p57
    %p59 = scmp.ne.s32.totalorder %s51, %s53
    %p60 = scmp.eq.s32.totalorder %s22, 1
    %p61 = por %p59, %p60
    %p62 = scmp.ne.s32.totalorder %s53, %s54
    %p63 = scmp.eq.s32.totalorder %s22, 0
    %p64 = por %p62, %p63
    %p65 = scmp.ne.s32.totalorder %s53, %s54
    %p66 = scmp.eq.s32.totalorder %s23, 1
    %p67 = por %p65, %p66
    %p69 = scmp.ne.s32.totalorder %s54, %s68
    %p70 = scmp.eq.s32.totalorder %s23, 0
    %p71 = por %p69, %p70
    %s73 = sadd.s32 %s72, 1
    %p76 = scmp.eq.s32.totalorder %s17, 1
    %p77 = scmp.ne.s32.totalorder %s72, %s74
    %p78 = scmp.eq.s32.totalorder %s17, 0
    %p79 = por %p77, %p78
    %p80 = scmp.ne.s32.totalorder %s72, %s74
    %p81 = scmp.eq.s32.totalorder %s22, 1
    %p82 = por %p80, %p81
    %p83 = scmp.ne.s32.totalorder %s74, %s75
    %p84 = scmp.eq.s32.totalorder %s22, 0
    %p85 = por %p83, %p84
    %p86 = scmp.ne.s32.totalorder %s74, %s75
    %p87 = scmp.eq.s32.totalorder %s23, 1
    %p88 = por %p86, %p87
    %p90 = scmp.ne.s32.totalorder %s75, %s89
    %p91 = scmp.eq.s32.totalorder %s23, 0
    %p92 = por %p90, %p91
    %s94 = sadd.s32 %s93, 1
    %p97 = scmp.eq.s32.totalorder %s17, 1
    %p98 = scmp.ne.s32.totalorder %s93, %s95
    %p99 = scmp.eq.s32.totalorder %s17, 0
    %p100 = por %p98, %p99
    %p101 = scmp.ne.s32.totalorder %s93, %s95
    %p102 = scmp.eq.s32.totalorder %s22, 1
    %p103 = por %p101, %p102
    %p104 = scmp.ne.s32.totalorder %s95, %s96
    %p105 = scmp.eq.s32.totalorder %s22, 0
    %p106 = por %p104, %p105
    %p107 = scmp.ne.s32.totalorder %s95, %s96
    %p108 = scmp.eq.s32.totalorder %s23, 1
    %p109 = por %p107, %p108
    %p111 = scmp.ne.s32.totalorder %s96, %s110
    %p112 = scmp.eq.s32.totalorder %s23, 0
    %p113 = por %p111, %p112
    %s115 = sadd.s32 %s114, 1
    %p118 = scmp.eq.s32.totalorder %s17, 1
    %p119 = scmp.ne.s32.totalorder %s114, %s116
    %p120 = scmp.eq.s32.totalorder %s17, 0
    %p121 = por %p119, %p120
    %p122 = scmp.ne.s32.totalorder %s114, %s116
    %p123 = scmp.eq.s32.totalorder %s22, 1
    %p124 = por %p122, %p123
    %p125 = scmp.ne.s32.totalorder %s116, %s117
    %p126 = scmp.eq.s32.totalorder %s22, 0
    %p127 = por %p125, %p126
    %p128 = scmp.ne.s32.totalorder %s116, %s117
    %p129 = scmp.eq.s32.totalorder %s23, 1
    %p130 = por %p128, %p129
    %p132 = scmp.ne.s32.totalorder %s117, %s131
    %p133 = scmp.eq.s32.totalorder %s23, 0
    %p134 = por %p132, %p133
    %s136 = sadd.s32 %s135, 1
    %p139 = scmp.eq.s32.totalorder %s17, 1
    %p140 = scmp.ne.s32.totalorder %s135, %s137
    %p141 = scmp.eq.s32.totalorder %s17, 0
    %p142 = por %p140, %p141
    %p143 = scmp.ne.s32.totalorder %s135, %s137
    %p144 = scmp.eq.s32.totalorder %s22, 1
    %p145 = por %p143, %p144
    %p146 = scmp.ne.s32.totalorder %s137, %s138
    %p147 = scmp.eq.s32.totalorder %s22, 0
    %p148 = por %p146, %p147
    %p149 = scmp.ne.s32.totalorder %s137, %s138
    %p150 = scmp.eq.s32.totalorder %s23, 1
    %p151 = por %p149, %p150
    %p153 = scmp.ne.s32.totalorder %s138, %s152
    %p154 = scmp.eq.s32.totalorder %s23, 0
    %p155 = por %p153, %p154
    %s157 = sadd.s32 %s156, 1
    %p160 = scmp.eq.s32.totalorder %s17, 1
    %p161 = scmp.ne.s32.totalorder %s156, %s158
    %p162 = scmp.eq.s32.totalorder %s17, 0
    %p163 = por %p161, %p162
    %p164 = scmp.ne.s32.totalorder %s156, %s158
    %p165 = scmp.eq.s32.totalorder %s22, 1
    %p166 = por %p164, %p165
    %p167 = scmp.ne.s32.totalorder %s158, %s159
    %p168 = scmp.eq.s32.totalorder %s22, 0
    %p169 = por %p167, %p168
    %p170 = scmp.ne.s32.totalorder %s158, %s159
    %p171 = scmp.eq.s32.totalorder %s23, 1
    %p172 = por %p170, %p171
    %p174 = scmp.ne.s32.totalorder %s159, %s173
    %p175 = scmp.eq.s32.totalorder %s23, 0
    %p176 = por %p174, %p175
    %s178 = sadd.s32 %s177, 1
    %p181 = scmp.eq.s32.totalorder %s17, 1
    %p182 = scmp.ne.s32.totalorder %s177, %s179
    %p183 = scmp.eq.s32.totalorder %s17, 0
    %p184 = por %p182, %p183
    %p185 = scmp.ne.s32.totalorder %s177, %s179
    %p186 = scmp.eq.s32.totalorder %s22, 1
    %p187 = por %p185, %p186
    %p188 = scmp.ne.s32.totalorder %s179, %s180
    %p189 = scmp.eq.s32.totalorder %s22, 0
    %p190 = por %p188, %p189
    %p191 = scmp.ne.s32.totalorder %s179, %s180
    %p192 = scmp.eq.s32.totalorder %s23, 1
    %p193 = por %p191, %p192
    %p195 = scmp.ne.s32.totalorder %s180, %s194
    %p196 = scmp.eq.s32.totalorder %s23, 0
    %p197 = por %p195, %p196
    %s199 = sadd.s32 %s198, 1
    %p202 = scmp.eq.s32.totalorder %s17, 1
    %p203 = scmp.ne.s32.totalorder %s198, %s200
    %p204 = scmp.eq.s32.totalorder %s17, 0
    %p205 = por %p203, %p204
    %p206 = scmp.ne.s32.totalorder %s198, %s200
    %p207 = scmp.eq.s32.totalorder %s22, 1
    %p208 = por %p206, %p207
    %p209 = scmp.ne.s32.totalorder %s200, %s201
    %p210 = scmp.eq.s32.totalorder %s22, 0
    %p211 = por %p209, %p210
    %p212 = scmp.ne.s32.totalorder %s200, %s201
    %p213 = scmp.eq.s32.totalorder %s23, 1
    %p214 = por %p212, %p213
    %p216 = scmp.ne.s32.totalorder %s201, %s215
    %p217 = scmp.eq.s32.totalorder %s23, 0
    %p218 = por %p216, %p217
    %s220 = sadd.s32 %s219, 1
    %p223 = scmp.eq.s32.totalorder %s17, 1
    %p224 = scmp.ne.s32.totalorder %s219, %s221
    %p225 = scmp.eq.s32.totalorder %s17, 0
    %p226 = por %p224, %p225
    %p227 = scmp.ne.s32.totalorder %s219, %s221
    %p228 = scmp.eq.s32.totalorder %s22, 1
    %p229 = por %p227, %p228
    %p230 = scmp.ne.s32.totalorder %s221, %s222
    %p231 = scmp.eq.s32.totalorder %s22, 0
    %p232 = por %p230, %p231
    %p233 = scmp.ne.s32.totalorder %s221, %s222
    %p234 = scmp.eq.s32.totalorder %s23, 1
    %p235 = por %p233, %p234
    %p237 = scmp.ne.s32.totalorder %s222, %s236
    %p238 = scmp.eq.s32.totalorder %s23, 0
    %p239 = por %p237, %p238
    %s241 = sadd.s32 %s240, 1
    %p244 = scmp.eq.s32.totalorder %s17, 1
    %p245 = scmp.ne.s32.totalorder %s240, %s242
    %p246 = scmp.eq.s32.totalorder %s17, 0
    %p247 = por %p245, %p246
    %p248 = scmp.ne.s32.totalorder %s240, %s242
    %p249 = scmp.eq.s32.totalorder %s22, 1
    %p250 = por %p248, %p249
    %p251 = scmp.ne.s32.totalorder %s242, %s243
    %p252 = scmp.eq.s32.totalorder %s22, 0
    %p253 = por %p251, %p252
    %p254 = scmp.ne.s32.totalorder %s242, %s243
    %p255 = scmp.eq.s32.totalorder %s23, 1
    %p256 = por %p254, %p255
    %p258 = scmp.ne.s32.totalorder %s243, %s257
    %p259 = scmp.eq.s32.totalorder %s23, 0
    %p260 = por %p258, %p259
    %s261 = ssub.s32 %s17, %s24
    %p262 = scmp.eq.s32.totalorder %s261, 0
    %s264 = sadd.s32 %s263, 1
    %s265 = scalar_select %p262, %s263, %s264
    %p268 = pneg %p262
    %p269 = scmp.eq.s32.totalorder %s17, 1
    %p270 = por %p268, %p269
    %p271 = scmp.ne.s32.totalorder %s263, %s266
    %p272 = scmp.eq.s32.totalorder %s17, 0
    %p273 = por %p271, %p272
    %p274 = scmp.ne.s32.totalorder %s263, %s266
    %p275 = scmp.eq.s32.totalorder %s22, 1
    %p276 = por %p274, %p275
    %p277 = scmp.ne.s32.totalorder %s266, %s267
    %p278 = scmp.eq.s32.totalorder %s22, 0
    %p279 = por %p277, %p278
    %p280 = scmp.ne.s32.totalorder %s266, %s267
    %p281 = scmp.eq.s32.totalorder %s23, 1
    %p282 = por %p280, %p281
    %p284 = scmp.ne.s32.totalorder %s267, %s283
    %p285 = scmp.eq.s32.totalorder %s23, 0
    %p286 = por %p284, %p285
    %p287 = scmp.le.s32.totalorder 1, %s17
    %p288 = scmp.lt.s32.totalorder %s17, 3
    %p289 = pnand %p287, %p288
    %p290 = pneg %p289
    // Predicated region
    $region9: #{depthwise_vit_forward.1} parent=5 // pred_check
      _
    $region10: #{depthwise_vit_forward.1} parent=5 // pred_check_branch
      %292 = sbr.rel (%p289) target = $region12
    $region11: #{depthwise_vit_forward.1} parent=5 // pred_region
      %s293 = ssub.s32 %s17, 1
      // Predicated region
      $region13: #{depthwise_vit_forward.1} parent=11 // pred_check
        %p294 = pneg %p64
      $region14: #{depthwise_vit_forward.1} parent=11 // pred_check_branch
        %296 = sbr.rel (%p294) target = $region16
      $region15: #{depthwise_vit_forward.1} parent=11 // pred_region
        _
      $region16: #{depthwise_vit_forward.1} parent=11 // pred_fallthru
        _
      // Predicated region
      $region17: #{depthwise_vit_forward.1} parent=11 // pred_check
        %p297 = pneg %p85
      $region18: #{depthwise_vit_forward.1} parent=11 // pred_check_branch
        %299 = sbr.rel (%p297) target = $region20
      $region19: #{depthwise_vit_forward.1} parent=11 // pred_region
        _
      $region20: #{depthwise_vit_forward.1} parent=11 // pred_fallthru
        _
      // Predicated region
      $region21: #{depthwise_vit_forward.1} parent=11 // pred_check
        %p300 = pneg %p106
      $region22: #{depthwise_vit_forward.1} parent=11 // pred_check_branch
        %302 = sbr.rel (%p300) target = $region24
      $region23: #{depthwise_vit_forward.1} parent=11 // pred_region
        _
      $region24: #{depthwise_vit_forward.1} parent=11 // pred_fallthru
        _
      // Predicated region
      $region25: #{depthwise_vit_forward.1} parent=11 // pred_check
        %p303 = pneg %p127
      $region26: #{depthwise_vit_forward.1} parent=11 // pred_check_branch
        %305 = sbr.rel (%p303) target = $region28
      $region27: #{depthwise_vit_forward.1} parent=11 // pred_region
        _
      $region28: #{depthwise_vit_forward.1} parent=11 // pred_fallthru
        _
      // Predicated region
      $region29: #{depthwise_vit_forward.1} parent=11 // pred_check
        %p306 = pneg %p148
      $region30: #{depthwise_vit_forward.1} parent=11 // pred_check_branch
        %308 = sbr.rel (%p306) target = $region32
      $region31: #{depthwise_vit_forward.1} parent=11 // pred_region
        _
      $region32: #{depthwise_vit_forward.1} parent=11 // pred_fallthru
        _
      // Predicated region
      $region33: #{depthwise_vit_forward.1} parent=11 // pred_check
        %p309 = pneg %p169
      $region34: #{depthwise_vit_forward.1} parent=11 // pred_check_branch
        %311 = sbr.rel (%p309) target = $region36
      $region35: #{depthwise_vit_forward.1} parent=11 // pred_region
        _
      $region36: #{depthwise_vit_forward.1} parent=11 // pred_fallthru
        _
      // Predicated region
      $region37: #{depthwise_vit_forward.1} parent=11 // pred_check
        %p312 = pneg %p190
      $region38: #{depthwise_vit_forward.1} parent=11 // pred_check_branch
        %314 = sbr.rel (%p312) target = $region40
      $region39: #{depthwise_vit_forward.1} parent=11 // pred_region
        _
      $region40: #{depthwise_vit_forward.1} parent=11 // pred_fallthru
        _
      // Predicated region
      $region41: #{depthwise_vit_forward.1} parent=11 // pred_check
        %p315 = pneg %p211
      $region42: #{depthwise_vit_forward.1} parent=11 // pred_check_branch
        %317 = sbr.rel (%p315) target = $region44
      $region43: #{depthwise_vit_forward.1} parent=11 // pred_region
        _
      $region44: #{depthwise_vit_forward.1} parent=11 // pred_fallthru
        _
      // Predicated region
      $region45: #{depthwise_vit_forward.1} parent=11 // pred_check
        %p318 = pneg %p232
      $region46: #{depthwise_vit_forward.1} parent=11 // pred_check_branch
        %320 = sbr.rel (%p318) target = $region48
      $region47: #{depthwise_vit_forward.1} parent=11 // pred_region
        _
      $region48: #{depthwise_vit_forward.1} parent=11 // pred_fallthru
        _
      // Predicated region
      $region49: #{depthwise_vit_forward.1} parent=11 // pred_check
        %p321 = pneg %p253
      $region50: #{depthwise_vit_forward.1} parent=11 // pred_check_branch
        %323 = sbr.rel (%p321) target = $region52
      $region51: #{depthwise_vit_forward.1} parent=11 // pred_region
        _
      $region52: #{depthwise_vit_forward.1} parent=11 // pred_fallthru
        _
    $region12: #{depthwise_vit_forward.1} parent=5 // pred_fallthru
      _
    %p324 = scmp.lt.s32.totalorder %s17, 2
    // Predicated region
    $region53: #{depthwise_vit_forward.1} parent=5 // pred_check
      %p325 = pneg %p324
    $region54: #{depthwise_vit_forward.1} parent=5 // pred_check_branch
      %327 = sbr.rel (%p325) target = $region56
    $region55: #{depthwise_vit_forward.1} parent=5 // pred_region
      // Predicated region
      $region57: #{depthwise_vit_forward.1} parent=55 // pred_check
        %p328 = pneg %p37
      $region58: #{depthwise_vit_forward.1} parent=55 // pred_check_branch
        %330 = sbr.rel (%p328) target = $region60
      $region59: #{depthwise_vit_forward.1} parent=55 // pred_region
        %p331 = scmp.lt.s32.totalorder %s17, 1
        %s332 = scalar_select %p331, %s17, 1
        %s333 = smul.addr %s332, 9
        %s334 = smul.addr %s333, 8
        %s335 = scalar_lea.vmem %s0, %s334
      $region60: #{depthwise_vit_forward.1} parent=55 // pred_fallthru
        _
    $region56: #{depthwise_vit_forward.1} parent=5 // pred_fallthru
      _
    %p336 = scmp.le.s32.totalorder 1, %s17
    %p337 = scmp.lt.s32.totalorder %s17, 3
    %p338 = pnand %p336, %p337
    %p339 = pneg %p338
    // Predicated region
    $region61: #{depthwise_vit_forward.1} parent=5 // pred_check
      _
    $region62: #{depthwise_vit_forward.1} parent=5 // pred_check_branch
      %341 = sbr.rel (%p338) target = $region64
    $region63: #{depthwise_vit_forward.1} parent=5 // pred_region
      %s342 = ssub.s32 %s17, 1
      %p343 = scmp.lt.s32.totalorder %s22, 1
      %s344 = scalar_select %p343, %s22, 1
      %s345 = smul.addr %s344, 9
      %s346 = smul.addr %s345, 8
      %s347 = scalar_lea.vmem %s0, %s346
      %p348 = pneg %p43
      %p349 = pneg %p40
      %p350 = pneg %p64
      %p351 = pneg %p61
      %p352 = pneg %p85
      %p353 = pneg %p82
      %p354 = pneg %p106
      %p355 = pneg %p103
      %p356 = pneg %p127
      %p357 = pneg %p124
      %p358 = pneg %p148
      %p359 = pneg %p145
      %p360 = pneg %p169
      %p361 = pneg %p166
      %p362 = pneg %p190
      %p363 = pneg %p187
      %p364 = pneg %p211
      %p365 = pneg %p208
      %p366 = pneg %p232
      %p367 = pneg %p229
      %p368 = pneg %p253
      %p369 = pneg %p250
      %p370 = pneg %p279
      %p371 = pneg %p276
      %p372 = scmp.lt.s32.totalorder %s22, 1
      %s373 = scalar_select %p372, %s22, 1
      %s374 = smul.addr %s373, 3
      %s375 = smul.addr %s374, 8
      %s376 = scalar_lea.vmem %s11, %s375
      %p377 = scmp.lt.s32.totalorder %s22, 1
      %s378 = scalar_select %p377, %s22, 1
      %s379 = smul.addr %s378, 9
      %s380 = smul.addr %s379, 8
      %s381 = scalar_lea.vmem %s0, %s380
      %p382 = scmp.lt.s32.totalorder %s22, 1
      %s383 = scalar_select %p382, %s22, 1
      %s384 = smul.addr %s383, 3
      %s385 = smul.addr %s384, 8
      %s386 = scalar_lea.vmem %s11, %s385
      %v387 = vld [vmem:[%s381] sm:$0xff]
      %v388 = vld [vmem:[%s381 + $0x8] sm:$0xff]
      %v389 = vld [vmem:[%s381 + $0x10] sm:$0xff]
      %v390 = vld [vmem:[%s381 + $0x18] sm:$0xff]
      %v391 = vld [vmem:[%s381 + $0x20] sm:$0xff]
      %v392 = vld [vmem:[%s381 + $0x28] sm:$0xff]
      %v393 = vld [vmem:[%s381 + $0x30] sm:$0xff]
      %v394 = vld [vmem:[%s381 + $0x38] sm:$0xff]
      %v395 = vld [vmem:[%s381 + $0x40] sm:$0xff]
      %v396 = vld [vmem:[%s1] sm:$0xff]
      %v397 = vld [vmem:[%s1 + $0x8] sm:$0xff]
      %v398 = vld [vmem:[%s2] sm:$0xff]
      %v399 = vld [vmem:[%s2 + $0x8] sm:$0xff]
      %v400 = vld [vmem:[%s2 + $0x10] sm:$0xff]
      %v401 = vld [vmem:[%s2 + $0x18] sm:$0xff]
      %v402 = vld [vmem:[%s2 + $0x20] sm:$0xff]
      %v403 = vld [vmem:[%s2 + $0x28] sm:$0xff]
      %v404 = vld [vmem:[%s2 + $0x30] sm:$0xff]
      %v405 = vld [vmem:[%s2 + $0x38] sm:$0xff]
      %v406 = vld [vmem:[%s2 + $0x40] sm:$0xff]
      %vm407 = vcmask 130048
      %v409 = vsel %vm407, %v387, 0
      %v412 = vsel %vm407, %v388, 0
      %v415 = vsel %vm407, %v389, 0
      %v418 = vsel %vm407, %v390, 0
      %v421 = vsel %vm407, %v391, 0
      %v424 = vsel %vm407, %v392, 0
      %v427 = vsel %vm407, %v393, 0
      %v430 = vsel %vm407, %v394, 0
      %v433 = vsel %vm407, %v395, 0
      %435 = vmatprep.subr.mxu0 0.0
      %436 = vmatpush1.msra.mxu0 %v396
      %437 = vmatprep.subr.mxu0 0.0
      %438 = vmatpush1.msra.mxu0 %v397
      %439 = vmatprep.subr.mxu0 0.0
      %440 = vmatpush1.msra.mxu0 0.0
      %441 = vmatprep.subr.mxu0 0.0
      %442 = vmatpush1.msra.mxu0 0.0
      %443 = vmatprep.subr.mxu0 0.0
      %444 = vmatpush1.msra.mxu0 0.0
      %445 = vmatprep.subr.mxu0 0.0
      %446 = vmatpush1.msra.mxu0 0.0
      %447 = vmatprep.subr.mxu0 0.0
      %448 = vmatpush1.msra.mxu0 0.0
      %449 = vmatprep.subr.mxu0 0.0
      %450 = vmatpush1.msra.mxu0 0.0
      %451 = vmatprep.subr.mxu0 0.0
      %452 = vmatpush1.msra.mxu0 0.0
      %453 = vmatprep.subr.mxu0 0.0
      %454 = vmatpush1.msra.mxu0 0.0
      %455 = vmatprep.subr.mxu0 0.0
      %456 = vmatpush1.msra.mxu0 0.0
      %457 = vmatprep.subr.mxu0 0.0
      %458 = vmatpush1.msra.mxu0 0.0
      %459 = vmatprep.subr.mxu0 0.0
      %460 = vmatpush1.msra.mxu0 0.0
      %461 = vmatprep.subr.mxu0 0.0
      %462 = vmatpush1.msra.mxu0 0.0
      %463 = vmatprep.subr.mxu0 0.0
      %464 = vmatpush1.msra.mxu0 0.0
      %465 = vmatprep.subr.mxu0 0.0
      %466 = vmatpush1.msra.mxu0 0.0
      %467 = vmatprep.subr.mxu0 0.0
      %468 = vmatpush1.msra.mxu0 0.0
      %469 = vmatprep.subr.mxu0 0.0
      %470 = vmatpush1.msra.mxu0 0.0
      %471 = vmatprep.subr.mxu0 0.0
      %472 = vmatpush1.msra.mxu0 0.0
      %473 = vmatprep.subr.mxu0 0.0
      %474 = vmatpush1.msra.mxu0 0.0
      %475 = vmatprep.subr.mxu0 0.0
      %476 = vmatpush1.msra.mxu0 0.0
      %477 = vmatprep.subr.mxu0 0.0
      %478 = vmatpush1.msra.mxu0 0.0
      %479 = vmatprep.subr.mxu0 0.0
      %480 = vmatpush1.msra.mxu0 0.0
      %481 = vmatprep.subr.mxu0 0.0
      %482 = vmatpush1.msra.mxu0 0.0
      %483 = vmatprep.subr.mxu0 0.0
      %484 = vmatpush1.msra.mxu0 0.0
      %485 = vmatprep.subr.mxu0 0.0
      %486 = vmatpush1.msra.mxu0 0.0
      %487 = vmatprep.subr.mxu0 0.0
      %488 = vmatpush1.msra.mxu0 0.0
      %489 = vmatprep.subr.mxu0 0.0
      %490 = vmatpush1.msra.mxu0 0.0
      %491 = vmatprep.subr.mxu0 0.0
      %492 = vmatpush1.msra.mxu0 0.0
      %493 = vmatprep.subr.mxu0 0.0
      %494 = vmatpush1.msra.mxu0 0.0
      %495 = vmatprep.subr.mxu0 0.0
      %496 = vmatpush1.msra.mxu0 0.0
      %497 = vmatprep.subr.mxu0 0.0
      %498 = vmatpush1.msra.mxu0 0.0
      %499 = vmatprep.mubr.f32.mxu0 0.0
      %500 = vmatmul.mubr.f32.gmra.mrb[0].mxu0 %v409
      %v501 = vpop.f32.mrb[0].mxu0
      %v502 = vadd.f32 %v398, %v501
      %v503 = vpop.f32.mrb[0].mxu0
      %504 = vmatprep.mubr.f32.mxu0 0.0
      %505 = vmatmul.mubr.f32.gmra.mrb[0].mxu0 %v412
      %v506 = vpop.f32.mrb[0].mxu0
      %v507 = vadd.f32 %v399, %v506
      %v508 = vpop.f32.mrb[0].mxu0
      %509 = vmatprep.mubr.f32.mxu0 0.0
      %510 = vmatmul.mubr.f32.gmra.mrb[0].mxu0 %v415
      %v511 = vpop.f32.mrb[0].mxu0
      %v512 = vadd.f32 %v400, %v511
      %v513 = vpop.f32.mrb[0].mxu0
      %514 = vmatprep.mubr.f32.mxu0 0.0
      %515 = vmatmul.mubr.f32.gmra.mrb[0].mxu0 %v418
      %v516 = vpop.f32.mrb[0].mxu0
      %v517 = vadd.f32 %v401, %v516
      %v518 = vpop.f32.mrb[0].mxu0
      %519 = vmatprep.mubr.f32.mxu0 0.0
      %520 = vmatmul.mubr.f32.gmra.mrb[0].mxu0 %v421
      %v521 = vpop.f32.mrb[0].mxu0
      %v522 = vadd.f32 %v402, %v521
      %v523 = vpop.f32.mrb[0].mxu0
      %524 = vmatprep.mubr.f32.mxu0 0.0
      %525 = vmatmul.mubr.f32.gmra.mrb[0].mxu0 %v424
      %v526 = vpop.f32.mrb[0].mxu0
      %v527 = vadd.f32 %v403, %v526
      %v528 = vpop.f32.mrb[0].mxu0
      %529 = vmatprep.mubr.f32.mxu0 0.0
      %530 = vmatmul.mubr.f32.gmra.mrb[0].mxu0 %v427
      %v531 = vpop.f32.mrb[0].mxu0
      %v532 = vadd.f32 %v404, %v531
      %v533 = vpop.f32.mrb[0].mxu0
      %534 = vmatprep.mubr.f32.mxu0 0.0
      %535 = vmatmul.mubr.f32.gmra.mrb[0].mxu0 %v430
      %v536 = vpop.f32.mrb[0].mxu0
      %v537 = vadd.f32 %v405, %v536
      %v538 = vpop.f32.mrb[0].mxu0
      %539 = vmatprep.mubr.f32.mxu0 0.0
      %540 = vmatmul.mubr.f32.gmra.mrb[0].mxu0 %v433
      %v541 = vpop.f32.mrb[0].mxu0
      %v542 = vadd.f32 %v406, %v541
      %v543 = vpop.f32.mrb[0].mxu0
      %544 = vdwg.mxu0
      %v545 = vld [vmem:[%s3] sm:$0xff]
      %v546 = vld [vmem:[%s3 + $0x8] sm:$0xff]
      %v547 = vld [vmem:[%s3 + $0x10] sm:$0xff]
      %v548 = vld [vmem:[%s3 + $0x18] sm:$0xff]
      %v549 = vld [vmem:[%s3 + $0x20] sm:$0xff]
      %v550 = vld [vmem:[%s3 + $0x28] sm:$0xff]
      %v551 = vld [vmem:[%s3 + $0x30] sm:$0xff]
      %v552 = vld [vmem:[%s3 + $0x38] sm:$0xff]
      %v553 = vld [vmem:[%s3 + $0x40] sm:$0xff]
      %v554 = vld [vmem:[%s4] sm:$0xff]
      %vm555 = vcmask 261120
      %v556 = vsel %vm555, %v502, 0.0
      %557 = vadd.xlane.f32.xlu0 %v556
      %v558 = vpop.xlane.xlu0 %557
      %v559 = vsel %vm555, %v507, 0.0
      %560 = vadd.xlane.f32.xlu0 %v559
      %v561 = vpop.xlane.xlu0 %560
      %v562 = vsel %vm555, %v512, 0.0
      %563 = vadd.xlane.f32.xlu0 %v562
      %v564 = vpop.xlane.xlu0 %563
      %v565 = vsel %vm555, %v517, 0.0
      %566 = vadd.xlane.f32.xlu0 %v565
      %v567 = vpop.xlane.xlu0 %566
      %v568 = vsel %vm555, %v522, 0.0
      %569 = vadd.xlane.f32.xlu0 %v568
      %v570 = vpop.xlane.xlu0 %569
      %v571 = vsel %vm555, %v527, 0.0
      %572 = vadd.xlane.f32.xlu0 %v571
      %v573 = vpop.xlane.xlu0 %572
      %v574 = vsel %vm555, %v532, 0.0
      %575 = vadd.xlane.f32.xlu0 %v574
      %v576 = vpop.xlane.xlu0 %575
      %v577 = vsel %vm555, %v537, 0.0
      %578 = vadd.xlane.f32.xlu0 %v577
      %v579 = vpop.xlane.xlu0 %578
      %v580 = vsel %vm555, %v542, 0.0
      %581 = vadd.xlane.f32.xlu0 %v580
      %v582 = vpop.xlane.xlu0 %581
      %v583 = vrcp.pop 32.0
      %v584 = vmul.f32 %v558, %v583
      %v585 = vmul.f32 %v561, %v583
      %v586 = vmul.f32 %v564, %v583
      %v587 = vmul.f32 %v567, %v583
      %v588 = vmul.f32 %v570, %v583
      %v589 = vmul.f32 %v573, %v583
      %v590 = vmul.f32 %v576, %v583
      %v591 = vmul.f32 %v579, %v583
      %v592 = vmul.f32 %v582, %v583
      %v593 = vsub.f32 %v502, %v584
      %v594 = vsub.f32 %v507, %v585
      %v595 = vsub.f32 %v512, %v586
      %v596 = vsub.f32 %v517, %v587
      %v597 = vsub.f32 %v522, %v588
      %v598 = vsub.f32 %v527, %v589
      %v599 = vsub.f32 %v532, %v590
      %v600 = vsub.f32 %v537, %v591
      %v601 = vsub.f32 %v542, %v592
      %v602 = vmul.f32 %v593, %v593
      %v603 = vmul.f32 %v594, %v594
      %v604 = vmul.f32 %v595, %v595
      %v605 = vmul.f32 %v596, %v596
      %v606 = vmul.f32 %v597, %v597
      %v607 = vmul.f32 %v598, %v598
      %v608 = vmul.f32 %v599, %v599
      %v609 = vmul.f32 %v600, %v600
      %v610 = vmul.f32 %v601, %v601
      %v611 = vsel %vm555, %v602, 0.0
      %612 = vadd.xlane.f32.xlu0 %v611
      %v613 = vpop.xlane.xlu0 %612
      %v614 = vsel %vm555, %v603, 0.0
      %615 = vadd.xlane.f32.xlu0 %v614
      %v616 = vpop.xlane.xlu0 %615
      %v617 = vsel %vm555, %v604, 0.0
      %618 = vadd.xlane.f32.xlu0 %v617
      %v619 = vpop.xlane.xlu0 %618
      %v620 = vsel %vm555, %v605, 0.0
      %621 = vadd.xlane.f32.xlu0 %v620
      %v622 = vpop.xlane.xlu0 %621
      %v623 = vsel %vm555, %v606, 0.0
      %624 = vadd.xlane.f32.xlu0 %v623
      %v625 = vpop.xlane.xlu0 %624
      %v626 = vsel %vm555, %v607, 0.0
      %627 = vadd.xlane.f32.xlu0 %v626
      %v628 = vpop.xlane.xlu0 %627
      %v629 = vsel %vm555, %v608, 0.0
      %630 = vadd.xlane.f32.xlu0 %v629
      %v631 = vpop.xlane.xlu0 %630
      %v632 = vsel %vm555, %v609, 0.0
      %633 = vadd.xlane.f32.xlu0 %v632
      %v634 = vpop.xlane.xlu0 %633
      %v635 = vsel %vm555, %v610, 0.0
      %636 = vadd.xlane.f32.xlu0 %v635
      %v637 = vpop.xlane.xlu0 %636
      %v638 = vmul.f32 %v613, %v583
      %v639 = vmul.f32 %v616, %v583
      %v640 = vmul.f32 %v619, %v583
      %v641 = vmul.f32 %v622, %v583
      %v642 = vmul.f32 %v625, %v583
      %v643 = vmul.f32 %v628, %v583
      %v644 = vmul.f32 %v631, %v583
      %v645 = vmul.f32 %v634, %v583
      %v646 = vmul.f32 %v637, %v583
      %v647 = vadd.f32 %v638, 1e-05
      %v648 = vadd.f32 %v639, 1e-05
      %v649 = vadd.f32 %v640, 1e-05
      %v650 = vadd.f32 %v641, 1e-05
      %v651 = vadd.f32 %v642, 1e-05
      %v652 = vadd.f32 %v643, 1e-05
      %v653 = vadd.f32 %v644, 1e-05
      %v654 = vadd.f32 %v645, 1e-05
      %v655 = vadd.f32 %v646, 1e-05
      %v656 = vrsqrt.pop %v647
      %v657 = vrsqrt.pop %v648
      %v658 = vrsqrt.pop %v649
      %v659 = vrsqrt.pop %v650
      %v660 = vrsqrt.pop %v651
      %v661 = vrsqrt.pop %v652
      %v662 = vrsqrt.pop %v653
      %v663 = vrsqrt.pop %v654
      %v664 = vrsqrt.pop %v655
      %v665 = vmul.f32 %v593, %v656
      %v666 = vmul.f32 %v594, %v657
      %v667 = vmul.f32 %v595, %v658
      %v668 = vmul.f32 %v596, %v659
      %v669 = vmul.f32 %v597, %v660
      %v670 = vmul.f32 %v598, %v661
      %v671 = vmul.f32 %v599, %v662
      %v672 = vmul.f32 %v600, %v663
      %v673 = vmul.f32 %v601, %v664
      %v674 = vlaneseq
      %v675 = vshrl.u32 %v674, 7
      %v676 = vsub.s32 0, %v675
      %v677 = vrot.slane %v554, %v676
      %v678 = vmul.f32 %v665, %v677
      %v679 = vmul.f32 %v666, %v677
      %v680 = vmul.f32 %v667, %v677
      %v681 = vmul.f32 %v668, %v677
      %v682 = vmul.f32 %v669, %v677
      %v683 = vmul.f32 %v670, %v677
      %v684 = vmul.f32 %v671, %v677
      %v685 = vmul.f32 %v672, %v677
      %v686 = vmul.f32 %v673, %v677
      %v687 = vlaneseq
      %v688 = vshrl.u32 %v687, 7
      %v689 = vsub.s32 1, %v688
      %v690 = vrot.slane %v554, %v689
      %v691 = vadd.f32 %v678, %v690
      %v692 = vadd.f32 %v679, %v690
      %v693 = vadd.f32 %v680, %v690
      %v694 = vadd.f32 %v681, %v690
      %v695 = vadd.f32 %v682, %v690
      %v696 = vadd.f32 %v683, %v690
      %v697 = vadd.f32 %v684, %v690
      %v698 = vadd.f32 %v685, %v690
      %v699 = vadd.f32 %v686, %v690
      %v700 = vld [vmem:[%s5] sm:$0xff]
      %v701 = vld [vmem:[%s5 + $0x8] sm:$0xff]
      %v702 = vld [vmem:[%s5 + $0x10] sm:$0xff]
      %v703 = vld [vmem:[%s5 + $0x18] sm:$0xff]
      %v704 = vlaneseq
      %v705 = vshrl.u32 %v704, 7
      %v706 = vsub.s32 2, %v705
      %v707 = vrot.slane %v554, %v706
      %v709 = vsel %vm555, %v691, 0
      %v712 = vsel %vm555, %v692, 0
      %v715 = vsel %vm555, %v693, 0
      %v718 = vsel %vm555, %v694, 0
      %v721 = vsel %vm555, %v695, 0
      %v724 = vsel %vm555, %v696, 0
      %v727 = vsel %vm555, %v697, 0
      %v730 = vsel %vm555, %v698, 0
      %v733 = vsel %vm555, %v699, 0
      %735 = vmatprep.subr.mxu0 0.0
      %736 = vmatpush1.msra.mxu0 %v700
      %737 = vmatprep.subr.mxu0 0.0
      %738 = vmatpush1.msra.mxu0 %v701
      %739 = vmatprep.subr.mxu0 0.0
      %740 = vmatpush1.msra.mxu0 %v702
      %741 = vmatprep.subr.mxu0 0.0
      %742 = vmatpush1.msra.mxu0 %v703
      %743 = vmatprep.subr.mxu0 0.0
      %744 = vmatpush1.msra.mxu0 0.0
      %745 = vmatprep.subr.mxu0 0.0
      %746 = vmatpush1.msra.mxu0 0.0
      %747 = vmatprep.subr.mxu0 0.0
      %748 = vmatpush1.msra.mxu0 0.0
      %749 = vmatprep.subr.mxu0 0.0
      %750 = vmatpush1.msra.mxu0 0.0
      %751 = vmatprep.subr.mxu0 0.0
      %752 = vmatpush1.msra.mxu0 0.0
      %753 = vmatprep.subr.mxu0 0.0
      %754 = vmatpush1.msra.mxu0 0.0
      %755 = vmatprep.subr.mxu0 0.0
      %756 = vmatpush1.msra.mxu0 0.0
      %757 = vmatprep.subr.mxu0 0.0
      %758 = vmatpush1.msra.mxu0 0.0
      %759 = vmatprep.subr.mxu0 0.0
      %760 = vmatpush1.msra.mxu0 0.0
      %761 = vmatprep.subr.mxu0 0.0
      %762 = vmatpush1.msra.mxu0 0.0
      %763 = vmatprep.subr.mxu0 0.0
      %764 = vmatpush1.msra.mxu0 0.0
      %765 = vmatprep.subr.mxu0 0.0
      %766 = vmatpush1.msra.mxu0 0.0
      %767 = vmatprep.subr.mxu0 0.0
      %768 = vmatpush1.msra.mxu0 0.0
      %769 = vmatprep.subr.mxu0 0.0
      %770 = vmatpush1.msra.mxu0 0.0
      %771 = vmatprep.subr.mxu0 0.0
      %772 = vmatpush1.msra.mxu0 0.0
      %773 = vmatprep.subr.mxu0 0.0
      %774 = vmatpush1.msra.mxu0 0.0
      %775 = vmatprep.subr.mxu0 0.0
      %776 = vmatpush1.msra.mxu0 0.0
      %777 = vmatprep.subr.mxu0 0.0
      %778 = vmatpush1.msra.mxu0 0.0
      %779 = vmatprep.subr.mxu0 0.0
      %780 = vmatpush1.msra.mxu0 0.0
      %781 = vmatprep.subr.mxu0 0.0
      %782 = vmatpush1.msra.mxu0 0.0
      %783 = vmatprep.subr.mxu0 0.0
      %784 = vmatpush1.msra.mxu0 0.0
      %785 = vmatprep.subr.mxu0 0.0
      %786 = vmatpush1.msra.mxu0 0.0
      %787 = vmatprep.subr.mxu0 0.0
      %788 = vmatpush1.msra.mxu0 0.0
      %789 = vmatprep.subr.mxu0 0.0
      %790 = vmatpush1.msra.mxu0 0.0
      %791 = vmatprep.subr.mxu0 0.0
      %792 = vmatpush1.msra.mxu0 0.0
      %793 = vmatprep.subr.mxu0 0.0
      %794 = vmatpush1.msra.mxu0 0.0
      %795 = vmatprep.subr.mxu0 0.0
      %796 = vmatpush1.msra.mxu0 0.0
      %797 = vmatprep.subr.mxu0 0.0
      %798 = vmatpush1.msra.mxu0 0.0
      %799 = vmatprep.mubr.f32.mxu0 0.0
      %800 = vmatmul.mubr.f32.gmra.mrb[0].mxu0 %v709
      %v801 = vpop.f32.mrb[0].mxu0
      %v802 = vadd.f32 %v707, %v801
      %v803 = vpop.f32.mrb[0].mxu0
      %804 = vmatprep.mubr.f32.mxu0 0.0
      %805 = vmatmul.mubr.f32.gmra.mrb[0].mxu0 %v712
      %v806 = vpop.f32.mrb[0].mxu0
      %v807 = vadd.f32 %v707, %v806
      %v808 = vpop.f32.mrb[0].mxu0
      %809 = vmatprep.mubr.f32.mxu0 0.0
      %810 = vmatmul.mubr.f32.gmra.mrb[0].mxu0 %v715
      %v811 = vpop.f32.mrb[0].mxu0
      %v812 = vadd.f32 %v707, %v811
      %v813 = vpop.f32.mrb[0].mxu0
      %814 = vmatprep.mubr.f32.mxu0 0.0
      %815 = vmatmul.mubr.f32.gmra.mrb[0].mxu0 %v718
      %v816 = vpop.f32.mrb[0].mxu0
      %v817 = vadd.f32 %v707, %v816
      %v818 = vpop.f32.mrb[0].mxu0
      %819 = vmatprep.mubr.f32.mxu0 0.0
      %820 = vmatmul.mubr.f32.gmra.mrb[0].mxu0 %v721
      %v821 = vpop.f32.mrb[0].mxu0
      %v822 = vadd.f32 %v707, %v821
      %v823 = vpop.f32.mrb[0].mxu0
      %824 = vmatprep.mubr.f32.mxu0 0.0
      %825 = vmatmul.mubr.f32.gmra.mrb[0].mxu0 %v724
      %v826 = vpop.f32.mrb[0].mxu0
      %v827 = vadd.f32 %v707, %v826
      %v828 = vpop.f32.mrb[0].mxu0
      %829 = vmatprep.mubr.f32.mxu0 0.0
      %830 = vmatmul.mubr.f32.gmra.mrb[0].mxu0 %v727
      %v831 = vpop.f32.mrb[0].mxu0
      %v832 = vadd.f32 %v707, %v831
      %v833 = vpop.f32.mrb[0].mxu0
      %834 = vmatprep.mubr.f32.mxu0 0.0
      %835 = vmatmul.mubr.f32.gmra.mrb[0].mxu0 %v730
      %v836 = vpop.f32.mrb[0].mxu0
      %v837 = vadd.f32 %v707, %v836
      %v838 = vpop.f32.mrb[0].mxu0
      %839 = vmatprep.mubr.f32.mxu0 0.0
      %840 = vmatmul.mubr.f32.gmra.mrb[0].mxu0 %v733
      %v841 = vpop.f32.mrb[0].mxu0
      %v842 = vadd.f32 %v707, %v841
      %v843 = vpop.f32.mrb[0].mxu0
      %844 = vdwg.mxu0
      %854 = vrot.lane.b32.xlu0 %v802, 96
      %v855 = vpop.permute.xlu0 %854
      %856 = vrot.lane.b32.xlu0 %v807, 96
      %v857 = vpop.permute.xlu0 %856
      %858 = vrot.lane.b32.xlu0 %v812, 96
      %v859 = vpop.permute.xlu0 %858
      %860 = vrot.lane.b32.xlu0 %v817, 96
      %v861 = vpop.permute.xlu0 %860
      %862 = vrot.lane.b32.xlu0 %v822, 96
      %v863 = vpop.permute.xlu0 %862
      %864 = vrot.lane.b32.xlu0 %v827, 96
      %v865 = vpop.permute.xlu0 %864
      %866 = vrot.lane.b32.xlu0 %v832, 96
      %v867 = vpop.permute.xlu0 %866
      %868 = vrot.lane.b32.xlu0 %v837, 96
      %v869 = vpop.permute.xlu0 %868
      %870 = vrot.lane.b32.xlu0 %v842, 96
      %v871 = vpop.permute.xlu0 %870
      %vm872 = vcmask 64512
      %v873 = vsel %vm872, %v802, 0
      %v875 = vsel %vm872, %v807, 0
      %v877 = vsel %vm872, %v812, 0
      %v879 = vsel %vm872, %v817, 0
      %v881 = vsel %vm872, %v822, 0
      %v883 = vsel %vm872, %v827, 0
      %v885 = vsel %vm872, %v832, 0
      %v887 = vsel %vm872, %v837, 0
      %v889 = vsel %vm872, %v842, 0
      %v891 = vsel %vm872, %v855, 0
      %v893 = vsel %vm872, %v857, 0
      %v895 = vsel %vm872, %v859, 0
      %v897 = vsel %vm872, %v861, 0
      %v899 = vsel %vm872, %v863, 0
      %v901 = vsel %vm872, %v865, 0
      %v903 = vsel %vm872, %v867, 0
      %v905 = vsel %vm872, %v869, 0
      %v907 = vsel %vm872, %v871, 0
      %909 = vmatprep.subr.mxu0 0.0
      %910 = vmatpush1.xpose.msra.mxu0 %v891
      %911 = vmatprep.subr.mxu0 0.0
      %912 = vmatpush1.xpose.msra.mxu0 %v893
      %913 = vmatprep.subr.mxu0 0.0
      %914 = vmatpush1.xpose.msra.mxu0 %v895
      %915 = vmatprep.subr.mxu0 0.0
      %916 = vmatpush1.xpose.msra.mxu0 %v897
      %917 = vmatprep.subr.mxu0 0.0
      %918 = vmatpush1.xpose.msra.mxu0 %v899
      %919 = vmatprep.subr.mxu0 0.0
      %920 = vmatpush1.xpose.msra.mxu0 %v901
      %921 = vmatprep.subr.mxu0 0.0
      %922 = vmatpush1.xpose.msra.mxu0 %v903
      %923 = vmatprep.subr.mxu0 0.0
      %924 = vmatpush1.xpose.msra.mxu0 %v905
      %925 = vmatprep.subr.mxu0 0.0
      %926 = vmatpush1.xpose.msra.mxu0 %v907
      %927 = vmatprep.subr.mxu0 0.0
      %928 = vmatpush1.xpose.msra.mxu0 0.0
      %929 = vmatprep.subr.mxu0 0.0
      %930 = vmatpush1.xpose.msra.mxu0 0.0
      %931 = vmatprep.subr.mxu0 0.0
      %932 = vmatpush1.xpose.msra.mxu0 0.0
      %933 = vmatprep.subr.mxu0 0.0
      %934 = vmatpush1.xpose.msra.mxu0 0.0
      %935 = vmatprep.subr.mxu0 0.0
      %936 = vmatpush1.xpose.msra.mxu0 0.0
      %937 = vmatprep.subr.mxu0 0.0
      %938 = vmatpush1.xpose.msra.mxu0 0.0
      %939 = vmatprep.subr.mxu0 0.0
      %940 = vmatpush1.xpose.msra.mxu0 0.0
      %941 = vmatprep.subr.mxu0 0.0
      %942 = vmatpush1.xpose.msra.mxu0 0.0
      %943 = vmatprep.subr.mxu0 0.0
      %944 = vmatpush1.xpose.msra.mxu0 0.0
      %945 = vmatprep.subr.mxu0 0.0
      %946 = vmatpush1.xpose.msra.mxu0 0.0
      %947 = vmatprep.subr.mxu0 0.0
      %948 = vmatpush1.xpose.msra.mxu0 0.0
      %949 = vmatprep.subr.mxu0 0.0
      %950 = vmatpush1.xpose.msra.mxu0 0.0
      %951 = vmatprep.subr.mxu0 0.0
      %952 = vmatpush1.xpose.msra.mxu0 0.0
      %953 = vmatprep.subr.mxu0 0.0
      %954 = vmatpush1.xpose.msra.mxu0 0.0
      %955 = vmatprep.subr.mxu0 0.0
      %956 = vmatpush1.xpose.msra.mxu0 0.0
      %957 = vmatprep.subr.mxu0 0.0
      %958 = vmatpush1.xpose.msra.mxu0 0.0
      %959 = vmatprep.subr.mxu0 0.0
      %960 = vmatpush1.xpose.msra.mxu0 0.0
      %961 = vmatprep.subr.mxu0 0.0
      %962 = vmatpush1.xpose.msra.mxu0 0.0
      %963 = vmatprep.subr.mxu0 0.0
      %964 = vmatpush1.xpose.msra.mxu0 0.0
      %965 = vmatprep.subr.mxu0 0.0
      %966 = vmatpush1.xpose.msra.mxu0 0.0
      %967 = vmatprep.subr.mxu0 0.0
      %968 = vmatpush1.xpose.msra.mxu0 0.0
      %969 = vmatprep.subr.mxu0 0.0
      %970 = vmatpush1.xpose.msra.mxu0 0.0
      %971 = vmatprep.subr.mxu0 0.0
      %972 = vmatpush1.xpose.msra.mxu0 0.0
      %973 = vmatprep.mubr.f32.mxu0 0.0
      %974 = vmatmul.mubr.f32.gmra.mrb[0].mxu0 %v873
      %v975 = vpop.f32.mrb[0].mxu0
      %v976 = vadd.f32 %v545, %v975
      %v977 = vpop.f32.mrb[0].mxu0
      %978 = vmatprep.mubr.f32.mxu0 0.0
      %979 = vmatmul.mubr.f32.gmra.mrb[0].mxu0 %v875
      %v980 = vpop.f32.mrb[0].mxu0
      %v981 = vadd.f32 %v546, %v980
      %v982 = vpop.f32.mrb[0].mxu0
      %983 = vmatprep.mubr.f32.mxu0 0.0
      %984 = vmatmul.mubr.f32.gmra.mrb[0].mxu0 %v877
      %v985 = vpop.f32.mrb[0].mxu0
      %v986 = vadd.f32 %v547, %v985
      %v987 = vpop.f32.mrb[0].mxu0
      %988 = vmatprep.mubr.f32.mxu0 0.0
      %989 = vmatmul.mubr.f32.gmra.mrb[0].mxu0 %v879
      %v990 = vpop.f32.mrb[0].mxu0
      %v991 = vadd.f32 %v548, %v990
      %v992 = vpop.f32.mrb[0].mxu0
      %993 = vmatprep.mubr.f32.mxu0 0.0
      %994 = vmatmul.mubr.f32.gmra.mrb[0].mxu0 %v881
      %v995 = vpop.f32.mrb[0].mxu0
      %v996 = vadd.f32 %v549, %v995
      %v997 = vpop.f32.mrb[0].mxu0
      %998 = vmatprep.mubr.f32.mxu0 0.0
      %999 = vmatmul.mubr.f32.gmra.mrb[0].mxu0 %v883
      %v1000 = vpop.f32.mrb[0].mxu0
      %v1001 = vadd.f32 %v550, %v1000
      %v1002 = vpop.f32.mrb[0].mxu0
      %1003 = vmatprep.mubr.f32.mxu0 0.0
      %1004 = vmatmul.mubr.f32.gmra.mrb[0].mxu0 %v885
      %v1005 = vpop.f32.mrb[0].mxu0
      %v1006 = vadd.f32 %v551, %v1005
      %v1007 = vpop.f32.mrb[0].mxu0
      %1008 = vmatprep.mubr.f32.mxu0 0.0
      %1009 = vmatmul.mubr.f32.gmra.mrb[0].mxu0 %v887
      %v1010 = vpop.f32.mrb[0].mxu0
      %v1011 = vadd.f32 %v552, %v1010
      %v1012 = vpop.f32.mrb[0].mxu0
      %1013 = vmatprep.mubr.f32.mxu0 0.0
      %1014 = vmatmul.mubr.f32.gmra.mrb[0].mxu0 %v889
      %v1015 = vpop.f32.mrb[0].mxu0
      %v1016 = vadd.f32 %v553, %v1015
      %v1017 = vpop.f32.mrb[0].mxu0
      %1018 = vdwg.mxu0
      %vm1019 = vcmask 588800
      %v1020 = vsel %vm1019, %v976, -inf
      %1021 = vmax.xlane.f32.xlu0 %v1020
      %v1022 = vpop.xlane.xlu0 %1021
      %v1023 = vsel %vm1019, %v981, -inf
      %1024 = vmax.xlane.f32.xlu0 %v1023
      %v1025 = vpop.xlane.xlu0 %1024
      %v1026 = vsel %vm1019, %v986, -inf
      %1027 = vmax.xlane.f32.xlu0 %v1026
      %v1028 = vpop.xlane.xlu0 %1027
      %v1029 = vsel %vm1019, %v991, -inf
      %1030 = vmax.xlane.f32.xlu0 %v1029
      %v1031 = vpop.xlane.xlu0 %1030
      %v1032 = vsel %vm1019, %v996, -inf
      %1033 = vmax.xlane.f32.xlu0 %v1032
      %v1034 = vpop.xlane.xlu0 %1033
      %v1035 = vsel %vm1019, %v1001, -inf
      %1036 = vmax.xlane.f32.xlu0 %v1035
      %v1037 = vpop.xlane.xlu0 %1036
      %v1038 = vsel %vm1019, %v1006, -inf
      %1039 = vmax.xlane.f32.xlu0 %v1038
      %v1040 = vpop.xlane.xlu0 %1039
      %v1041 = vsel %vm1019, %v1011, -inf
      %1042 = vmax.xlane.f32.xlu0 %v1041
      %v1043 = vpop.xlane.xlu0 %1042
      %v1044 = vsel %vm1019, %v1016, -inf
      %1045 = vmax.xlane.f32.xlu0 %v1044
      %v1046 = vpop.xlane.xlu0 %1045
      %v1047 = vsub.f32 %v976, %v1022
      %v1048 = vsub.f32 %v981, %v1025
      %v1049 = vsub.f32 %v986, %v1028
      %v1050 = vsub.f32 %v991, %v1031
      %v1051 = vsub.f32 %v996, %v1034
      %v1052 = vsub.f32 %v1001, %v1037
      %v1053 = vsub.f32 %v1006, %v1040
      %v1054 = vsub.f32 %v1011, %v1043
      %v1055 = vsub.f32 %v1016, %v1046
      %v1056 = vmul.f32 %v1047, 1.442695
      %v1057 = vpow.pop %v1056
      %v1058 = vmul.f32 %v1048, 1.442695
      %v1059 = vpow.pop %v1058
      %v1060 = vmul.f32 %v1049, 1.442695
      %v1061 = vpow.pop %v1060
      %v1062 = vmul.f32 %v1050, 1.442695
      %v1063 = vpow.pop %v1062
      %v1064 = vmul.f32 %v1051, 1.442695
      %v1065 = vpow.pop %v1064
      %v1066 = vmul.f32 %v1052, 1.442695
      %v1067 = vpow.pop %v1066
      %v1068 = vmul.f32 %v1053, 1.442695
      %v1069 = vpow.pop %v1068
      %v1070 = vmul.f32 %v1054, 1.442695
      %v1071 = vpow.pop %v1070
      %v1072 = vmul.f32 %v1055, 1.442695
      %v1073 = vpow.pop %v1072
      %v1074 = vsel %vm1019, %v1057, 0.0
      %1075 = vadd.xlane.f32.xlu0 %v1074
      %v1076 = vpop.xlane.xlu0 %1075
      %v1077 = vsel %vm1019, %v1059, 0.0
      %1078 = vadd.xlane.f32.xlu0 %v1077
      %v1079 = vpop.xlane.xlu0 %1078
      %v1080 = vsel %vm1019, %v1061, 0.0
      %1081 = vadd.xlane.f32.xlu0 %v1080
      %v1082 = vpop.xlane.xlu0 %1081
      %v1083 = vsel %vm1019, %v1063, 0.0
      %1084 = vadd.xlane.f32.xlu0 %v1083
      %v1085 = vpop.xlane.xlu0 %1084
      %v1086 = vsel %vm1019, %v1065, 0.0
      %1087 = vadd.xlane.f32.xlu0 %v1086
      %v1088 = vpop.xlane.xlu0 %1087
      %v1089 = vsel %vm1019, %v1067, 0.0
      %1090 = vadd.xlane.f32.xlu0 %v1089
      %v1091 = vpop.xlane.xlu0 %1090
      %v1092 = vsel %vm1019, %v1069, 0.0
      %1093 = vadd.xlane.f32.xlu0 %v1092
      %v1094 = vpop.xlane.xlu0 %1093
      %v1095 = vsel %vm1019, %v1071, 0.0
      %1096 = vadd.xlane.f32.xlu0 %v1095
      %v1097 = vpop.xlane.xlu0 %1096
      %v1098 = vsel %vm1019, %v1073, 0.0
      %1099 = vadd.xlane.f32.xlu0 %v1098
      %v1100 = vpop.xlane.xlu0 %1099
      %v1101 = vrcp.pop %v1076
      %v1102 = vrcp.pop %v1079
      %v1103 = vrcp.pop %v1082
      %v1104 = vrcp.pop %v1085
      %v1105 = vrcp.pop %v1088
      %v1106 = vrcp.pop %v1091
      %v1107 = vrcp.pop %v1094
      %v1108 = vrcp.pop %v1097
      %v1109 = vrcp.pop %v1100
      %v1110 = vmul.f32 %v1057, %v1101
      %v1111 = vmul.f32 %v1059, %v1102
      %v1112 = vmul.f32 %v1061, %v1103
      %v1113 = vmul.f32 %v1063, %v1104
      %v1114 = vmul.f32 %v1065, %v1105
      %v1115 = vmul.f32 %v1067, %v1106
      %v1116 = vmul.f32 %v1069, %v1107
      %v1117 = vmul.f32 %v1071, %v1108
      %v1118 = vmul.f32 %v1073, %v1109
      %1119 = vrot.lane.b32.xlu0 %v802, 64
      %v1120 = vpop.permute.xlu0 %1119
      %1121 = vrot.lane.b32.xlu0 %v807, 64
      %v1122 = vpop.permute.xlu0 %1121
      %1123 = vrot.lane.b32.xlu0 %v812, 64
      %v1124 = vpop.permute.xlu0 %1123
      %1125 = vrot.lane.b32.xlu0 %v817, 64
      %v1126 = vpop.permute.xlu0 %1125
      %1127 = vrot.lane.b32.xlu0 %v822, 64
      %v1128 = vpop.permute.xlu0 %1127
      %1129 = vrot.lane.b32.xlu0 %v827, 64
      %v1130 = vpop.permute.xlu0 %1129
      %1131 = vrot.lane.b32.xlu0 %v832, 64
      %v1132 = vpop.permute.xlu0 %1131
      %1133 = vrot.lane.b32.xlu0 %v837, 64
      %v1134 = vpop.permute.xlu0 %1133
      %1135 = vrot.lane.b32.xlu0 %v842, 64
      %v1136 = vpop.permute.xlu0 %1135
      %v1147 = vsel %vm1019, %v1110, 0
      %v1150 = vsel %vm1019, %v1111, 0
      %v1153 = vsel %vm1019, %v1112, 0
      %v1156 = vsel %vm1019, %v1113, 0
      %v1159 = vsel %vm1019, %v1114, 0
      %v1162 = vsel %vm1019, %v1115, 0
      %v1165 = vsel %vm1019, %v1116, 0
      %v1168 = vsel %vm1019, %v1117, 0
      %v1171 = vsel %vm1019, %v1118, 0
      %1173 = vmatprep.subr.mxu0 0.0
      %1174 = vmatpush1.msra.mxu0 %v1120
      %1175 = vmatprep.subr.mxu0 0.0
      %1176 = vmatpush1.msra.mxu0 %v1122
      %1177 = vmatprep.subr.mxu0 0.0
      %1178 = vmatpush1.msra.mxu0 %v1124
      %1179 = vmatprep.subr.mxu0 0.0
      %1180 = vmatpush1.msra.mxu0 %v1126
      %1181 = vmatprep.subr.mxu0 0.0
      %1182 = vmatpush1.msra.mxu0 %v1128
      %1183 = vmatprep.subr.mxu0 0.0
      %1184 = vmatpush1.msra.mxu0 %v1130
      %1185 = vmatprep.subr.mxu0 0.0
      %1186 = vmatpush1.msra.mxu0 %v1132
      %1187 = vmatprep.subr.mxu0 0.0
      %1188 = vmatpush1.msra.mxu0 %v1134
      %1189 = vmatprep.subr.mxu0 0.0
      %1190 = vmatpush1.msra.mxu0 %v1136
      %1191 = vmatprep.subr.mxu0 0.0
      %1192 = vmatpush1.msra.mxu0 0.0
      %1193 = vmatprep.subr.mxu0 0.0
      %1194 = vmatpush1.msra.mxu0 0.0
      %1195 = vmatprep.subr.mxu0 0.0
      %1196 = vmatpush1.msra.mxu0 0.0
      %1197 = vmatprep.subr.mxu0 0.0
      %1198 = vmatpush1.msra.mxu0 0.0
      %1199 = vmatprep.subr.mxu0 0.0
      %1200 = vmatpush1.msra.mxu0 0.0
      %1201 = vmatprep.subr.mxu0 0.0
      %1202 = vmatpush1.msra.mxu0 0.0
      %1203 = vmatprep.subr.mxu0 0.0
      %1204 = vmatpush1.msra.mxu0 0.0
      %1205 = vmatprep.subr.mxu0 0.0
      %1206 = vmatpush1.msra.mxu0 0.0
      %1207 = vmatprep.subr.mxu0 0.0
      %1208 = vmatpush1.msra.mxu0 0.0
      %1209 = vmatprep.subr.mxu0 0.0
      %1210 = vmatpush1.msra.mxu0 0.0
      %1211 = vmatprep.subr.mxu0 0.0
      %1212 = vmatpush1.msra.mxu0 0.0
      %1213 = vmatprep.subr.mxu0 0.0
      %1214 = vmatpush1.msra.mxu0 0.0
      %1215 = vmatprep.subr.mxu0 0.0
      %1216 = vmatpush1.msra.mxu0 0.0
      %1217 = vmatprep.subr.mxu0 0.0
      %1218 = vmatpush1.msra.mxu0 0.0
      %1219 = vmatprep.subr.mxu0 0.0
      %1220 = vmatpush1.msra.mxu0 0.0
      %1221 = vmatprep.subr.mxu0 0.0
      %1222 = vmatpush1.msra.mxu0 0.0
      %1223 = vmatprep.subr.mxu0 0.0
      %1224 = vmatpush1.msra.mxu0 0.0
      %1225 = vmatprep.subr.mxu0 0.0
      %1226 = vmatpush1.msra.mxu0 0.0
      %1227 = vmatprep.subr.mxu0 0.0
      %1228 = vmatpush1.msra.mxu0 0.0
      %1229 = vmatprep.subr.mxu0 0.0
      %1230 = vmatpush1.msra.mxu0 0.0
      %1231 = vmatprep.subr.mxu0 0.0
      %1232 = vmatpush1.msra.mxu0 0.0
      %1233 = vmatprep.subr.mxu0 0.0
      %1234 = vmatpush1.msra.mxu0 0.0
      %1235 = vmatprep.subr.mxu0 0.0
      %1236 = vmatpush1.msra.mxu0 0.0
      %1237 = vmatprep.mubr.f32.mxu0 0.0
      %1238 = vmatmul.mubr.f32.gmra.mrb[0].mxu0 %v1147
      %v1239 = vpop.f32.mrb[0].mxu0
      %v1240 = vadd.f32 0.0, %v1239
      %v1241 = vpop.f32.mrb[0].mxu0
      %1242 = vmatprep.mubr.f32.mxu0 0.0
      %1243 = vmatmul.mubr.f32.gmra.mrb[0].mxu0 %v1150
      %v1244 = vpop.f32.mrb[0].mxu0
      %v1245 = vadd.f32 0.0, %v1244
      %v1246 = vpop.f32.mrb[0].mxu0
      %1247 = vmatprep.mubr.f32.mxu0 0.0
      %1248 = vmatmul.mubr.f32.gmra.mrb[0].mxu0 %v1153
      %v1249 = vpop.f32.mrb[0].mxu0
      %v1250 = vadd.f32 0.0, %v1249
      %v1251 = vpop.f32.mrb[0].mxu0
      %1252 = vmatprep.mubr.f32.mxu0 0.0
      %1253 = vmatmul.mubr.f32.gmra.mrb[0].mxu0 %v1156
      %v1254 = vpop.f32.mrb[0].mxu0
      %v1255 = vadd.f32 0.0, %v1254
      %v1256 = vpop.f32.mrb[0].mxu0
      %1257 = vmatprep.mubr.f32.mxu0 0.0
      %1258 = vmatmul.mubr.f32.gmra.mrb[0].mxu0 %v1159
      %v1259 = vpop.f32.mrb[0].mxu0
      %v1260 = vadd.f32 0.0, %v1259
      %v1261 = vpop.f32.mrb[0].mxu0
      %1262 = vmatprep.mubr.f32.mxu0 0.0
      %1263 = vmatmul.mubr.f32.gmra.mrb[0].mxu0 %v1162
      %v1264 = vpop.f32.mrb[0].mxu0
      %v1265 = vadd.f32 0.0, %v1264
      %v1266 = vpop.f32.mrb[0].mxu0
      %1267 = vmatprep.mubr.f32.mxu0 0.0
      %1268 = vmatmul.mubr.f32.gmra.mrb[0].mxu0 %v1165
      %v1269 = vpop.f32.mrb[0].mxu0
      %v1270 = vadd.f32 0.0, %v1269
      %v1271 = vpop.f32.mrb[0].mxu0
      %1272 = vmatprep.mubr.f32.mxu0 0.0
      %1273 = vmatmul.mubr.f32.gmra.mrb[0].mxu0 %v1168
      %v1274 = vpop.f32.mrb[0].mxu0
      %v1275 = vadd.f32 0.0, %v1274
      %v1276 = vpop.f32.mrb[0].mxu0
      %1277 = vmatprep.mubr.f32.mxu0 0.0
      %1278 = vmatmul.mubr.f32.gmra.mrb[0].mxu0 %v1171
      %v1279 = vpop.f32.mrb[0].mxu0
      %v1280 = vadd.f32 0.0, %v1279
      %v1281 = vpop.f32.mrb[0].mxu0
      %1282 = vdwg.mxu0
      %1283 = vrot.lane.b32.xlu0 %v802, 120
      %v1284 = vpop.permute.xlu0 %1283
      %1285 = vrot.lane.b32.xlu0 %v807, 120
      %v1286 = vpop.permute.xlu0 %1285
      %1287 = vrot.lane.b32.xlu0 %v812, 120
      %v1288 = vpop.permute.xlu0 %1287
      %1289 = vrot.lane.b32.xlu0 %v817, 120
      %v1290 = vpop.permute.xlu0 %1289
      %1291 = vrot.lane.b32.xlu0 %v822, 120
      %v1292 = vpop.permute.xlu0 %1291
      %1293 = vrot.lane.b32.xlu0 %v827, 120
      %v1294 = vpop.permute.xlu0 %1293
      %1295 = vrot.lane.b32.xlu0 %v832, 120
      %v1296 = vpop.permute.xlu0 %1295
      %1297 = vrot.lane.b32.xlu0 %v837, 120
      %v1298 = vpop.permute.xlu0 %1297
      %1299 = vrot.lane.b32.xlu0 %v842, 120
      %v1300 = vpop.permute.xlu0 %1299
      %1301 = vrot.lane.b32.xlu0 %v802, 88
      %v1302 = vpop.permute.xlu0 %1301
      %1303 = vrot.lane.b32.xlu0 %v807, 88
      %v1304 = vpop.permute.xlu0 %1303
      %1305 = vrot.lane.b32.xlu0 %v812, 88
      %v1306 = vpop.permute.xlu0 %1305
      %1307 = vrot.lane.b32.xlu0 %v817, 88
      %v1308 = vpop.permute.xlu0 %1307
      %1309 = vrot.lane.b32.xlu0 %v822, 88
      %v1310 = vpop.permute.xlu0 %1309
      %1311 = vrot.lane.b32.xlu0 %v827, 88
      %v1312 = vpop.permute.xlu0 %1311
      %1313 = vrot.lane.b32.xlu0 %v832, 88
      %v1314 = vpop.permute.xlu0 %1313
      %1315 = vrot.lane.b32.xlu0 %v837, 88
      %v1316 = vpop.permute.xlu0 %1315
      %1317 = vrot.lane.b32.xlu0 %v842, 88
      %v1318 = vpop.permute.xlu0 %1317
      %v1319 = vsel %vm872, %v1284, 0
      %v1321 = vsel %vm872, %v1286, 0
      %v1323 = vsel %vm872, %v1288, 0
      %v1325 = vsel %vm872, %v1290, 0
      %v1327 = vsel %vm872, %v1292, 0
      %v1329 = vsel %vm872, %v1294, 0
      %v1331 = vsel %vm872, %v1296, 0
      %v1333 = vsel %vm872, %v1298, 0
      %v1335 = vsel %vm872, %v1300, 0
      %v1337 = vsel %vm872, %v1302, 0
      %v1339 = vsel %vm872, %v1304, 0
      %v1341 = vsel %vm872, %v1306, 0
      %v1343 = vsel %vm872, %v1308, 0
      %v1345 = vsel %vm872, %v1310, 0
      %v1347 = vsel %vm872, %v1312, 0
      %v1349 = vsel %vm872, %v1314, 0
      %v1351 = vsel %vm872, %v1316, 0
      %v1353 = vsel %vm872, %v1318, 0
      %1355 = vmatprep.subr.mxu0 0.0
      %1356 = vmatpush1.xpose.msra.mxu0 %v1337
      %1357 = vmatprep.subr.mxu0 0.0
      %1358 = vmatpush1.xpose.msra.mxu0 %v1339
      %1359 = vmatprep.subr.mxu0 0.0
      %1360 = vmatpush1.xpose.msra.mxu0 %v1341
      %1361 = vmatprep.subr.mxu0 0.0
      %1362 = vmatpush1.xpose.msra.mxu0 %v1343
      %1363 = vmatprep.subr.mxu0 0.0
      %1364 = vmatpush1.xpose.msra.mxu0 %v1345
      %1365 = vmatprep.subr.mxu0 0.0
      %1366 = vmatpush1.xpose.msra.mxu0 %v1347
      %1367 = vmatprep.subr.mxu0 0.0
      %1368 = vmatpush1.xpose.msra.mxu0 %v1349
      %1369 = vmatprep.subr.mxu0 0.0
      %1370 = vmatpush1.xpose.msra.mxu0 %v1351
      %1371 = vmatprep.subr.mxu0 0.0
      %1372 = vmatpush1.xpose.msra.mxu0 %v1353
      %1373 = vmatprep.subr.mxu0 0.0
      %1374 = vmatpush1.xpose.msra.mxu0 0.0
      %1375 = vmatprep.subr.mxu0 0.0
      %1376 = vmatpush1.xpose.msra.mxu0 0.0
      %1377 = vmatprep.subr.mxu0 0.0
      %1378 = vmatpush1.xpose.msra.mxu0 0.0
      %1379 = vmatprep.subr.mxu0 0.0
      %1380 = vmatpush1.xpose.msra.mxu0 0.0
      %1381 = vmatprep.subr.mxu0 0.0
      %1382 = vmatpush1.xpose.msra.mxu0 0.0
      %1383 = vmatprep.subr.mxu0 0.0
      %1384 = vmatpush1.xpose.msra.mxu0 0.0
      %1385 = vmatprep.subr.mxu0 0.0
      %1386 = vmatpush1.xpose.msra.mxu0 0.0
      %1387 = vmatprep.subr.mxu0 0.0
      %1388 = vmatpush1.xpose.msra.mxu0 0.0
      %1389 = vmatprep.subr.mxu0 0.0
      %1390 = vmatpush1.xpose.msra.mxu0 0.0
      %1391 = vmatprep.subr.mxu0 0.0
      %1392 = vmatpush1.xpose.msra.mxu0 0.0
      %1393 = vmatprep.subr.mxu0 0.0
      %1394 = vmatpush1.xpose.msra.mxu0 0.0
      %1395 = vmatprep.subr.mxu0 0.0
      %1396 = vmatpush1.xpose.msra.mxu0 0.0
      %1397 = vmatprep.subr.mxu0 0.0
      %1398 = vmatpush1.xpose.msra.mxu0 0.0
      %1399 = vmatprep.subr.mxu0 0.0
      %1400 = vmatpush1.xpose.msra.mxu0 0.0
      %1401 = vmatprep.subr.mxu0 0.0
      %1402 = vmatpush1.xpose.msra.mxu0 0.0
      %1403 = vmatprep.subr.mxu0 0.0
      %1404 = vmatpush1.xpose.msra.mxu0 0.0
      %1405 = vmatprep.subr.mxu0 0.0
      %1406 = vmatpush1.xpose.msra.mxu0 0.0
      %1407 = vmatprep.subr.mxu0 0.0
      %1408 = vmatpush1.xpose.msra.mxu0 0.0
      %1409 = vmatprep.subr.mxu0 0.0
      %1410 = vmatpush1.xpose.msra.mxu0 0.0
      %1411 = vmatprep.subr.mxu0 0.0
      %1412 = vmatpush1.xpose.msra.mxu0 0.0
      %1413 = vmatprep.subr.mxu0 0.0
      %1414 = vmatpush1.xpose.msra.mxu0 0.0
      %1415 = vmatprep.subr.mxu0 0.0
      %1416 = vmatpush1.xpose.msra.mxu0 0.0
      %1417 = vmatprep.subr.mxu0 0.0
      %1418 = vmatpush1.xpose.msra.mxu0 0.0
      %1419 = vmatprep.mubr.f32.mxu0 0.0
      %1420 = vmatmul.mubr.f32.gmra.mrb[0].mxu0 %v1319
      %v1421 = vpop.f32.mrb[0].mxu0
      %v1422 = vadd.f32 %v545, %v1421
      %v1423 = vpop.f32.mrb[0].mxu0
      %1424 = vmatprep.mubr.f32.mxu0 0.0
      %1425 = vmatmul.mubr.f32.gmra.mrb[0].mxu0 %v1321
      %v1426 = vpop.f32.mrb[0].mxu0
      %v1427 = vadd.f32 %v546, %v1426
      %v1428 = vpop.f32.mrb[0].mxu0
      %1429 = vmatprep.mubr.f32.mxu0 0.0
      %1430 = vmatmul.mubr.f32.gmra.mrb[0].mxu0 %v1323
      %v1431 = vpop.f32.mrb[0].mxu0
      %v1432 = vadd.f32 %v547, %v1431
      %v1433 = vpop.f32.mrb[0].mxu0
      %1434 = vmatprep.mubr.f32.mxu0 0.0
      %1435 = vmatmul.mubr.f32.gmra.mrb[0].mxu0 %v1325
      %v1436 = vpop.f32.mrb[0].mxu0
      %v1437 = vadd.f32 %v548, %v1436
      %v1438 = vpop.f32.mrb[0].mxu0
      %1439 = vmatprep.mubr.f32.mxu0 0.0
      %1440 = vmatmul.mubr.f32.gmra.mrb[0].mxu0 %v1327
      %v1441 = vpop.f32.mrb[0].mxu0
      %v1442 = vadd.f32 %v549, %v1441
      %v1443 = vpop.f32.mrb[0].mxu0
      %1444 = vmatprep.mubr.f32.mxu0 0.0
      %1445 = vmatmul.mubr.f32.gmra.mrb[0].mxu0 %v1329
      %v1446 = vpop.f32.mrb[0].mxu0
      %v1447 = vadd.f32 %v550, %v1446
      %v1448 = vpop.f32.mrb[0].mxu0
      %1449 = vmatprep.mubr.f32.mxu0 0.0
      %1450 = vmatmul.mubr.f32.gmra.mrb[0].mxu0 %v1331
      %v1451 = vpop.f32.mrb[0].mxu0
      %v1452 = vadd.f32 %v551, %v1451
      %v1453 = vpop.f32.mrb[0].mxu0
      %1454 = vmatprep.mubr.f32.mxu0 0.0
      %1455 = vmatmul.mubr.f32.gmra.mrb[0].mxu0 %v1333
      %v1456 = vpop.f32.mrb[0].mxu0
      %v1457 = vadd.f32 %v552, %v1456
      %v1458 = vpop.f32.mrb[0].mxu0
      %1459 = vmatprep.mubr.f32.mxu0 0.0
      %1460 = vmatmul.mubr.f32.gmra.mrb[0].mxu0 %v1335
      %v1461 = vpop.f32.mrb[0].mxu0
      %v1462 = vadd.f32 %v553, %v1461
      %v1463 = vpop.f32.mrb[0].mxu0
      %1464 = vdwg.mxu0
      %v1465 = vsel %vm1019, %v1422, -inf
      %1466 = vmax.xlane.f32.xlu0 %v1465
      %v1467 = vpop.xlane.xlu0 %1466
      %v1468 = vsel %vm1019, %v1427, -inf
      %1469 = vmax.xlane.f32.xlu0 %v1468
      %v1470 = vpop.xlane.xlu0 %1469
      %v1471 = vsel %vm1019, %v1432, -inf
      %1472 = vmax.xlane.f32.xlu0 %v1471
      %v1473 = vpop.xlane.xlu0 %1472
      %v1474 = vsel %vm1019, %v1437, -inf
      %1475 = vmax.xlane.f32.xlu0 %v1474
      %v1476 = vpop.xlane.xlu0 %1475
      %v1477 = vsel %vm1019, %v1442, -inf
      %1478 = vmax.xlane.f32.xlu0 %v1477
      %v1479 = vpop.xlane.xlu0 %1478
      %v1480 = vsel %vm1019, %v1447, -inf
      %1481 = vmax.xlane.f32.xlu0 %v1480
      %v1482 = vpop.xlane.xlu0 %1481
      %v1483 = vsel %vm1019, %v1452, -inf
      %1484 = vmax.xlane.f32.xlu0 %v1483
      %v1485 = vpop.xlane.xlu0 %1484
      %v1486 = vsel %vm1019, %v1457, -inf
      %1487 = vmax.xlane.f32.xlu0 %v1486
      %v1488 = vpop.xlane.xlu0 %1487
      %v1489 = vsel %vm1019, %v1462, -inf
      %1490 = vmax.xlane.f32.xlu0 %v1489
      %v1491 = vpop.xlane.xlu0 %1490
      %v1492 = vsub.f32 %v1422, %v1467
      %v1493 = vsub.f32 %v1427, %v1470
      %v1494 = vsub.f32 %v1432, %v1473
      %v1495 = vsub.f32 %v1437, %v1476
      %v1496 = vsub.f32 %v1442, %v1479
      %v1497 = vsub.f32 %v1447, %v1482
      %v1498 = vsub.f32 %v1452, %v1485
      %v1499 = vsub.f32 %v1457, %v1488
      %v1500 = vsub.f32 %v1462, %v1491
      %v1501 = vmul.f32 %v1492, 1.442695
      %v1502 = vpow.pop %v1501
      %v1503 = vmul.f32 %v1493, 1.442695
      %v1504 = vpow.pop %v1503
      %v1505 = vmul.f32 %v1494, 1.442695
      %v1506 = vpow.pop %v1505
      %v1507 = vmul.f32 %v1495, 1.442695
      %v1508 = vpow.pop %v1507
      %v1509 = vmul.f32 %v1496, 1.442695
      %v1510 = vpow.pop %v1509
      %v1511 = vmul.f32 %v1497, 1.442695
      %v1512 = vpow.pop %v1511
      %v1513 = vmul.f32 %v1498, 1.442695
      %v1514 = vpow.pop %v1513
      %v1515 = vmul.f32 %v1499, 1.442695
      %v1516 = vpow.pop %v1515
      %v1517 = vmul.f32 %v1500, 1.442695
      %v1518 = vpow.pop %v1517
      %v1519 = vsel %vm1019, %v1502, 0.0
      %1520 = vadd.xlane.f32.xlu0 %v1519
      %v1521 = vpop.xlane.xlu0 %1520
      %v1522 = vsel %vm1019, %v1504, 0.0
      %1523 = vadd.xlane.f32.xlu0 %v1522
      %v1524 = vpop.xlane.xlu0 %1523
      %v1525 = vsel %vm1019, %v1506, 0.0
      %1526 = vadd.xlane.f32.xlu0 %v1525
      %v1527 = vpop.xlane.xlu0 %1526
      %v1528 = vsel %vm1019, %v1508, 0.0
      %1529 = vadd.xlane.f32.xlu0 %v1528
      %v1530 = vpop.xlane.xlu0 %1529
      %v1531 = vsel %vm1019, %v1510, 0.0
      %1532 = vadd.xlane.f32.xlu0 %v1531
      %v1533 = vpop.xlane.xlu0 %1532
      %v1534 = vsel %vm1019, %v1512, 0.0
      %1535 = vadd.xlane.f32.xlu0 %v1534
      %v1536 = vpop.xlane.xlu0 %1535
      %v1537 = vsel %vm1019, %v1514, 0.0
      %1538 = vadd.xlane.f32.xlu0 %v1537
      %v1539 = vpop.xlane.xlu0 %1538
      %v1540 = vsel %vm1019, %v1516, 0.0
      %1541 = vadd.xlane.f32.xlu0 %v1540
      %v1542 = vpop.xlane.xlu0 %1541
      %v1543 = vsel %vm1019, %v1518, 0.0
      %1544 = vadd.xlane.f32.xlu0 %v1543
      %v1545 = vpop.xlane.xlu0 %1544
      %v1546 = vrcp.pop %v1521
      %v1547 = vrcp.pop %v1524
      %v1548 = vrcp.pop %v1527
      %v1549 = vrcp.pop %v1530
      %v1550 = vrcp.pop %v1533
      %v1551 = vrcp.pop %v1536
      %v1552 = vrcp.pop %v1539
      %v1553 = vrcp.pop %v1542
      %v1554 = vrcp.pop %v1545
      %v1555 = vmul.f32 %v1502, %v1546
      %v1556 = vmul.f32 %v1504, %v1547
      %v1557 = vmul.f32 %v1506, %v1548
      %v1558 = vmul.f32 %v1508, %v1549
      %v1559 = vmul.f32 %v1510, %v1550
      %v1560 = vmul.f32 %v1512, %v1551
      %v1561 = vmul.f32 %v1514, %v1552
      %v1562 = vmul.f32 %v1516, %v1553
      %v1563 = vmul.f32 %v1518, %v1554
      %1564 = vrot.lane.b32.xlu0 %v802, 56
      %v1565 = vpop.permute.xlu0 %1564
      %1566 = vrot.lane.b32.xlu0 %v807, 56
      %v1567 = vpop.permute.xlu0 %1566
      %1568 = vrot.lane.b32.xlu0 %v812, 56
      %v1569 = vpop.permute.xlu0 %1568
      %1570 = vrot.lane.b32.xlu0 %v817, 56
      %v1571 = vpop.permute.xlu0 %1570
      %1572 = vrot.lane.b32.xlu0 %v822, 56
      %v1573 = vpop.permute.xlu0 %1572
      %1574 = vrot.lane.b32.xlu0 %v827, 56
      %v1575 = vpop.permute.xlu0 %1574
      %1576 = vrot.lane.b32.xlu0 %v832, 56
      %v1577 = vpop.permute.xlu0 %1576
      %1578 = vrot.lane.b32.xlu0 %v837, 56
      %v1579 = vpop.permute.xlu0 %1578
      %1580 = vrot.lane.b32.xlu0 %v842, 56
      %v1581 = vpop.permute.xlu0 %1580
      %v1592 = vsel %vm1019, %v1555, 0
      %v1595 = vsel %vm1019, %v1556, 0
      %v1598 = vsel %vm1019, %v1557, 0
      %v1601 = vsel %vm1019, %v1558, 0
      %v1604 = vsel %vm1019, %v1559, 0
      %v1607 = vsel %vm1019, %v1560, 0
      %v1610 = vsel %vm1019, %v1561, 0
      %v1613 = vsel %vm1019, %v1562, 0
      %v1616 = vsel %vm1019, %v1563, 0
      %1618 = vmatprep.subr.mxu0 0.0
      %1619 = vmatpush1.msra.mxu0 %v1565
      %1620 = vmatprep.subr.mxu0 0.0
      %1621 = vmatpush1.msra.mxu0 %v1567
      %1622 = vmatprep.subr.mxu0 0.0
      %1623 = vmatpush1.msra.mxu0 %v1569
      %1624 = vmatprep.subr.mxu0 0.0
      %1625 = vmatpush1.msra.mxu0 %v1571
      %1626 = vmatprep.subr.mxu0 0.0
      %1627 = vmatpush1.msra.mxu0 %v1573
      %1628 = vmatprep.subr.mxu0 0.0
      %1629 = vmatpush1.msra.mxu0 %v1575
      %1630 = vmatprep.subr.mxu0 0.0
      %1631 = vmatpush1.msra.mxu0 %v1577
      %1632 = vmatprep.subr.mxu0 0.0
      %1633 = vmatpush1.msra.mxu0 %v1579
      %1634 = vmatprep.subr.mxu0 0.0
      %1635 = vmatpush1.msra.mxu0 %v1581
      %1636 = vmatprep.subr.mxu0 0.0
      %1637 = vmatpush1.msra.mxu0 0.0
      %1638 = vmatprep.subr.mxu0 0.0
      %1639 = vmatpush1.msra.mxu0 0.0
      %1640 = vmatprep.subr.mxu0 0.0
      %1641 = vmatpush1.msra.mxu0 0.0
      %1642 = vmatprep.subr.mxu0 0.0
      %1643 = vmatpush1.msra.mxu0 0.0
      %1644 = vmatprep.subr.mxu0 0.0
      %1645 = vmatpush1.msra.mxu0 0.0
      %1646 = vmatprep.subr.mxu0 0.0
      %1647 = vmatpush1.msra.mxu0 0.0
      %1648 = vmatprep.subr.mxu0 0.0
      %1649 = vmatpush1.msra.mxu0 0.0
      %1650 = vmatprep.subr.mxu0 0.0
      %1651 = vmatpush1.msra.mxu0 0.0
      %1652 = vmatprep.subr.mxu0 0.0
      %1653 = vmatpush1.msra.mxu0 0.0
      %1654 = vmatprep.subr.mxu0 0.0
      %1655 = vmatpush1.msra.mxu0 0.0
      %1656 = vmatprep.subr.mxu0 0.0
      %1657 = vmatpush1.msra.mxu0 0.0
      %1658 = vmatprep.subr.mxu0 0.0
      %1659 = vmatpush1.msra.mxu0 0.0
      %1660 = vmatprep.subr.mxu0 0.0
      %1661 = vmatpush1.msra.mxu0 0.0
      %1662 = vmatprep.subr.mxu0 0.0
      %1663 = vmatpush1.msra.mxu0 0.0
      %1664 = vmatprep.subr.mxu0 0.0
      %1665 = vmatpush1.msra.mxu0 0.0
      %1666 = vmatprep.subr.mxu0 0.0
      %1667 = vmatpush1.msra.mxu0 0.0
      %1668 = vmatprep.subr.mxu0 0.0
      %1669 = vmatpush1.msra.mxu0 0.0
      %1670 = vmatprep.subr.mxu0 0.0
      %1671 = vmatpush1.msra.mxu0 0.0
      %1672 = vmatprep.subr.mxu0 0.0
      %1673 = vmatpush1.msra.mxu0 0.0
      %1674 = vmatprep.subr.mxu0 0.0
      %1675 = vmatpush1.msra.mxu0 0.0
      %1676 = vmatprep.subr.mxu0 0.0
      %1677 = vmatpush1.msra.mxu0 0.0
      %1678 = vmatprep.subr.mxu0 0.0
      %1679 = vmatpush1.msra.mxu0 0.0
      %1680 = vmatprep.subr.mxu0 0.0
      %1681 = vmatpush1.msra.mxu0 0.0
      %1682 = vmatprep.mubr.f32.mxu0 0.0
      %1683 = vmatmul.mubr.f32.gmra.mrb[0].mxu0 %v1592
      %v1684 = vpop.f32.mrb[0].mxu0
      %v1685 = vadd.f32 0.0, %v1684
      %v1686 = vpop.f32.mrb[0].mxu0
      %1687 = vmatprep.mubr.f32.mxu0 0.0
      %1688 = vmatmul.mubr.f32.gmra.mrb[0].mxu0 %v1595
      %v1689 = vpop.f32.mrb[0].mxu0
      %v1690 = vadd.f32 0.0, %v1689
      %v1691 = vpop.f32.mrb[0].mxu0
      %1692 = vmatprep.mubr.f32.mxu0 0.0
      %1693 = vmatmul.mubr.f32.gmra.mrb[0].mxu0 %v1598
      %v1694 = vpop.f32.mrb[0].mxu0
      %v1695 = vadd.f32 0.0, %v1694
      %v1696 = vpop.f32.mrb[0].mxu0
      %1697 = vmatprep.mubr.f32.mxu0 0.0
      %1698 = vmatmul.mubr.f32.gmra.mrb[0].mxu0 %v1601
      %v1699 = vpop.f32.mrb[0].mxu0
      %v1700 = vadd.f32 0.0, %v1699
      %v1701 = vpop.f32.mrb[0].mxu0
      %1702 = vmatprep.mubr.f32.mxu0 0.0
      %1703 = vmatmul.mubr.f32.gmra.mrb[0].mxu0 %v1604
      %v1704 = vpop.f32.mrb[0].mxu0
      %v1705 = vadd.f32 0.0, %v1704
      %v1706 = vpop.f32.mrb[0].mxu0
      %1707 = vmatprep.mubr.f32.mxu0 0.0
      %1708 = vmatmul.mubr.f32.gmra.mrb[0].mxu0 %v1607
      %v1709 = vpop.f32.mrb[0].mxu0
      %v1710 = vadd.f32 0.0, %v1709
      %v1711 = vpop.f32.mrb[0].mxu0
      %1712 = vmatprep.mubr.f32.mxu0 0.0
      %1713 = vmatmul.mubr.f32.gmra.mrb[0].mxu0 %v1610
      %v1714 = vpop.f32.mrb[0].mxu0
      %v1715 = vadd.f32 0.0, %v1714
      %v1716 = vpop.f32.mrb[0].mxu0
      %1717 = vmatprep.mubr.f32.mxu0 0.0
      %1718 = vmatmul.mubr.f32.gmra.mrb[0].mxu0 %v1613
      %v1719 = vpop.f32.mrb[0].mxu0
      %v1720 = vadd.f32 0.0, %v1719
      %v1721 = vpop.f32.mrb[0].mxu0
      %1722 = vmatprep.mubr.f32.mxu0 0.0
      %1723 = vmatmul.mubr.f32.gmra.mrb[0].mxu0 %v1616
      %v1724 = vpop.f32.mrb[0].mxu0
      %v1725 = vadd.f32 0.0, %v1724
      %v1726 = vpop.f32.mrb[0].mxu0
      %1727 = vdwg.mxu0
      %1728 = vrot.lane.b32.xlu0 %v802, 112
      %v1729 = vpop.permute.xlu0 %1728
      %1730 = vrot.lane.b32.xlu0 %v807, 112
      %v1731 = vpop.permute.xlu0 %1730
      %1732 = vrot.lane.b32.xlu0 %v812, 112
      %v1733 = vpop.permute.xlu0 %1732
      %1734 = vrot.lane.b32.xlu0 %v817, 112
      %v1735 = vpop.permute.xlu0 %1734
      %1736 = vrot.lane.b32.xlu0 %v822, 112
      %v1737 = vpop.permute.xlu0 %1736
      %1738 = vrot.lane.b32.xlu0 %v827, 112
      %v1739 = vpop.permute.xlu0 %1738
      %1740 = vrot.lane.b32.xlu0 %v832, 112
      %v1741 = vpop.permute.xlu0 %1740
      %1742 = vrot.lane.b32.xlu0 %v837, 112
      %v1743 = vpop.permute.xlu0 %1742
      %1744 = vrot.lane.b32.xlu0 %v842, 112
      %v1745 = vpop.permute.xlu0 %1744
      %1746 = vrot.lane.b32.xlu0 %v802, 80
      %v1747 = vpop.permute.xlu0 %1746
      %1748 = vrot.lane.b32.xlu0 %v807, 80
      %v1749 = vpop.permute.xlu0 %1748
      %1750 = vrot.lane.b32.xlu0 %v812, 80
      %v1751 = vpop.permute.xlu0 %1750
      %1752 = vrot.lane.b32.xlu0 %v817, 80
      %v1753 = vpop.permute.xlu0 %1752
      %1754 = vrot.lane.b32.xlu0 %v822, 80
      %v1755 = vpop.permute.xlu0 %1754
      %1756 = vrot.lane.b32.xlu0 %v827, 80
      %v1757 = vpop.permute.xlu0 %1756
      %1758 = vrot.lane.b32.xlu0 %v832, 80
      %v1759 = vpop.permute.xlu0 %1758
      %1760 = vrot.lane.b32.xlu0 %v837, 80
      %v1761 = vpop.permute.xlu0 %1760
      %1762 = vrot.lane.b32.xlu0 %v842, 80
      %v1763 = vpop.permute.xlu0 %1762
      %v1764 = vsel %vm872, %v1729, 0
      %v1766 = vsel %vm872, %v1731, 0
      %v1768 = vsel %vm872, %v1733, 0
      %v1770 = vsel %vm872, %v1735, 0
      %v1772 = vsel %vm872, %v1737, 0
      %v1774 = vsel %vm872, %v1739, 0
      %v1776 = vsel %vm872, %v1741, 0
      %v1778 = vsel %vm872, %v1743, 0
      %v1780 = vsel %vm872, %v1745, 0
      %v1782 = vsel %vm872, %v1747, 0
      %v1784 = vsel %vm872, %v1749, 0
      %v1786 = vsel %vm872, %v1751, 0
      %v1788 = vsel %vm872, %v1753, 0
      %v1790 = vsel %vm872, %v1755, 0
      %v1792 = vsel %vm872, %v1757, 0
      %v1794 = vsel %vm872, %v1759, 0
      %v1796 = vsel %vm872, %v1761, 0
      %v1798 = vsel %vm872, %v1763, 0
      %1800 = vmatprep.subr.mxu0 0.0
      %1801 = vmatpush1.xpose.msra.mxu0 %v1782
      %1802 = vmatprep.subr.mxu0 0.0
      %1803 = vmatpush1.xpose.msra.mxu0 %v1784
      %1804 = vmatprep.subr.mxu0 0.0
      %1805 = vmatpush1.xpose.msra.mxu0 %v1786
      %1806 = vmatprep.subr.mxu0 0.0
      %1807 = vmatpush1.xpose.msra.mxu0 %v1788
      %1808 = vmatprep.subr.mxu0 0.0
      %1809 = vmatpush1.xpose.msra.mxu0 %v1790
      %1810 = vmatprep.subr.mxu0 0.0
      %1811 = vmatpush1.xpose.msra.mxu0 %v1792
      %1812 = vmatprep.subr.mxu0 0.0
      %1813 = vmatpush1.xpose.msra.mxu0 %v1794
      %1814 = vmatprep.subr.mxu0 0.0
      %1815 = vmatpush1.xpose.msra.mxu0 %v1796
      %1816 = vmatprep.subr.mxu0 0.0
      %1817 = vmatpush1.xpose.msra.mxu0 %v1798
      %1818 = vmatprep.subr.mxu0 0.0
      %1819 = vmatpush1.xpose.msra.mxu0 0.0
      %1820 = vmatprep.subr.mxu0 0.0
      %1821 = vmatpush1.xpose.msra.mxu0 0.0
      %1822 = vmatprep.subr.mxu0 0.0
      %1823 = vmatpush1.xpose.msra.mxu0 0.0
      %1824 = vmatprep.subr.mxu0 0.0
      %1825 = vmatpush1.xpose.msra.mxu0 0.0
      %1826 = vmatprep.subr.mxu0 0.0
      %1827 = vmatpush1.xpose.msra.mxu0 0.0
      %1828 = vmatprep.subr.mxu0 0.0
      %1829 = vmatpush1.xpose.msra.mxu0 0.0
      %1830 = vmatprep.subr.mxu0 0.0
      %1831 = vmatpush1.xpose.msra.mxu0 0.0
      %1832 = vmatprep.subr.mxu0 0.0
      %1833 = vmatpush1.xpose.msra.mxu0 0.0
      %1834 = vmatprep.subr.mxu0 0.0
      %1835 = vmatpush1.xpose.msra.mxu0 0.0
      %1836 = vmatprep.subr.mxu0 0.0
      %1837 = vmatpush1.xpose.msra.mxu0 0.0
      %1838 = vmatprep.subr.mxu0 0.0
      %1839 = vmatpush1.xpose.msra.mxu0 0.0
      %1840 = vmatprep.subr.mxu0 0.0
      %1841 = vmatpush1.xpose.msra.mxu0 0.0
      %1842 = vmatprep.subr.mxu0 0.0
      %1843 = vmatpush1.xpose.msra.mxu0 0.0
      %1844 = vmatprep.subr.mxu0 0.0
      %1845 = vmatpush1.xpose.msra.mxu0 0.0
      %1846 = vmatprep.subr.mxu0 0.0
      %1847 = vmatpush1.xpose.msra.mxu0 0.0
      %1848 = vmatprep.subr.mxu0 0.0
      %1849 = vmatpush1.xpose.msra.mxu0 0.0
      %1850 = vmatprep.subr.mxu0 0.0
      %1851 = vmatpush1.xpose.msra.mxu0 0.0
      %1852 = vmatprep.subr.mxu0 0.0
      %1853 = vmatpush1.xpose.msra.mxu0 0.0
      %1854 = vmatprep.subr.mxu0 0.0
      %1855 = vmatpush1.xpose.msra.mxu0 0.0
      %1856 = vmatprep.subr.mxu0 0.0
      %1857 = vmatpush1.xpose.msra.mxu0 0.0
      %1858 = vmatprep.subr.mxu0 0.0
      %1859 = vmatpush1.xpose.msra.mxu0 0.0
      %1860 = vmatprep.subr.mxu0 0.0
      %1861 = vmatpush1.xpose.msra.mxu0 0.0
      %1862 = vmatprep.subr.mxu0 0.0
      %1863 = vmatpush1.xpose.msra.mxu0 0.0
      %1864 = vmatprep.mubr.f32.mxu0 0.0
      %1865 = vmatmul.mubr.f32.gmra.mrb[0].mxu0 %v1764
      %v1866 = vpop.f32.mrb[0].mxu0
      %v1867 = vadd.f32 %v545, %v1866
      %v1868 = vpop.f32.mrb[0].mxu0
      %1869 = vmatprep.mubr.f32.mxu0 0.0
      %1870 = vmatmul.mubr.f32.gmra.mrb[0].mxu0 %v1766
      %v1871 = vpop.f32.mrb[0].mxu0
      %v1872 = vadd.f32 %v546, %v1871
      %v1873 = vpop.f32.mrb[0].mxu0
      %1874 = vmatprep.mubr.f32.mxu0 0.0
      %1875 = vmatmul.mubr.f32.gmra.mrb[0].mxu0 %v1768
      %v1876 = vpop.f32.mrb[0].mxu0
      %v1877 = vadd.f32 %v547, %v1876
      %v1878 = vpop.f32.mrb[0].mxu0
      %1879 = vmatprep.mubr.f32.mxu0 0.0
      %1880 = vmatmul.mubr.f32.gmra.mrb[0].mxu0 %v1770
      %v1881 = vpop.f32.mrb[0].mxu0
      %v1882 = vadd.f32 %v548, %v1881
      %v1883 = vpop.f32.mrb[0].mxu0
      %1884 = vmatprep.mubr.f32.mxu0 0.0
      %1885 = vmatmul.mubr.f32.gmra.mrb[0].mxu0 %v1772
      %v1886 = vpop.f32.mrb[0].mxu0
      %v1887 = vadd.f32 %v549, %v1886
      %v1888 = vpop.f32.mrb[0].mxu0
      %1889 = vmatprep.mubr.f32.mxu0 0.0
      %1890 = vmatmul.mubr.f32.gmra.mrb[0].mxu0 %v1774
      %v1891 = vpop.f32.mrb[0].mxu0
      %v1892 = vadd.f32 %v550, %v1891
      %v1893 = vpop.f32.mrb[0].mxu0
      %1894 = vmatprep.mubr.f32.mxu0 0.0
      %1895 = vmatmul.mubr.f32.gmra.mrb[0].mxu0 %v1776
      %v1896 = vpop.f32.mrb[0].mxu0
      %v1897 = vadd.f32 %v551, %v1896
      %v1898 = vpop.f32.mrb[0].mxu0
      %1899 = vmatprep.mubr.f32.mxu0 0.0
      %1900 = vmatmul.mubr.f32.gmra.mrb[0].mxu0 %v1778
      %v1901 = vpop.f32.mrb[0].mxu0
      %v1902 = vadd.f32 %v552, %v1901
      %v1903 = vpop.f32.mrb[0].mxu0
      %1904 = vmatprep.mubr.f32.mxu0 0.0
      %1905 = vmatmul.mubr.f32.gmra.mrb[0].mxu0 %v1780
      %v1906 = vpop.f32.mrb[0].mxu0
      %v1907 = vadd.f32 %v553, %v1906
      %v1908 = vpop.f32.mrb[0].mxu0
      %1909 = vdwg.mxu0
      %v1910 = vsel %vm1019, %v1867, -inf
      %1911 = vmax.xlane.f32.xlu0 %v1910
      %v1912 = vpop.xlane.xlu0 %1911
      %v1913 = vsel %vm1019, %v1872, -inf
      %1914 = vmax.xlane.f32.xlu0 %v1913
      %v1915 = vpop.xlane.xlu0 %1914
      %v1916 = vsel %vm1019, %v1877, -inf
      %1917 = vmax.xlane.f32.xlu0 %v1916
      %v1918 = vpop.xlane.xlu0 %1917
      %v1919 = vsel %vm1019, %v1882, -inf
      %1920 = vmax.xlane.f32.xlu0 %v1919
      %v1921 = vpop.xlane.xlu0 %1920
      %v1922 = vsel %vm1019, %v1887, -inf
      %1923 = vmax.xlane.f32.xlu0 %v1922
      %v1924 = vpop.xlane.xlu0 %1923
      %v1925 = vsel %vm1019, %v1892, -inf
      %1926 = vmax.xlane.f32.xlu0 %v1925
      %v1927 = vpop.xlane.xlu0 %1926
      %v1928 = vsel %vm1019, %v1897, -inf
      %1929 = vmax.xlane.f32.xlu0 %v1928
      %v1930 = vpop.xlane.xlu0 %1929
      %v1931 = vsel %vm1019, %v1902, -inf
      %1932 = vmax.xlane.f32.xlu0 %v1931
      %v1933 = vpop.xlane.xlu0 %1932
      %v1934 = vsel %vm1019, %v1907, -inf
      %1935 = vmax.xlane.f32.xlu0 %v1934
      %v1936 = vpop.xlane.xlu0 %1935
      %v1937 = vsub.f32 %v1867, %v1912
      %v1938 = vsub.f32 %v1872, %v1915
      %v1939 = vsub.f32 %v1877, %v1918
      %v1940 = vsub.f32 %v1882, %v1921
      %v1941 = vsub.f32 %v1887, %v1924
      %v1942 = vsub.f32 %v1892, %v1927
      %v1943 = vsub.f32 %v1897, %v1930
      %v1944 = vsub.f32 %v1902, %v1933
      %v1945 = vsub.f32 %v1907, %v1936
      %v1946 = vmul.f32 %v1937, 1.442695
      %v1947 = vpow.pop %v1946
      %v1948 = vmul.f32 %v1938, 1.442695
      %v1949 = vpow.pop %v1948
      %v1950 = vmul.f32 %v1939, 1.442695
      %v1951 = vpow.pop %v1950
      %v1952 = vmul.f32 %v1940, 1.442695
      %v1953 = vpow.pop %v1952
      %v1954 = vmul.f32 %v1941, 1.442695
      %v1955 = vpow.pop %v1954
      %v1956 = vmul.f32 %v1942, 1.442695
      %v1957 = vpow.pop %v1956
      %v1958 = vmul.f32 %v1943, 1.442695
      %v1959 = vpow.pop %v1958
      %v1960 = vmul.f32 %v1944, 1.442695
      %v1961 = vpow.pop %v1960
      %v1962 = vmul.f32 %v1945, 1.442695
      %v1963 = vpow.pop %v1962
      %v1964 = vsel %vm1019, %v1947, 0.0
      %1965 = vadd.xlane.f32.xlu0 %v1964
      %v1966 = vpop.xlane.xlu0 %1965
      %v1967 = vsel %vm1019, %v1949, 0.0
      %1968 = vadd.xlane.f32.xlu0 %v1967
      %v1969 = vpop.xlane.xlu0 %1968
      %v1970 = vsel %vm1019, %v1951, 0.0
      %1971 = vadd.xlane.f32.xlu0 %v1970
      %v1972 = vpop.xlane.xlu0 %1971
      %v1973 = vsel %vm1019, %v1953, 0.0
      %1974 = vadd.xlane.f32.xlu0 %v1973
      %v1975 = vpop.xlane.xlu0 %1974
      %v1976 = vsel %vm1019, %v1955, 0.0
      %1977 = vadd.xlane.f32.xlu0 %v1976
      %v1978 = vpop.xlane.xlu0 %1977
      %v1979 = vsel %vm1019, %v1957, 0.0
      %1980 = vadd.xlane.f32.xlu0 %v1979
      %v1981 = vpop.xlane.xlu0 %1980
      %v1982 = vsel %vm1019, %v1959, 0.0
      %1983 = vadd.xlane.f32.xlu0 %v1982
      %v1984 = vpop.xlane.xlu0 %1983
      %v1985 = vsel %vm1019, %v1961, 0.0
      %1986 = vadd.xlane.f32.xlu0 %v1985
      %v1987 = vpop.xlane.xlu0 %1986
      %v1988 = vsel %vm1019, %v1963, 0.0
      %1989 = vadd.xlane.f32.xlu0 %v1988
      %v1990 = vpop.xlane.xlu0 %1989
      %v1991 = vrcp.pop %v1966
      %v1992 = vrcp.pop %v1969
      %v1993 = vrcp.pop %v1972
      %v1994 = vrcp.pop %v1975
      %v1995 = vrcp.pop %v1978
      %v1996 = vrcp.pop %v1981
      %v1997 = vrcp.pop %v1984
      %v1998 = vrcp.pop %v1987
      %v1999 = vrcp.pop %v1990
      %v2000 = vmul.f32 %v1947, %v1991
      %v2001 = vmul.f32 %v1949, %v1992
      %v2002 = vmul.f32 %v1951, %v1993
      %v2003 = vmul.f32 %v1953, %v1994
      %v2004 = vmul.f32 %v1955, %v1995
      %v2005 = vmul.f32 %v1957, %v1996
      %v2006 = vmul.f32 %v1959, %v1997
      %v2007 = vmul.f32 %v1961, %v1998
      %v2008 = vmul.f32 %v1963, %v1999
      %2009 = vrot.lane.b32.xlu0 %v802, 48
      %v2010 = vpop.permute.xlu0 %2009
      %2011 = vrot.lane.b32.xlu0 %v807, 48
      %v2012 = vpop.permute.xlu0 %2011
      %2013 = vrot.lane.b32.xlu0 %v812, 48
      %v2014 = vpop.permute.xlu0 %2013
      %2015 = vrot.lane.b32.xlu0 %v817, 48
      %v2016 = vpop.permute.xlu0 %2015
      %2017 = vrot.lane.b32.xlu0 %v822, 48
      %v2018 = vpop.permute.xlu0 %2017
      %2019 = vrot.lane.b32.xlu0 %v827, 48
      %v2020 = vpop.permute.xlu0 %2019
      %2021 = vrot.lane.b32.xlu0 %v832, 48
      %v2022 = vpop.permute.xlu0 %2021
      %2023 = vrot.lane.b32.xlu0 %v837, 48
      %v2024 = vpop.permute.xlu0 %2023
      %2025 = vrot.lane.b32.xlu0 %v842, 48
      %v2026 = vpop.permute.xlu0 %2025
      %v2037 = vsel %vm1019, %v2000, 0
      %v2040 = vsel %vm1019, %v2001, 0
      %v2043 = vsel %vm1019, %v2002, 0
      %v2046 = vsel %vm1019, %v2003, 0
      %v2049 = vsel %vm1019, %v2004, 0
      %v2052 = vsel %vm1019, %v2005, 0
      %v2055 = vsel %vm1019, %v2006, 0
      %v2058 = vsel %vm1019, %v2007, 0
      %v2061 = vsel %vm1019, %v2008, 0
      %2063 = vmatprep.subr.mxu0 0.0
      %2064 = vmatpush1.msra.mxu0 %v2010
      %2065 = vmatprep.subr.mxu0 0.0
      %2066 = vmatpush1.msra.mxu0 %v2012
      %2067 = vmatprep.subr.mxu0 0.0
      %2068 = vmatpush1.msra.mxu0 %v2014
      %2069 = vmatprep.subr.mxu0 0.0
      %2070 = vmatpush1.msra.mxu0 %v2016
      %2071 = vmatprep.subr.mxu0 0.0
      %2072 = vmatpush1.msra.mxu0 %v2018
      %2073 = vmatprep.subr.mxu0 0.0
      %2074 = vmatpush1.msra.mxu0 %v2020
      %2075 = vmatprep.subr.mxu0 0.0
      %2076 = vmatpush1.msra.mxu0 %v2022
      %2077 = vmatprep.subr.mxu0 0.0
      %2078 = vmatpush1.msra.mxu0 %v2024
      %2079 = vmatprep.subr.mxu0 0.0
      %2080 = vmatpush1.msra.mxu0 %v2026
      %2081 = vmatprep.subr.mxu0 0.0
      %2082 = vmatpush1.msra.mxu0 0.0
      %2083 = vmatprep.subr.mxu0 0.0
      %2084 = vmatpush1.msra.mxu0 0.0
      %2085 = vmatprep.subr.mxu0 0.0
      %2086 = vmatpush1.msra.mxu0 0.0
      %2087 = vmatprep.subr.mxu0 0.0
      %2088 = vmatpush1.msra.mxu0 0.0
      %2089 = vmatprep.subr.mxu0 0.0
      %2090 = vmatpush1.msra.mxu0 0.0
      %2091 = vmatprep.subr.mxu0 0.0
      %2092 = vmatpush1.msra.mxu0 0.0
      %2093 = vmatprep.subr.mxu0 0.0
      %2094 = vmatpush1.msra.mxu0 0.0
      %2095 = vmatprep.subr.mxu0 0.0
      %2096 = vmatpush1.msra.mxu0 0.0
      %2097 = vmatprep.subr.mxu0 0.0
      %2098 = vmatpush1.msra.mxu0 0.0
      %2099 = vmatprep.subr.mxu0 0.0
      %2100 = vmatpush1.msra.mxu0 0.0
      %2101 = vmatprep.subr.mxu0 0.0
      %2102 = vmatpush1.msra.mxu0 0.0
      %2103 = vmatprep.subr.mxu0 0.0
      %2104 = vmatpush1.msra.mxu0 0.0
      %2105 = vmatprep.subr.mxu0 0.0
      %2106 = vmatpush1.msra.mxu0 0.0
      %2107 = vmatprep.subr.mxu0 0.0
      %2108 = vmatpush1.msra.mxu0 0.0
      %2109 = vmatprep.subr.mxu0 0.0
      %2110 = vmatpush1.msra.mxu0 0.0
      %2111 = vmatprep.subr.mxu0 0.0
      %2112 = vmatpush1.msra.mxu0 0.0
      %2113 = vmatprep.subr.mxu0 0.0
      %2114 = vmatpush1.msra.mxu0 0.0
      %2115 = vmatprep.subr.mxu0 0.0
      %2116 = vmatpush1.msra.mxu0 0.0
      %2117 = vmatprep.subr.mxu0 0.0
      %2118 = vmatpush1.msra.mxu0 0.0
      %2119 = vmatprep.subr.mxu0 0.0
      %2120 = vmatpush1.msra.mxu0 0.0
      %2121 = vmatprep.subr.mxu0 0.0
      %2122 = vmatpush1.msra.mxu0 0.0
      %2123 = vmatprep.subr.mxu0 0.0
      %2124 = vmatpush1.msra.mxu0 0.0
      %2125 = vmatprep.subr.mxu0 0.0
      %2126 = vmatpush1.msra.mxu0 0.0
      %2127 = vmatprep.mubr.f32.mxu0 0.0
      %2128 = vmatmul.mubr.f32.gmra.mrb[0].mxu0 %v2037
      %v2129 = vpop.f32.mrb[0].mxu0
      %v2130 = vadd.f32 0.0, %v2129
      %v2131 = vpop.f32.mrb[0].mxu0
      %2132 = vmatprep.mubr.f32.mxu0 0.0
      %2133 = vmatmul.mubr.f32.gmra.mrb[0].mxu0 %v2040
      %v2134 = vpop.f32.mrb[0].mxu0
      %v2135 = vadd.f32 0.0, %v2134
      %v2136 = vpop.f32.mrb[0].mxu0
      %2137 = vmatprep.mubr.f32.mxu0 0.0
      %2138 = vmatmul.mubr.f32.gmra.mrb[0].mxu0 %v2043
      %v2139 = vpop.f32.mrb[0].mxu0
      %v2140 = vadd.f32 0.0, %v2139
      %v2141 = vpop.f32.mrb[0].mxu0
      %2142 = vmatprep.mubr.f32.mxu0 0.0
      %2143 = vmatmul.mubr.f32.gmra.mrb[0].mxu0 %v2046
      %v2144 = vpop.f32.mrb[0].mxu0
      %v2145 = vadd.f32 0.0, %v2144
      %v2146 = vpop.f32.mrb[0].mxu0
      %2147 = vmatprep.mubr.f32.mxu0 0.0
      %2148 = vmatmul.mubr.f32.gmra.mrb[0].mxu0 %v2049
      %v2149 = vpop.f32.mrb[0].mxu0
      %v2150 = vadd.f32 0.0, %v2149
      %v2151 = vpop.f32.mrb[0].mxu0
      %2152 = vmatprep.mubr.f32.mxu0 0.0
      %2153 = vmatmul.mubr.f32.gmra.mrb[0].mxu0 %v2052
      %v2154 = vpop.f32.mrb[0].mxu0
      %v2155 = vadd.f32 0.0, %v2154
      %v2156 = vpop.f32.mrb[0].mxu0
      %2157 = vmatprep.mubr.f32.mxu0 0.0
      %2158 = vmatmul.mubr.f32.gmra.mrb[0].mxu0 %v2055
      %v2159 = vpop.f32.mrb[0].mxu0
      %v2160 = vadd.f32 0.0, %v2159
      %v2161 = vpop.f32.mrb[0].mxu0
      %2162 = vmatprep.mubr.f32.mxu0 0.0
      %2163 = vmatmul.mubr.f32.gmra.mrb[0].mxu0 %v2058
      %v2164 = vpop.f32.mrb[0].mxu0
      %v2165 = vadd.f32 0.0, %v2164
      %v2166 = vpop.f32.mrb[0].mxu0
      %2167 = vmatprep.mubr.f32.mxu0 0.0
      %2168 = vmatmul.mubr.f32.gmra.mrb[0].mxu0 %v2061
      %v2169 = vpop.f32.mrb[0].mxu0
      %v2170 = vadd.f32 0.0, %v2169
      %v2171 = vpop.f32.mrb[0].mxu0
      %2172 = vdwg.mxu0
      %2173 = vrot.lane.b32.xlu0 %v802, 104
      %v2174 = vpop.permute.xlu0 %2173
      %2175 = vrot.lane.b32.xlu0 %v807, 104
      %v2176 = vpop.permute.xlu0 %2175
      %2177 = vrot.lane.b32.xlu0 %v812, 104
      %v2178 = vpop.permute.xlu0 %2177
      %2179 = vrot.lane.b32.xlu0 %v817, 104
      %v2180 = vpop.permute.xlu0 %2179
      %2181 = vrot.lane.b32.xlu0 %v822, 104
      %v2182 = vpop.permute.xlu0 %2181
      %2183 = vrot.lane.b32.xlu0 %v827, 104
      %v2184 = vpop.permute.xlu0 %2183
      %2185 = vrot.lane.b32.xlu0 %v832, 104
      %v2186 = vpop.permute.xlu0 %2185
      %2187 = vrot.lane.b32.xlu0 %v837, 104
      %v2188 = vpop.permute.xlu0 %2187
      %2189 = vrot.lane.b32.xlu0 %v842, 104
      %v2190 = vpop.permute.xlu0 %2189
      %2191 = vrot.lane.b32.xlu0 %v802, 72
      %v2192 = vpop.permute.xlu0 %2191
      %2193 = vrot.lane.b32.xlu0 %v807, 72
      %v2194 = vpop.permute.xlu0 %2193
      %2195 = vrot.lane.b32.xlu0 %v812, 72
      %v2196 = vpop.permute.xlu0 %2195
      %2197 = vrot.lane.b32.xlu0 %v817, 72
      %v2198 = vpop.permute.xlu0 %2197
      %2199 = vrot.lane.b32.xlu0 %v822, 72
      %v2200 = vpop.permute.xlu0 %2199
      %2201 = vrot.lane.b32.xlu0 %v827, 72
      %v2202 = vpop.permute.xlu0 %2201
      %2203 = vrot.lane.b32.xlu0 %v832, 72
      %v2204 = vpop.permute.xlu0 %2203
      %2205 = vrot.lane.b32.xlu0 %v837, 72
      %v2206 = vpop.permute.xlu0 %2205
      %2207 = vrot.lane.b32.xlu0 %v842, 72
      %v2208 = vpop.permute.xlu0 %2207
      %v2209 = vsel %vm872, %v2174, 0
      %v2211 = vsel %vm872, %v2176, 0
      %v2213 = vsel %vm872, %v2178, 0
      %v2215 = vsel %vm872, %v2180, 0
      %v2217 = vsel %vm872, %v2182, 0
      %v2219 = vsel %vm872, %v2184, 0
      %v2221 = vsel %vm872, %v2186, 0
      %v2223 = vsel %vm872, %v2188, 0
      %v2225 = vsel %vm872, %v2190, 0
      %v2227 = vsel %vm872, %v2192, 0
      %v2229 = vsel %vm872, %v2194, 0
      %v2231 = vsel %vm872, %v2196, 0
      %v2233 = vsel %vm872, %v2198, 0
      %v2235 = vsel %vm872, %v2200, 0
      %v2237 = vsel %vm872, %v2202, 0
      %v2239 = vsel %vm872, %v2204, 0
      %v2241 = vsel %vm872, %v2206, 0
      %v2243 = vsel %vm872, %v2208, 0
      %2245 = vmatprep.subr.mxu0 0.0
      %2246 = vmatpush1.xpose.msra.mxu0 %v2227
      %2247 = vmatprep.subr.mxu0 0.0
      %2248 = vmatpush1.xpose.msra.mxu0 %v2229
      %2249 = vmatprep.subr.mxu0 0.0
      %2250 = vmatpush1.xpose.msra.mxu0 %v2231
      %2251 = vmatprep.subr.mxu0 0.0
      %2252 = vmatpush1.xpose.msra.mxu0 %v2233
      %2253 = vmatprep.subr.mxu0 0.0
      %2254 = vmatpush1.xpose.msra.mxu0 %v2235
      %2255 = vmatprep.subr.mxu0 0.0
      %2256 = vmatpush1.xpose.msra.mxu0 %v2237
      %2257 = vmatprep.subr.mxu0 0.0
      %2258 = vmatpush1.xpose.msra.mxu0 %v2239
      %2259 = vmatprep.subr.mxu0 0.0
      %2260 = vmatpush1.xpose.msra.mxu0 %v2241
      %2261 = vmatprep.subr.mxu0 0.0
      %2262 = vmatpush1.xpose.msra.mxu0 %v2243
      %2263 = vmatprep.subr.mxu0 0.0
      %2264 = vmatpush1.xpose.msra.mxu0 0.0
      %2265 = vmatprep.subr.mxu0 0.0
      %2266 = vmatpush1.xpose.msra.mxu0 0.0
      %2267 = vmatprep.subr.mxu0 0.0
      %2268 = vmatpush1.xpose.msra.mxu0 0.0
      %2269 = vmatprep.subr.mxu0 0.0
      %2270 = vmatpush1.xpose.msra.mxu0 0.0
      %2271 = vmatprep.subr.mxu0 0.0
      %2272 = vmatpush1.xpose.msra.mxu0 0.0
      %2273 = vmatprep.subr.mxu0 0.0
      %2274 = vmatpush1.xpose.msra.mxu0 0.0
      %2275 = vmatprep.subr.mxu0 0.0
      %2276 = vmatpush1.xpose.msra.mxu0 0.0
      %2277 = vmatprep.subr.mxu0 0.0
      %2278 = vmatpush1.xpose.msra.mxu0 0.0
      %2279 = vmatprep.subr.mxu0 0.0
      %2280 = vmatpush1.xpose.msra.mxu0 0.0
      %2281 = vmatprep.subr.mxu0 0.0
      %2282 = vmatpush1.xpose.msra.mxu0 0.0
      %2283 = vmatprep.subr.mxu0 0.0
      %2284 = vmatpush1.xpose.msra.mxu0 0.0
      %2285 = vmatprep.subr.mxu0 0.0
      %2286 = vmatpush1.xpose.msra.mxu0 0.0
      %2287 = vmatprep.subr.mxu0 0.0
      %2288 = vmatpush1.xpose.msra.mxu0 0.0
      %2289 = vmatprep.subr.mxu0 0.0
      %2290 = vmatpush1.xpose.msra.mxu0 0.0
      %2291 = vmatprep.subr.mxu0 0.0
      %2292 = vmatpush1.xpose.msra.mxu0 0.0
      %2293 = vmatprep.subr.mxu0 0.0
      %2294 = vmatpush1.xpose.msra.mxu0 0.0
      %2295 = vmatprep.subr.mxu0 0.0
      %2296 = vmatpush1.xpose.msra.mxu0 0.0
      %2297 = vmatprep.subr.mxu0 0.0
      %2298 = vmatpush1.xpose.msra.mxu0 0.0
      %2299 = vmatprep.subr.mxu0 0.0
      %2300 = vmatpush1.xpose.msra.mxu0 0.0
      %2301 = vmatprep.subr.mxu0 0.0
      %2302 = vmatpush1.xpose.msra.mxu0 0.0
      %2303 = vmatprep.subr.mxu0 0.0
      %2304 = vmatpush1.xpose.msra.mxu0 0.0
      %2305 = vmatprep.subr.mxu0 0.0
      %2306 = vmatpush1.xpose.msra.mxu0 0.0
      %2307 = vmatprep.subr.mxu0 0.0
      %2308 = vmatpush1.xpose.msra.mxu0 0.0
      %2309 = vmatprep.mubr.f32.mxu0 0.0
      %2310 = vmatmul.mubr.f32.gmra.mrb[0].mxu0 %v2209
      %v2311 = vpop.f32.mrb[0].mxu0
      %v2312 = vadd.f32 %v545, %v2311
      %v2313 = vpop.f32.mrb[0].mxu0
      %2314 = vmatprep.mubr.f32.mxu0 0.0
      %2315 = vmatmul.mubr.f32.gmra.mrb[0].mxu0 %v2211
      %v2316 = vpop.f32.mrb[0].mxu0
      %v2317 = vadd.f32 %v546, %v2316
      %v2318 = vpop.f32.mrb[0].mxu0
      %2319 = vmatprep.mubr.f32.mxu0 0.0
      %2320 = vmatmul.mubr.f32.gmra.mrb[0].mxu0 %v2213
      %v2321 = vpop.f32.mrb[0].mxu0
      %v2322 = vadd.f32 %v547, %v2321
      %v2323 = vpop.f32.mrb[0].mxu0
      %2324 = vmatprep.mubr.f32.mxu0 0.0
      %2325 = vmatmul.mubr.f32.gmra.mrb[0].mxu0 %v2215
      %v2326 = vpop.f32.mrb[0].mxu0
      %v2327 = vadd.f32 %v548, %v2326
      %v2328 = vpop.f32.mrb[0].mxu0
      %2329 = vmatprep.mubr.f32.mxu0 0.0
      %2330 = vmatmul.mubr.f32.gmra.mrb[0].mxu0 %v2217
      %v2331 = vpop.f32.mrb[0].mxu0
      %v2332 = vadd.f32 %v549, %v2331
      %v2333 = vpop.f32.mrb[0].mxu0
      %2334 = vmatprep.mubr.f32.mxu0 0.0
      %2335 = vmatmul.mubr.f32.gmra.mrb[0].mxu0 %v2219
      %v2336 = vpop.f32.mrb[0].mxu0
      %v2337 = vadd.f32 %v550, %v2336
      %v2338 = vpop.f32.mrb[0].mxu0
      %2339 = vmatprep.mubr.f32.mxu0 0.0
      %2340 = vmatmul.mubr.f32.gmra.mrb[0].mxu0 %v2221
      %v2341 = vpop.f32.mrb[0].mxu0
      %v2342 = vadd.f32 %v551, %v2341
      %v2343 = vpop.f32.mrb[0].mxu0
      %2344 = vmatprep.mubr.f32.mxu0 0.0
      %2345 = vmatmul.mubr.f32.gmra.mrb[0].mxu0 %v2223
      %v2346 = vpop.f32.mrb[0].mxu0
      %v2347 = vadd.f32 %v552, %v2346
      %v2348 = vpop.f32.mrb[0].mxu0
      %2349 = vmatprep.mubr.f32.mxu0 0.0
      %2350 = vmatmul.mubr.f32.gmra.mrb[0].mxu0 %v2225
      %v2351 = vpop.f32.mrb[0].mxu0
      %v2352 = vadd.f32 %v553, %v2351
      %v2353 = vpop.f32.mrb[0].mxu0
      %2354 = vdwg.mxu0
      %v2355 = vsel %vm1019, %v2312, -inf
      %2356 = vmax.xlane.f32.xlu0 %v2355
      %v2357 = vpop.xlane.xlu0 %2356
      %v2358 = vsel %vm1019, %v2317, -inf
      %2359 = vmax.xlane.f32.xlu0 %v2358
      %v2360 = vpop.xlane.xlu0 %2359
      %v2361 = vsel %vm1019, %v2322, -inf
      %2362 = vmax.xlane.f32.xlu0 %v2361
      %v2363 = vpop.xlane.xlu0 %2362
      %v2364 = vsel %vm1019, %v2327, -inf
      %2365 = vmax.xlane.f32.xlu0 %v2364
      %v2366 = vpop.xlane.xlu0 %2365
      %v2367 = vsel %vm1019, %v2332, -inf
      %2368 = vmax.xlane.f32.xlu0 %v2367
      %v2369 = vpop.xlane.xlu0 %2368
      %v2370 = vsel %vm1019, %v2337, -inf
      %2371 = vmax.xlane.f32.xlu0 %v2370
      %v2372 = vpop.xlane.xlu0 %2371
      %v2373 = vsel %vm1019, %v2342, -inf
      %2374 = vmax.xlane.f32.xlu0 %v2373
      %v2375 = vpop.xlane.xlu0 %2374
      %v2376 = vsel %vm1019, %v2347, -inf
      %2377 = vmax.xlane.f32.xlu0 %v2376
      %v2378 = vpop.xlane.xlu0 %2377
      %v2379 = vsel %vm1019, %v2352, -inf
      %2380 = vmax.xlane.f32.xlu0 %v2379
      %v2381 = vpop.xlane.xlu0 %2380
      %v2382 = vsub.f32 %v2312, %v2357
      %v2383 = vsub.f32 %v2317, %v2360
      %v2384 = vsub.f32 %v2322, %v2363
      %v2385 = vsub.f32 %v2327, %v2366
      %v2386 = vsub.f32 %v2332, %v2369
      %v2387 = vsub.f32 %v2337, %v2372
      %v2388 = vsub.f32 %v2342, %v2375
      %v2389 = vsub.f32 %v2347, %v2378
      %v2390 = vsub.f32 %v2352, %v2381
      %v2391 = vmul.f32 %v2382, 1.442695
      %v2392 = vpow.pop %v2391
      %v2393 = vmul.f32 %v2383, 1.442695
      %v2394 = vpow.pop %v2393
      %v2395 = vmul.f32 %v2384, 1.442695
      %v2396 = vpow.pop %v2395
      %v2397 = vmul.f32 %v2385, 1.442695
      %v2398 = vpow.pop %v2397
      %v2399 = vmul.f32 %v2386, 1.442695
      %v2400 = vpow.pop %v2399
      %v2401 = vmul.f32 %v2387, 1.442695
      %v2402 = vpow.pop %v2401
      %v2403 = vmul.f32 %v2388, 1.442695
      %v2404 = vpow.pop %v2403
      %v2405 = vmul.f32 %v2389, 1.442695
      %v2406 = vpow.pop %v2405
      %v2407 = vmul.f32 %v2390, 1.442695
      %v2408 = vpow.pop %v2407
      %v2409 = vsel %vm1019, %v2392, 0.0
      %2410 = vadd.xlane.f32.xlu0 %v2409
      %v2411 = vpop.xlane.xlu0 %2410
      %v2412 = vsel %vm1019, %v2394, 0.0
      %2413 = vadd.xlane.f32.xlu0 %v2412
      %v2414 = vpop.xlane.xlu0 %2413
      %v2415 = vsel %vm1019, %v2396, 0.0
      %2416 = vadd.xlane.f32.xlu0 %v2415
      %v2417 = vpop.xlane.xlu0 %2416
      %v2418 = vsel %vm1019, %v2398, 0.0
      %2419 = vadd.xlane.f32.xlu0 %v2418
      %v2420 = vpop.xlane.xlu0 %2419
      %v2421 = vsel %vm1019, %v2400, 0.0
      %2422 = vadd.xlane.f32.xlu0 %v2421
      %v2423 = vpop.xlane.xlu0 %2422
      %v2424 = vsel %vm1019, %v2402, 0.0
      %2425 = vadd.xlane.f32.xlu0 %v2424
      %v2426 = vpop.xlane.xlu0 %2425
      %v2427 = vsel %vm1019, %v2404, 0.0
      %2428 = vadd.xlane.f32.xlu0 %v2427
      %v2429 = vpop.xlane.xlu0 %2428
      %v2430 = vsel %vm1019, %v2406, 0.0
      %2431 = vadd.xlane.f32.xlu0 %v2430
      %v2432 = vpop.xlane.xlu0 %2431
      %v2433 = vsel %vm1019, %v2408, 0.0
      %2434 = vadd.xlane.f32.xlu0 %v2433
      %v2435 = vpop.xlane.xlu0 %2434
      %v2436 = vrcp.pop %v2411
      %v2437 = vrcp.pop %v2414
      %v2438 = vrcp.pop %v2417
      %v2439 = vrcp.pop %v2420
      %v2440 = vrcp.pop %v2423
      %v2441 = vrcp.pop %v2426
      %v2442 = vrcp.pop %v2429
      %v2443 = vrcp.pop %v2432
      %v2444 = vrcp.pop %v2435
      %v2445 = vmul.f32 %v2392, %v2436
      %v2446 = vmul.f32 %v2394, %v2437
      %v2447 = vmul.f32 %v2396, %v2438
      %v2448 = vmul.f32 %v2398, %v2439
      %v2449 = vmul.f32 %v2400, %v2440
      %v2450 = vmul.f32 %v2402, %v2441
      %v2451 = vmul.f32 %v2404, %v2442
      %v2452 = vmul.f32 %v2406, %v2443
      %v2453 = vmul.f32 %v2408, %v2444
      %2454 = vrot.lane.b32.xlu0 %v802, 40
      %v2455 = vpop.permute.xlu0 %2454
      %2456 = vrot.lane.b32.xlu0 %v807, 40
      %v2457 = vpop.permute.xlu0 %2456
      %2458 = vrot.lane.b32.xlu0 %v812, 40
      %v2459 = vpop.permute.xlu0 %2458
      %2460 = vrot.lane.b32.xlu0 %v817, 40
      %v2461 = vpop.permute.xlu0 %2460
      %2462 = vrot.lane.b32.xlu0 %v822, 40
      %v2463 = vpop.permute.xlu0 %2462
      %2464 = vrot.lane.b32.xlu0 %v827, 40
      %v2465 = vpop.permute.xlu0 %2464
      %2466 = vrot.lane.b32.xlu0 %v832, 40
      %v2467 = vpop.permute.xlu0 %2466
      %2468 = vrot.lane.b32.xlu0 %v837, 40
      %v2469 = vpop.permute.xlu0 %2468
      %2470 = vrot.lane.b32.xlu0 %v842, 40
      %v2471 = vpop.permute.xlu0 %2470
      %v2482 = vsel %vm1019, %v2445, 0
      %v2485 = vsel %vm1019, %v2446, 0
      %v2488 = vsel %vm1019, %v2447, 0
      %v2491 = vsel %vm1019, %v2448, 0
      %v2494 = vsel %vm1019, %v2449, 0
      %v2497 = vsel %vm1019, %v2450, 0
      %v2500 = vsel %vm1019, %v2451, 0
      %v2503 = vsel %vm1019, %v2452, 0
      %v2506 = vsel %vm1019, %v2453, 0
      %2508 = vmatprep.subr.mxu0 0.0
      %2509 = vmatpush1.msra.mxu0 %v2455
      %2510 = vmatprep.subr.mxu0 0.0
      %2511 = vmatpush1.msra.mxu0 %v2457
      %2512 = vmatprep.subr.mxu0 0.0
      %2513 = vmatpush1.msra.mxu0 %v2459
      %2514 = vmatprep.subr.mxu0 0.0
      %2515 = vmatpush1.msra.mxu0 %v2461
      %2516 = vmatprep.subr.mxu0 0.0
      %2517 = vmatpush1.msra.mxu0 %v2463
      %2518 = vmatprep.subr.mxu0 0.0
      %2519 = vmatpush1.msra.mxu0 %v2465
      %2520 = vmatprep.subr.mxu0 0.0
      %2521 = vmatpush1.msra.mxu0 %v2467
      %2522 = vmatprep.subr.mxu0 0.0
      %2523 = vmatpush1.msra.mxu0 %v2469
      %2524 = vmatprep.subr.mxu0 0.0
      %2525 = vmatpush1.msra.mxu0 %v2471
      %2526 = vmatprep.subr.mxu0 0.0
      %2527 = vmatpush1.msra.mxu0 0.0
      %2528 = vmatprep.subr.mxu0 0.0
      %2529 = vmatpush1.msra.mxu0 0.0
      %2530 = vmatprep.subr.mxu0 0.0
      %2531 = vmatpush1.msra.mxu0 0.0
      %2532 = vmatprep.subr.mxu0 0.0
      %2533 = vmatpush1.msra.mxu0 0.0
      %2534 = vmatprep.subr.mxu0 0.0
      %2535 = vmatpush1.msra.mxu0 0.0
      %2536 = vmatprep.subr.mxu0 0.0
      %2537 = vmatpush1.msra.mxu0 0.0
      %2538 = vmatprep.subr.mxu0 0.0
      %2539 = vmatpush1.msra.mxu0 0.0
      %2540 = vmatprep.subr.mxu0 0.0
      %2541 = vmatpush1.msra.mxu0 0.0
      %2542 = vmatprep.subr.mxu0 0.0
      %2543 = vmatpush1.msra.mxu0 0.0
      %2544 = vmatprep.subr.mxu0 0.0
      %2545 = vmatpush1.msra.mxu0 0.0
      %2546 = vmatprep.subr.mxu0 0.0
      %2547 = vmatpush1.msra.mxu0 0.0
      %2548 = vmatprep.subr.mxu0 0.0
      %2549 = vmatpush1.msra.mxu0 0.0
      %2550 = vmatprep.subr.mxu0 0.0
      %2551 = vmatpush1.msra.mxu0 0.0
      %2552 = vmatprep.subr.mxu0 0.0
      %2553 = vmatpush1.msra.mxu0 0.0
      %2554 = vmatprep.subr.mxu0 0.0
      %2555 = vmatpush1.msra.mxu0 0.0
      %2556 = vmatprep.subr.mxu0 0.0
      %2557 = vmatpush1.msra.mxu0 0.0
      %2558 = vmatprep.subr.mxu0 0.0
      %2559 = vmatpush1.msra.mxu0 0.0
      %2560 = vmatprep.subr.mxu0 0.0
      %2561 = vmatpush1.msra.mxu0 0.0
      %2562 = vmatprep.subr.mxu0 0.0
      %2563 = vmatpush1.msra.mxu0 0.0
      %2564 = vmatprep.subr.mxu0 0.0
      %2565 = vmatpush1.msra.mxu0 0.0
      %2566 = vmatprep.subr.mxu0 0.0
      %2567 = vmatpush1.msra.mxu0 0.0
      %2568 = vmatprep.subr.mxu0 0.0
      %2569 = vmatpush1.msra.mxu0 0.0
      %2570 = vmatprep.subr.mxu0 0.0
      %2571 = vmatpush1.msra.mxu0 0.0
      %2572 = vmatprep.mubr.f32.mxu0 0.0
      %2573 = vmatmul.mubr.f32.gmra.mrb[0].mxu0 %v2482
      %v2574 = vpop.f32.mrb[0].mxu0
      %v2575 = vadd.f32 0.0, %v2574
      %v2576 = vpop.f32.mrb[0].mxu0
      %2577 = vmatprep.mubr.f32.mxu0 0.0
      %2578 = vmatmul.mubr.f32.gmra.mrb[0].mxu0 %v2485
      %v2579 = vpop.f32.mrb[0].mxu0
      %v2580 = vadd.f32 0.0, %v2579
      %v2581 = vpop.f32.mrb[0].mxu0
      %2582 = vmatprep.mubr.f32.mxu0 0.0
      %2583 = vmatmul.mubr.f32.gmra.mrb[0].mxu0 %v2488
      %v2584 = vpop.f32.mrb[0].mxu0
      %v2585 = vadd.f32 0.0, %v2584
      %v2586 = vpop.f32.mrb[0].mxu0
      %2587 = vmatprep.mubr.f32.mxu0 0.0
      %2588 = vmatmul.mubr.f32.gmra.mrb[0].mxu0 %v2491
      %v2589 = vpop.f32.mrb[0].mxu0
      %v2590 = vadd.f32 0.0, %v2589
      %v2591 = vpop.f32.mrb[0].mxu0
      %2592 = vmatprep.mubr.f32.mxu0 0.0
      %2593 = vmatmul.mubr.f32.gmra.mrb[0].mxu0 %v2494
      %v2594 = vpop.f32.mrb[0].mxu0
      %v2595 = vadd.f32 0.0, %v2594
      %v2596 = vpop.f32.mrb[0].mxu0
      %2597 = vmatprep.mubr.f32.mxu0 0.0
      %2598 = vmatmul.mubr.f32.gmra.mrb[0].mxu0 %v2497
      %v2599 = vpop.f32.mrb[0].mxu0
      %v2600 = vadd.f32 0.0, %v2599
      %v2601 = vpop.f32.mrb[0].mxu0
      %2602 = vmatprep.mubr.f32.mxu0 0.0
      %2603 = vmatmul.mubr.f32.gmra.mrb[0].mxu0 %v2500
      %v2604 = vpop.f32.mrb[0].mxu0
      %v2605 = vadd.f32 0.0, %v2604
      %v2606 = vpop.f32.mrb[0].mxu0
      %2607 = vmatprep.mubr.f32.mxu0 0.0
      %2608 = vmatmul.mubr.f32.gmra.mrb[0].mxu0 %v2503
      %v2609 = vpop.f32.mrb[0].mxu0
      %v2610 = vadd.f32 0.0, %v2609
      %v2611 = vpop.f32.mrb[0].mxu0
      %2612 = vmatprep.mubr.f32.mxu0 0.0
      %2613 = vmatmul.mubr.f32.gmra.mrb[0].mxu0 %v2506
      %v2614 = vpop.f32.mrb[0].mxu0
      %v2615 = vadd.f32 0.0, %v2614
      %v2616 = vpop.f32.mrb[0].mxu0
      %2617 = vdwg.mxu0
      %2627 = vrot.lane.b32.xlu0 %v1685, 8
      %v2628 = vpop.permute.xlu0 %2627
      %2629 = vrot.lane.b32.xlu0 %v1690, 8
      %v2630 = vpop.permute.xlu0 %2629
      %2631 = vrot.lane.b32.xlu0 %v1695, 8
      %v2632 = vpop.permute.xlu0 %2631
      %2633 = vrot.lane.b32.xlu0 %v1700, 8
      %v2634 = vpop.permute.xlu0 %2633
      %2635 = vrot.lane.b32.xlu0 %v1705, 8
      %v2636 = vpop.permute.xlu0 %2635
      %2637 = vrot.lane.b32.xlu0 %v1710, 8
      %v2638 = vpop.permute.xlu0 %2637
      %2639 = vrot.lane.b32.xlu0 %v1715, 8
      %v2640 = vpop.permute.xlu0 %2639
      %2641 = vrot.lane.b32.xlu0 %v1720, 8
      %v2642 = vpop.permute.xlu0 %2641
      %2643 = vrot.lane.b32.xlu0 %v1725, 8
      %v2644 = vpop.permute.xlu0 %2643
      %2663 = vrot.lane.b32.xlu0 %v2130, 16
      %v2664 = vpop.permute.xlu0 %2663
      %2665 = vrot.lane.b32.xlu0 %v2135, 16
      %v2666 = vpop.permute.xlu0 %2665
      %2667 = vrot.lane.b32.xlu0 %v2140, 16
      %v2668 = vpop.permute.xlu0 %2667
      %2669 = vrot.lane.b32.xlu0 %v2145, 16
      %v2670 = vpop.permute.xlu0 %2669
      %2671 = vrot.lane.b32.xlu0 %v2150, 16
      %v2672 = vpop.permute.xlu0 %2671
      %2673 = vrot.lane.b32.xlu0 %v2155, 16
      %v2674 = vpop.permute.xlu0 %2673
      %2675 = vrot.lane.b32.xlu0 %v2160, 16
      %v2676 = vpop.permute.xlu0 %2675
      %2677 = vrot.lane.b32.xlu0 %v2165, 16
      %v2678 = vpop.permute.xlu0 %2677
      %2679 = vrot.lane.b32.xlu0 %v2170, 16
      %v2680 = vpop.permute.xlu0 %2679
      %2699 = vrot.lane.b32.xlu0 %v2575, 24
      %v2700 = vpop.permute.xlu0 %2699
      %2701 = vrot.lane.b32.xlu0 %v2580, 24
      %v2702 = vpop.permute.xlu0 %2701
      %2703 = vrot.lane.b32.xlu0 %v2585, 24
      %v2704 = vpop.permute.xlu0 %2703
      %2705 = vrot.lane.b32.xlu0 %v2590, 24
      %v2706 = vpop.permute.xlu0 %2705
      %2707 = vrot.lane.b32.xlu0 %v2595, 24
      %v2708 = vpop.permute.xlu0 %2707
      %2709 = vrot.lane.b32.xlu0 %v2600, 24
      %v2710 = vpop.permute.xlu0 %2709
      %2711 = vrot.lane.b32.xlu0 %v2605, 24
      %v2712 = vpop.permute.xlu0 %2711
      %2713 = vrot.lane.b32.xlu0 %v2610, 24
      %v2714 = vpop.permute.xlu0 %2713
      %2715 = vrot.lane.b32.xlu0 %v2615, 24
      %v2716 = vpop.permute.xlu0 %2715
      %v2726 = vsel %vm872, %v1240, %v2628
      %v2727 = vsel %vm872, %v1245, %v2630
      %v2728 = vsel %vm872, %v1250, %v2632
      %v2729 = vsel %vm872, %v1255, %v2634
      %v2730 = vsel %vm872, %v1260, %v2636
      %v2731 = vsel %vm872, %v1265, %v2638
      %v2732 = vsel %vm872, %v1270, %v2640
      %v2733 = vsel %vm872, %v1275, %v2642
      %v2734 = vsel %vm872, %v1280, %v2644
      %v2735 = vsel %vm407, %v2726, %v2664
      %v2736 = vsel %vm407, %v2727, %v2666
      %v2737 = vsel %vm407, %v2728, %v2668
      %v2738 = vsel %vm407, %v2729, %v2670
      %v2739 = vsel %vm407, %v2730, %v2672
      %v2740 = vsel %vm407, %v2731, %v2674
      %v2741 = vsel %vm407, %v2732, %v2676
      %v2742 = vsel %vm407, %v2733, %v2678
      %v2743 = vsel %vm407, %v2734, %v2680
      %vm2744 = vcmask 195584
      %v2745 = vsel %vm2744, %v2735, %v2700
      %v2746 = vsel %vm2744, %v2736, %v2702
      %v2747 = vsel %vm2744, %v2737, %v2704
      %v2748 = vsel %vm2744, %v2738, %v2706
      %v2749 = vsel %vm2744, %v2739, %v2708
      %v2750 = vsel %vm2744, %v2740, %v2710
      %v2751 = vsel %vm2744, %v2741, %v2712
      %v2752 = vsel %vm2744, %v2742, %v2714
      %v2753 = vsel %vm2744, %v2743, %v2716
      %v2754 = vld [vmem:[%s6] sm:$0xff]
      %v2755 = vld [vmem:[%s6 + $0x8] sm:$0xff]
      %v2756 = vld [vmem:[%s6 + $0x10] sm:$0xff]
      %v2757 = vld [vmem:[%s6 + $0x18] sm:$0xff]
      %v2759 = vsel %vm555, %v2745, 0
      %v2762 = vsel %vm555, %v2746, 0
      %v2765 = vsel %vm555, %v2747, 0
      %v2768 = vsel %vm555, %v2748, 0
      %v2771 = vsel %vm555, %v2749, 0
      %v2774 = vsel %vm555, %v2750, 0
      %v2777 = vsel %vm555, %v2751, 0
      %v2780 = vsel %vm555, %v2752, 0
      %v2783 = vsel %vm555, %v2753, 0
      %2785 = vmatprep.subr.mxu0 0.0
      %2786 = vmatpush1.msra.mxu0 %v2754
      %2787 = vmatprep.subr.mxu0 0.0
      %2788 = vmatpush1.msra.mxu0 %v2755
      %2789 = vmatprep.subr.mxu0 0.0
      %2790 = vmatpush1.msra.mxu0 %v2756
      %2791 = vmatprep.subr.mxu0 0.0
      %2792 = vmatpush1.msra.mxu0 %v2757
      %2793 = vmatprep.subr.mxu0 0.0
      %2794 = vmatpush1.msra.mxu0 0.0
      %2795 = vmatprep.subr.mxu0 0.0
      %2796 = vmatpush1.msra.mxu0 0.0
      %2797 = vmatprep.subr.mxu0 0.0
      %2798 = vmatpush1.msra.mxu0 0.0
      %2799 = vmatprep.subr.mxu0 0.0
      %2800 = vmatpush1.msra.mxu0 0.0
      %2801 = vmatprep.subr.mxu0 0.0
      %2802 = vmatpush1.msra.mxu0 0.0
      %2803 = vmatprep.subr.mxu0 0.0
      %2804 = vmatpush1.msra.mxu0 0.0
      %2805 = vmatprep.subr.mxu0 0.0
      %2806 = vmatpush1.msra.mxu0 0.0
      %2807 = vmatprep.subr.mxu0 0.0
      %2808 = vmatpush1.msra.mxu0 0.0
      %2809 = vmatprep.subr.mxu0 0.0
      %2810 = vmatpush1.msra.mxu0 0.0
      %2811 = vmatprep.subr.mxu0 0.0
      %2812 = vmatpush1.msra.mxu0 0.0
      %2813 = vmatprep.subr.mxu0 0.0
      %2814 = vmatpush1.msra.mxu0 0.0
      %2815 = vmatprep.subr.mxu0 0.0
      %2816 = vmatpush1.msra.mxu0 0.0
      %2817 = vmatprep.subr.mxu0 0.0
      %2818 = vmatpush1.msra.mxu0 0.0
      %2819 = vmatprep.subr.mxu0 0.0
      %2820 = vmatpush1.msra.mxu0 0.0
      %2821 = vmatprep.subr.mxu0 0.0
      %2822 = vmatpush1.msra.mxu0 0.0
      %2823 = vmatprep.subr.mxu0 0.0
      %2824 = vmatpush1.msra.mxu0 0.0
      %2825 = vmatprep.subr.mxu0 0.0
      %2826 = vmatpush1.msra.mxu0 0.0
      %2827 = vmatprep.subr.mxu0 0.0
      %2828 = vmatpush1.msra.mxu0 0.0
      %2829 = vmatprep.subr.mxu0 0.0
      %2830 = vmatpush1.msra.mxu0 0.0
      %2831 = vmatprep.subr.mxu0 0.0
      %2832 = vmatpush1.msra.mxu0 0.0
      %2833 = vmatprep.subr.mxu0 0.0
      %2834 = vmatpush1.msra.mxu0 0.0
      %2835 = vmatprep.subr.mxu0 0.0
      %2836 = vmatpush1.msra.mxu0 0.0
      %2837 = vmatprep.subr.mxu0 0.0
      %2838 = vmatpush1.msra.mxu0 0.0
      %2839 = vmatprep.subr.mxu0 0.0
      %2840 = vmatpush1.msra.mxu0 0.0
      %2841 = vmatprep.subr.mxu0 0.0
      %2842 = vmatpush1.msra.mxu0 0.0
      %2843 = vmatprep.subr.mxu0 0.0
      %2844 = vmatpush1.msra.mxu0 0.0
      %2845 = vmatprep.subr.mxu0 0.0
      %2846 = vmatpush1.msra.mxu0 0.0
      %2847 = vmatprep.subr.mxu0 0.0
      %2848 = vmatpush1.msra.mxu0 0.0
      %2849 = vmatprep.mubr.f32.mxu0 0.0
      %2850 = vmatmul.mubr.f32.gmra.mrb[0].mxu0 %v2759
      %v2851 = vpop.f32.mrb[0].mxu0
      %v2852 = vadd.f32 0.0, %v2851
      %v2853 = vpop.f32.mrb[0].mxu0
      %2854 = vmatprep.mubr.f32.mxu0 0.0
      %2855 = vmatmul.mubr.f32.gmra.mrb[0].mxu0 %v2762
      %v2856 = vpop.f32.mrb[0].mxu0
      %v2857 = vadd.f32 0.0, %v2856
      %v2858 = vpop.f32.mrb[0].mxu0
      %2859 = vmatprep.mubr.f32.mxu0 0.0
      %2860 = vmatmul.mubr.f32.gmra.mrb[0].mxu0 %v2765
      %v2861 = vpop.f32.mrb[0].mxu0
      %v2862 = vadd.f32 0.0, %v2861
      %v2863 = vpop.f32.mrb[0].mxu0
      %2864 = vmatprep.mubr.f32.mxu0 0.0
      %2865 = vmatmul.mubr.f32.gmra.mrb[0].mxu0 %v2768
      %v2866 = vpop.f32.mrb[0].mxu0
      %v2867 = vadd.f32 0.0, %v2866
      %v2868 = vpop.f32.mrb[0].mxu0
      %2869 = vmatprep.mubr.f32.mxu0 0.0
      %2870 = vmatmul.mubr.f32.gmra.mrb[0].mxu0 %v2771
      %v2871 = vpop.f32.mrb[0].mxu0
      %v2872 = vadd.f32 0.0, %v2871
      %v2873 = vpop.f32.mrb[0].mxu0
      %2874 = vmatprep.mubr.f32.mxu0 0.0
      %2875 = vmatmul.mubr.f32.gmra.mrb[0].mxu0 %v2774
      %v2876 = vpop.f32.mrb[0].mxu0
      %v2877 = vadd.f32 0.0, %v2876
      %v2878 = vpop.f32.mrb[0].mxu0
      %2879 = vmatprep.mubr.f32.mxu0 0.0
      %2880 = vmatmul.mubr.f32.gmra.mrb[0].mxu0 %v2777
      %v2881 = vpop.f32.mrb[0].mxu0
      %v2882 = vadd.f32 0.0, %v2881
      %v2883 = vpop.f32.mrb[0].mxu0
      %2884 = vmatprep.mubr.f32.mxu0 0.0
      %2885 = vmatmul.mubr.f32.gmra.mrb[0].mxu0 %v2780
      %v2886 = vpop.f32.mrb[0].mxu0
      %v2887 = vadd.f32 0.0, %v2886
      %v2888 = vpop.f32.mrb[0].mxu0
      %2889 = vmatprep.mubr.f32.mxu0 0.0
      %2890 = vmatmul.mubr.f32.gmra.mrb[0].mxu0 %v2783
      %v2891 = vpop.f32.mrb[0].mxu0
      %v2892 = vadd.f32 0.0, %v2891
      %v2893 = vpop.f32.mrb[0].mxu0
      %2894 = vdwg.mxu0
      %v2895 = vadd.f32 %v502, %v2852
      %v2896 = vadd.f32 %v507, %v2857
      %v2897 = vadd.f32 %v512, %v2862
      %v2898 = vadd.f32 %v517, %v2867
      %v2899 = vadd.f32 %v522, %v2872
      %v2900 = vadd.f32 %v527, %v2877
      %v2901 = vadd.f32 %v532, %v2882
      %v2902 = vadd.f32 %v537, %v2887
      %v2903 = vadd.f32 %v542, %v2892
      %v2904 = vlaneseq
      %v2905 = vshrl.u32 %v2904, 7
      %v2906 = vsub.s32 3, %v2905
      %v2907 = vrot.slane %v554, %v2906
      %v2908 = vadd.f32 %v2895, %v2907
      %v2909 = vadd.f32 %v2896, %v2907
      %v2910 = vadd.f32 %v2897, %v2907
      %v2911 = vadd.f32 %v2898, %v2907
      %v2912 = vadd.f32 %v2899, %v2907
      %v2913 = vadd.f32 %v2900, %v2907
      %v2914 = vadd.f32 %v2901, %v2907
      %v2915 = vadd.f32 %v2902, %v2907
      %v2916 = vadd.f32 %v2903, %v2907
      %v2917 = vsel %vm555, %v2908, 0.0
      %2918 = vadd.xlane.f32.xlu0 %v2917
      %v2919 = vpop.xlane.xlu0 %2918
      %v2920 = vsel %vm555, %v2909, 0.0
      %2921 = vadd.xlane.f32.xlu0 %v2920
      %v2922 = vpop.xlane.xlu0 %2921
      %v2923 = vsel %vm555, %v2910, 0.0
      %2924 = vadd.xlane.f32.xlu0 %v2923
      %v2925 = vpop.xlane.xlu0 %2924
      %v2926 = vsel %vm555, %v2911, 0.0
      %2927 = vadd.xlane.f32.xlu0 %v2926
      %v2928 = vpop.xlane.xlu0 %2927
      %v2929 = vsel %vm555, %v2912, 0.0
      %2930 = vadd.xlane.f32.xlu0 %v2929
      %v2931 = vpop.xlane.xlu0 %2930
      %v2932 = vsel %vm555, %v2913, 0.0
      %2933 = vadd.xlane.f32.xlu0 %v2932
      %v2934 = vpop.xlane.xlu0 %2933
      %v2935 = vsel %vm555, %v2914, 0.0
      %2936 = vadd.xlane.f32.xlu0 %v2935
      %v2937 = vpop.xlane.xlu0 %2936
      %v2938 = vsel %vm555, %v2915, 0.0
      %2939 = vadd.xlane.f32.xlu0 %v2938
      %v2940 = vpop.xlane.xlu0 %2939
      %v2941 = vsel %vm555, %v2916, 0.0
      %2942 = vadd.xlane.f32.xlu0 %v2941
      %v2943 = vpop.xlane.xlu0 %2942
      %v2944 = vmul.f32 %v2919, %v583
      %v2945 = vmul.f32 %v2922, %v583
      %v2946 = vmul.f32 %v2925, %v583
      %v2947 = vmul.f32 %v2928, %v583
      %v2948 = vmul.f32 %v2931, %v583
      %v2949 = vmul.f32 %v2934, %v583
      %v2950 = vmul.f32 %v2937, %v583
      %v2951 = vmul.f32 %v2940, %v583
      %v2952 = vmul.f32 %v2943, %v583
      %v2953 = vsub.f32 %v2908, %v2944
      %v2954 = vsub.f32 %v2909, %v2945
      %v2955 = vsub.f32 %v2910, %v2946
      %v2956 = vsub.f32 %v2911, %v2947
      %v2957 = vsub.f32 %v2912, %v2948
      %v2958 = vsub.f32 %v2913, %v2949
      %v2959 = vsub.f32 %v2914, %v2950
      %v2960 = vsub.f32 %v2915, %v2951
      %v2961 = vsub.f32 %v2916, %v2952
      %v2962 = vmul.f32 %v2953, %v2953
      %v2963 = vmul.f32 %v2954, %v2954
      %v2964 = vmul.f32 %v2955, %v2955
      %v2965 = vmul.f32 %v2956, %v2956
      %v2966 = vmul.f32 %v2957, %v2957
      %v2967 = vmul.f32 %v2958, %v2958
      %v2968 = vmul.f32 %v2959, %v2959
      %v2969 = vmul.f32 %v2960, %v2960
      %v2970 = vmul.f32 %v2961, %v2961
      %v2971 = vsel %vm555, %v2962, 0.0
      %2972 = vadd.xlane.f32.xlu0 %v2971
      %v2973 = vpop.xlane.xlu0 %2972
      %v2974 = vsel %vm555, %v2963, 0.0
      %2975 = vadd.xlane.f32.xlu0 %v2974
      %v2976 = vpop.xlane.xlu0 %2975
      %v2977 = vsel %vm555, %v2964, 0.0
      %2978 = vadd.xlane.f32.xlu0 %v2977
      %v2979 = vpop.xlane.xlu0 %2978
      %v2980 = vsel %vm555, %v2965, 0.0
      %2981 = vadd.xlane.f32.xlu0 %v2980
      %v2982 = vpop.xlane.xlu0 %2981
      %v2983 = vsel %vm555, %v2966, 0.0
      %2984 = vadd.xlane.f32.xlu0 %v2983
      %v2985 = vpop.xlane.xlu0 %2984
      %v2986 = vsel %vm555, %v2967, 0.0
      %2987 = vadd.xlane.f32.xlu0 %v2986
      %v2988 = vpop.xlane.xlu0 %2987
      %v2989 = vsel %vm555, %v2968, 0.0
      %2990 = vadd.xlane.f32.xlu0 %v2989
      %v2991 = vpop.xlane.xlu0 %2990
      %v2992 = vsel %vm555, %v2969, 0.0
      %2993 = vadd.xlane.f32.xlu0 %v2992
      %v2994 = vpop.xlane.xlu0 %2993
      %v2995 = vsel %vm555, %v2970, 0.0
      %2996 = vadd.xlane.f32.xlu0 %v2995
      %v2997 = vpop.xlane.xlu0 %2996
      %v2998 = vmul.f32 %v2973, %v583
      %v2999 = vmul.f32 %v2976, %v583
      %v3000 = vmul.f32 %v2979, %v583
      %v3001 = vmul.f32 %v2982, %v583
      %v3002 = vmul.f32 %v2985, %v583
      %v3003 = vmul.f32 %v2988, %v583
      %v3004 = vmul.f32 %v2991, %v583
      %v3005 = vmul.f32 %v2994, %v583
      %v3006 = vmul.f32 %v2997, %v583
      %v3007 = vadd.f32 %v2998, 1e-05
      %v3008 = vadd.f32 %v2999, 1e-05
      %v3009 = vadd.f32 %v3000, 1e-05
      %v3010 = vadd.f32 %v3001, 1e-05
      %v3011 = vadd.f32 %v3002, 1e-05
      %v3012 = vadd.f32 %v3003, 1e-05
      %v3013 = vadd.f32 %v3004, 1e-05
      %v3014 = vadd.f32 %v3005, 1e-05
      %v3015 = vadd.f32 %v3006, 1e-05
      %v3016 = vrsqrt.pop %v3007
      %v3017 = vrsqrt.pop %v3008
      %v3018 = vrsqrt.pop %v3009
      %v3019 = vrsqrt.pop %v3010
      %v3020 = vrsqrt.pop %v3011
      %v3021 = vrsqrt.pop %v3012
      %v3022 = vrsqrt.pop %v3013
      %v3023 = vrsqrt.pop %v3014
      %v3024 = vrsqrt.pop %v3015
      %v3025 = vmul.f32 %v2953, %v3016
      %v3026 = vmul.f32 %v2954, %v3017
      %v3027 = vmul.f32 %v2955, %v3018
      %v3028 = vmul.f32 %v2956, %v3019
      %v3029 = vmul.f32 %v2957, %v3020
      %v3030 = vmul.f32 %v2958, %v3021
      %v3031 = vmul.f32 %v2959, %v3022
      %v3032 = vmul.f32 %v2960, %v3023
      %v3033 = vmul.f32 %v2961, %v3024
      %v3034 = vlaneseq
      %v3035 = vshrl.u32 %v3034, 7
      %v3036 = vsub.s32 4, %v3035
      %v3037 = vrot.slane %v554, %v3036
      %v3038 = vmul.f32 %v3025, %v3037
      %v3039 = vmul.f32 %v3026, %v3037
      %v3040 = vmul.f32 %v3027, %v3037
      %v3041 = vmul.f32 %v3028, %v3037
      %v3042 = vmul.f32 %v3029, %v3037
      %v3043 = vmul.f32 %v3030, %v3037
      %v3044 = vmul.f32 %v3031, %v3037
      %v3045 = vmul.f32 %v3032, %v3037
      %v3046 = vmul.f32 %v3033, %v3037
      %v3047 = vlaneseq
      %v3048 = vshrl.u32 %v3047, 7
      %v3049 = vsub.s32 5, %v3048
      %v3050 = vrot.slane %v554, %v3049
      %v3051 = vadd.f32 %v3038, %v3050
      %v3052 = vadd.f32 %v3039, %v3050
      %v3053 = vadd.f32 %v3040, %v3050
      %v3054 = vadd.f32 %v3041, %v3050
      %v3055 = vadd.f32 %v3042, %v3050
      %v3056 = vadd.f32 %v3043, %v3050
      %v3057 = vadd.f32 %v3044, %v3050
      %v3058 = vadd.f32 %v3045, %v3050
      %v3059 = vadd.f32 %v3046, %v3050
      %v3060 = vld [vmem:[%s7] sm:$0xff]
      %v3061 = vld [vmem:[%s7 + $0x8] sm:$0xff]
      %v3062 = vld [vmem:[%s7 + $0x10] sm:$0xff]
      %v3063 = vld [vmem:[%s7 + $0x18] sm:$0xff]
      %v3064 = vlaneseq
      %v3065 = vshrl.u32 %v3064, 7
      %v3066 = vsub.s32 6, %v3065
      %v3067 = vrot.slane %v554, %v3066
      %v3069 = vsel %vm555, %v3051, 0
      %v3072 = vsel %vm555, %v3052, 0
      %v3075 = vsel %vm555, %v3053, 0
      %v3078 = vsel %vm555, %v3054, 0
      %v3081 = vsel %vm555, %v3055, 0
      %v3084 = vsel %vm555, %v3056, 0
      %v3087 = vsel %vm555, %v3057, 0
      %v3090 = vsel %vm555, %v3058, 0
      %v3093 = vsel %vm555, %v3059, 0
      %3095 = vmatprep.subr.mxu0 0.0
      %3096 = vmatpush1.msra.mxu0 %v3060
      %3097 = vmatprep.subr.mxu0 0.0
      %3098 = vmatpush1.msra.mxu0 %v3061
      %3099 = vmatprep.subr.mxu0 0.0
      %3100 = vmatpush1.msra.mxu0 %v3062
      %3101 = vmatprep.subr.mxu0 0.0
      %3102 = vmatpush1.msra.mxu0 %v3063
      %3103 = vmatprep.subr.mxu0 0.0
      %3104 = vmatpush1.msra.mxu0 0.0
      %3105 = vmatprep.subr.mxu0 0.0
      %3106 = vmatpush1.msra.mxu0 0.0
      %3107 = vmatprep.subr.mxu0 0.0
      %3108 = vmatpush1.msra.mxu0 0.0
      %3109 = vmatprep.subr.mxu0 0.0
      %3110 = vmatpush1.msra.mxu0 0.0
      %3111 = vmatprep.subr.mxu0 0.0
      %3112 = vmatpush1.msra.mxu0 0.0
      %3113 = vmatprep.subr.mxu0 0.0
      %3114 = vmatpush1.msra.mxu0 0.0
      %3115 = vmatprep.subr.mxu0 0.0
      %3116 = vmatpush1.msra.mxu0 0.0
      %3117 = vmatprep.subr.mxu0 0.0
      %3118 = vmatpush1.msra.mxu0 0.0
      %3119 = vmatprep.subr.mxu0 0.0
      %3120 = vmatpush1.msra.mxu0 0.0
      %3121 = vmatprep.subr.mxu0 0.0
      %3122 = vmatpush1.msra.mxu0 0.0
      %3123 = vmatprep.subr.mxu0 0.0
      %3124 = vmatpush1.msra.mxu0 0.0
      %3125 = vmatprep.subr.mxu0 0.0
      %3126 = vmatpush1.msra.mxu0 0.0
      %3127 = vmatprep.subr.mxu0 0.0
      %3128 = vmatpush1.msra.mxu0 0.0
      %3129 = vmatprep.subr.mxu0 0.0
      %3130 = vmatpush1.msra.mxu0 0.0
      %3131 = vmatprep.subr.mxu0 0.0
      %3132 = vmatpush1.msra.mxu0 0.0
      %3133 = vmatprep.subr.mxu0 0.0
      %3134 = vmatpush1.msra.mxu0 0.0
      %3135 = vmatprep.subr.mxu0 0.0
      %3136 = vmatpush1.msra.mxu0 0.0
      %3137 = vmatprep.subr.mxu0 0.0
      %3138 = vmatpush1.msra.mxu0 0.0
      %3139 = vmatprep.subr.mxu0 0.0
      %3140 = vmatpush1.msra.mxu0 0.0
      %3141 = vmatprep.subr.mxu0 0.0
      %3142 = vmatpush1.msra.mxu0 0.0
      %3143 = vmatprep.subr.mxu0 0.0
      %3144 = vmatpush1.msra.mxu0 0.0
      %3145 = vmatprep.subr.mxu0 0.0
      %3146 = vmatpush1.msra.mxu0 0.0
      %3147 = vmatprep.subr.mxu0 0.0
      %3148 = vmatpush1.msra.mxu0 0.0
      %3149 = vmatprep.subr.mxu0 0.0
      %3150 = vmatpush1.msra.mxu0 0.0
      %3151 = vmatprep.subr.mxu0 0.0
      %3152 = vmatpush1.msra.mxu0 0.0
      %3153 = vmatprep.subr.mxu0 0.0
      %3154 = vmatpush1.msra.mxu0 0.0
      %3155 = vmatprep.subr.mxu0 0.0
      %3156 = vmatpush1.msra.mxu0 0.0
      %3157 = vmatprep.subr.mxu0 0.0
      %3158 = vmatpush1.msra.mxu0 0.0
      %3159 = vmatprep.mubr.f32.mxu0 0.0
      %3160 = vmatmul.mubr.f32.gmra.mrb[0].mxu0 %v3069
      %v3161 = vpop.f32.mrb[0].mxu0
      %v3162 = vadd.f32 %v3067, %v3161
      %v3163 = vpop.f32.mrb[0].mxu0
      %3164 = vmatprep.mubr.f32.mxu0 0.0
      %3165 = vmatmul.mubr.f32.gmra.mrb[0].mxu0 %v3072
      %v3166 = vpop.f32.mrb[0].mxu0
      %v3167 = vadd.f32 %v3067, %v3166
      %v3168 = vpop.f32.mrb[0].mxu0
      %3169 = vmatprep.mubr.f32.mxu0 0.0
      %3170 = vmatmul.mubr.f32.gmra.mrb[0].mxu0 %v3075
      %v3171 = vpop.f32.mrb[0].mxu0
      %v3172 = vadd.f32 %v3067, %v3171
      %v3173 = vpop.f32.mrb[0].mxu0
      %3174 = vmatprep.mubr.f32.mxu0 0.0
      %3175 = vmatmul.mubr.f32.gmra.mrb[0].mxu0 %v3078
      %v3176 = vpop.f32.mrb[0].mxu0
      %v3177 = vadd.f32 %v3067, %v3176
      %v3178 = vpop.f32.mrb[0].mxu0
      %3179 = vmatprep.mubr.f32.mxu0 0.0
      %3180 = vmatmul.mubr.f32.gmra.mrb[0].mxu0 %v3081
      %v3181 = vpop.f32.mrb[0].mxu0
      %v3182 = vadd.f32 %v3067, %v3181
      %v3183 = vpop.f32.mrb[0].mxu0
      %3184 = vmatprep.mubr.f32.mxu0 0.0
      %3185 = vmatmul.mubr.f32.gmra.mrb[0].mxu0 %v3084
      %v3186 = vpop.f32.mrb[0].mxu0
      %v3187 = vadd.f32 %v3067, %v3186
      %v3188 = vpop.f32.mrb[0].mxu0
      %3189 = vmatprep.mubr.f32.mxu0 0.0
      %3190 = vmatmul.mubr.f32.gmra.mrb[0].mxu0 %v3087
      %v3191 = vpop.f32.mrb[0].mxu0
      %v3192 = vadd.f32 %v3067, %v3191
      %v3193 = vpop.f32.mrb[0].mxu0
      %3194 = vmatprep.mubr.f32.mxu0 0.0
      %3195 = vmatmul.mubr.f32.gmra.mrb[0].mxu0 %v3090
      %v3196 = vpop.f32.mrb[0].mxu0
      %v3197 = vadd.f32 %v3067, %v3196
      %v3198 = vpop.f32.mrb[0].mxu0
      %3199 = vmatprep.mubr.f32.mxu0 0.0
      %3200 = vmatmul.mubr.f32.gmra.mrb[0].mxu0 %v3093
      %v3201 = vpop.f32.mrb[0].mxu0
      %v3202 = vadd.f32 %v3067, %v3201
      %v3203 = vpop.f32.mrb[0].mxu0
      %3204 = vdwg.mxu0
      %v3205 = vmul.f32 %v3162, %v3162
      %v3206 = vmul.f32 %v3167, %v3167
      %v3207 = vmul.f32 %v3172, %v3172
      %v3208 = vmul.f32 %v3177, %v3177
      %v3209 = vmul.f32 %v3182, %v3182
      %v3210 = vmul.f32 %v3187, %v3187
      %v3211 = vmul.f32 %v3192, %v3192
      %v3212 = vmul.f32 %v3197, %v3197
      %v3213 = vmul.f32 %v3202, %v3202
      %v3214 = vmul.f32 %v3162, %v3205
      %v3215 = vmul.f32 %v3167, %v3206
      %v3216 = vmul.f32 %v3172, %v3207
      %v3217 = vmul.f32 %v3177, %v3208
      %v3218 = vmul.f32 %v3182, %v3209
      %v3219 = vmul.f32 %v3187, %v3210
      %v3220 = vmul.f32 %v3192, %v3211
      %v3221 = vmul.f32 %v3197, %v3212
      %v3222 = vmul.f32 %v3202, %v3213
      %v3223 = vmul.f32 %v3214, 0.044715
      %v3224 = vmul.f32 %v3215, 0.044715
      %v3225 = vmul.f32 %v3216, 0.044715
      %v3226 = vmul.f32 %v3217, 0.044715
      %v3227 = vmul.f32 %v3218, 0.044715
      %v3228 = vmul.f32 %v3219, 0.044715
      %v3229 = vmul.f32 %v3220, 0.044715
      %v3230 = vmul.f32 %v3221, 0.044715
      %v3231 = vmul.f32 %v3222, 0.044715
      %v3232 = vadd.f32 %v3162, %v3223
      %v3233 = vadd.f32 %v3167, %v3224
      %v3234 = vadd.f32 %v3172, %v3225
      %v3235 = vadd.f32 %v3177, %v3226
      %v3236 = vadd.f32 %v3182, %v3227
      %v3237 = vadd.f32 %v3187, %v3228
      %v3238 = vadd.f32 %v3192, %v3229
      %v3239 = vadd.f32 %v3197, %v3230
      %v3240 = vadd.f32 %v3202, %v3231
      %v3241 = vmul.f32 %v3232, 0.7978846
      %v3242 = vmul.f32 %v3233, 0.7978846
      %v3243 = vmul.f32 %v3234, 0.7978846
      %v3244 = vmul.f32 %v3235, 0.7978846
      %v3245 = vmul.f32 %v3236, 0.7978846
      %v3246 = vmul.f32 %v3237, 0.7978846
      %v3247 = vmul.f32 %v3238, 0.7978846
      %v3248 = vmul.f32 %v3239, 0.7978846
      %v3249 = vmul.f32 %v3240, 0.7978846
      %v3250 = vtanh.pop %v3241
      %v3251 = vtanh.pop %v3242
      %v3252 = vtanh.pop %v3243
      %v3253 = vtanh.pop %v3244
      %v3254 = vtanh.pop %v3245
      %v3255 = vtanh.pop %v3246
      %v3256 = vtanh.pop %v3247
      %v3257 = vtanh.pop %v3248
      %v3258 = vtanh.pop %v3249
      %v3259 = vadd.f32 %v3250, 1.0
      %v3260 = vadd.f32 %v3251, 1.0
      %v3261 = vadd.f32 %v3252, 1.0
      %v3262 = vadd.f32 %v3253, 1.0
      %v3263 = vadd.f32 %v3254, 1.0
      %v3264 = vadd.f32 %v3255, 1.0
      %v3265 = vadd.f32 %v3256, 1.0
      %v3266 = vadd.f32 %v3257, 1.0
      %v3267 = vadd.f32 %v3258, 1.0
      %v3268 = vmul.f32 %v3259, 0.5
      %v3269 = vmul.f32 %v3260, 0.5
      %v3270 = vmul.f32 %v3261, 0.5
      %v3271 = vmul.f32 %v3262, 0.5
      %v3272 = vmul.f32 %v3263, 0.5
      %v3273 = vmul.f32 %v3264, 0.5
      %v3274 = vmul.f32 %v3265, 0.5
      %v3275 = vmul.f32 %v3266, 0.5
      %v3276 = vmul.f32 %v3267, 0.5
      %v3277 = vmul.f32 %v3162, %v3268
      %v3278 = vmul.f32 %v3167, %v3269
      %v3279 = vmul.f32 %v3172, %v3270
      %v3280 = vmul.f32 %v3177, %v3271
      %v3281 = vmul.f32 %v3182, %v3272
      %v3282 = vmul.f32 %v3187, %v3273
      %v3283 = vmul.f32 %v3192, %v3274
      %v3284 = vmul.f32 %v3197, %v3275
      %v3285 = vmul.f32 %v3202, %v3276
      %v3286 = vld [vmem:[%s8] sm:$0xff]
      %v3287 = vld [vmem:[%s8 + $0x8] sm:$0xff]
      %v3288 = vld [vmem:[%s8 + $0x10] sm:$0xff]
      %v3289 = vld [vmem:[%s8 + $0x18] sm:$0xff]
      %v3290 = vld [vmem:[%s8 + $0x20] sm:$0xff]
      %v3291 = vld [vmem:[%s8 + $0x28] sm:$0xff]
      %v3292 = vld [vmem:[%s8 + $0x30] sm:$0xff]
      %v3293 = vld [vmem:[%s8 + $0x38] sm:$0xff]
      %v3294 = vld [vmem:[%s8 + $0x40] sm:$0xff]
      %v3295 = vld [vmem:[%s8 + $0x48] sm:$0xff]
      %v3296 = vld [vmem:[%s8 + $0x50] sm:$0xff]
      %v3297 = vld [vmem:[%s8 + $0x58] sm:$0xff]
      %v3298 = vld [vmem:[%s8 + $0x60] sm:$0xff]
      %v3299 = vld [vmem:[%s8 + $0x68] sm:$0xff]
      %v3300 = vld [vmem:[%s8 + $0x70] sm:$0xff]
      %v3301 = vld [vmem:[%s8 + $0x78] sm:$0xff]
      %v3302 = vlaneseq
      %v3303 = vshrl.u32 %v3302, 7
      %v3304 = vsub.s32 7, %v3303
      %v3305 = vrot.slane %v554, %v3304
      %3306 = vmatprep.subr.mxu0 0.0
      %3307 = vmatpush1.msra.mxu0 %v3286
      %3308 = vmatprep.subr.mxu0 0.0
      %3309 = vmatpush1.msra.mxu0 %v3287
      %3310 = vmatprep.subr.mxu0 0.0
      %3311 = vmatpush1.msra.mxu0 %v3288
      %3312 = vmatprep.subr.mxu0 0.0
      %3313 = vmatpush1.msra.mxu0 %v3289
      %3314 = vmatprep.subr.mxu0 0.0
      %3315 = vmatpush1.msra.mxu0 %v3290
      %3316 = vmatprep.subr.mxu0 0.0
      %3317 = vmatpush1.msra.mxu0 %v3291
      %3318 = vmatprep.subr.mxu0 0.0
      %3319 = vmatpush1.msra.mxu0 %v3292
      %3320 = vmatprep.subr.mxu0 0.0
      %3321 = vmatpush1.msra.mxu0 %v3293
      %3322 = vmatprep.subr.mxu0 0.0
      %3323 = vmatpush1.msra.mxu0 %v3294
      %3324 = vmatprep.subr.mxu0 0.0
      %3325 = vmatpush1.msra.mxu0 %v3295
      %3326 = vmatprep.subr.mxu0 0.0
      %3327 = vmatpush1.msra.mxu0 %v3296
      %3328 = vmatprep.subr.mxu0 0.0
      %3329 = vmatpush1.msra.mxu0 %v3297
      %3330 = vmatprep.subr.mxu0 0.0
      %3331 = vmatpush1.msra.mxu0 %v3298
      %3332 = vmatprep.subr.mxu0 0.0
      %3333 = vmatpush1.msra.mxu0 %v3299
      %3334 = vmatprep.subr.mxu0 0.0
      %3335 = vmatpush1.msra.mxu0 %v3300
      %3336 = vmatprep.subr.mxu0 0.0
      %3337 = vmatpush1.msra.mxu0 %v3301
      %3338 = vmatprep.subr.mxu0 0.0
      %3339 = vmatpush1.msra.mxu0 0.0
      %3340 = vmatprep.subr.mxu0 0.0
      %3341 = vmatpush1.msra.mxu0 0.0
      %3342 = vmatprep.subr.mxu0 0.0
      %3343 = vmatpush1.msra.mxu0 0.0
      %3344 = vmatprep.subr.mxu0 0.0
      %3345 = vmatpush1.msra.mxu0 0.0
      %3346 = vmatprep.subr.mxu0 0.0
      %3347 = vmatpush1.msra.mxu0 0.0
      %3348 = vmatprep.subr.mxu0 0.0
      %3349 = vmatpush1.msra.mxu0 0.0
      %3350 = vmatprep.subr.mxu0 0.0
      %3351 = vmatpush1.msra.mxu0 0.0
      %3352 = vmatprep.subr.mxu0 0.0
      %3353 = vmatpush1.msra.mxu0 0.0
      %3354 = vmatprep.subr.mxu0 0.0
      %3355 = vmatpush1.msra.mxu0 0.0
      %3356 = vmatprep.subr.mxu0 0.0
      %3357 = vmatpush1.msra.mxu0 0.0
      %3358 = vmatprep.subr.mxu0 0.0
      %3359 = vmatpush1.msra.mxu0 0.0
      %3360 = vmatprep.subr.mxu0 0.0
      %3361 = vmatpush1.msra.mxu0 0.0
      %3362 = vmatprep.subr.mxu0 0.0
      %3363 = vmatpush1.msra.mxu0 0.0
      %3364 = vmatprep.subr.mxu0 0.0
      %3365 = vmatpush1.msra.mxu0 0.0
      %3366 = vmatprep.subr.mxu0 0.0
      %3367 = vmatpush1.msra.mxu0 0.0
      %3368 = vmatprep.subr.mxu0 0.0
      %3369 = vmatpush1.msra.mxu0 0.0
      %3370 = vmatprep.mubr.f32.mxu0 0.0
      %3371 = vmatmul.mubr.f32.gmra.mrb[0].mxu0 %v3277
      %v3372 = vpop.f32.mrb[0].mxu0
      %v3373 = vadd.f32 %v3305, %v3372
      %v3374 = vpop.f32.mrb[0].mxu0
      %3375 = vmatprep.mubr.f32.mxu0 0.0
      %3376 = vmatmul.mubr.f32.gmra.mrb[0].mxu0 %v3278
      %v3377 = vpop.f32.mrb[0].mxu0
      %v3378 = vadd.f32 %v3305, %v3377
      %v3379 = vpop.f32.mrb[0].mxu0
      %3380 = vmatprep.mubr.f32.mxu0 0.0
      %3381 = vmatmul.mubr.f32.gmra.mrb[0].mxu0 %v3279
      %v3382 = vpop.f32.mrb[0].mxu0
      %v3383 = vadd.f32 %v3305, %v3382
      %v3384 = vpop.f32.mrb[0].mxu0
      %3385 = vmatprep.mubr.f32.mxu0 0.0
      %3386 = vmatmul.mubr.f32.gmra.mrb[0].mxu0 %v3280
      %v3387 = vpop.f32.mrb[0].mxu0
      %v3388 = vadd.f32 %v3305, %v3387
      %v3389 = vpop.f32.mrb[0].mxu0
      %3390 = vmatprep.mubr.f32.mxu0 0.0
      %3391 = vmatmul.mubr.f32.gmra.mrb[0].mxu0 %v3281
      %v3392 = vpop.f32.mrb[0].mxu0
      %v3393 = vadd.f32 %v3305, %v3392
      %v3394 = vpop.f32.mrb[0].mxu0
      %3395 = vmatprep.mubr.f32.mxu0 0.0
      %3396 = vmatmul.mubr.f32.gmra.mrb[0].mxu0 %v3282
      %v3397 = vpop.f32.mrb[0].mxu0
      %v3398 = vadd.f32 %v3305, %v3397
      %v3399 = vpop.f32.mrb[0].mxu0
      %3400 = vmatprep.mubr.f32.mxu0 0.0
      %3401 = vmatmul.mubr.f32.gmra.mrb[0].mxu0 %v3283
      %v3402 = vpop.f32.mrb[0].mxu0
      %v3403 = vadd.f32 %v3305, %v3402
      %v3404 = vpop.f32.mrb[0].mxu0
      %3405 = vmatprep.mubr.f32.mxu0 0.0
      %3406 = vmatmul.mubr.f32.gmra.mrb[0].mxu0 %v3284
      %v3407 = vpop.f32.mrb[0].mxu0
      %v3408 = vadd.f32 %v3305, %v3407
      %v3409 = vpop.f32.mrb[0].mxu0
      %3410 = vmatprep.mubr.f32.mxu0 0.0
      %3411 = vmatmul.mubr.f32.gmra.mrb[0].mxu0 %v3285
      %v3412 = vpop.f32.mrb[0].mxu0
      %v3413 = vadd.f32 %v3305, %v3412
      %v3414 = vpop.f32.mrb[0].mxu0
      %3415 = vdwg.mxu0
      %v3416 = vmul.f32 %v3373, %v3373
      %v3417 = vmul.f32 %v3378, %v3378
      %v3418 = vmul.f32 %v3383, %v3383
      %v3419 = vmul.f32 %v3388, %v3388
      %v3420 = vmul.f32 %v3393, %v3393
      %v3421 = vmul.f32 %v3398, %v3398
      %v3422 = vmul.f32 %v3403, %v3403
      %v3423 = vmul.f32 %v3408, %v3408
      %v3424 = vmul.f32 %v3413, %v3413
      %v3425 = vmul.f32 %v3373, %v3416
      %v3426 = vmul.f32 %v3378, %v3417
      %v3427 = vmul.f32 %v3383, %v3418
      %v3428 = vmul.f32 %v3388, %v3419
      %v3429 = vmul.f32 %v3393, %v3420
      %v3430 = vmul.f32 %v3398, %v3421
      %v3431 = vmul.f32 %v3403, %v3422
      %v3432 = vmul.f32 %v3408, %v3423
      %v3433 = vmul.f32 %v3413, %v3424
      %v3434 = vmul.f32 %v3425, 0.044715
      %v3435 = vmul.f32 %v3426, 0.044715
      %v3436 = vmul.f32 %v3427, 0.044715
      %v3437 = vmul.f32 %v3428, 0.044715
      %v3438 = vmul.f32 %v3429, 0.044715
      %v3439 = vmul.f32 %v3430, 0.044715
      %v3440 = vmul.f32 %v3431, 0.044715
      %v3441 = vmul.f32 %v3432, 0.044715
      %v3442 = vmul.f32 %v3433, 0.044715
      %v3443 = vadd.f32 %v3373, %v3434
      %v3444 = vadd.f32 %v3378, %v3435
      %v3445 = vadd.f32 %v3383, %v3436
      %v3446 = vadd.f32 %v3388, %v3437
      %v3447 = vadd.f32 %v3393, %v3438
      %v3448 = vadd.f32 %v3398, %v3439
      %v3449 = vadd.f32 %v3403, %v3440
      %v3450 = vadd.f32 %v3408, %v3441
      %v3451 = vadd.f32 %v3413, %v3442
      %v3452 = vmul.f32 %v3443, 0.7978846
      %v3453 = vmul.f32 %v3444, 0.7978846
      %v3454 = vmul.f32 %v3445, 0.7978846
      %v3455 = vmul.f32 %v3446, 0.7978846
      %v3456 = vmul.f32 %v3447, 0.7978846
      %v3457 = vmul.f32 %v3448, 0.7978846
      %v3458 = vmul.f32 %v3449, 0.7978846
      %v3459 = vmul.f32 %v3450, 0.7978846
      %v3460 = vmul.f32 %v3451, 0.7978846
      %v3461 = vtanh.pop %v3452
      %v3462 = vtanh.pop %v3453
      %v3463 = vtanh.pop %v3454
      %v3464 = vtanh.pop %v3455
      %v3465 = vtanh.pop %v3456
      %v3466 = vtanh.pop %v3457
      %v3467 = vtanh.pop %v3458
      %v3468 = vtanh.pop %v3459
      %v3469 = vtanh.pop %v3460
      %v3470 = vadd.f32 %v3461, 1.0
      %v3471 = vadd.f32 %v3462, 1.0
      %v3472 = vadd.f32 %v3463, 1.0
      %v3473 = vadd.f32 %v3464, 1.0
      %v3474 = vadd.f32 %v3465, 1.0
      %v3475 = vadd.f32 %v3466, 1.0
      %v3476 = vadd.f32 %v3467, 1.0
      %v3477 = vadd.f32 %v3468, 1.0
      %v3478 = vadd.f32 %v3469, 1.0
      %v3479 = vmul.f32 %v3470, 0.5
      %v3480 = vmul.f32 %v3471, 0.5
      %v3481 = vmul.f32 %v3472, 0.5
      %v3482 = vmul.f32 %v3473, 0.5
      %v3483 = vmul.f32 %v3474, 0.5
      %v3484 = vmul.f32 %v3475, 0.5
      %v3485 = vmul.f32 %v3476, 0.5
      %v3486 = vmul.f32 %v3477, 0.5
      %v3487 = vmul.f32 %v3478, 0.5
      %v3488 = vmul.f32 %v3373, %v3479
      %v3489 = vmul.f32 %v3378, %v3480
      %v3490 = vmul.f32 %v3383, %v3481
      %v3491 = vmul.f32 %v3388, %v3482
      %v3492 = vmul.f32 %v3393, %v3483
      %v3493 = vmul.f32 %v3398, %v3484
      %v3494 = vmul.f32 %v3403, %v3485
      %v3495 = vmul.f32 %v3408, %v3486
      %v3496 = vmul.f32 %v3413, %v3487
      %v3497 = vadd.f32 %v2908, %v3488
      %v3498 = vadd.f32 %v2909, %v3489
      %v3499 = vadd.f32 %v2910, %v3490
      %v3500 = vadd.f32 %v2911, %v3491
      %v3501 = vadd.f32 %v2912, %v3492
      %v3502 = vadd.f32 %v2913, %v3493
      %v3503 = vadd.f32 %v2914, %v3494
      %v3504 = vadd.f32 %v2915, %v3495
      %v3505 = vadd.f32 %v2916, %v3496
      %s3506 = scalar_lea.vmem %s4, 8
      %v3507 = vld [vmem:[%s3506] sm:$0xff]
      %v3508 = vsel %vm555, %v3497, 0.0
      %3509 = vadd.xlane.f32.xlu0 %v3508
      %v3510 = vpop.xlane.xlu0 %3509
      %v3511 = vsel %vm555, %v3498, 0.0
      %3512 = vadd.xlane.f32.xlu0 %v3511
      %v3513 = vpop.xlane.xlu0 %3512
      %v3514 = vsel %vm555, %v3499, 0.0
      %3515 = vadd.xlane.f32.xlu0 %v3514
      %v3516 = vpop.xlane.xlu0 %3515
      %v3517 = vsel %vm555, %v3500, 0.0
      %3518 = vadd.xlane.f32.xlu0 %v3517
      %v3519 = vpop.xlane.xlu0 %3518
      %v3520 = vsel %vm555, %v3501, 0.0
      %3521 = vadd.xlane.f32.xlu0 %v3520
      %v3522 = vpop.xlane.xlu0 %3521
      %v3523 = vsel %vm555, %v3502, 0.0
      %3524 = vadd.xlane.f32.xlu0 %v3523
      %v3525 = vpop.xlane.xlu0 %3524
      %v3526 = vsel %vm555, %v3503, 0.0
      %3527 = vadd.xlane.f32.xlu0 %v3526
      %v3528 = vpop.xlane.xlu0 %3527
      %v3529 = vsel %vm555, %v3504, 0.0
      %3530 = vadd.xlane.f32.xlu0 %v3529
      %v3531 = vpop.xlane.xlu0 %3530
      %v3532 = vsel %vm555, %v3505, 0.0
      %3533 = vadd.xlane.f32.xlu0 %v3532
      %v3534 = vpop.xlane.xlu0 %3533
      %v3535 = vmul.f32 %v3510, %v583
      %v3536 = vmul.f32 %v3513, %v583
      %v3537 = vmul.f32 %v3516, %v583
      %v3538 = vmul.f32 %v3519, %v583
      %v3539 = vmul.f32 %v3522, %v583
      %v3540 = vmul.f32 %v3525, %v583
      %v3541 = vmul.f32 %v3528, %v583
      %v3542 = vmul.f32 %v3531, %v583
      %v3543 = vmul.f32 %v3534, %v583
      %v3544 = vsub.f32 %v3497, %v3535
      %v3545 = vsub.f32 %v3498, %v3536
      %v3546 = vsub.f32 %v3499, %v3537
      %v3547 = vsub.f32 %v3500, %v3538
      %v3548 = vsub.f32 %v3501, %v3539
      %v3549 = vsub.f32 %v3502, %v3540
      %v3550 = vsub.f32 %v3503, %v3541
      %v3551 = vsub.f32 %v3504, %v3542
      %v3552 = vsub.f32 %v3505, %v3543
      %v3553 = vmul.f32 %v3544, %v3544
      %v3554 = vmul.f32 %v3545, %v3545
      %v3555 = vmul.f32 %v3546, %v3546
      %v3556 = vmul.f32 %v3547, %v3547
      %v3557 = vmul.f32 %v3548, %v3548
      %v3558 = vmul.f32 %v3549, %v3549
      %v3559 = vmul.f32 %v3550, %v3550
      %v3560 = vmul.f32 %v3551, %v3551
      %v3561 = vmul.f32 %v3552, %v3552
      %v3562 = vsel %vm555, %v3553, 0.0
      %3563 = vadd.xlane.f32.xlu0 %v3562
      %v3564 = vpop.xlane.xlu0 %3563
      %v3565 = vsel %vm555, %v3554, 0.0
      %3566 = vadd.xlane.f32.xlu0 %v3565
      %v3567 = vpop.xlane.xlu0 %3566
      %v3568 = vsel %vm555, %v3555, 0.0
      %3569 = vadd.xlane.f32.xlu0 %v3568
      %v3570 = vpop.xlane.xlu0 %3569
      %v3571 = vsel %vm555, %v3556, 0.0
      %3572 = vadd.xlane.f32.xlu0 %v3571
      %v3573 = vpop.xlane.xlu0 %3572
      %v3574 = vsel %vm555, %v3557, 0.0
      %3575 = vadd.xlane.f32.xlu0 %v3574
      %v3576 = vpop.xlane.xlu0 %3575
      %v3577 = vsel %vm555, %v3558, 0.0
      %3578 = vadd.xlane.f32.xlu0 %v3577
      %v3579 = vpop.xlane.xlu0 %3578
      %v3580 = vsel %vm555, %v3559, 0.0
      %3581 = vadd.xlane.f32.xlu0 %v3580
      %v3582 = vpop.xlane.xlu0 %3581
      %v3583 = vsel %vm555, %v3560, 0.0
      %3584 = vadd.xlane.f32.xlu0 %v3583
      %v3585 = vpop.xlane.xlu0 %3584
      %v3586 = vsel %vm555, %v3561, 0.0
      %3587 = vadd.xlane.f32.xlu0 %v3586
      %v3588 = vpop.xlane.xlu0 %3587
      %v3589 = vmul.f32 %v3564, %v583
      %v3590 = vmul.f32 %v3567, %v583
      %v3591 = vmul.f32 %v3570, %v583
      %v3592 = vmul.f32 %v3573, %v583
      %v3593 = vmul.f32 %v3576, %v583
      %v3594 = vmul.f32 %v3579, %v583
      %v3595 = vmul.f32 %v3582, %v583
      %v3596 = vmul.f32 %v3585, %v583
      %v3597 = vmul.f32 %v3588, %v583
      %v3598 = vadd.f32 %v3589, 1e-05
      %v3599 = vadd.f32 %v3590, 1e-05
      %v3600 = vadd.f32 %v3591, 1e-05
      %v3601 = vadd.f32 %v3592, 1e-05
      %v3602 = vadd.f32 %v3593, 1e-05
      %v3603 = vadd.f32 %v3594, 1e-05
      %v3604 = vadd.f32 %v3595, 1e-05
      %v3605 = vadd.f32 %v3596, 1e-05
      %v3606 = vadd.f32 %v3597, 1e-05
      %v3607 = vrsqrt.pop %v3598
      %v3608 = vrsqrt.pop %v3599
      %v3609 = vrsqrt.pop %v3600
      %v3610 = vrsqrt.pop %v3601
      %v3611 = vrsqrt.pop %v3602
      %v3612 = vrsqrt.pop %v3603
      %v3613 = vrsqrt.pop %v3604
      %v3614 = vrsqrt.pop %v3605
      %v3615 = vrsqrt.pop %v3606
      %v3616 = vmul.f32 %v3544, %v3607
      %v3617 = vmul.f32 %v3545, %v3608
      %v3618 = vmul.f32 %v3546, %v3609
      %v3619 = vmul.f32 %v3547, %v3610
      %v3620 = vmul.f32 %v3548, %v3611
      %v3621 = vmul.f32 %v3549, %v3612
      %v3622 = vmul.f32 %v3550, %v3613
      %v3623 = vmul.f32 %v3551, %v3614
      %v3624 = vmul.f32 %v3552, %v3615
      %v3625 = vlaneseq
      %v3626 = vshrl.u32 %v3625, 7
      %v3627 = vsub.s32 0, %v3626
      %v3628 = vrot.slane %v3507, %v3627
      %v3629 = vmul.f32 %v3616, %v3628
      %v3630 = vmul.f32 %v3617, %v3628
      %v3631 = vmul.f32 %v3618, %v3628
      %v3632 = vmul.f32 %v3619, %v3628
      %v3633 = vmul.f32 %v3620, %v3628
      %v3634 = vmul.f32 %v3621, %v3628
      %v3635 = vmul.f32 %v3622, %v3628
      %v3636 = vmul.f32 %v3623, %v3628
      %v3637 = vmul.f32 %v3624, %v3628
      %v3638 = vlaneseq
      %v3639 = vshrl.u32 %v3638, 7
      %v3640 = vsub.s32 1, %v3639
      %v3641 = vrot.slane %v3507, %v3640
      %v3642 = vadd.f32 %v3629, %v3641
      %v3643 = vadd.f32 %v3630, %v3641
      %v3644 = vadd.f32 %v3631, %v3641
      %v3645 = vadd.f32 %v3632, %v3641
      %v3646 = vadd.f32 %v3633, %v3641
      %v3647 = vadd.f32 %v3634, %v3641
      %v3648 = vadd.f32 %v3635, %v3641
      %v3649 = vadd.f32 %v3636, %v3641
      %v3650 = vadd.f32 %v3637, %v3641
      %s3651 = scalar_lea.vmem %s5, 32
      %v3652 = vld [vmem:[%s3651] sm:$0xff]
      %v3653 = vld [vmem:[%s3651 + $0x8] sm:$0xff]
      %v3654 = vld [vmem:[%s3651 + $0x10] sm:$0xff]
      %v3655 = vld [vmem:[%s3651 + $0x18] sm:$0xff]
      %v3656 = vlaneseq
      %v3657 = vshrl.u32 %v3656, 7
      %v3658 = vsub.s32 2, %v3657
      %v3659 = vrot.slane %v3507, %v3658
      %v3661 = vsel %vm555, %v3642, 0
      %v3664 = vsel %vm555, %v3643, 0
      %v3667 = vsel %vm555, %v3644, 0
      %v3670 = vsel %vm555, %v3645, 0
      %v3673 = vsel %vm555, %v3646, 0
      %v3676 = vsel %vm555, %v3647, 0
      %v3679 = vsel %vm555, %v3648, 0
      %v3682 = vsel %vm555, %v3649, 0
      %v3685 = vsel %vm555, %v3650, 0
      %3687 = vmatprep.subr.mxu0 0.0
      %3688 = vmatpush1.msra.mxu0 %v3652
      %3689 = vmatprep.subr.mxu0 0.0
      %3690 = vmatpush1.msra.mxu0 %v3653
      %3691 = vmatprep.subr.mxu0 0.0
      %3692 = vmatpush1.msra.mxu0 %v3654
      %3693 = vmatprep.subr.mxu0 0.0
      %3694 = vmatpush1.msra.mxu0 %v3655
      %3695 = vmatprep.subr.mxu0 0.0
      %3696 = vmatpush1.msra.mxu0 0.0
      %3697 = vmatprep.subr.mxu0 0.0
      %3698 = vmatpush1.msra.mxu0 0.0
      %3699 = vmatprep.subr.mxu0 0.0
      %3700 = vmatpush1.msra.mxu0 0.0
      %3701 = vmatprep.subr.mxu0 0.0
      %3702 = vmatpush1.msra.mxu0 0.0
      %3703 = vmatprep.subr.mxu0 0.0
      %3704 = vmatpush1.msra.mxu0 0.0
      %3705 = vmatprep.subr.mxu0 0.0
      %3706 = vmatpush1.msra.mxu0 0.0
      %3707 = vmatprep.subr.mxu0 0.0
      %3708 = vmatpush1.msra.mxu0 0.0
      %3709 = vmatprep.subr.mxu0 0.0
      %3710 = vmatpush1.msra.mxu0 0.0
      %3711 = vmatprep.subr.mxu0 0.0
      %3712 = vmatpush1.msra.mxu0 0.0
      %3713 = vmatprep.subr.mxu0 0.0
      %3714 = vmatpush1.msra.mxu0 0.0
      %3715 = vmatprep.subr.mxu0 0.0
      %3716 = vmatpush1.msra.mxu0 0.0
      %3717 = vmatprep.subr.mxu0 0.0
      %3718 = vmatpush1.msra.mxu0 0.0
      %3719 = vmatprep.subr.mxu0 0.0
      %3720 = vmatpush1.msra.mxu0 0.0
      %3721 = vmatprep.subr.mxu0 0.0
      %3722 = vmatpush1.msra.mxu0 0.0
      %3723 = vmatprep.subr.mxu0 0.0
      %3724 = vmatpush1.msra.mxu0 0.0
      %3725 = vmatprep.subr.mxu0 0.0
      %3726 = vmatpush1.msra.mxu0 0.0
      %3727 = vmatprep.subr.mxu0 0.0
      %3728 = vmatpush1.msra.mxu0 0.0
      %3729 = vmatprep.subr.mxu0 0.0
      %3730 = vmatpush1.msra.mxu0 0.0
      %3731 = vmatprep.subr.mxu0 0.0
      %3732 = vmatpush1.msra.mxu0 0.0
      %3733 = vmatprep.subr.mxu0 0.0
      %3734 = vmatpush1.msra.mxu0 0.0
      %3735 = vmatprep.subr.mxu0 0.0
      %3736 = vmatpush1.msra.mxu0 0.0
      %3737 = vmatprep.subr.mxu0 0.0
      %3738 = vmatpush1.msra.mxu0 0.0
      %3739 = vmatprep.subr.mxu0 0.0
      %3740 = vmatpush1.msra.mxu0 0.0
      %3741 = vmatprep.subr.mxu0 0.0
      %3742 = vmatpush1.msra.mxu0 0.0
      %3743 = vmatprep.subr.mxu0 0.0
      %3744 = vmatpush1.msra.mxu0 0.0
      %3745 = vmatprep.subr.mxu0 0.0
      %3746 = vmatpush1.msra.mxu0 0.0
      %3747 = vmatprep.subr.mxu0 0.0
      %3748 = vmatpush1.msra.mxu0 0.0
      %3749 = vmatprep.subr.mxu0 0.0
      %3750 = vmatpush1.msra.mxu0 0.0
      %3751 = vmatprep.mubr.f32.mxu0 0.0
      %3752 = vmatmul.mubr.f32.gmra.mrb[0].mxu0 %v3661
      %v3753 = vpop.f32.mrb[0].mxu0
      %v3754 = vadd.f32 %v3659, %v3753
      %v3755 = vpop.f32.mrb[0].mxu0
      %3756 = vmatprep.mubr.f32.mxu0 0.0
      %3757 = vmatmul.mubr.f32.gmra.mrb[0].mxu0 %v3664
      %v3758 = vpop.f32.mrb[0].mxu0
      %v3759 = vadd.f32 %v3659, %v3758
      %v3760 = vpop.f32.mrb[0].mxu0
      %3761 = vmatprep.mubr.f32.mxu0 0.0
      %3762 = vmatmul.mubr.f32.gmra.mrb[0].mxu0 %v3667
      %v3763 = vpop.f32.mrb[0].mxu0
      %v3764 = vadd.f32 %v3659, %v3763
      %v3765 = vpop.f32.mrb[0].mxu0
      %3766 = vmatprep.mubr.f32.mxu0 0.0
      %3767 = vmatmul.mubr.f32.gmra.mrb[0].mxu0 %v3670
      %v3768 = vpop.f32.mrb[0].mxu0
      %v3769 = vadd.f32 %v3659, %v3768
      %v3770 = vpop.f32.mrb[0].mxu0
      %3771 = vmatprep.mubr.f32.mxu0 0.0
      %3772 = vmatmul.mubr.f32.gmra.mrb[0].mxu0 %v3673
      %v3773 = vpop.f32.mrb[0].mxu0
      %v3774 = vadd.f32 %v3659, %v3773
      %v3775 = vpop.f32.mrb[0].mxu0
      %3776 = vmatprep.mubr.f32.mxu0 0.0
      %3777 = vmatmul.mubr.f32.gmra.mrb[0].mxu0 %v3676
      %v3778 = vpop.f32.mrb[0].mxu0
      %v3779 = vadd.f32 %v3659, %v3778
      %v3780 = vpop.f32.mrb[0].mxu0
      %3781 = vmatprep.mubr.f32.mxu0 0.0
      %3782 = vmatmul.mubr.f32.gmra.mrb[0].mxu0 %v3679
      %v3783 = vpop.f32.mrb[0].mxu0
      %v3784 = vadd.f32 %v3659, %v3783
      %v3785 = vpop.f32.mrb[0].mxu0
      %3786 = vmatprep.mubr.f32.mxu0 0.0
      %3787 = vmatmul.mubr.f32.gmra.mrb[0].mxu0 %v3682
      %v3788 = vpop.f32.mrb[0].mxu0
      %v3789 = vadd.f32 %v3659, %v3788
      %v3790 = vpop.f32.mrb[0].mxu0
      %3791 = vmatprep.mubr.f32.mxu0 0.0
      %3792 = vmatmul.mubr.f32.gmra.mrb[0].mxu0 %v3685
      %v3793 = vpop.f32.mrb[0].mxu0
      %v3794 = vadd.f32 %v3659, %v3793
      %v3795 = vpop.f32.mrb[0].mxu0
      %3796 = vdwg.mxu0
      %3806 = vrot.lane.b32.xlu0 %v3754, 96
      %v3807 = vpop.permute.xlu0 %3806
      %3808 = vrot.lane.b32.xlu0 %v3759, 96
      %v3809 = vpop.permute.xlu0 %3808
      %3810 = vrot.lane.b32.xlu0 %v3764, 96
      %v3811 = vpop.permute.xlu0 %3810
      %3812 = vrot.lane.b32.xlu0 %v3769, 96
      %v3813 = vpop.permute.xlu0 %3812
      %3814 = vrot.lane.b32.xlu0 %v3774, 96
      %v3815 = vpop.permute.xlu0 %3814
      %3816 = vrot.lane.b32.xlu0 %v3779, 96
      %v3817 = vpop.permute.xlu0 %3816
      %3818 = vrot.lane.b32.xlu0 %v3784, 96
      %v3819 = vpop.permute.xlu0 %3818
      %3820 = vrot.lane.b32.xlu0 %v3789, 96
      %v3821 = vpop.permute.xlu0 %3820
      %3822 = vrot.lane.b32.xlu0 %v3794, 96
      %v3823 = vpop.permute.xlu0 %3822
      %v3824 = vsel %vm872, %v3754, 0
      %v3826 = vsel %vm872, %v3759, 0
      %v3828 = vsel %vm872, %v3764, 0
      %v3830 = vsel %vm872, %v3769, 0
      %v3832 = vsel %vm872, %v3774, 0
      %v3834 = vsel %vm872, %v3779, 0
      %v3836 = vsel %vm872, %v3784, 0
      %v3838 = vsel %vm872, %v3789, 0
      %v3840 = vsel %vm872, %v3794, 0
      %v3842 = vsel %vm872, %v3807, 0
      %v3844 = vsel %vm872, %v3809, 0
      %v3846 = vsel %vm872, %v3811, 0
      %v3848 = vsel %vm872, %v3813, 0
      %v3850 = vsel %vm872, %v3815, 0
      %v3852 = vsel %vm872, %v3817, 0
      %v3854 = vsel %vm872, %v3819, 0
      %v3856 = vsel %vm872, %v3821, 0
      %v3858 = vsel %vm872, %v3823, 0
      %3860 = vmatprep.subr.mxu0 0.0
      %3861 = vmatpush1.xpose.msra.mxu0 %v3842
      %3862 = vmatprep.subr.mxu0 0.0
      %3863 = vmatpush1.xpose.msra.mxu0 %v3844
      %3864 = vmatprep.subr.mxu0 0.0
      %3865 = vmatpush1.xpose.msra.mxu0 %v3846
      %3866 = vmatprep.subr.mxu0 0.0
      %3867 = vmatpush1.xpose.msra.mxu0 %v3848
      %3868 = vmatprep.subr.mxu0 0.0
      %3869 = vmatpush1.xpose.msra.mxu0 %v3850
      %3870 = vmatprep.subr.mxu0 0.0
      %3871 = vmatpush1.xpose.msra.mxu0 %v3852
      %3872 = vmatprep.subr.mxu0 0.0
      %3873 = vmatpush1.xpose.msra.mxu0 %v3854
      %3874 = vmatprep.subr.mxu0 0.0
      %3875 = vmatpush1.xpose.msra.mxu0 %v3856
      %3876 = vmatprep.subr.mxu0 0.0
      %3877 = vmatpush1.xpose.msra.mxu0 %v3858
      %3878 = vmatprep.subr.mxu0 0.0
      %3879 = vmatpush1.xpose.msra.mxu0 0.0
      %3880 = vmatprep.subr.mxu0 0.0
      %3881 = vmatpush1.xpose.msra.mxu0 0.0
      %3882 = vmatprep.subr.mxu0 0.0
      %3883 = vmatpush1.xpose.msra.mxu0 0.0
      %3884 = vmatprep.subr.mxu0 0.0
      %3885 = vmatpush1.xpose.msra.mxu0 0.0
      %3886 = vmatprep.subr.mxu0 0.0
      %3887 = vmatpush1.xpose.msra.mxu0 0.0
      %3888 = vmatprep.subr.mxu0 0.0
      %3889 = vmatpush1.xpose.msra.mxu0 0.0
      %3890 = vmatprep.subr.mxu0 0.0
      %3891 = vmatpush1.xpose.msra.mxu0 0.0
      %3892 = vmatprep.subr.mxu0 0.0
      %3893 = vmatpush1.xpose.msra.mxu0 0.0
      %3894 = vmatprep.subr.mxu0 0.0
      %3895 = vmatpush1.xpose.msra.mxu0 0.0
      %3896 = vmatprep.subr.mxu0 0.0
      %3897 = vmatpush1.xpose.msra.mxu0 0.0
      %3898 = vmatprep.subr.mxu0 0.0
      %3899 = vmatpush1.xpose.msra.mxu0 0.0
      %3900 = vmatprep.subr.mxu0 0.0
      %3901 = vmatpush1.xpose.msra.mxu0 0.0
      %3902 = vmatprep.subr.mxu0 0.0
      %3903 = vmatpush1.xpose.msra.mxu0 0.0
      %3904 = vmatprep.subr.mxu0 0.0
      %3905 = vmatpush1.xpose.msra.mxu0 0.0
      %3906 = vmatprep.subr.mxu0 0.0
      %3907 = vmatpush1.xpose.msra.mxu0 0.0
      %3908 = vmatprep.subr.mxu0 0.0
      %3909 = vmatpush1.xpose.msra.mxu0 0.0
      %3910 = vmatprep.subr.mxu0 0.0
      %3911 = vmatpush1.xpose.msra.mxu0 0.0
      %3912 = vmatprep.subr.mxu0 0.0
      %3913 = vmatpush1.xpose.msra.mxu0 0.0
      %3914 = vmatprep.subr.mxu0 0.0
      %3915 = vmatpush1.xpose.msra.mxu0 0.0
      %3916 = vmatprep.subr.mxu0 0.0
      %3917 = vmatpush1.xpose.msra.mxu0 0.0
      %3918 = vmatprep.subr.mxu0 0.0
      %3919 = vmatpush1.xpose.msra.mxu0 0.0
      %3920 = vmatprep.subr.mxu0 0.0
      %3921 = vmatpush1.xpose.msra.mxu0 0.0
      %3922 = vmatprep.subr.mxu0 0.0
      %3923 = vmatpush1.xpose.msra.mxu0 0.0
      %3924 = vmatprep.mubr.f32.mxu0 0.0
      %3925 = vmatmul.mubr.f32.gmra.mrb[0].mxu0 %v3824
      %v3926 = vpop.f32.mrb[0].mxu0
      %v3927 = vadd.f32 %v545, %v3926
      %v3928 = vpop.f32.mrb[0].mxu0
      %3929 = vmatprep.mubr.f32.mxu0 0.0
      %3930 = vmatmul.mubr.f32.gmra.mrb[0].mxu0 %v3826
      %v3931 = vpop.f32.mrb[0].mxu0
      %v3932 = vadd.f32 %v546, %v3931
      %v3933 = vpop.f32.mrb[0].mxu0
      %3934 = vmatprep.mubr.f32.mxu0 0.0
      %3935 = vmatmul.mubr.f32.gmra.mrb[0].mxu0 %v3828
      %v3936 = vpop.f32.mrb[0].mxu0
      %v3937 = vadd.f32 %v547, %v3936
      %v3938 = vpop.f32.mrb[0].mxu0
      %3939 = vmatprep.mubr.f32.mxu0 0.0
      %3940 = vmatmul.mubr.f32.gmra.mrb[0].mxu0 %v3830
      %v3941 = vpop.f32.mrb[0].mxu0
      %v3942 = vadd.f32 %v548, %v3941
      %v3943 = vpop.f32.mrb[0].mxu0
      %3944 = vmatprep.mubr.f32.mxu0 0.0
      %3945 = vmatmul.mubr.f32.gmra.mrb[0].mxu0 %v3832
      %v3946 = vpop.f32.mrb[0].mxu0
      %v3947 = vadd.f32 %v549, %v3946
      %v3948 = vpop.f32.mrb[0].mxu0
      %3949 = vmatprep.mubr.f32.mxu0 0.0
      %3950 = vmatmul.mubr.f32.gmra.mrb[0].mxu0 %v3834
      %v3951 = vpop.f32.mrb[0].mxu0
      %v3952 = vadd.f32 %v550, %v3951
      %v3953 = vpop.f32.mrb[0].mxu0
      %3954 = vmatprep.mubr.f32.mxu0 0.0
      %3955 = vmatmul.mubr.f32.gmra.mrb[0].mxu0 %v3836
      %v3956 = vpop.f32.mrb[0].mxu0
      %v3957 = vadd.f32 %v551, %v3956
      %v3958 = vpop.f32.mrb[0].mxu0
      %3959 = vmatprep.mubr.f32.mxu0 0.0
      %3960 = vmatmul.mubr.f32.gmra.mrb[0].mxu0 %v3838
      %v3961 = vpop.f32.mrb[0].mxu0
      %v3962 = vadd.f32 %v552, %v3961
      %v3963 = vpop.f32.mrb[0].mxu0
      %3964 = vmatprep.mubr.f32.mxu0 0.0
      %3965 = vmatmul.mubr.f32.gmra.mrb[0].mxu0 %v3840
      %v3966 = vpop.f32.mrb[0].mxu0
      %v3967 = vadd.f32 %v553, %v3966
      %v3968 = vpop.f32.mrb[0].mxu0
      %3969 = vdwg.mxu0
      %v3970 = vsel %vm1019, %v3927, -inf
      %3971 = vmax.xlane.f32.xlu0 %v3970
      %v3972 = vpop.xlane.xlu0 %3971
      %v3973 = vsel %vm1019, %v3932, -inf
      %3974 = vmax.xlane.f32.xlu0 %v3973
      %v3975 = vpop.xlane.xlu0 %3974
      %v3976 = vsel %vm1019, %v3937, -inf
      %3977 = vmax.xlane.f32.xlu0 %v3976
      %v3978 = vpop.xlane.xlu0 %3977
      %v3979 = vsel %vm1019, %v3942, -inf
      %3980 = vmax.xlane.f32.xlu0 %v3979
      %v3981 = vpop.xlane.xlu0 %3980
      %v3982 = vsel %vm1019, %v3947, -inf
      %3983 = vmax.xlane.f32.xlu0 %v3982
      %v3984 = vpop.xlane.xlu0 %3983
      %v3985 = vsel %vm1019, %v3952, -inf
      %3986 = vmax.xlane.f32.xlu0 %v3985
      %v3987 = vpop.xlane.xlu0 %3986
      %v3988 = vsel %vm1019, %v3957, -inf
      %3989 = vmax.xlane.f32.xlu0 %v3988
      %v3990 = vpop.xlane.xlu0 %3989
      %v3991 = vsel %vm1019, %v3962, -inf
      %3992 = vmax.xlane.f32.xlu0 %v3991
      %v3993 = vpop.xlane.xlu0 %3992
      %v3994 = vsel %vm1019, %v3967, -inf
      %3995 = vmax.xlane.f32.xlu0 %v3994
      %v3996 = vpop.xlane.xlu0 %3995
      %v3997 = vsub.f32 %v3927, %v3972
      %v3998 = vsub.f32 %v3932, %v3975
      %v3999 = vsub.f32 %v3937, %v3978
      %v4000 = vsub.f32 %v3942, %v3981
      %v4001 = vsub.f32 %v3947, %v3984
      %v4002 = vsub.f32 %v3952, %v3987
      %v4003 = vsub.f32 %v3957, %v3990
      %v4004 = vsub.f32 %v3962, %v3993
      %v4005 = vsub.f32 %v3967, %v3996
      %v4006 = vmul.f32 %v3997, 1.442695
      %v4007 = vpow.pop %v4006
      %v4008 = vmul.f32 %v3998, 1.442695
      %v4009 = vpow.pop %v4008
      %v4010 = vmul.f32 %v3999, 1.442695
      %v4011 = vpow.pop %v4010
      %v4012 = vmul.f32 %v4000, 1.442695
      %v4013 = vpow.pop %v4012
      %v4014 = vmul.f32 %v4001, 1.442695
      %v4015 = vpow.pop %v4014
      %v4016 = vmul.f32 %v4002, 1.442695
      %v4017 = vpow.pop %v4016
      %v4018 = vmul.f32 %v4003, 1.442695
      %v4019 = vpow.pop %v4018
      %v4020 = vmul.f32 %v4004, 1.442695
      %v4021 = vpow.pop %v4020
      %v4022 = vmul.f32 %v4005, 1.442695
      %v4023 = vpow.pop %v4022
      %v4024 = vsel %vm1019, %v4007, 0.0
      %4025 = vadd.xlane.f32.xlu0 %v4024
      %v4026 = vpop.xlane.xlu0 %4025
      %v4027 = vsel %vm1019, %v4009, 0.0
      %4028 = vadd.xlane.f32.xlu0 %v4027
      %v4029 = vpop.xlane.xlu0 %4028
      %v4030 = vsel %vm1019, %v4011, 0.0
      %4031 = vadd.xlane.f32.xlu0 %v4030
      %v4032 = vpop.xlane.xlu0 %4031
      %v4033 = vsel %vm1019, %v4013, 0.0
      %4034 = vadd.xlane.f32.xlu0 %v4033
      %v4035 = vpop.xlane.xlu0 %4034
      %v4036 = vsel %vm1019, %v4015, 0.0
      %4037 = vadd.xlane.f32.xlu0 %v4036
      %v4038 = vpop.xlane.xlu0 %4037
      %v4039 = vsel %vm1019, %v4017, 0.0
      %4040 = vadd.xlane.f32.xlu0 %v4039
      %v4041 = vpop.xlane.xlu0 %4040
      %v4042 = vsel %vm1019, %v4019, 0.0
      %4043 = vadd.xlane.f32.xlu0 %v4042
      %v4044 = vpop.xlane.xlu0 %4043
      %v4045 = vsel %vm1019, %v4021, 0.0
      %4046 = vadd.xlane.f32.xlu0 %v4045
      %v4047 = vpop.xlane.xlu0 %4046
      %v4048 = vsel %vm1019, %v4023, 0.0
      %4049 = vadd.xlane.f32.xlu0 %v4048
      %v4050 = vpop.xlane.xlu0 %4049
      %v4051 = vrcp.pop %v4026
      %v4052 = vrcp.pop %v4029
      %v4053 = vrcp.pop %v4032
      %v4054 = vrcp.pop %v4035
      %v4055 = vrcp.pop %v4038
      %v4056 = vrcp.pop %v4041
      %v4057 = vrcp.pop %v4044
      %v4058 = vrcp.pop %v4047
      %v4059 = vrcp.pop %v4050
      %v4060 = vmul.f32 %v4007, %v4051
      %v4061 = vmul.f32 %v4009, %v4052
      %v4062 = vmul.f32 %v4011, %v4053
      %v4063 = vmul.f32 %v4013, %v4054
      %v4064 = vmul.f32 %v4015, %v4055
      %v4065 = vmul.f32 %v4017, %v4056
      %v4066 = vmul.f32 %v4019, %v4057
      %v4067 = vmul.f32 %v4021, %v4058
      %v4068 = vmul.f32 %v4023, %v4059
      %4069 = vrot.lane.b32.xlu0 %v3754, 64
      %v4070 = vpop.permute.xlu0 %4069
      %4071 = vrot.lane.b32.xlu0 %v3759, 64
      %v4072 = vpop.permute.xlu0 %4071
      %4073 = vrot.lane.b32.xlu0 %v3764, 64
      %v4074 = vpop.permute.xlu0 %4073
      %4075 = vrot.lane.b32.xlu0 %v3769, 64
      %v4076 = vpop.permute.xlu0 %4075
      %4077 = vrot.lane.b32.xlu0 %v3774, 64
      %v4078 = vpop.permute.xlu0 %4077
      %4079 = vrot.lane.b32.xlu0 %v3779, 64
      %v4080 = vpop.permute.xlu0 %4079
      %4081 = vrot.lane.b32.xlu0 %v3784, 64
      %v4082 = vpop.permute.xlu0 %4081
      %4083 = vrot.lane.b32.xlu0 %v3789, 64
      %v4084 = vpop.permute.xlu0 %4083
      %4085 = vrot.lane.b32.xlu0 %v3794, 64
      %v4086 = vpop.permute.xlu0 %4085
      %v4097 = vsel %vm1019, %v4060, 0
      %v4100 = vsel %vm1019, %v4061, 0
      %v4103 = vsel %vm1019, %v4062, 0
      %v4106 = vsel %vm1019, %v4063, 0
      %v4109 = vsel %vm1019, %v4064, 0
      %v4112 = vsel %vm1019, %v4065, 0
      %v4115 = vsel %vm1019, %v4066, 0
      %v4118 = vsel %vm1019, %v4067, 0
      %v4121 = vsel %vm1019, %v4068, 0
      %4123 = vmatprep.subr.mxu0 0.0
      %4124 = vmatpush1.msra.mxu0 %v4070
      %4125 = vmatprep.subr.mxu0 0.0
      %4126 = vmatpush1.msra.mxu0 %v4072
      %4127 = vmatprep.subr.mxu0 0.0
      %4128 = vmatpush1.msra.mxu0 %v4074
      %4129 = vmatprep.subr.mxu0 0.0
      %4130 = vmatpush1.msra.mxu0 %v4076
      %4131 = vmatprep.subr.mxu0 0.0
      %4132 = vmatpush1.msra.mxu0 %v4078
      %4133 = vmatprep.subr.mxu0 0.0
      %4134 = vmatpush1.msra.mxu0 %v4080
      %4135 = vmatprep.subr.mxu0 0.0
      %4136 = vmatpush1.msra.mxu0 %v4082
      %4137 = vmatprep.subr.mxu0 0.0
      %4138 = vmatpush1.msra.mxu0 %v4084
      %4139 = vmatprep.subr.mxu0 0.0
      %4140 = vmatpush1.msra.mxu0 %v4086
      %4141 = vmatprep.subr.mxu0 0.0
      %4142 = vmatpush1.msra.mxu0 0.0
      %4143 = vmatprep.subr.mxu0 0.0
      %4144 = vmatpush1.msra.mxu0 0.0
      %4145 = vmatprep.subr.mxu0 0.0
      %4146 = vmatpush1.msra.mxu0 0.0
      %4147 = vmatprep.subr.mxu0 0.0
      %4148 = vmatpush1.msra.mxu0 0.0
      %4149 = vmatprep.subr.mxu0 0.0
      %4150 = vmatpush1.msra.mxu0 0.0
      %4151 = vmatprep.subr.mxu0 0.0
      %4152 = vmatpush1.msra.mxu0 0.0
      %4153 = vmatprep.subr.mxu0 0.0
      %4154 = vmatpush1.msra.mxu0 0.0
      %4155 = vmatprep.subr.mxu0 0.0
      %4156 = vmatpush1.msra.mxu0 0.0
      %4157 = vmatprep.subr.mxu0 0.0
      %4158 = vmatpush1.msra.mxu0 0.0
      %4159 = vmatprep.subr.mxu0 0.0
      %4160 = vmatpush1.msra.mxu0 0.0
      %4161 = vmatprep.subr.mxu0 0.0
      %4162 = vmatpush1.msra.mxu0 0.0
      %4163 = vmatprep.subr.mxu0 0.0
      %4164 = vmatpush1.msra.mxu0 0.0
      %4165 = vmatprep.subr.mxu0 0.0
      %4166 = vmatpush1.msra.mxu0 0.0
      %4167 = vmatprep.subr.mxu0 0.0
      %4168 = vmatpush1.msra.mxu0 0.0
      %4169 = vmatprep.subr.mxu0 0.0
      %4170 = vmatpush1.msra.mxu0 0.0
      %4171 = vmatprep.subr.mxu0 0.0
      %4172 = vmatpush1.msra.mxu0 0.0
      %4173 = vmatprep.subr.mxu0 0.0
      %4174 = vmatpush1.msra.mxu0 0.0
      %4175 = vmatprep.subr.mxu0 0.0
      %4176 = vmatpush1.msra.mxu0 0.0
      %4177 = vmatprep.subr.mxu0 0.0
      %4178 = vmatpush1.msra.mxu0 0.0
      %4179 = vmatprep.subr.mxu0 0.0
      %4180 = vmatpush1.msra.mxu0 0.0
      %4181 = vmatprep.subr.mxu0 0.0
      %4182 = vmatpush1.msra.mxu0 0.0
      %4183 = vmatprep.subr.mxu0 0.0
      %4184 = vmatpush1.msra.mxu0 0.0
      %4185 = vmatprep.subr.mxu0 0.0
      %4186 = vmatpush1.msra.mxu0 0.0
      %4187 = vmatprep.mubr.f32.mxu0 0.0
      %4188 = vmatmul.mubr.f32.gmra.mrb[0].mxu0 %v4097
      %v4189 = vpop.f32.mrb[0].mxu0
      %v4190 = vadd.f32 0.0, %v4189
      %v4191 = vpop.f32.mrb[0].mxu0
      %4192 = vmatprep.mubr.f32.mxu0 0.0
      %4193 = vmatmul.mubr.f32.gmra.mrb[0].mxu0 %v4100
      %v4194 = vpop.f32.mrb[0].mxu0
      %v4195 = vadd.f32 0.0, %v4194
      %v4196 = vpop.f32.mrb[0].mxu0
      %4197 = vmatprep.mubr.f32.mxu0 0.0
      %4198 = vmatmul.mubr.f32.gmra.mrb[0].mxu0 %v4103
      %v4199 = vpop.f32.mrb[0].mxu0
      %v4200 = vadd.f32 0.0, %v4199
      %v4201 = vpop.f32.mrb[0].mxu0
      %4202 = vmatprep.mubr.f32.mxu0 0.0
      %4203 = vmatmul.mubr.f32.gmra.mrb[0].mxu0 %v4106
      %v4204 = vpop.f32.mrb[0].mxu0
      %v4205 = vadd.f32 0.0, %v4204
      %v4206 = vpop.f32.mrb[0].mxu0
      %4207 = vmatprep.mubr.f32.mxu0 0.0
      %4208 = vmatmul.mubr.f32.gmra.mrb[0].mxu0 %v4109
      %v4209 = vpop.f32.mrb[0].mxu0
      %v4210 = vadd.f32 0.0, %v4209
      %v4211 = vpop.f32.mrb[0].mxu0
      %4212 = vmatprep.mubr.f32.mxu0 0.0
      %4213 = vmatmul.mubr.f32.gmra.mrb[0].mxu0 %v4112
      %v4214 = vpop.f32.mrb[0].mxu0
      %v4215 = vadd.f32 0.0, %v4214
      %v4216 = vpop.f32.mrb[0].mxu0
      %4217 = vmatprep.mubr.f32.mxu0 0.0
      %4218 = vmatmul.mubr.f32.gmra.mrb[0].mxu0 %v4115
      %v4219 = vpop.f32.mrb[0].mxu0
      %v4220 = vadd.f32 0.0, %v4219
      %v4221 = vpop.f32.mrb[0].mxu0
      %4222 = vmatprep.mubr.f32.mxu0 0.0
      %4223 = vmatmul.mubr.f32.gmra.mrb[0].mxu0 %v4118
      %v4224 = vpop.f32.mrb[0].mxu0
      %v4225 = vadd.f32 0.0, %v4224
      %v4226 = vpop.f32.mrb[0].mxu0
      %4227 = vmatprep.mubr.f32.mxu0 0.0
      %4228 = vmatmul.mubr.f32.gmra.mrb[0].mxu0 %v4121
      %v4229 = vpop.f32.mrb[0].mxu0
      %v4230 = vadd.f32 0.0, %v4229
      %v4231 = vpop.f32.mrb[0].mxu0
      %4232 = vdwg.mxu0
      %4233 = vrot.lane.b32.xlu0 %v3754, 120
      %v4234 = vpop.permute.xlu0 %4233
      %4235 = vrot.lane.b32.xlu0 %v3759, 120
      %v4236 = vpop.permute.xlu0 %4235
      %4237 = vrot.lane.b32.xlu0 %v3764, 120
      %v4238 = vpop.permute.xlu0 %4237
      %4239 = vrot.lane.b32.xlu0 %v3769, 120
      %v4240 = vpop.permute.xlu0 %4239
      %4241 = vrot.lane.b32.xlu0 %v3774, 120
      %v4242 = vpop.permute.xlu0 %4241
      %4243 = vrot.lane.b32.xlu0 %v3779, 120
      %v4244 = vpop.permute.xlu0 %4243
      %4245 = vrot.lane.b32.xlu0 %v3784, 120
      %v4246 = vpop.permute.xlu0 %4245
      %4247 = vrot.lane.b32.xlu0 %v3789, 120
      %v4248 = vpop.permute.xlu0 %4247
      %4249 = vrot.lane.b32.xlu0 %v3794, 120
      %v4250 = vpop.permute.xlu0 %4249
      %4251 = vrot.lane.b32.xlu0 %v3754, 88
      %v4252 = vpop.permute.xlu0 %4251
      %4253 = vrot.lane.b32.xlu0 %v3759, 88
      %v4254 = vpop.permute.xlu0 %4253
      %4255 = vrot.lane.b32.xlu0 %v3764, 88
      %v4256 = vpop.permute.xlu0 %4255
      %4257 = vrot.lane.b32.xlu0 %v3769, 88
      %v4258 = vpop.permute.xlu0 %4257
      %4259 = vrot.lane.b32.xlu0 %v3774, 88
      %v4260 = vpop.permute.xlu0 %4259
      %4261 = vrot.lane.b32.xlu0 %v3779, 88
      %v4262 = vpop.permute.xlu0 %4261
      %4263 = vrot.lane.b32.xlu0 %v3784, 88
      %v4264 = vpop.permute.xlu0 %4263
      %4265 = vrot.lane.b32.xlu0 %v3789, 88
      %v4266 = vpop.permute.xlu0 %4265
      %4267 = vrot.lane.b32.xlu0 %v3794, 88
      %v4268 = vpop.permute.xlu0 %4267
      %v4269 = vsel %vm872, %v4234, 0
      %v4271 = vsel %vm872, %v4236, 0
      %v4273 = vsel %vm872, %v4238, 0
      %v4275 = vsel %vm872, %v4240, 0
      %v4277 = vsel %vm872, %v4242, 0
      %v4279 = vsel %vm872, %v4244, 0
      %v4281 = vsel %vm872, %v4246, 0
      %v4283 = vsel %vm872, %v4248, 0
      %v4285 = vsel %vm872, %v4250, 0
      %v4287 = vsel %vm872, %v4252, 0
      %v4289 = vsel %vm872, %v4254, 0
      %v4291 = vsel %vm872, %v4256, 0
      %v4293 = vsel %vm872, %v4258, 0
      %v4295 = vsel %vm872, %v4260, 0
      %v4297 = vsel %vm872, %v4262, 0
      %v4299 = vsel %vm872, %v4264, 0
      %v4301 = vsel %vm872, %v4266, 0
      %v4303 = vsel %vm872, %v4268, 0
      %4305 = vmatprep.subr.mxu0 0.0
      %4306 = vmatpush1.xpose.msra.mxu0 %v4287
      %4307 = vmatprep.subr.mxu0 0.0
      %4308 = vmatpush1.xpose.msra.mxu0 %v4289
      %4309 = vmatprep.subr.mxu0 0.0
      %4310 = vmatpush1.xpose.msra.mxu0 %v4291
      %4311 = vmatprep.subr.mxu0 0.0
      %4312 = vmatpush1.xpose.msra.mxu0 %v4293
      %4313 = vmatprep.subr.mxu0 0.0
      %4314 = vmatpush1.xpose.msra.mxu0 %v4295
      %4315 = vmatprep.subr.mxu0 0.0
      %4316 = vmatpush1.xpose.msra.mxu0 %v4297
      %4317 = vmatprep.subr.mxu0 0.0
      %4318 = vmatpush1.xpose.msra.mxu0 %v4299
      %4319 = vmatprep.subr.mxu0 0.0
      %4320 = vmatpush1.xpose.msra.mxu0 %v4301
      %4321 = vmatprep.subr.mxu0 0.0
      %4322 = vmatpush1.xpose.msra.mxu0 %v4303
      %4323 = vmatprep.subr.mxu0 0.0
      %4324 = vmatpush1.xpose.msra.mxu0 0.0
      %4325 = vmatprep.subr.mxu0 0.0
      %4326 = vmatpush1.xpose.msra.mxu0 0.0
      %4327 = vmatprep.subr.mxu0 0.0
      %4328 = vmatpush1.xpose.msra.mxu0 0.0
      %4329 = vmatprep.subr.mxu0 0.0
      %4330 = vmatpush1.xpose.msra.mxu0 0.0
      %4331 = vmatprep.subr.mxu0 0.0
      %4332 = vmatpush1.xpose.msra.mxu0 0.0
      %4333 = vmatprep.subr.mxu0 0.0
      %4334 = vmatpush1.xpose.msra.mxu0 0.0
      %4335 = vmatprep.subr.mxu0 0.0
      %4336 = vmatpush1.xpose.msra.mxu0 0.0
      %4337 = vmatprep.subr.mxu0 0.0
      %4338 = vmatpush1.xpose.msra.mxu0 0.0
      %4339 = vmatprep.subr.mxu0 0.0
      %4340 = vmatpush1.xpose.msra.mxu0 0.0
      %4341 = vmatprep.subr.mxu0 0.0
      %4342 = vmatpush1.xpose.msra.mxu0 0.0
      %4343 = vmatprep.subr.mxu0 0.0
      %4344 = vmatpush1.xpose.msra.mxu0 0.0
      %4345 = vmatprep.subr.mxu0 0.0
      %4346 = vmatpush1.xpose.msra.mxu0 0.0
      %4347 = vmatprep.subr.mxu0 0.0
      %4348 = vmatpush1.xpose.msra.mxu0 0.0
      %4349 = vmatprep.subr.mxu0 0.0
      %4350 = vmatpush1.xpose.msra.mxu0 0.0
      %4351 = vmatprep.subr.mxu0 0.0
      %4352 = vmatpush1.xpose.msra.mxu0 0.0
      %4353 = vmatprep.subr.mxu0 0.0
      %4354 = vmatpush1.xpose.msra.mxu0 0.0
      %4355 = vmatprep.subr.mxu0 0.0
      %4356 = vmatpush1.xpose.msra.mxu0 0.0
      %4357 = vmatprep.subr.mxu0 0.0
      %4358 = vmatpush1.xpose.msra.mxu0 0.0
      %4359 = vmatprep.subr.mxu0 0.0
      %4360 = vmatpush1.xpose.msra.mxu0 0.0
      %4361 = vmatprep.subr.mxu0 0.0
      %4362 = vmatpush1.xpose.msra.mxu0 0.0
      %4363 = vmatprep.subr.mxu0 0.0
      %4364 = vmatpush1.xpose.msra.mxu0 0.0
      %4365 = vmatprep.subr.mxu0 0.0
      %4366 = vmatpush1.xpose.msra.mxu0 0.0
      %4367 = vmatprep.subr.mxu0 0.0
      %4368 = vmatpush1.xpose.msra.mxu0 0.0
      %4369 = vmatprep.mubr.f32.mxu0 0.0
      %4370 = vmatmul.mubr.f32.gmra.mrb[0].mxu0 %v4269
      %v4371 = vpop.f32.mrb[0].mxu0
      %v4372 = vadd.f32 %v545, %v4371
      %v4373 = vpop.f32.mrb[0].mxu0
      %4374 = vmatprep.mubr.f32.mxu0 0.0
      %4375 = vmatmul.mubr.f32.gmra.mrb[0].mxu0 %v4271
      %v4376 = vpop.f32.mrb[0].mxu0
      %v4377 = vadd.f32 %v546, %v4376
      %v4378 = vpop.f32.mrb[0].mxu0
      %4379 = vmatprep.mubr.f32.mxu0 0.0
      %4380 = vmatmul.mubr.f32.gmra.mrb[0].mxu0 %v4273
      %v4381 = vpop.f32.mrb[0].mxu0
      %v4382 = vadd.f32 %v547, %v4381
      %v4383 = vpop.f32.mrb[0].mxu0
      %4384 = vmatprep.mubr.f32.mxu0 0.0
      %4385 = vmatmul.mubr.f32.gmra.mrb[0].mxu0 %v4275
      %v4386 = vpop.f32.mrb[0].mxu0
      %v4387 = vadd.f32 %v548, %v4386
      %v4388 = vpop.f32.mrb[0].mxu0
      %4389 = vmatprep.mubr.f32.mxu0 0.0
      %4390 = vmatmul.mubr.f32.gmra.mrb[0].mxu0 %v4277
      %v4391 = vpop.f32.mrb[0].mxu0
      %v4392 = vadd.f32 %v549, %v4391
      %v4393 = vpop.f32.mrb[0].mxu0
      %4394 = vmatprep.mubr.f32.mxu0 0.0
      %4395 = vmatmul.mubr.f32.gmra.mrb[0].mxu0 %v4279
      %v4396 = vpop.f32.mrb[0].mxu0
      %v4397 = vadd.f32 %v550, %v4396
      %v4398 = vpop.f32.mrb[0].mxu0
      %4399 = vmatprep.mubr.f32.mxu0 0.0
      %4400 = vmatmul.mubr.f32.gmra.mrb[0].mxu0 %v4281
      %v4401 = vpop.f32.mrb[0].mxu0
      %v4402 = vadd.f32 %v551, %v4401
      %v4403 = vpop.f32.mrb[0].mxu0
      %4404 = vmatprep.mubr.f32.mxu0 0.0
      %4405 = vmatmul.mubr.f32.gmra.mrb[0].mxu0 %v4283
      %v4406 = vpop.f32.mrb[0].mxu0
      %v4407 = vadd.f32 %v552, %v4406
      %v4408 = vpop.f32.mrb[0].mxu0
      %4409 = vmatprep.mubr.f32.mxu0 0.0
      %4410 = vmatmul.mubr.f32.gmra.mrb[0].mxu0 %v4285
      %v4411 = vpop.f32.mrb[0].mxu0
      %v4412 = vadd.f32 %v553, %v4411
      %v4413 = vpop.f32.mrb[0].mxu0
      %4414 = vdwg.mxu0
      %v4415 = vsel %vm1019, %v4372, -inf
      %4416 = vmax.xlane.f32.xlu0 %v4415
      %v4417 = vpop.xlane.xlu0 %4416
      %v4418 = vsel %vm1019, %v4377, -inf
      %4419 = vmax.xlane.f32.xlu0 %v4418
      %v4420 = vpop.xlane.xlu0 %4419
      %v4421 = vsel %vm1019, %v4382, -inf
      %4422 = vmax.xlane.f32.xlu0 %v4421
      %v4423 = vpop.xlane.xlu0 %4422
      %v4424 = vsel %vm1019, %v4387, -inf
      %4425 = vmax.xlane.f32.xlu0 %v4424
      %v4426 = vpop.xlane.xlu0 %4425
      %v4427 = vsel %vm1019, %v4392, -inf
      %4428 = vmax.xlane.f32.xlu0 %v4427
      %v4429 = vpop.xlane.xlu0 %4428
      %v4430 = vsel %vm1019, %v4397, -inf
      %4431 = vmax.xlane.f32.xlu0 %v4430
      %v4432 = vpop.xlane.xlu0 %4431
      %v4433 = vsel %vm1019, %v4402, -inf
      %4434 = vmax.xlane.f32.xlu0 %v4433
      %v4435 = vpop.xlane.xlu0 %4434
      %v4436 = vsel %vm1019, %v4407, -inf
      %4437 = vmax.xlane.f32.xlu0 %v4436
      %v4438 = vpop.xlane.xlu0 %4437
      %v4439 = vsel %vm1019, %v4412, -inf
      %4440 = vmax.xlane.f32.xlu0 %v4439
      %v4441 = vpop.xlane.xlu0 %4440
      %v4442 = vsub.f32 %v4372, %v4417
      %v4443 = vsub.f32 %v4377, %v4420
      %v4444 = vsub.f32 %v4382, %v4423
      %v4445 = vsub.f32 %v4387, %v4426
      %v4446 = vsub.f32 %v4392, %v4429
      %v4447 = vsub.f32 %v4397, %v4432
      %v4448 = vsub.f32 %v4402, %v4435
      %v4449 = vsub.f32 %v4407, %v4438
      %v4450 = vsub.f32 %v4412, %v4441
      %v4451 = vmul.f32 %v4442, 1.442695
      %v4452 = vpow.pop %v4451
      %v4453 = vmul.f32 %v4443, 1.442695
      %v4454 = vpow.pop %v4453
      %v4455 = vmul.f32 %v4444, 1.442695
      %v4456 = vpow.pop %v4455
      %v4457 = vmul.f32 %v4445, 1.442695
      %v4458 = vpow.pop %v4457
      %v4459 = vmul.f32 %v4446, 1.442695
      %v4460 = vpow.pop %v4459
      %v4461 = vmul.f32 %v4447, 1.442695
      %v4462 = vpow.pop %v4461
      %v4463 = vmul.f32 %v4448, 1.442695
      %v4464 = vpow.pop %v4463
      %v4465 = vmul.f32 %v4449, 1.442695
      %v4466 = vpow.pop %v4465
      %v4467 = vmul.f32 %v4450, 1.442695
      %v4468 = vpow.pop %v4467
      %v4469 = vsel %vm1019, %v4452, 0.0
      %4470 = vadd.xlane.f32.xlu0 %v4469
      %v4471 = vpop.xlane.xlu0 %4470
      %v4472 = vsel %vm1019, %v4454, 0.0
      %4473 = vadd.xlane.f32.xlu0 %v4472
      %v4474 = vpop.xlane.xlu0 %4473
      %v4475 = vsel %vm1019, %v4456, 0.0
      %4476 = vadd.xlane.f32.xlu0 %v4475
      %v4477 = vpop.xlane.xlu0 %4476
      %v4478 = vsel %vm1019, %v4458, 0.0
      %4479 = vadd.xlane.f32.xlu0 %v4478
      %v4480 = vpop.xlane.xlu0 %4479
      %v4481 = vsel %vm1019, %v4460, 0.0
      %4482 = vadd.xlane.f32.xlu0 %v4481
      %v4483 = vpop.xlane.xlu0 %4482
      %v4484 = vsel %vm1019, %v4462, 0.0
      %4485 = vadd.xlane.f32.xlu0 %v4484
      %v4486 = vpop.xlane.xlu0 %4485
      %v4487 = vsel %vm1019, %v4464, 0.0
      %4488 = vadd.xlane.f32.xlu0 %v4487
      %v4489 = vpop.xlane.xlu0 %4488
      %v4490 = vsel %vm1019, %v4466, 0.0
      %4491 = vadd.xlane.f32.xlu0 %v4490
      %v4492 = vpop.xlane.xlu0 %4491
      %v4493 = vsel %vm1019, %v4468, 0.0
      %4494 = vadd.xlane.f32.xlu0 %v4493
      %v4495 = vpop.xlane.xlu0 %4494
      %v4496 = vrcp.pop %v4471
      %v4497 = vrcp.pop %v4474
      %v4498 = vrcp.pop %v4477
      %v4499 = vrcp.pop %v4480
      %v4500 = vrcp.pop %v4483
      %v4501 = vrcp.pop %v4486
      %v4502 = vrcp.pop %v4489
      %v4503 = vrcp.pop %v4492
      %v4504 = vrcp.pop %v4495
      %v4505 = vmul.f32 %v4452, %v4496
      %v4506 = vmul.f32 %v4454, %v4497
      %v4507 = vmul.f32 %v4456, %v4498
      %v4508 = vmul.f32 %v4458, %v4499
      %v4509 = vmul.f32 %v4460, %v4500
      %v4510 = vmul.f32 %v4462, %v4501
      %v4511 = vmul.f32 %v4464, %v4502
      %v4512 = vmul.f32 %v4466, %v4503
      %v4513 = vmul.f32 %v4468, %v4504
      %4514 = vrot.lane.b32.xlu0 %v3754, 56
      %v4515 = vpop.permute.xlu0 %4514
      %4516 = vrot.lane.b32.xlu0 %v3759, 56
      %v4517 = vpop.permute.xlu0 %4516
      %4518 = vrot.lane.b32.xlu0 %v3764, 56
      %v4519 = vpop.permute.xlu0 %4518
      %4520 = vrot.lane.b32.xlu0 %v3769, 56
      %v4521 = vpop.permute.xlu0 %4520
      %4522 = vrot.lane.b32.xlu0 %v3774, 56
      %v4523 = vpop.permute.xlu0 %4522
      %4524 = vrot.lane.b32.xlu0 %v3779, 56
      %v4525 = vpop.permute.xlu0 %4524
      %4526 = vrot.lane.b32.xlu0 %v3784, 56
      %v4527 = vpop.permute.xlu0 %4526
      %4528 = vrot.lane.b32.xlu0 %v3789, 56
      %v4529 = vpop.permute.xlu0 %4528
      %4530 = vrot.lane.b32.xlu0 %v3794, 56
      %v4531 = vpop.permute.xlu0 %4530
      %v4542 = vsel %vm1019, %v4505, 0
      %v4545 = vsel %vm1019, %v4506, 0
      %v4548 = vsel %vm1019, %v4507, 0
      %v4551 = vsel %vm1019, %v4508, 0
      %v4554 = vsel %vm1019, %v4509, 0
      %v4557 = vsel %vm1019, %v4510, 0
      %v4560 = vsel %vm1019, %v4511, 0
      %v4563 = vsel %vm1019, %v4512, 0
      %v4566 = vsel %vm1019, %v4513, 0
      %4568 = vmatprep.subr.mxu0 0.0
      %4569 = vmatpush1.msra.mxu0 %v4515
      %4570 = vmatprep.subr.mxu0 0.0
      %4571 = vmatpush1.msra.mxu0 %v4517
      %4572 = vmatprep.subr.mxu0 0.0
      %4573 = vmatpush1.msra.mxu0 %v4519
      %4574 = vmatprep.subr.mxu0 0.0
      %4575 = vmatpush1.msra.mxu0 %v4521
      %4576 = vmatprep.subr.mxu0 0.0
      %4577 = vmatpush1.msra.mxu0 %v4523
      %4578 = vmatprep.subr.mxu0 0.0
      %4579 = vmatpush1.msra.mxu0 %v4525
      %4580 = vmatprep.subr.mxu0 0.0
      %4581 = vmatpush1.msra.mxu0 %v4527
      %4582 = vmatprep.subr.mxu0 0.0
      %4583 = vmatpush1.msra.mxu0 %v4529
      %4584 = vmatprep.subr.mxu0 0.0
      %4585 = vmatpush1.msra.mxu0 %v4531
      %4586 = vmatprep.subr.mxu0 0.0
      %4587 = vmatpush1.msra.mxu0 0.0
      %4588 = vmatprep.subr.mxu0 0.0
      %4589 = vmatpush1.msra.mxu0 0.0
      %4590 = vmatprep.subr.mxu0 0.0
      %4591 = vmatpush1.msra.mxu0 0.0
      %4592 = vmatprep.subr.mxu0 0.0
      %4593 = vmatpush1.msra.mxu0 0.0
      %4594 = vmatprep.subr.mxu0 0.0
      %4595 = vmatpush1.msra.mxu0 0.0
      %4596 = vmatprep.subr.mxu0 0.0
      %4597 = vmatpush1.msra.mxu0 0.0
      %4598 = vmatprep.subr.mxu0 0.0
      %4599 = vmatpush1.msra.mxu0 0.0
      %4600 = vmatprep.subr.mxu0 0.0
      %4601 = vmatpush1.msra.mxu0 0.0
      %4602 = vmatprep.subr.mxu0 0.0
      %4603 = vmatpush1.msra.mxu0 0.0
      %4604 = vmatprep.subr.mxu0 0.0
      %4605 = vmatpush1.msra.mxu0 0.0
      %4606 = vmatprep.subr.mxu0 0.0
      %4607 = vmatpush1.msra.mxu0 0.0
      %4608 = vmatprep.subr.mxu0 0.0
      %4609 = vmatpush1.msra.mxu0 0.0
      %4610 = vmatprep.subr.mxu0 0.0
      %4611 = vmatpush1.msra.mxu0 0.0
      %4612 = vmatprep.subr.mxu0 0.0
      %4613 = vmatpush1.msra.mxu0 0.0
      %4614 = vmatprep.subr.mxu0 0.0
      %4615 = vmatpush1.msra.mxu0 0.0
      %4616 = vmatprep.subr.mxu0 0.0
      %4617 = vmatpush1.msra.mxu0 0.0
      %4618 = vmatprep.subr.mxu0 0.0
      %4619 = vmatpush1.msra.mxu0 0.0
      %4620 = vmatprep.subr.mxu0 0.0
      %4621 = vmatpush1.msra.mxu0 0.0
      %4622 = vmatprep.subr.mxu0 0.0
      %4623 = vmatpush1.msra.mxu0 0.0
      %4624 = vmatprep.subr.mxu0 0.0
      %4625 = vmatpush1.msra.mxu0 0.0
      %4626 = vmatprep.subr.mxu0 0.0
      %4627 = vmatpush1.msra.mxu0 0.0
      %4628 = vmatprep.subr.mxu0 0.0
      %4629 = vmatpush1.msra.mxu0 0.0
      %4630 = vmatprep.subr.mxu0 0.0
      %4631 = vmatpush1.msra.mxu0 0.0
      %4632 = vmatprep.mubr.f32.mxu0 0.0
      %4633 = vmatmul.mubr.f32.gmra.mrb[0].mxu0 %v4542
      %v4634 = vpop.f32.mrb[0].mxu0
      %v4635 = vadd.f32 0.0, %v4634
      %v4636 = vpop.f32.mrb[0].mxu0
      %4637 = vmatprep.mubr.f32.mxu0 0.0
      %4638 = vmatmul.mubr.f32.gmra.mrb[0].mxu0 %v4545
      %v4639 = vpop.f32.mrb[0].mxu0
      %v4640 = vadd.f32 0.0, %v4639
      %v4641 = vpop.f32.mrb[0].mxu0
      %4642 = vmatprep.mubr.f32.mxu0 0.0
      %4643 = vmatmul.mubr.f32.gmra.mrb[0].mxu0 %v4548
      %v4644 = vpop.f32.mrb[0].mxu0
      %v4645 = vadd.f32 0.0, %v4644
      %v4646 = vpop.f32.mrb[0].mxu0
      %4647 = vmatprep.mubr.f32.mxu0 0.0
      %4648 = vmatmul.mubr.f32.gmra.mrb[0].mxu0 %v4551
      %v4649 = vpop.f32.mrb[0].mxu0
      %v4650 = vadd.f32 0.0, %v4649
      %v4651 = vpop.f32.mrb[0].mxu0
      %4652 = vmatprep.mubr.f32.mxu0 0.0
      %4653 = vmatmul.mubr.f32.gmra.mrb[0].mxu0 %v4554
      %v4654 = vpop.f32.mrb[0].mxu0
      %v4655 = vadd.f32 0.0, %v4654
      %v4656 = vpop.f32.mrb[0].mxu0
      %4657 = vmatprep.mubr.f32.mxu0 0.0
      %4658 = vmatmul.mubr.f32.gmra.mrb[0].mxu0 %v4557
      %v4659 = vpop.f32.mrb[0].mxu0
      %v4660 = vadd.f32 0.0, %v4659
      %v4661 = vpop.f32.mrb[0].mxu0
      %4662 = vmatprep.mubr.f32.mxu0 0.0
      %4663 = vmatmul.mubr.f32.gmra.mrb[0].mxu0 %v4560
      %v4664 = vpop.f32.mrb[0].mxu0
      %v4665 = vadd.f32 0.0, %v4664
      %v4666 = vpop.f32.mrb[0].mxu0
      %4667 = vmatprep.mubr.f32.mxu0 0.0
      %4668 = vmatmul.mubr.f32.gmra.mrb[0].mxu0 %v4563
      %v4669 = vpop.f32.mrb[0].mxu0
      %v4670 = vadd.f32 0.0, %v4669
      %v4671 = vpop.f32.mrb[0].mxu0
      %4672 = vmatprep.mubr.f32.mxu0 0.0
      %4673 = vmatmul.mubr.f32.gmra.mrb[0].mxu0 %v4566
      %v4674 = vpop.f32.mrb[0].mxu0
      %v4675 = vadd.f32 0.0, %v4674
      %v4676 = vpop.f32.mrb[0].mxu0
      %4677 = vdwg.mxu0
      %4678 = vrot.lane.b32.xlu0 %v3754, 112
      %v4679 = vpop.permute.xlu0 %4678
      %4680 = vrot.lane.b32.xlu0 %v3759, 112
      %v4681 = vpop.permute.xlu0 %4680
      %4682 = vrot.lane.b32.xlu0 %v3764, 112
      %v4683 = vpop.permute.xlu0 %4682
      %4684 = vrot.lane.b32.xlu0 %v3769, 112
      %v4685 = vpop.permute.xlu0 %4684
      %4686 = vrot.lane.b32.xlu0 %v3774, 112
      %v4687 = vpop.permute.xlu0 %4686
      %4688 = vrot.lane.b32.xlu0 %v3779, 112
      %v4689 = vpop.permute.xlu0 %4688
      %4690 = vrot.lane.b32.xlu0 %v3784, 112
      %v4691 = vpop.permute.xlu0 %4690
      %4692 = vrot.lane.b32.xlu0 %v3789, 112
      %v4693 = vpop.permute.xlu0 %4692
      %4694 = vrot.lane.b32.xlu0 %v3794, 112
      %v4695 = vpop.permute.xlu0 %4694
      %4696 = vrot.lane.b32.xlu0 %v3754, 80
      %v4697 = vpop.permute.xlu0 %4696
      %4698 = vrot.lane.b32.xlu0 %v3759, 80
      %v4699 = vpop.permute.xlu0 %4698
      %4700 = vrot.lane.b32.xlu0 %v3764, 80
      %v4701 = vpop.permute.xlu0 %4700
      %4702 = vrot.lane.b32.xlu0 %v3769, 80
      %v4703 = vpop.permute.xlu0 %4702
      %4704 = vrot.lane.b32.xlu0 %v3774, 80
      %v4705 = vpop.permute.xlu0 %4704
      %4706 = vrot.lane.b32.xlu0 %v3779, 80
      %v4707 = vpop.permute.xlu0 %4706
      %4708 = vrot.lane.b32.xlu0 %v3784, 80
      %v4709 = vpop.permute.xlu0 %4708
      %4710 = vrot.lane.b32.xlu0 %v3789, 80
      %v4711 = vpop.permute.xlu0 %4710
      %4712 = vrot.lane.b32.xlu0 %v3794, 80
      %v4713 = vpop.permute.xlu0 %4712
      %v4714 = vsel %vm872, %v4679, 0
      %v4716 = vsel %vm872, %v4681, 0
      %v4718 = vsel %vm872, %v4683, 0
      %v4720 = vsel %vm872, %v4685, 0
      %v4722 = vsel %vm872, %v4687, 0
      %v4724 = vsel %vm872, %v4689, 0
      %v4726 = vsel %vm872, %v4691, 0
      %v4728 = vsel %vm872, %v4693, 0
      %v4730 = vsel %vm872, %v4695, 0
      %v4732 = vsel %vm872, %v4697, 0
      %v4734 = vsel %vm872, %v4699, 0
      %v4736 = vsel %vm872, %v4701, 0
      %v4738 = vsel %vm872, %v4703, 0
      %v4740 = vsel %vm872, %v4705, 0
      %v4742 = vsel %vm872, %v4707, 0
      %v4744 = vsel %vm872, %v4709, 0
      %v4746 = vsel %vm872, %v4711, 0
      %v4748 = vsel %vm872, %v4713, 0
      %4750 = vmatprep.subr.mxu0 0.0
      %4751 = vmatpush1.xpose.msra.mxu0 %v4732
      %4752 = vmatprep.subr.mxu0 0.0
      %4753 = vmatpush1.xpose.msra.mxu0 %v4734
      %4754 = vmatprep.subr.mxu0 0.0
      %4755 = vmatpush1.xpose.msra.mxu0 %v4736
      %4756 = vmatprep.subr.mxu0 0.0
      %4757 = vmatpush1.xpose.msra.mxu0 %v4738
      %4758 = vmatprep.subr.mxu0 0.0
      %4759 = vmatpush1.xpose.msra.mxu0 %v4740
      %4760 = vmatprep.subr.mxu0 0.0
      %4761 = vmatpush1.xpose.msra.mxu0 %v4742
      %4762 = vmatprep.subr.mxu0 0.0
      %4763 = vmatpush1.xpose.msra.mxu0 %v4744
      %4764 = vmatprep.subr.mxu0 0.0
      %4765 = vmatpush1.xpose.msra.mxu0 %v4746
      %4766 = vmatprep.subr.mxu0 0.0
      %4767 = vmatpush1.xpose.msra.mxu0 %v4748
      %4768 = vmatprep.subr.mxu0 0.0
      %4769 = vmatpush1.xpose.msra.mxu0 0.0
      %4770 = vmatprep.subr.mxu0 0.0
      %4771 = vmatpush1.xpose.msra.mxu0 0.0
      %4772 = vmatprep.subr.mxu0 0.0
      %4773 = vmatpush1.xpose.msra.mxu0 0.0
      %4774 = vmatprep.subr.mxu0 0.0
      %4775 = vmatpush1.xpose.msra.mxu0 0.0
      %4776 = vmatprep.subr.mxu0 0.0
      %4777 = vmatpush1.xpose.msra.mxu0 0.0
      %4778 = vmatprep.subr.mxu0 0.0
      %4779 = vmatpush1.xpose.msra.mxu0 0.0
      %4780 = vmatprep.subr.mxu0 0.0
      %4781 = vmatpush1.xpose.msra.mxu0 0.0
      %4782 = vmatprep.subr.mxu0 0.0
      %4783 = vmatpush1.xpose.msra.mxu0 0.0
      %4784 = vmatprep.subr.mxu0 0.0
      %4785 = vmatpush1.xpose.msra.mxu0 0.0
      %4786 = vmatprep.subr.mxu0 0.0
      %4787 = vmatpush1.xpose.msra.mxu0 0.0
      %4788 = vmatprep.subr.mxu0 0.0
      %4789 = vmatpush1.xpose.msra.mxu0 0.0
      %4790 = vmatprep.subr.mxu0 0.0
      %4791 = vmatpush1.xpose.msra.mxu0 0.0
      %4792 = vmatprep.subr.mxu0 0.0
      %4793 = vmatpush1.xpose.msra.mxu0 0.0
      %4794 = vmatprep.subr.mxu0 0.0
      %4795 = vmatpush1.xpose.msra.mxu0 0.0
      %4796 = vmatprep.subr.mxu0 0.0
      %4797 = vmatpush1.xpose.msra.mxu0 0.0
      %4798 = vmatprep.subr.mxu0 0.0
      %4799 = vmatpush1.xpose.msra.mxu0 0.0
      %4800 = vmatprep.subr.mxu0 0.0
      %4801 = vmatpush1.xpose.msra.mxu0 0.0
      %4802 = vmatprep.subr.mxu0 0.0
      %4803 = vmatpush1.xpose.msra.mxu0 0.0
      %4804 = vmatprep.subr.mxu0 0.0
      %4805 = vmatpush1.xpose.msra.mxu0 0.0
      %4806 = vmatprep.subr.mxu0 0.0
      %4807 = vmatpush1.xpose.msra.mxu0 0.0
      %4808 = vmatprep.subr.mxu0 0.0
      %4809 = vmatpush1.xpose.msra.mxu0 0.0
      %4810 = vmatprep.subr.mxu0 0.0
      %4811 = vmatpush1.xpose.msra.mxu0 0.0
      %4812 = vmatprep.subr.mxu0 0.0
      %4813 = vmatpush1.xpose.msra.mxu0 0.0
      %4814 = vmatprep.mubr.f32.mxu0 0.0
      %4815 = vmatmul.mubr.f32.gmra.mrb[0].mxu0 %v4714
      %v4816 = vpop.f32.mrb[0].mxu0
      %v4817 = vadd.f32 %v545, %v4816
      %v4818 = vpop.f32.mrb[0].mxu0
      %4819 = vmatprep.mubr.f32.mxu0 0.0
      %4820 = vmatmul.mubr.f32.gmra.mrb[0].mxu0 %v4716
      %v4821 = vpop.f32.mrb[0].mxu0
      %v4822 = vadd.f32 %v546, %v4821
      %v4823 = vpop.f32.mrb[0].mxu0
      %4824 = vmatprep.mubr.f32.mxu0 0.0
      %4825 = vmatmul.mubr.f32.gmra.mrb[0].mxu0 %v4718
      %v4826 = vpop.f32.mrb[0].mxu0
      %v4827 = vadd.f32 %v547, %v4826
      %v4828 = vpop.f32.mrb[0].mxu0
      %4829 = vmatprep.mubr.f32.mxu0 0.0
      %4830 = vmatmul.mubr.f32.gmra.mrb[0].mxu0 %v4720
      %v4831 = vpop.f32.mrb[0].mxu0
      %v4832 = vadd.f32 %v548, %v4831
      %v4833 = vpop.f32.mrb[0].mxu0
      %4834 = vmatprep.mubr.f32.mxu0 0.0
      %4835 = vmatmul.mubr.f32.gmra.mrb[0].mxu0 %v4722
      %v4836 = vpop.f32.mrb[0].mxu0
      %v4837 = vadd.f32 %v549, %v4836
      %v4838 = vpop.f32.mrb[0].mxu0
      %4839 = vmatprep.mubr.f32.mxu0 0.0
      %4840 = vmatmul.mubr.f32.gmra.mrb[0].mxu0 %v4724
      %v4841 = vpop.f32.mrb[0].mxu0
      %v4842 = vadd.f32 %v550, %v4841
      %v4843 = vpop.f32.mrb[0].mxu0
      %4844 = vmatprep.mubr.f32.mxu0 0.0
      %4845 = vmatmul.mubr.f32.gmra.mrb[0].mxu0 %v4726
      %v4846 = vpop.f32.mrb[0].mxu0
      %v4847 = vadd.f32 %v551, %v4846
      %v4848 = vpop.f32.mrb[0].mxu0
      %4849 = vmatprep.mubr.f32.mxu0 0.0
      %4850 = vmatmul.mubr.f32.gmra.mrb[0].mxu0 %v4728
      %v4851 = vpop.f32.mrb[0].mxu0
      %v4852 = vadd.f32 %v552, %v4851
      %v4853 = vpop.f32.mrb[0].mxu0
      %4854 = vmatprep.mubr.f32.mxu0 0.0
      %4855 = vmatmul.mubr.f32.gmra.mrb[0].mxu0 %v4730
      %v4856 = vpop.f32.mrb[0].mxu0
      %v4857 = vadd.f32 %v553, %v4856
      %v4858 = vpop.f32.mrb[0].mxu0
      %4859 = vdwg.mxu0
      %v4860 = vsel %vm1019, %v4817, -inf
      %4861 = vmax.xlane.f32.xlu0 %v4860
      %v4862 = vpop.xlane.xlu0 %4861
      %v4863 = vsel %vm1019, %v4822, -inf
      %4864 = vmax.xlane.f32.xlu0 %v4863
      %v4865 = vpop.xlane.xlu0 %4864
      %v4866 = vsel %vm1019, %v4827, -inf
      %4867 = vmax.xlane.f32.xlu0 %v4866
      %v4868 = vpop.xlane.xlu0 %4867
      %v4869 = vsel %vm1019, %v4832, -inf
      %4870 = vmax.xlane.f32.xlu0 %v4869
      %v4871 = vpop.xlane.xlu0 %4870
      %v4872 = vsel %vm1019, %v4837, -inf
      %4873 = vmax.xlane.f32.xlu0 %v4872
      %v4874 = vpop.xlane.xlu0 %4873
      %v4875 = vsel %vm1019, %v4842, -inf
      %4876 = vmax.xlane.f32.xlu0 %v4875
      %v4877 = vpop.xlane.xlu0 %4876
      %v4878 = vsel %vm1019, %v4847, -inf
      %4879 = vmax.xlane.f32.xlu0 %v4878
      %v4880 = vpop.xlane.xlu0 %4879
      %v4881 = vsel %vm1019, %v4852, -inf
      %4882 = vmax.xlane.f32.xlu0 %v4881
      %v4883 = vpop.xlane.xlu0 %4882
      %v4884 = vsel %vm1019, %v4857, -inf
      %4885 = vmax.xlane.f32.xlu0 %v4884
      %v4886 = vpop.xlane.xlu0 %4885
      %v4887 = vsub.f32 %v4817, %v4862
      %v4888 = vsub.f32 %v4822, %v4865
      %v4889 = vsub.f32 %v4827, %v4868
      %v4890 = vsub.f32 %v4832, %v4871
      %v4891 = vsub.f32 %v4837, %v4874
      %v4892 = vsub.f32 %v4842, %v4877
      %v4893 = vsub.f32 %v4847, %v4880
      %v4894 = vsub.f32 %v4852, %v4883
      %v4895 = vsub.f32 %v4857, %v4886
      %v4896 = vmul.f32 %v4887, 1.442695
      %v4897 = vpow.pop %v4896
      %v4898 = vmul.f32 %v4888, 1.442695
      %v4899 = vpow.pop %v4898
      %v4900 = vmul.f32 %v4889, 1.442695
      %v4901 = vpow.pop %v4900
      %v4902 = vmul.f32 %v4890, 1.442695
      %v4903 = vpow.pop %v4902
      %v4904 = vmul.f32 %v4891, 1.442695
      %v4905 = vpow.pop %v4904
      %v4906 = vmul.f32 %v4892, 1.442695
      %v4907 = vpow.pop %v4906
      %v4908 = vmul.f32 %v4893, 1.442695
      %v4909 = vpow.pop %v4908
      %v4910 = vmul.f32 %v4894, 1.442695
      %v4911 = vpow.pop %v4910
      %v4912 = vmul.f32 %v4895, 1.442695
      %v4913 = vpow.pop %v4912
      %v4914 = vsel %vm1019, %v4897, 0.0
      %4915 = vadd.xlane.f32.xlu0 %v4914
      %v4916 = vpop.xlane.xlu0 %4915
      %v4917 = vsel %vm1019, %v4899, 0.0
      %4918 = vadd.xlane.f32.xlu0 %v4917
      %v4919 = vpop.xlane.xlu0 %4918
      %v4920 = vsel %vm1019, %v4901, 0.0
      %4921 = vadd.xlane.f32.xlu0 %v4920
      %v4922 = vpop.xlane.xlu0 %4921
      %v4923 = vsel %vm1019, %v4903, 0.0
      %4924 = vadd.xlane.f32.xlu0 %v4923
      %v4925 = vpop.xlane.xlu0 %4924
      %v4926 = vsel %vm1019, %v4905, 0.0
      %4927 = vadd.xlane.f32.xlu0 %v4926
      %v4928 = vpop.xlane.xlu0 %4927
      %v4929 = vsel %vm1019, %v4907, 0.0
      %4930 = vadd.xlane.f32.xlu0 %v4929
      %v4931 = vpop.xlane.xlu0 %4930
      %v4932 = vsel %vm1019, %v4909, 0.0
      %4933 = vadd.xlane.f32.xlu0 %v4932
      %v4934 = vpop.xlane.xlu0 %4933
      %v4935 = vsel %vm1019, %v4911, 0.0
      %4936 = vadd.xlane.f32.xlu0 %v4935
      %v4937 = vpop.xlane.xlu0 %4936
      %v4938 = vsel %vm1019, %v4913, 0.0
      %4939 = vadd.xlane.f32.xlu0 %v4938
      %v4940 = vpop.xlane.xlu0 %4939
      %v4941 = vrcp.pop %v4916
      %v4942 = vrcp.pop %v4919
      %v4943 = vrcp.pop %v4922
      %v4944 = vrcp.pop %v4925
      %v4945 = vrcp.pop %v4928
      %v4946 = vrcp.pop %v4931
      %v4947 = vrcp.pop %v4934
      %v4948 = vrcp.pop %v4937
      %v4949 = vrcp.pop %v4940
      %v4950 = vmul.f32 %v4897, %v4941
      %v4951 = vmul.f32 %v4899, %v4942
      %v4952 = vmul.f32 %v4901, %v4943
      %v4953 = vmul.f32 %v4903, %v4944
      %v4954 = vmul.f32 %v4905, %v4945
      %v4955 = vmul.f32 %v4907, %v4946
      %v4956 = vmul.f32 %v4909, %v4947
      %v4957 = vmul.f32 %v4911, %v4948
      %v4958 = vmul.f32 %v4913, %v4949
      %4959 = vrot.lane.b32.xlu0 %v3754, 48
      %v4960 = vpop.permute.xlu0 %4959
      %4961 = vrot.lane.b32.xlu0 %v3759, 48
      %v4962 = vpop.permute.xlu0 %4961
      %4963 = vrot.lane.b32.xlu0 %v3764, 48
      %v4964 = vpop.permute.xlu0 %4963
      %4965 = vrot.lane.b32.xlu0 %v3769, 48
      %v4966 = vpop.permute.xlu0 %4965
      %4967 = vrot.lane.b32.xlu0 %v3774, 48
      %v4968 = vpop.permute.xlu0 %4967
      %4969 = vrot.lane.b32.xlu0 %v3779, 48
      %v4970 = vpop.permute.xlu0 %4969
      %4971 = vrot.lane.b32.xlu0 %v3784, 48
      %v4972 = vpop.permute.xlu0 %4971
      %4973 = vrot.lane.b32.xlu0 %v3789, 48
      %v4974 = vpop.permute.xlu0 %4973
      %4975 = vrot.lane.b32.xlu0 %v3794, 48
      %v4976 = vpop.permute.xlu0 %4975
      %v4987 = vsel %vm1019, %v4950, 0
      %v4990 = vsel %vm1019, %v4951, 0
      %v4993 = vsel %vm1019, %v4952, 0
      %v4996 = vsel %vm1019, %v4953, 0
      %v4999 = vsel %vm1019, %v4954, 0
      %v5002 = vsel %vm1019, %v4955, 0
      %v5005 = vsel %vm1019, %v4956, 0
      %v5008 = vsel %vm1019, %v4957, 0
      %v5011 = vsel %vm1019, %v4958, 0
      %5013 = vmatprep.subr.mxu0 0.0
      %5014 = vmatpush1.msra.mxu0 %v4960
      %5015 = vmatprep.subr.mxu0 0.0
      %5016 = vmatpush1.msra.mxu0 %v4962
      %5017 = vmatprep.subr.mxu0 0.0
      %5018 = vmatpush1.msra.mxu0 %v4964
      %5019 = vmatprep.subr.mxu0 0.0
      %5020 = vmatpush1.msra.mxu0 %v4966
      %5021 = vmatprep.subr.mxu0 0.0
      %5022 = vmatpush1.msra.mxu0 %v4968
      %5023 = vmatprep.subr.mxu0 0.0
      %5024 = vmatpush1.msra.mxu0 %v4970
      %5025 = vmatprep.subr.mxu0 0.0
      %5026 = vmatpush1.msra.mxu0 %v4972
      %5027 = vmatprep.subr.mxu0 0.0
      %5028 = vmatpush1.msra.mxu0 %v4974
      %5029 = vmatprep.subr.mxu0 0.0
      %5030 = vmatpush1.msra.mxu0 %v4976
      %5031 = vmatprep.subr.mxu0 0.0
      %5032 = vmatpush1.msra.mxu0 0.0
      %5033 = vmatprep.subr.mxu0 0.0
      %5034 = vmatpush1.msra.mxu0 0.0
      %5035 = vmatprep.subr.mxu0 0.0
      %5036 = vmatpush1.msra.mxu0 0.0
      %5037 = vmatprep.subr.mxu0 0.0
      %5038 = vmatpush1.msra.mxu0 0.0
      %5039 = vmatprep.subr.mxu0 0.0
      %5040 = vmatpush1.msra.mxu0 0.0
      %5041 = vmatprep.subr.mxu0 0.0
      %5042 = vmatpush1.msra.mxu0 0.0
      %5043 = vmatprep.subr.mxu0 0.0
      %5044 = vmatpush1.msra.mxu0 0.0
      %5045 = vmatprep.subr.mxu0 0.0
      %5046 = vmatpush1.msra.mxu0 0.0
      %5047 = vmatprep.subr.mxu0 0.0
      %5048 = vmatpush1.msra.mxu0 0.0
      %5049 = vmatprep.subr.mxu0 0.0
      %5050 = vmatpush1.msra.mxu0 0.0
      %5051 = vmatprep.subr.mxu0 0.0
      %5052 = vmatpush1.msra.mxu0 0.0
      %5053 = vmatprep.subr.mxu0 0.0
      %5054 = vmatpush1.msra.mxu0 0.0
      %5055 = vmatprep.subr.mxu0 0.0
      %5056 = vmatpush1.msra.mxu0 0.0
      %5057 = vmatprep.subr.mxu0 0.0
      %5058 = vmatpush1.msra.mxu0 0.0
      %5059 = vmatprep.subr.mxu0 0.0
      %5060 = vmatpush1.msra.mxu0 0.0
      %5061 = vmatprep.subr.mxu0 0.0
      %5062 = vmatpush1.msra.mxu0 0.0
      %5063 = vmatprep.subr.mxu0 0.0
      %5064 = vmatpush1.msra.mxu0 0.0
      %5065 = vmatprep.subr.mxu0 0.0
      %5066 = vmatpush1.msra.mxu0 0.0
      %5067 = vmatprep.subr.mxu0 0.0
      %5068 = vmatpush1.msra.mxu0 0.0
      %5069 = vmatprep.subr.mxu0 0.0
      %5070 = vmatpush1.msra.mxu0 0.0
      %5071 = vmatprep.subr.mxu0 0.0
      %5072 = vmatpush1.msra.mxu0 0.0
      %5073 = vmatprep.subr.mxu0 0.0
      %5074 = vmatpush1.msra.mxu0 0.0
      %5075 = vmatprep.subr.mxu0 0.0
      %5076 = vmatpush1.msra.mxu0 0.0
      %5077 = vmatprep.mubr.f32.mxu0 0.0
      %5078 = vmatmul.mubr.f32.gmra.mrb[0].mxu0 %v4987
      %v5079 = vpop.f32.mrb[0].mxu0
      %v5080 = vadd.f32 0.0, %v5079
      %v5081 = vpop.f32.mrb[0].mxu0
      %5082 = vmatprep.mubr.f32.mxu0 0.0
      %5083 = vmatmul.mubr.f32.gmra.mrb[0].mxu0 %v4990
      %v5084 = vpop.f32.mrb[0].mxu0
      %v5085 = vadd.f32 0.0, %v5084
      %v5086 = vpop.f32.mrb[0].mxu0
      %5087 = vmatprep.mubr.f32.mxu0 0.0
      %5088 = vmatmul.mubr.f32.gmra.mrb[0].mxu0 %v4993
      %v5089 = vpop.f32.mrb[0].mxu0
      %v5090 = vadd.f32 0.0, %v5089
      %v5091 = vpop.f32.mrb[0].mxu0
      %5092 = vmatprep.mubr.f32.mxu0 0.0
      %5093 = vmatmul.mubr.f32.gmra.mrb[0].mxu0 %v4996
      %v5094 = vpop.f32.mrb[0].mxu0
      %v5095 = vadd.f32 0.0, %v5094
      %v5096 = vpop.f32.mrb[0].mxu0
      %5097 = vmatprep.mubr.f32.mxu0 0.0
      %5098 = vmatmul.mubr.f32.gmra.mrb[0].mxu0 %v4999
      %v5099 = vpop.f32.mrb[0].mxu0
      %v5100 = vadd.f32 0.0, %v5099
      %v5101 = vpop.f32.mrb[0].mxu0
      %5102 = vmatprep.mubr.f32.mxu0 0.0
      %5103 = vmatmul.mubr.f32.gmra.mrb[0].mxu0 %v5002
      %v5104 = vpop.f32.mrb[0].mxu0
      %v5105 = vadd.f32 0.0, %v5104
      %v5106 = vpop.f32.mrb[0].mxu0
      %5107 = vmatprep.mubr.f32.mxu0 0.0
      %5108 = vmatmul.mubr.f32.gmra.mrb[0].mxu0 %v5005
      %v5109 = vpop.f32.mrb[0].mxu0
      %v5110 = vadd.f32 0.0, %v5109
      %v5111 = vpop.f32.mrb[0].mxu0
      %5112 = vmatprep.mubr.f32.mxu0 0.0
      %5113 = vmatmul.mubr.f32.gmra.mrb[0].mxu0 %v5008
      %v5114 = vpop.f32.mrb[0].mxu0
      %v5115 = vadd.f32 0.0, %v5114
      %v5116 = vpop.f32.mrb[0].mxu0
      %5117 = vmatprep.mubr.f32.mxu0 0.0
      %5118 = vmatmul.mubr.f32.gmra.mrb[0].mxu0 %v5011
      %v5119 = vpop.f32.mrb[0].mxu0
      %v5120 = vadd.f32 0.0, %v5119
      %v5121 = vpop.f32.mrb[0].mxu0
      %5122 = vdwg.mxu0
      %5123 = vrot.lane.b32.xlu0 %v3754, 104
      %v5124 = vpop.permute.xlu0 %5123
      %5125 = vrot.lane.b32.xlu0 %v3759, 104
      %v5126 = vpop.permute.xlu0 %5125
      %5127 = vrot.lane.b32.xlu0 %v3764, 104
      %v5128 = vpop.permute.xlu0 %5127
      %5129 = vrot.lane.b32.xlu0 %v3769, 104
      %v5130 = vpop.permute.xlu0 %5129
      %5131 = vrot.lane.b32.xlu0 %v3774, 104
      %v5132 = vpop.permute.xlu0 %5131
      %5133 = vrot.lane.b32.xlu0 %v3779, 104
      %v5134 = vpop.permute.xlu0 %5133
      %5135 = vrot.lane.b32.xlu0 %v3784, 104
      %v5136 = vpop.permute.xlu0 %5135
      %5137 = vrot.lane.b32.xlu0 %v3789, 104
      %v5138 = vpop.permute.xlu0 %5137
      %5139 = vrot.lane.b32.xlu0 %v3794, 104
      %v5140 = vpop.permute.xlu0 %5139
      %5141 = vrot.lane.b32.xlu0 %v3754, 72
      %v5142 = vpop.permute.xlu0 %5141
      %5143 = vrot.lane.b32.xlu0 %v3759, 72
      %v5144 = vpop.permute.xlu0 %5143
      %5145 = vrot.lane.b32.xlu0 %v3764, 72
      %v5146 = vpop.permute.xlu0 %5145
      %5147 = vrot.lane.b32.xlu0 %v3769, 72
      %v5148 = vpop.permute.xlu0 %5147
      %5149 = vrot.lane.b32.xlu0 %v3774, 72
      %v5150 = vpop.permute.xlu0 %5149
      %5151 = vrot.lane.b32.xlu0 %v3779, 72
      %v5152 = vpop.permute.xlu0 %5151
      %5153 = vrot.lane.b32.xlu0 %v3784, 72
      %v5154 = vpop.permute.xlu0 %5153
      %5155 = vrot.lane.b32.xlu0 %v3789, 72
      %v5156 = vpop.permute.xlu0 %5155
      %5157 = vrot.lane.b32.xlu0 %v3794, 72
      %v5158 = vpop.permute.xlu0 %5157
      %v5159 = vsel %vm872, %v5124, 0
      %v5161 = vsel %vm872, %v5126, 0
      %v5163 = vsel %vm872, %v5128, 0
      %v5165 = vsel %vm872, %v5130, 0
      %v5167 = vsel %vm872, %v5132, 0
      %v5169 = vsel %vm872, %v5134, 0
      %v5171 = vsel %vm872, %v5136, 0
      %v5173 = vsel %vm872, %v5138, 0
      %v5175 = vsel %vm872, %v5140, 0
      %v5177 = vsel %vm872, %v5142, 0
      %v5179 = vsel %vm872, %v5144, 0
      %v5181 = vsel %vm872, %v5146, 0
      %v5183 = vsel %vm872, %v5148, 0
      %v5185 = vsel %vm872, %v5150, 0
      %v5187 = vsel %vm872, %v5152, 0
      %v5189 = vsel %vm872, %v5154, 0
      %v5191 = vsel %vm872, %v5156, 0
      %v5193 = vsel %vm872, %v5158, 0
      %5195 = vmatprep.subr.mxu0 0.0
      %5196 = vmatpush1.xpose.msra.mxu0 %v5177
      %5197 = vmatprep.subr.mxu0 0.0
      %5198 = vmatpush1.xpose.msra.mxu0 %v5179
      %5199 = vmatprep.subr.mxu0 0.0
      %5200 = vmatpush1.xpose.msra.mxu0 %v5181
      %5201 = vmatprep.subr.mxu0 0.0
      %5202 = vmatpush1.xpose.msra.mxu0 %v5183
      %5203 = vmatprep.subr.mxu0 0.0
      %5204 = vmatpush1.xpose.msra.mxu0 %v5185
      %5205 = vmatprep.subr.mxu0 0.0
      %5206 = vmatpush1.xpose.msra.mxu0 %v5187
      %5207 = vmatprep.subr.mxu0 0.0
      %5208 = vmatpush1.xpose.msra.mxu0 %v5189
      %5209 = vmatprep.subr.mxu0 0.0
      %5210 = vmatpush1.xpose.msra.mxu0 %v5191
      %5211 = vmatprep.subr.mxu0 0.0
      %5212 = vmatpush1.xpose.msra.mxu0 %v5193
      %5213 = vmatprep.subr.mxu0 0.0
      %5214 = vmatpush1.xpose.msra.mxu0 0.0
      %5215 = vmatprep.subr.mxu0 0.0
      %5216 = vmatpush1.xpose.msra.mxu0 0.0
      %5217 = vmatprep.subr.mxu0 0.0
      %5218 = vmatpush1.xpose.msra.mxu0 0.0
      %5219 = vmatprep.subr.mxu0 0.0
      %5220 = vmatpush1.xpose.msra.mxu0 0.0
      %5221 = vmatprep.subr.mxu0 0.0
      %5222 = vmatpush1.xpose.msra.mxu0 0.0
      %5223 = vmatprep.subr.mxu0 0.0
      %5224 = vmatpush1.xpose.msra.mxu0 0.0
      %5225 = vmatprep.subr.mxu0 0.0
      %5226 = vmatpush1.xpose.msra.mxu0 0.0
      %5227 = vmatprep.subr.mxu0 0.0
      %5228 = vmatpush1.xpose.msra.mxu0 0.0
      %5229 = vmatprep.subr.mxu0 0.0
      %5230 = vmatpush1.xpose.msra.mxu0 0.0
      %5231 = vmatprep.subr.mxu0 0.0
      %5232 = vmatpush1.xpose.msra.mxu0 0.0
      %5233 = vmatprep.subr.mxu0 0.0
      %5234 = vmatpush1.xpose.msra.mxu0 0.0
      %5235 = vmatprep.subr.mxu0 0.0
      %5236 = vmatpush1.xpose.msra.mxu0 0.0
      %5237 = vmatprep.subr.mxu0 0.0
      %5238 = vmatpush1.xpose.msra.mxu0 0.0
      %5239 = vmatprep.subr.mxu0 0.0
      %5240 = vmatpush1.xpose.msra.mxu0 0.0
      %5241 = vmatprep.subr.mxu0 0.0
      %5242 = vmatpush1.xpose.msra.mxu0 0.0
      %5243 = vmatprep.subr.mxu0 0.0
      %5244 = vmatpush1.xpose.msra.mxu0 0.0
      %5245 = vmatprep.subr.mxu0 0.0
      %5246 = vmatpush1.xpose.msra.mxu0 0.0
      %5247 = vmatprep.subr.mxu0 0.0
      %5248 = vmatpush1.xpose.msra.mxu0 0.0
      %5249 = vmatprep.subr.mxu0 0.0
      %5250 = vmatpush1.xpose.msra.mxu0 0.0
      %5251 = vmatprep.subr.mxu0 0.0
      %5252 = vmatpush1.xpose.msra.mxu0 0.0
      %5253 = vmatprep.subr.mxu0 0.0
      %5254 = vmatpush1.xpose.msra.mxu0 0.0
      %5255 = vmatprep.subr.mxu0 0.0
      %5256 = vmatpush1.xpose.msra.mxu0 0.0
      %5257 = vmatprep.subr.mxu0 0.0
      %5258 = vmatpush1.xpose.msra.mxu0 0.0
      %5259 = vmatprep.mubr.f32.mxu0 0.0
      %5260 = vmatmul.mubr.f32.gmra.mrb[0].mxu0 %v5159
      %v5261 = vpop.f32.mrb[0].mxu0
      %v5262 = vadd.f32 %v545, %v5261
      %v5263 = vpop.f32.mrb[0].mxu0
      %5264 = vmatprep.mubr.f32.mxu0 0.0
      %5265 = vmatmul.mubr.f32.gmra.mrb[0].mxu0 %v5161
      %v5266 = vpop.f32.mrb[0].mxu0
      %v5267 = vadd.f32 %v546, %v5266
      %v5268 = vpop.f32.mrb[0].mxu0
      %5269 = vmatprep.mubr.f32.mxu0 0.0
      %5270 = vmatmul.mubr.f32.gmra.mrb[0].mxu0 %v5163
      %v5271 = vpop.f32.mrb[0].mxu0
      %v5272 = vadd.f32 %v547, %v5271
      %v5273 = vpop.f32.mrb[0].mxu0
      %5274 = vmatprep.mubr.f32.mxu0 0.0
      %5275 = vmatmul.mubr.f32.gmra.mrb[0].mxu0 %v5165
      %v5276 = vpop.f32.mrb[0].mxu0
      %v5277 = vadd.f32 %v548, %v5276
      %v5278 = vpop.f32.mrb[0].mxu0
      %5279 = vmatprep.mubr.f32.mxu0 0.0
      %5280 = vmatmul.mubr.f32.gmra.mrb[0].mxu0 %v5167
      %v5281 = vpop.f32.mrb[0].mxu0
      %v5282 = vadd.f32 %v549, %v5281
      %v5283 = vpop.f32.mrb[0].mxu0
      %5284 = vmatprep.mubr.f32.mxu0 0.0
      %5285 = vmatmul.mubr.f32.gmra.mrb[0].mxu0 %v5169
      %v5286 = vpop.f32.mrb[0].mxu0
      %v5287 = vadd.f32 %v550, %v5286
      %v5288 = vpop.f32.mrb[0].mxu0
      %5289 = vmatprep.mubr.f32.mxu0 0.0
      %5290 = vmatmul.mubr.f32.gmra.mrb[0].mxu0 %v5171
      %v5291 = vpop.f32.mrb[0].mxu0
      %v5292 = vadd.f32 %v551, %v5291
      %v5293 = vpop.f32.mrb[0].mxu0
      %5294 = vmatprep.mubr.f32.mxu0 0.0
      %5295 = vmatmul.mubr.f32.gmra.mrb[0].mxu0 %v5173
      %v5296 = vpop.f32.mrb[0].mxu0
      %v5297 = vadd.f32 %v552, %v5296
      %v5298 = vpop.f32.mrb[0].mxu0
      %5299 = vmatprep.mubr.f32.mxu0 0.0
      %5300 = vmatmul.mubr.f32.gmra.mrb[0].mxu0 %v5175
      %v5301 = vpop.f32.mrb[0].mxu0
      %v5302 = vadd.f32 %v553, %v5301
      %v5303 = vpop.f32.mrb[0].mxu0
      %5304 = vdwg.mxu0
      %v5305 = vsel %vm1019, %v5262, -inf
      %5306 = vmax.xlane.f32.xlu0 %v5305
      %v5307 = vpop.xlane.xlu0 %5306
      %v5308 = vsel %vm1019, %v5267, -inf
      %5309 = vmax.xlane.f32.xlu0 %v5308
      %v5310 = vpop.xlane.xlu0 %5309
      %v5311 = vsel %vm1019, %v5272, -inf
      %5312 = vmax.xlane.f32.xlu0 %v5311
      %v5313 = vpop.xlane.xlu0 %5312
      %v5314 = vsel %vm1019, %v5277, -inf
      %5315 = vmax.xlane.f32.xlu0 %v5314
      %v5316 = vpop.xlane.xlu0 %5315
      %v5317 = vsel %vm1019, %v5282, -inf
      %5318 = vmax.xlane.f32.xlu0 %v5317
      %v5319 = vpop.xlane.xlu0 %5318
      %v5320 = vsel %vm1019, %v5287, -inf
      %5321 = vmax.xlane.f32.xlu0 %v5320
      %v5322 = vpop.xlane.xlu0 %5321
      %v5323 = vsel %vm1019, %v5292, -inf
      %5324 = vmax.xlane.f32.xlu0 %v5323
      %v5325 = vpop.xlane.xlu0 %5324
      %v5326 = vsel %vm1019, %v5297, -inf
      %5327 = vmax.xlane.f32.xlu0 %v5326
      %v5328 = vpop.xlane.xlu0 %5327
      %v5329 = vsel %vm1019, %v5302, -inf
      %5330 = vmax.xlane.f32.xlu0 %v5329
      %v5331 = vpop.xlane.xlu0 %5330
      %v5332 = vsub.f32 %v5262, %v5307
      %v5333 = vsub.f32 %v5267, %v5310
      %v5334 = vsub.f32 %v5272, %v5313
      %v5335 = vsub.f32 %v5277, %v5316
      %v5336 = vsub.f32 %v5282, %v5319
      %v5337 = vsub.f32 %v5287, %v5322
      %v5338 = vsub.f32 %v5292, %v5325
      %v5339 = vsub.f32 %v5297, %v5328
      %v5340 = vsub.f32 %v5302, %v5331
      %v5341 = vmul.f32 %v5332, 1.442695
      %v5342 = vpow.pop %v5341
      %v5343 = vmul.f32 %v5333, 1.442695
      %v5344 = vpow.pop %v5343
      %v5345 = vmul.f32 %v5334, 1.442695
      %v5346 = vpow.pop %v5345
      %v5347 = vmul.f32 %v5335, 1.442695
      %v5348 = vpow.pop %v5347
      %v5349 = vmul.f32 %v5336, 1.442695
      %v5350 = vpow.pop %v5349
      %v5351 = vmul.f32 %v5337, 1.442695
      %v5352 = vpow.pop %v5351
      %v5353 = vmul.f32 %v5338, 1.442695
      %v5354 = vpow.pop %v5353
      %v5355 = vmul.f32 %v5339, 1.442695
      %v5356 = vpow.pop %v5355
      %v5357 = vmul.f32 %v5340, 1.442695
      %v5358 = vpow.pop %v5357
      %v5359 = vsel %vm1019, %v5342, 0.0
      %5360 = vadd.xlane.f32.xlu0 %v5359
      %v5361 = vpop.xlane.xlu0 %5360
      %v5362 = vsel %vm1019, %v5344, 0.0
      %5363 = vadd.xlane.f32.xlu0 %v5362
      %v5364 = vpop.xlane.xlu0 %5363
      %v5365 = vsel %vm1019, %v5346, 0.0
      %5366 = vadd.xlane.f32.xlu0 %v5365
      %v5367 = vpop.xlane.xlu0 %5366
      %v5368 = vsel %vm1019, %v5348, 0.0
      %5369 = vadd.xlane.f32.xlu0 %v5368
      %v5370 = vpop.xlane.xlu0 %5369
      %v5371 = vsel %vm1019, %v5350, 0.0
      %5372 = vadd.xlane.f32.xlu0 %v5371
      %v5373 = vpop.xlane.xlu0 %5372
      %v5374 = vsel %vm1019, %v5352, 0.0
      %5375 = vadd.xlane.f32.xlu0 %v5374
      %v5376 = vpop.xlane.xlu0 %5375
      %v5377 = vsel %vm1019, %v5354, 0.0
      %5378 = vadd.xlane.f32.xlu0 %v5377
      %v5379 = vpop.xlane.xlu0 %5378
      %v5380 = vsel %vm1019, %v5356, 0.0
      %5381 = vadd.xlane.f32.xlu0 %v5380
      %v5382 = vpop.xlane.xlu0 %5381
      %v5383 = vsel %vm1019, %v5358, 0.0
      %5384 = vadd.xlane.f32.xlu0 %v5383
      %v5385 = vpop.xlane.xlu0 %5384
      %v5386 = vrcp.pop %v5361
      %v5387 = vrcp.pop %v5364
      %v5388 = vrcp.pop %v5367
      %v5389 = vrcp.pop %v5370
      %v5390 = vrcp.pop %v5373
      %v5391 = vrcp.pop %v5376
      %v5392 = vrcp.pop %v5379
      %v5393 = vrcp.pop %v5382
      %v5394 = vrcp.pop %v5385
      %v5395 = vmul.f32 %v5342, %v5386
      %v5396 = vmul.f32 %v5344, %v5387
      %v5397 = vmul.f32 %v5346, %v5388
      %v5398 = vmul.f32 %v5348, %v5389
      %v5399 = vmul.f32 %v5350, %v5390
      %v5400 = vmul.f32 %v5352, %v5391
      %v5401 = vmul.f32 %v5354, %v5392
      %v5402 = vmul.f32 %v5356, %v5393
      %v5403 = vmul.f32 %v5358, %v5394
      %5404 = vrot.lane.b32.xlu0 %v3754, 40
      %v5405 = vpop.permute.xlu0 %5404
      %5406 = vrot.lane.b32.xlu0 %v3759, 40
      %v5407 = vpop.permute.xlu0 %5406
      %5408 = vrot.lane.b32.xlu0 %v3764, 40
      %v5409 = vpop.permute.xlu0 %5408
      %5410 = vrot.lane.b32.xlu0 %v3769, 40
      %v5411 = vpop.permute.xlu0 %5410
      %5412 = vrot.lane.b32.xlu0 %v3774, 40
      %v5413 = vpop.permute.xlu0 %5412
      %5414 = vrot.lane.b32.xlu0 %v3779, 40
      %v5415 = vpop.permute.xlu0 %5414
      %5416 = vrot.lane.b32.xlu0 %v3784, 40
      %v5417 = vpop.permute.xlu0 %5416
      %5418 = vrot.lane.b32.xlu0 %v3789, 40
      %v5419 = vpop.permute.xlu0 %5418
      %5420 = vrot.lane.b32.xlu0 %v3794, 40
      %v5421 = vpop.permute.xlu0 %5420
      %v5432 = vsel %vm1019, %v5395, 0
      %v5435 = vsel %vm1019, %v5396, 0
      %v5438 = vsel %vm1019, %v5397, 0
      %v5441 = vsel %vm1019, %v5398, 0
      %v5444 = vsel %vm1019, %v5399, 0
      %v5447 = vsel %vm1019, %v5400, 0
      %v5450 = vsel %vm1019, %v5401, 0
      %v5453 = vsel %vm1019, %v5402, 0
      %v5456 = vsel %vm1019, %v5403, 0
      %5458 = vmatprep.subr.mxu0 0.0
      %5459 = vmatpush1.msra.mxu0 %v5405
      %5460 = vmatprep.subr.mxu0 0.0
      %5461 = vmatpush1.msra.mxu0 %v5407
      %5462 = vmatprep.subr.mxu0 0.0
      %5463 = vmatpush1.msra.mxu0 %v5409
      %5464 = vmatprep.subr.mxu0 0.0
      %5465 = vmatpush1.msra.mxu0 %v5411
      %5466 = vmatprep.subr.mxu0 0.0
      %5467 = vmatpush1.msra.mxu0 %v5413
      %5468 = vmatprep.subr.mxu0 0.0
      %5469 = vmatpush1.msra.mxu0 %v5415
      %5470 = vmatprep.subr.mxu0 0.0
      %5471 = vmatpush1.msra.mxu0 %v5417
      %5472 = vmatprep.subr.mxu0 0.0
      %5473 = vmatpush1.msra.mxu0 %v5419
      %5474 = vmatprep.subr.mxu0 0.0
      %5475 = vmatpush1.msra.mxu0 %v5421
      %5476 = vmatprep.subr.mxu0 0.0
      %5477 = vmatpush1.msra.mxu0 0.0
      %5478 = vmatprep.subr.mxu0 0.0
      %5479 = vmatpush1.msra.mxu0 0.0
      %5480 = vmatprep.subr.mxu0 0.0
      %5481 = vmatpush1.msra.mxu0 0.0
      %5482 = vmatprep.subr.mxu0 0.0
      %5483 = vmatpush1.msra.mxu0 0.0
      %5484 = vmatprep.subr.mxu0 0.0
      %5485 = vmatpush1.msra.mxu0 0.0
      %5486 = vmatprep.subr.mxu0 0.0
      %5487 = vmatpush1.msra.mxu0 0.0
      %5488 = vmatprep.subr.mxu0 0.0
      %5489 = vmatpush1.msra.mxu0 0.0
      %5490 = vmatprep.subr.mxu0 0.0
      %5491 = vmatpush1.msra.mxu0 0.0
      %5492 = vmatprep.subr.mxu0 0.0
      %5493 = vmatpush1.msra.mxu0 0.0
      %5494 = vmatprep.subr.mxu0 0.0
      %5495 = vmatpush1.msra.mxu0 0.0
      %5496 = vmatprep.subr.mxu0 0.0
      %5497 = vmatpush1.msra.mxu0 0.0
      %5498 = vmatprep.subr.mxu0 0.0
      %5499 = vmatpush1.msra.mxu0 0.0
      %5500 = vmatprep.subr.mxu0 0.0
      %5501 = vmatpush1.msra.mxu0 0.0
      %5502 = vmatprep.subr.mxu0 0.0
      %5503 = vmatpush1.msra.mxu0 0.0
      %5504 = vmatprep.subr.mxu0 0.0
      %5505 = vmatpush1.msra.mxu0 0.0
      %5506 = vmatprep.subr.mxu0 0.0
      %5507 = vmatpush1.msra.mxu0 0.0
      %5508 = vmatprep.subr.mxu0 0.0
      %5509 = vmatpush1.msra.mxu0 0.0
      %5510 = vmatprep.subr.mxu0 0.0
      %5511 = vmatpush1.msra.mxu0 0.0
      %5512 = vmatprep.subr.mxu0 0.0
      %5513 = vmatpush1.msra.mxu0 0.0
      %5514 = vmatprep.subr.mxu0 0.0
      %5515 = vmatpush1.msra.mxu0 0.0
      %5516 = vmatprep.subr.mxu0 0.0
      %5517 = vmatpush1.msra.mxu0 0.0
      %5518 = vmatprep.subr.mxu0 0.0
      %5519 = vmatpush1.msra.mxu0 0.0
      %5520 = vmatprep.subr.mxu0 0.0
      %5521 = vmatpush1.msra.mxu0 0.0
      %5522 = vmatprep.mubr.f32.mxu0 0.0
      %5523 = vmatmul.mubr.f32.gmra.mrb[0].mxu0 %v5432
      %v5524 = vpop.f32.mrb[0].mxu0
      %v5525 = vadd.f32 0.0, %v5524
      %v5526 = vpop.f32.mrb[0].mxu0
      %5527 = vmatprep.mubr.f32.mxu0 0.0
      %5528 = vmatmul.mubr.f32.gmra.mrb[0].mxu0 %v5435
      %v5529 = vpop.f32.mrb[0].mxu0
      %v5530 = vadd.f32 0.0, %v5529
      %v5531 = vpop.f32.mrb[0].mxu0
      %5532 = vmatprep.mubr.f32.mxu0 0.0
      %5533 = vmatmul.mubr.f32.gmra.mrb[0].mxu0 %v5438
      %v5534 = vpop.f32.mrb[0].mxu0
      %v5535 = vadd.f32 0.0, %v5534
      %v5536 = vpop.f32.mrb[0].mxu0
      %5537 = vmatprep.mubr.f32.mxu0 0.0
      %5538 = vmatmul.mubr.f32.gmra.mrb[0].mxu0 %v5441
      %v5539 = vpop.f32.mrb[0].mxu0
      %v5540 = vadd.f32 0.0, %v5539
      %v5541 = vpop.f32.mrb[0].mxu0
      %5542 = vmatprep.mubr.f32.mxu0 0.0
      %5543 = vmatmul.mubr.f32.gmra.mrb[0].mxu0 %v5444
      %v5544 = vpop.f32.mrb[0].mxu0
      %v5545 = vadd.f32 0.0, %v5544
      %v5546 = vpop.f32.mrb[0].mxu0
      %5547 = vmatprep.mubr.f32.mxu0 0.0
      %5548 = vmatmul.mubr.f32.gmra.mrb[0].mxu0 %v5447
      %v5549 = vpop.f32.mrb[0].mxu0
      %v5550 = vadd.f32 0.0, %v5549
      %v5551 = vpop.f32.mrb[0].mxu0
      %5552 = vmatprep.mubr.f32.mxu0 0.0
      %5553 = vmatmul.mubr.f32.gmra.mrb[0].mxu0 %v5450
      %v5554 = vpop.f32.mrb[0].mxu0
      %v5555 = vadd.f32 0.0, %v5554
      %v5556 = vpop.f32.mrb[0].mxu0
      %5557 = vmatprep.mubr.f32.mxu0 0.0
      %5558 = vmatmul.mubr.f32.gmra.mrb[0].mxu0 %v5453
      %v5559 = vpop.f32.mrb[0].mxu0
      %v5560 = vadd.f32 0.0, %v5559
      %v5561 = vpop.f32.mrb[0].mxu0
      %5562 = vmatprep.mubr.f32.mxu0 0.0
      %5563 = vmatmul.mubr.f32.gmra.mrb[0].mxu0 %v5456
      %v5564 = vpop.f32.mrb[0].mxu0
      %v5565 = vadd.f32 0.0, %v5564
      %v5566 = vpop.f32.mrb[0].mxu0
      %5567 = vdwg.mxu0
      %5577 = vrot.lane.b32.xlu0 %v4635, 8
      %v5578 = vpop.permute.xlu0 %5577
      %5579 = vrot.lane.b32.xlu0 %v4640, 8
      %v5580 = vpop.permute.xlu0 %5579
      %5581 = vrot.lane.b32.xlu0 %v4645, 8
      %v5582 = vpop.permute.xlu0 %5581
      %5583 = vrot.lane.b32.xlu0 %v4650, 8
      %v5584 = vpop.permute.xlu0 %5583
      %5585 = vrot.lane.b32.xlu0 %v4655, 8
      %v5586 = vpop.permute.xlu0 %5585
      %5587 = vrot.lane.b32.xlu0 %v4660, 8
      %v5588 = vpop.permute.xlu0 %5587
      %5589 = vrot.lane.b32.xlu0 %v4665, 8
      %v5590 = vpop.permute.xlu0 %5589
      %5591 = vrot.lane.b32.xlu0 %v4670, 8
      %v5592 = vpop.permute.xlu0 %5591
      %5593 = vrot.lane.b32.xlu0 %v4675, 8
      %v5594 = vpop.permute.xlu0 %5593
      %5613 = vrot.lane.b32.xlu0 %v5080, 16
      %v5614 = vpop.permute.xlu0 %5613
      %5615 = vrot.lane.b32.xlu0 %v5085, 16
      %v5616 = vpop.permute.xlu0 %5615
      %5617 = vrot.lane.b32.xlu0 %v5090, 16
      %v5618 = vpop.permute.xlu0 %5617
      %5619 = vrot.lane.b32.xlu0 %v5095, 16
      %v5620 = vpop.permute.xlu0 %5619
      %5621 = vrot.lane.b32.xlu0 %v5100, 16
      %v5622 = vpop.permute.xlu0 %5621
      %5623 = vrot.lane.b32.xlu0 %v5105, 16
      %v5624 = vpop.permute.xlu0 %5623
      %5625 = vrot.lane.b32.xlu0 %v5110, 16
      %v5626 = vpop.permute.xlu0 %5625
      %5627 = vrot.lane.b32.xlu0 %v5115, 16
      %v5628 = vpop.permute.xlu0 %5627
      %5629 = vrot.lane.b32.xlu0 %v5120, 16
      %v5630 = vpop.permute.xlu0 %5629
      %5649 = vrot.lane.b32.xlu0 %v5525, 24
      %v5650 = vpop.permute.xlu0 %5649
      %5651 = vrot.lane.b32.xlu0 %v5530, 24
      %v5652 = vpop.permute.xlu0 %5651
      %5653 = vrot.lane.b32.xlu0 %v5535, 24
      %v5654 = vpop.permute.xlu0 %5653
      %5655 = vrot.lane.b32.xlu0 %v5540, 24
      %v5656 = vpop.permute.xlu0 %5655
      %5657 = vrot.lane.b32.xlu0 %v5545, 24
      %v5658 = vpop.permute.xlu0 %5657
      %5659 = vrot.lane.b32.xlu0 %v5550, 24
      %v5660 = vpop.permute.xlu0 %5659
      %5661 = vrot.lane.b32.xlu0 %v5555, 24
      %v5662 = vpop.permute.xlu0 %5661
      %5663 = vrot.lane.b32.xlu0 %v5560, 24
      %v5664 = vpop.permute.xlu0 %5663
      %5665 = vrot.lane.b32.xlu0 %v5565, 24
      %v5666 = vpop.permute.xlu0 %5665
      %v5676 = vsel %vm872, %v4190, %v5578
      %v5677 = vsel %vm872, %v4195, %v5580
      %v5678 = vsel %vm872, %v4200, %v5582
      %v5679 = vsel %vm872, %v4205, %v5584
      %v5680 = vsel %vm872, %v4210, %v5586
      %v5681 = vsel %vm872, %v4215, %v5588
      %v5682 = vsel %vm872, %v4220, %v5590
      %v5683 = vsel %vm872, %v4225, %v5592
      %v5684 = vsel %vm872, %v4230, %v5594
      %v5685 = vsel %vm407, %v5676, %v5614
      %v5686 = vsel %vm407, %v5677, %v5616
      %v5687 = vsel %vm407, %v5678, %v5618
      %v5688 = vsel %vm407, %v5679, %v5620
      %v5689 = vsel %vm407, %v5680, %v5622
      %v5690 = vsel %vm407, %v5681, %v5624
      %v5691 = vsel %vm407, %v5682, %v5626
      %v5692 = vsel %vm407, %v5683, %v5628
      %v5693 = vsel %vm407, %v5684, %v5630
      %v5694 = vsel %vm2744, %v5685, %v5650
      %v5695 = vsel %vm2744, %v5686, %v5652
      %v5696 = vsel %vm2744, %v5687, %v5654
      %v5697 = vsel %vm2744, %v5688, %v5656
      %v5698 = vsel %vm2744, %v5689, %v5658
      %v5699 = vsel %vm2744, %v5690, %v5660
      %v5700 = vsel %vm2744, %v5691, %v5662
      %v5701 = vsel %vm2744, %v5692, %v5664
      %v5702 = vsel %vm2744, %v5693, %v5666
      %s5703 = scalar_lea.vmem %s6, 32
      %v5704 = vld [vmem:[%s5703] sm:$0xff]
      %v5705 = vld [vmem:[%s5703 + $0x8] sm:$0xff]
      %v5706 = vld [vmem:[%s5703 + $0x10] sm:$0xff]
      %v5707 = vld [vmem:[%s5703 + $0x18] sm:$0xff]
      %v5709 = vsel %vm555, %v5694, 0
      %v5712 = vsel %vm555, %v5695, 0
      %v5715 = vsel %vm555, %v5696, 0
      %v5718 = vsel %vm555, %v5697, 0
      %v5721 = vsel %vm555, %v5698, 0
      %v5724 = vsel %vm555, %v5699, 0
      %v5727 = vsel %vm555, %v5700, 0
      %v5730 = vsel %vm555, %v5701, 0
      %v5733 = vsel %vm555, %v5702, 0
      %5735 = vmatprep.subr.mxu0 0.0
      %5736 = vmatpush1.msra.mxu0 %v5704
      %5737 = vmatprep.subr.mxu0 0.0
      %5738 = vmatpush1.msra.mxu0 %v5705
      %5739 = vmatprep.subr.mxu0 0.0
      %5740 = vmatpush1.msra.mxu0 %v5706
      %5741 = vmatprep.subr.mxu0 0.0
      %5742 = vmatpush1.msra.mxu0 %v5707
      %5743 = vmatprep.subr.mxu0 0.0
      %5744 = vmatpush1.msra.mxu0 0.0
      %5745 = vmatprep.subr.mxu0 0.0
      %5746 = vmatpush1.msra.mxu0 0.0
      %5747 = vmatprep.subr.mxu0 0.0
      %5748 = vmatpush1.msra.mxu0 0.0
      %5749 = vmatprep.subr.mxu0 0.0
      %5750 = vmatpush1.msra.mxu0 0.0
      %5751 = vmatprep.subr.mxu0 0.0
      %5752 = vmatpush1.msra.mxu0 0.0
      %5753 = vmatprep.subr.mxu0 0.0
      %5754 = vmatpush1.msra.mxu0 0.0
      %5755 = vmatprep.subr.mxu0 0.0
      %5756 = vmatpush1.msra.mxu0 0.0
      %5757 = vmatprep.subr.mxu0 0.0
      %5758 = vmatpush1.msra.mxu0 0.0
      %5759 = vmatprep.subr.mxu0 0.0
      %5760 = vmatpush1.msra.mxu0 0.0
      %5761 = vmatprep.subr.mxu0 0.0
      %5762 = vmatpush1.msra.mxu0 0.0
      %5763 = vmatprep.subr.mxu0 0.0
      %5764 = vmatpush1.msra.mxu0 0.0
      %5765 = vmatprep.subr.mxu0 0.0
      %5766 = vmatpush1.msra.mxu0 0.0
      %5767 = vmatprep.subr.mxu0 0.0
      %5768 = vmatpush1.msra.mxu0 0.0
      %5769 = vmatprep.subr.mxu0 0.0
      %5770 = vmatpush1.msra.mxu0 0.0
      %5771 = vmatprep.subr.mxu0 0.0
      %5772 = vmatpush1.msra.mxu0 0.0
      %5773 = vmatprep.subr.mxu0 0.0
      %5774 = vmatpush1.msra.mxu0 0.0
      %5775 = vmatprep.subr.mxu0 0.0
      %5776 = vmatpush1.msra.mxu0 0.0
      %5777 = vmatprep.subr.mxu0 0.0
      %5778 = vmatpush1.msra.mxu0 0.0
      %5779 = vmatprep.subr.mxu0 0.0
      %5780 = vmatpush1.msra.mxu0 0.0
      %5781 = vmatprep.subr.mxu0 0.0
      %5782 = vmatpush1.msra.mxu0 0.0
      %5783 = vmatprep.subr.mxu0 0.0
      %5784 = vmatpush1.msra.mxu0 0.0
      %5785 = vmatprep.subr.mxu0 0.0
      %5786 = vmatpush1.msra.mxu0 0.0
      %5787 = vmatprep.subr.mxu0 0.0
      %5788 = vmatpush1.msra.mxu0 0.0
      %5789 = vmatprep.subr.mxu0 0.0
      %5790 = vmatpush1.msra.mxu0 0.0
      %5791 = vmatprep.subr.mxu0 0.0
      %5792 = vmatpush1.msra.mxu0 0.0
      %5793 = vmatprep.subr.mxu0 0.0
      %5794 = vmatpush1.msra.mxu0 0.0
      %5795 = vmatprep.subr.mxu0 0.0
      %5796 = vmatpush1.msra.mxu0 0.0
      %5797 = vmatprep.subr.mxu0 0.0
      %5798 = vmatpush1.msra.mxu0 0.0
      %5799 = vmatprep.mubr.f32.mxu0 0.0
      %5800 = vmatmul.mubr.f32.gmra.mrb[0].mxu0 %v5709
      %v5801 = vpop.f32.mrb[0].mxu0
      %v5802 = vadd.f32 0.0, %v5801
      %v5803 = vpop.f32.mrb[0].mxu0
      %5804 = vmatprep.mubr.f32.mxu0 0.0
      %5805 = vmatmul.mubr.f32.gmra.mrb[0].mxu0 %v5712
      %v5806 = vpop.f32.mrb[0].mxu0
      %v5807 = vadd.f32 0.0, %v5806
      %v5808 = vpop.f32.mrb[0].mxu0
      %5809 = vmatprep.mubr.f32.mxu0 0.0
      %5810 = vmatmul.mubr.f32.gmra.mrb[0].mxu0 %v5715
      %v5811 = vpop.f32.mrb[0].mxu0
      %v5812 = vadd.f32 0.0, %v5811
      %v5813 = vpop.f32.mrb[0].mxu0
      %5814 = vmatprep.mubr.f32.mxu0 0.0
      %5815 = vmatmul.mubr.f32.gmra.mrb[0].mxu0 %v5718
      %v5816 = vpop.f32.mrb[0].mxu0
      %v5817 = vadd.f32 0.0, %v5816
      %v5818 = vpop.f32.mrb[0].mxu0
      %5819 = vmatprep.mubr.f32.mxu0 0.0
      %5820 = vmatmul.mubr.f32.gmra.mrb[0].mxu0 %v5721
      %v5821 = vpop.f32.mrb[0].mxu0
      %v5822 = vadd.f32 0.0, %v5821
      %v5823 = vpop.f32.mrb[0].mxu0
      %5824 = vmatprep.mubr.f32.mxu0 0.0
      %5825 = vmatmul.mubr.f32.gmra.mrb[0].mxu0 %v5724
      %v5826 = vpop.f32.mrb[0].mxu0
      %v5827 = vadd.f32 0.0, %v5826
      %v5828 = vpop.f32.mrb[0].mxu0
      %5829 = vmatprep.mubr.f32.mxu0 0.0
      %5830 = vmatmul.mubr.f32.gmra.mrb[0].mxu0 %v5727
      %v5831 = vpop.f32.mrb[0].mxu0
      %v5832 = vadd.f32 0.0, %v5831
      %v5833 = vpop.f32.mrb[0].mxu0
      %5834 = vmatprep.mubr.f32.mxu0 0.0
      %5835 = vmatmul.mubr.f32.gmra.mrb[0].mxu0 %v5730
      %v5836 = vpop.f32.mrb[0].mxu0
      %v5837 = vadd.f32 0.0, %v5836
      %v5838 = vpop.f32.mrb[0].mxu0
      %5839 = vmatprep.mubr.f32.mxu0 0.0
      %5840 = vmatmul.mubr.f32.gmra.mrb[0].mxu0 %v5733
      %v5841 = vpop.f32.mrb[0].mxu0
      %v5842 = vadd.f32 0.0, %v5841
      %v5843 = vpop.f32.mrb[0].mxu0
      %5844 = vdwg.mxu0
      %v5845 = vadd.f32 %v3497, %v5802
      %v5846 = vadd.f32 %v3498, %v5807
      %v5847 = vadd.f32 %v3499, %v5812
      %v5848 = vadd.f32 %v3500, %v5817
      %v5849 = vadd.f32 %v3501, %v5822
      %v5850 = vadd.f32 %v3502, %v5827
      %v5851 = vadd.f32 %v3503, %v5832
      %v5852 = vadd.f32 %v3504, %v5837
      %v5853 = vadd.f32 %v3505, %v5842
      %v5854 = vlaneseq
      %v5855 = vshrl.u32 %v5854, 7
      %v5856 = vsub.s32 3, %v5855
      %v5857 = vrot.slane %v3507, %v5856
      %v5858 = vadd.f32 %v5845, %v5857
      %v5859 = vadd.f32 %v5846, %v5857
      %v5860 = vadd.f32 %v5847, %v5857
      %v5861 = vadd.f32 %v5848, %v5857
      %v5862 = vadd.f32 %v5849, %v5857
      %v5863 = vadd.f32 %v5850, %v5857
      %v5864 = vadd.f32 %v5851, %v5857
      %v5865 = vadd.f32 %v5852, %v5857
      %v5866 = vadd.f32 %v5853, %v5857
      %v5867 = vsel %vm555, %v5858, 0.0
      %5868 = vadd.xlane.f32.xlu0 %v5867
      %v5869 = vpop.xlane.xlu0 %5868
      %v5870 = vsel %vm555, %v5859, 0.0
      %5871 = vadd.xlane.f32.xlu0 %v5870
      %v5872 = vpop.xlane.xlu0 %5871
      %v5873 = vsel %vm555, %v5860, 0.0
      %5874 = vadd.xlane.f32.xlu0 %v5873
      %v5875 = vpop.xlane.xlu0 %5874
      %v5876 = vsel %vm555, %v5861, 0.0
      %5877 = vadd.xlane.f32.xlu0 %v5876
      %v5878 = vpop.xlane.xlu0 %5877
      %v5879 = vsel %vm555, %v5862, 0.0
      %5880 = vadd.xlane.f32.xlu0 %v5879
      %v5881 = vpop.xlane.xlu0 %5880
      %v5882 = vsel %vm555, %v5863, 0.0
      %5883 = vadd.xlane.f32.xlu0 %v5882
      %v5884 = vpop.xlane.xlu0 %5883
      %v5885 = vsel %vm555, %v5864, 0.0
      %5886 = vadd.xlane.f32.xlu0 %v5885
      %v5887 = vpop.xlane.xlu0 %5886
      %v5888 = vsel %vm555, %v5865, 0.0
      %5889 = vadd.xlane.f32.xlu0 %v5888
      %v5890 = vpop.xlane.xlu0 %5889
      %v5891 = vsel %vm555, %v5866, 0.0
      %5892 = vadd.xlane.f32.xlu0 %v5891
      %v5893 = vpop.xlane.xlu0 %5892
      %v5894 = vmul.f32 %v5869, %v583
      %v5895 = vmul.f32 %v5872, %v583
      %v5896 = vmul.f32 %v5875, %v583
      %v5897 = vmul.f32 %v5878, %v583
      %v5898 = vmul.f32 %v5881, %v583
      %v5899 = vmul.f32 %v5884, %v583
      %v5900 = vmul.f32 %v5887, %v583
      %v5901 = vmul.f32 %v5890, %v583
      %v5902 = vmul.f32 %v5893, %v583
      %v5903 = vsub.f32 %v5858, %v5894
      %v5904 = vsub.f32 %v5859, %v5895
      %v5905 = vsub.f32 %v5860, %v5896
      %v5906 = vsub.f32 %v5861, %v5897
      %v5907 = vsub.f32 %v5862, %v5898
      %v5908 = vsub.f32 %v5863, %v5899
      %v5909 = vsub.f32 %v5864, %v5900
      %v5910 = vsub.f32 %v5865, %v5901
      %v5911 = vsub.f32 %v5866, %v5902
      %v5912 = vmul.f32 %v5903, %v5903
      %v5913 = vmul.f32 %v5904, %v5904
      %v5914 = vmul.f32 %v5905, %v5905
      %v5915 = vmul.f32 %v5906, %v5906
      %v5916 = vmul.f32 %v5907, %v5907
      %v5917 = vmul.f32 %v5908, %v5908
      %v5918 = vmul.f32 %v5909, %v5909
      %v5919 = vmul.f32 %v5910, %v5910
      %v5920 = vmul.f32 %v5911, %v5911
      %v5921 = vsel %vm555, %v5912, 0.0
      %5922 = vadd.xlane.f32.xlu0 %v5921
      %v5923 = vpop.xlane.xlu0 %5922
      %v5924 = vsel %vm555, %v5913, 0.0
      %5925 = vadd.xlane.f32.xlu0 %v5924
      %v5926 = vpop.xlane.xlu0 %5925
      %v5927 = vsel %vm555, %v5914, 0.0
      %5928 = vadd.xlane.f32.xlu0 %v5927
      %v5929 = vpop.xlane.xlu0 %5928
      %v5930 = vsel %vm555, %v5915, 0.0
      %5931 = vadd.xlane.f32.xlu0 %v5930
      %v5932 = vpop.xlane.xlu0 %5931
      %v5933 = vsel %vm555, %v5916, 0.0
      %5934 = vadd.xlane.f32.xlu0 %v5933
      %v5935 = vpop.xlane.xlu0 %5934
      %v5936 = vsel %vm555, %v5917, 0.0
      %5937 = vadd.xlane.f32.xlu0 %v5936
      %v5938 = vpop.xlane.xlu0 %5937
      %v5939 = vsel %vm555, %v5918, 0.0
      %5940 = vadd.xlane.f32.xlu0 %v5939
      %v5941 = vpop.xlane.xlu0 %5940
      %v5942 = vsel %vm555, %v5919, 0.0
      %5943 = vadd.xlane.f32.xlu0 %v5942
      %v5944 = vpop.xlane.xlu0 %5943
      %v5945 = vsel %vm555, %v5920, 0.0
      %5946 = vadd.xlane.f32.xlu0 %v5945
      %v5947 = vpop.xlane.xlu0 %5946
      %v5948 = vmul.f32 %v5923, %v583
      %v5949 = vmul.f32 %v5926, %v583
      %v5950 = vmul.f32 %v5929, %v583
      %v5951 = vmul.f32 %v5932, %v583
      %v5952 = vmul.f32 %v5935, %v583
      %v5953 = vmul.f32 %v5938, %v583
      %v5954 = vmul.f32 %v5941, %v583
      %v5955 = vmul.f32 %v5944, %v583
      %v5956 = vmul.f32 %v5947, %v583
      %v5957 = vadd.f32 %v5948, 1e-05
      %v5958 = vadd.f32 %v5949, 1e-05
      %v5959 = vadd.f32 %v5950, 1e-05
      %v5960 = vadd.f32 %v5951, 1e-05
      %v5961 = vadd.f32 %v5952, 1e-05
      %v5962 = vadd.f32 %v5953, 1e-05
      %v5963 = vadd.f32 %v5954, 1e-05
      %v5964 = vadd.f32 %v5955, 1e-05
      %v5965 = vadd.f32 %v5956, 1e-05
      %v5966 = vrsqrt.pop %v5957
      %v5967 = vrsqrt.pop %v5958
      %v5968 = vrsqrt.pop %v5959
      %v5969 = vrsqrt.pop %v5960
      %v5970 = vrsqrt.pop %v5961
      %v5971 = vrsqrt.pop %v5962
      %v5972 = vrsqrt.pop %v5963
      %v5973 = vrsqrt.pop %v5964
      %v5974 = vrsqrt.pop %v5965
      %v5975 = vmul.f32 %v5903, %v5966
      %v5976 = vmul.f32 %v5904, %v5967
      %v5977 = vmul.f32 %v5905, %v5968
      %v5978 = vmul.f32 %v5906, %v5969
      %v5979 = vmul.f32 %v5907, %v5970
      %v5980 = vmul.f32 %v5908, %v5971
      %v5981 = vmul.f32 %v5909, %v5972
      %v5982 = vmul.f32 %v5910, %v5973
      %v5983 = vmul.f32 %v5911, %v5974
      %v5984 = vlaneseq
      %v5985 = vshrl.u32 %v5984, 7
      %v5986 = vsub.s32 4, %v5985
      %v5987 = vrot.slane %v3507, %v5986
      %v5988 = vmul.f32 %v5975, %v5987
      %v5989 = vmul.f32 %v5976, %v5987
      %v5990 = vmul.f32 %v5977, %v5987
      %v5991 = vmul.f32 %v5978, %v5987
      %v5992 = vmul.f32 %v5979, %v5987
      %v5993 = vmul.f32 %v5980, %v5987
      %v5994 = vmul.f32 %v5981, %v5987
      %v5995 = vmul.f32 %v5982, %v5987
      %v5996 = vmul.f32 %v5983, %v5987
      %v5997 = vlaneseq
      %v5998 = vshrl.u32 %v5997, 7
      %v5999 = vsub.s32 5, %v5998
      %v6000 = vrot.slane %v3507, %v5999
      %v6001 = vadd.f32 %v5988, %v6000
      %v6002 = vadd.f32 %v5989, %v6000
      %v6003 = vadd.f32 %v5990, %v6000
      %v6004 = vadd.f32 %v5991, %v6000
      %v6005 = vadd.f32 %v5992, %v6000
      %v6006 = vadd.f32 %v5993, %v6000
      %v6007 = vadd.f32 %v5994, %v6000
      %v6008 = vadd.f32 %v5995, %v6000
      %v6009 = vadd.f32 %v5996, %v6000
      %s6010 = scalar_lea.vmem %s7, 32
      %v6011 = vld [vmem:[%s6010] sm:$0xff]
      %v6012 = vld [vmem:[%s6010 + $0x8] sm:$0xff]
      %v6013 = vld [vmem:[%s6010 + $0x10] sm:$0xff]
      %v6014 = vld [vmem:[%s6010 + $0x18] sm:$0xff]
      %v6015 = vlaneseq
      %v6016 = vshrl.u32 %v6015, 7
      %v6017 = vsub.s32 6, %v6016
      %v6018 = vrot.slane %v3507, %v6017
      %v6020 = vsel %vm555, %v6001, 0
      %v6023 = vsel %vm555, %v6002, 0
      %v6026 = vsel %vm555, %v6003, 0
      %v6029 = vsel %vm555, %v6004, 0
      %v6032 = vsel %vm555, %v6005, 0
      %v6035 = vsel %vm555, %v6006, 0
      %v6038 = vsel %vm555, %v6007, 0
      %v6041 = vsel %vm555, %v6008, 0
      %v6044 = vsel %vm555, %v6009, 0
      %6046 = vmatprep.subr.mxu0 0.0
      %6047 = vmatpush1.msra.mxu0 %v6011
      %6048 = vmatprep.subr.mxu0 0.0
      %6049 = vmatpush1.msra.mxu0 %v6012
      %6050 = vmatprep.subr.mxu0 0.0
      %6051 = vmatpush1.msra.mxu0 %v6013
      %6052 = vmatprep.subr.mxu0 0.0
      %6053 = vmatpush1.msra.mxu0 %v6014
      %6054 = vmatprep.subr.mxu0 0.0
      %6055 = vmatpush1.msra.mxu0 0.0
      %6056 = vmatprep.subr.mxu0 0.0
      %6057 = vmatpush1.msra.mxu0 0.0
      %6058 = vmatprep.subr.mxu0 0.0
      %6059 = vmatpush1.msra.mxu0 0.0
      %6060 = vmatprep.subr.mxu0 0.0
      %6061 = vmatpush1.msra.mxu0 0.0
      %6062 = vmatprep.subr.mxu0 0.0
      %6063 = vmatpush1.msra.mxu0 0.0
      %6064 = vmatprep.subr.mxu0 0.0
      %6065 = vmatpush1.msra.mxu0 0.0
      %6066 = vmatprep.subr.mxu0 0.0
      %6067 = vmatpush1.msra.mxu0 0.0
      %6068 = vmatprep.subr.mxu0 0.0
      %6069 = vmatpush1.msra.mxu0 0.0
      %6070 = vmatprep.subr.mxu0 0.0
      %6071 = vmatpush1.msra.mxu0 0.0
      %6072 = vmatprep.subr.mxu0 0.0
      %6073 = vmatpush1.msra.mxu0 0.0
      %6074 = vmatprep.subr.mxu0 0.0
      %6075 = vmatpush1.msra.mxu0 0.0
      %6076 = vmatprep.subr.mxu0 0.0
      %6077 = vmatpush1.msra.mxu0 0.0
      %6078 = vmatprep.subr.mxu0 0.0
      %6079 = vmatpush1.msra.mxu0 0.0
      %6080 = vmatprep.subr.mxu0 0.0
      %6081 = vmatpush1.msra.mxu0 0.0
      %6082 = vmatprep.subr.mxu0 0.0
      %6083 = vmatpush1.msra.mxu0 0.0
      %6084 = vmatprep.subr.mxu0 0.0
      %6085 = vmatpush1.msra.mxu0 0.0
      %6086 = vmatprep.subr.mxu0 0.0
      %6087 = vmatpush1.msra.mxu0 0.0
      %6088 = vmatprep.subr.mxu0 0.0
      %6089 = vmatpush1.msra.mxu0 0.0
      %6090 = vmatprep.subr.mxu0 0.0
      %6091 = vmatpush1.msra.mxu0 0.0
      %6092 = vmatprep.subr.mxu0 0.0
      %6093 = vmatpush1.msra.mxu0 0.0
      %6094 = vmatprep.subr.mxu0 0.0
      %6095 = vmatpush1.msra.mxu0 0.0
      %6096 = vmatprep.subr.mxu0 0.0
      %6097 = vmatpush1.msra.mxu0 0.0
      %6098 = vmatprep.subr.mxu0 0.0
      %6099 = vmatpush1.msra.mxu0 0.0
      %6100 = vmatprep.subr.mxu0 0.0
      %6101 = vmatpush1.msra.mxu0 0.0
      %6102 = vmatprep.subr.mxu0 0.0
      %6103 = vmatpush1.msra.mxu0 0.0
      %6104 = vmatprep.subr.mxu0 0.0
      %6105 = vmatpush1.msra.mxu0 0.0
      %6106 = vmatprep.subr.mxu0 0.0
      %6107 = vmatpush1.msra.mxu0 0.0
      %6108 = vmatprep.subr.mxu0 0.0
      %6109 = vmatpush1.msra.mxu0 0.0
      %6110 = vmatprep.mubr.f32.mxu0 0.0
      %6111 = vmatmul.mubr.f32.gmra.mrb[0].mxu0 %v6020
      %v6112 = vpop.f32.mrb[0].mxu0
      %v6113 = vadd.f32 %v6018, %v6112
      %v6114 = vpop.f32.mrb[0].mxu0
      %6115 = vmatprep.mubr.f32.mxu0 0.0
      %6116 = vmatmul.mubr.f32.gmra.mrb[0].mxu0 %v6023
      %v6117 = vpop.f32.mrb[0].mxu0
      %v6118 = vadd.f32 %v6018, %v6117
      %v6119 = vpop.f32.mrb[0].mxu0
      %6120 = vmatprep.mubr.f32.mxu0 0.0
      %6121 = vmatmul.mubr.f32.gmra.mrb[0].mxu0 %v6026
      %v6122 = vpop.f32.mrb[0].mxu0
      %v6123 = vadd.f32 %v6018, %v6122
      %v6124 = vpop.f32.mrb[0].mxu0
      %6125 = vmatprep.mubr.f32.mxu0 0.0
      %6126 = vmatmul.mubr.f32.gmra.mrb[0].mxu0 %v6029
      %v6127 = vpop.f32.mrb[0].mxu0
      %v6128 = vadd.f32 %v6018, %v6127
      %v6129 = vpop.f32.mrb[0].mxu0
      %6130 = vmatprep.mubr.f32.mxu0 0.0
      %6131 = vmatmul.mubr.f32.gmra.mrb[0].mxu0 %v6032
      %v6132 = vpop.f32.mrb[0].mxu0
      %v6133 = vadd.f32 %v6018, %v6132
      %v6134 = vpop.f32.mrb[0].mxu0
      %6135 = vmatprep.mubr.f32.mxu0 0.0
      %6136 = vmatmul.mubr.f32.gmra.mrb[0].mxu0 %v6035
      %v6137 = vpop.f32.mrb[0].mxu0
      %v6138 = vadd.f32 %v6018, %v6137
      %v6139 = vpop.f32.mrb[0].mxu0
      %6140 = vmatprep.mubr.f32.mxu0 0.0
      %6141 = vmatmul.mubr.f32.gmra.mrb[0].mxu0 %v6038
      %v6142 = vpop.f32.mrb[0].mxu0
      %v6143 = vadd.f32 %v6018, %v6142
      %v6144 = vpop.f32.mrb[0].mxu0
      %6145 = vmatprep.mubr.f32.mxu0 0.0
      %6146 = vmatmul.mubr.f32.gmra.mrb[0].mxu0 %v6041
      %v6147 = vpop.f32.mrb[0].mxu0
      %v6148 = vadd.f32 %v6018, %v6147
      %v6149 = vpop.f32.mrb[0].mxu0
      %6150 = vmatprep.mubr.f32.mxu0 0.0
      %6151 = vmatmul.mubr.f32.gmra.mrb[0].mxu0 %v6044
      %v6152 = vpop.f32.mrb[0].mxu0
      %v6153 = vadd.f32 %v6018, %v6152
      %v6154 = vpop.f32.mrb[0].mxu0
      %6155 = vdwg.mxu0
      %v6156 = vmul.f32 %v6113, %v6113
      %v6157 = vmul.f32 %v6118, %v6118
      %v6158 = vmul.f32 %v6123, %v6123
      %v6159 = vmul.f32 %v6128, %v6128
      %v6160 = vmul.f32 %v6133, %v6133
      %v6161 = vmul.f32 %v6138, %v6138
      %v6162 = vmul.f32 %v6143, %v6143
      %v6163 = vmul.f32 %v6148, %v6148
      %v6164 = vmul.f32 %v6153, %v6153
      %v6165 = vmul.f32 %v6113, %v6156
      %v6166 = vmul.f32 %v6118, %v6157
      %v6167 = vmul.f32 %v6123, %v6158
      %v6168 = vmul.f32 %v6128, %v6159
      %v6169 = vmul.f32 %v6133, %v6160
      %v6170 = vmul.f32 %v6138, %v6161
      %v6171 = vmul.f32 %v6143, %v6162
      %v6172 = vmul.f32 %v6148, %v6163
      %v6173 = vmul.f32 %v6153, %v6164
      %v6174 = vmul.f32 %v6165, 0.044715
      %v6175 = vmul.f32 %v6166, 0.044715
      %v6176 = vmul.f32 %v6167, 0.044715
      %v6177 = vmul.f32 %v6168, 0.044715
      %v6178 = vmul.f32 %v6169, 0.044715
      %v6179 = vmul.f32 %v6170, 0.044715
      %v6180 = vmul.f32 %v6171, 0.044715
      %v6181 = vmul.f32 %v6172, 0.044715
      %v6182 = vmul.f32 %v6173, 0.044715
      %v6183 = vadd.f32 %v6113, %v6174
      %v6184 = vadd.f32 %v6118, %v6175
      %v6185 = vadd.f32 %v6123, %v6176
      %v6186 = vadd.f32 %v6128, %v6177
      %v6187 = vadd.f32 %v6133, %v6178
      %v6188 = vadd.f32 %v6138, %v6179
      %v6189 = vadd.f32 %v6143, %v6180
      %v6190 = vadd.f32 %v6148, %v6181
      %v6191 = vadd.f32 %v6153, %v6182
      %v6192 = vmul.f32 %v6183, 0.7978846
      %v6193 = vmul.f32 %v6184, 0.7978846
      %v6194 = vmul.f32 %v6185, 0.7978846
      %v6195 = vmul.f32 %v6186, 0.7978846
      %v6196 = vmul.f32 %v6187, 0.7978846
      %v6197 = vmul.f32 %v6188, 0.7978846
      %v6198 = vmul.f32 %v6189, 0.7978846
      %v6199 = vmul.f32 %v6190, 0.7978846
      %v6200 = vmul.f32 %v6191, 0.7978846
      %v6201 = vtanh.pop %v6192
      %v6202 = vtanh.pop %v6193
      %v6203 = vtanh.pop %v6194
      %v6204 = vtanh.pop %v6195
      %v6205 = vtanh.pop %v6196
      %v6206 = vtanh.pop %v6197
      %v6207 = vtanh.pop %v6198
      %v6208 = vtanh.pop %v6199
      %v6209 = vtanh.pop %v6200
      %v6210 = vadd.f32 %v6201, 1.0
      %v6211 = vadd.f32 %v6202, 1.0
      %v6212 = vadd.f32 %v6203, 1.0
      %v6213 = vadd.f32 %v6204, 1.0
      %v6214 = vadd.f32 %v6205, 1.0
      %v6215 = vadd.f32 %v6206, 1.0
      %v6216 = vadd.f32 %v6207, 1.0
      %v6217 = vadd.f32 %v6208, 1.0
      %v6218 = vadd.f32 %v6209, 1.0
      %v6219 = vmul.f32 %v6210, 0.5
      %v6220 = vmul.f32 %v6211, 0.5
      %v6221 = vmul.f32 %v6212, 0.5
      %v6222 = vmul.f32 %v6213, 0.5
      %v6223 = vmul.f32 %v6214, 0.5
      %v6224 = vmul.f32 %v6215, 0.5
      %v6225 = vmul.f32 %v6216, 0.5
      %v6226 = vmul.f32 %v6217, 0.5
      %v6227 = vmul.f32 %v6218, 0.5
      %v6228 = vmul.f32 %v6113, %v6219
      %v6229 = vmul.f32 %v6118, %v6220
      %v6230 = vmul.f32 %v6123, %v6221
      %v6231 = vmul.f32 %v6128, %v6222
      %v6232 = vmul.f32 %v6133, %v6223
      %v6233 = vmul.f32 %v6138, %v6224
      %v6234 = vmul.f32 %v6143, %v6225
      %v6235 = vmul.f32 %v6148, %v6226
      %v6236 = vmul.f32 %v6153, %v6227
      %s6237 = scalar_lea.vmem %s8, 128
      %v6238 = vld [vmem:[%s6237] sm:$0xff]
      %v6239 = vld [vmem:[%s6237 + $0x8] sm:$0xff]
      %v6240 = vld [vmem:[%s6237 + $0x10] sm:$0xff]
      %v6241 = vld [vmem:[%s6237 + $0x18] sm:$0xff]
      %v6242 = vld [vmem:[%s6237 + $0x20] sm:$0xff]
      %v6243 = vld [vmem:[%s6237 + $0x28] sm:$0xff]
      %v6244 = vld [vmem:[%s6237 + $0x30] sm:$0xff]
      %v6245 = vld [vmem:[%s6237 + $0x38] sm:$0xff]
      %v6246 = vld [vmem:[%s6237 + $0x40] sm:$0xff]
      %v6247 = vld [vmem:[%s6237 + $0x48] sm:$0xff]
      %v6248 = vld [vmem:[%s6237 + $0x50] sm:$0xff]
      %v6249 = vld [vmem:[%s6237 + $0x58] sm:$0xff]
      %v6250 = vld [vmem:[%s6237 + $0x60] sm:$0xff]
      %v6251 = vld [vmem:[%s6237 + $0x68] sm:$0xff]
      %v6252 = vld [vmem:[%s6237 + $0x70] sm:$0xff]
      %v6253 = vld [vmem:[%s6237 + $0x78] sm:$0xff]
      %v6254 = vlaneseq
      %v6255 = vshrl.u32 %v6254, 7
      %v6256 = vsub.s32 7, %v6255
      %v6257 = vrot.slane %v3507, %v6256
      %6258 = vmatprep.subr.mxu0 0.0
      %6259 = vmatpush1.msra.mxu0 %v6238
      %6260 = vmatprep.subr.mxu0 0.0
      %6261 = vmatpush1.msra.mxu0 %v6239
      %6262 = vmatprep.subr.mxu0 0.0
      %6263 = vmatpush1.msra.mxu0 %v6240
      %6264 = vmatprep.subr.mxu0 0.0
      %6265 = vmatpush1.msra.mxu0 %v6241
      %6266 = vmatprep.subr.mxu0 0.0
      %6267 = vmatpush1.msra.mxu0 %v6242
      %6268 = vmatprep.subr.mxu0 0.0
      %6269 = vmatpush1.msra.mxu0 %v6243
      %6270 = vmatprep.subr.mxu0 0.0
      %6271 = vmatpush1.msra.mxu0 %v6244
      %6272 = vmatprep.subr.mxu0 0.0
      %6273 = vmatpush1.msra.mxu0 %v6245
      %6274 = vmatprep.subr.mxu0 0.0
      %6275 = vmatpush1.msra.mxu0 %v6246
      %6276 = vmatprep.subr.mxu0 0.0
      %6277 = vmatpush1.msra.mxu0 %v6247
      %6278 = vmatprep.subr.mxu0 0.0
      %6279 = vmatpush1.msra.mxu0 %v6248
      %6280 = vmatprep.subr.mxu0 0.0
      %6281 = vmatpush1.msra.mxu0 %v6249
      %6282 = vmatprep.subr.mxu0 0.0
      %6283 = vmatpush1.msra.mxu0 %v6250
      %6284 = vmatprep.subr.mxu0 0.0
      %6285 = vmatpush1.msra.mxu0 %v6251
      %6286 = vmatprep.subr.mxu0 0.0
      %6287 = vmatpush1.msra.mxu0 %v6252
      %6288 = vmatprep.subr.mxu0 0.0
      %6289 = vmatpush1.msra.mxu0 %v6253
      %6290 = vmatprep.subr.mxu0 0.0
      %6291 = vmatpush1.msra.mxu0 0.0
      %6292 = vmatprep.subr.mxu0 0.0
      %6293 = vmatpush1.msra.mxu0 0.0
      %6294 = vmatprep.subr.mxu0 0.0
      %6295 = vmatpush1.msra.mxu0 0.0
      %6296 = vmatprep.subr.mxu0 0.0
      %6297 = vmatpush1.msra.mxu0 0.0
      %6298 = vmatprep.subr.mxu0 0.0
      %6299 = vmatpush1.msra.mxu0 0.0
      %6300 = vmatprep.subr.mxu0 0.0
      %6301 = vmatpush1.msra.mxu0 0.0
      %6302 = vmatprep.subr.mxu0 0.0
      %6303 = vmatpush1.msra.mxu0 0.0
      %6304 = vmatprep.subr.mxu0 0.0
      %6305 = vmatpush1.msra.mxu0 0.0
      %6306 = vmatprep.subr.mxu0 0.0
      %6307 = vmatpush1.msra.mxu0 0.0
      %6308 = vmatprep.subr.mxu0 0.0
      %6309 = vmatpush1.msra.mxu0 0.0
      %6310 = vmatprep.subr.mxu0 0.0
      %6311 = vmatpush1.msra.mxu0 0.0
      %6312 = vmatprep.subr.mxu0 0.0
      %6313 = vmatpush1.msra.mxu0 0.0
      %6314 = vmatprep.subr.mxu0 0.0
      %6315 = vmatpush1.msra.mxu0 0.0
      %6316 = vmatprep.subr.mxu0 0.0
      %6317 = vmatpush1.msra.mxu0 0.0
      %6318 = vmatprep.subr.mxu0 0.0
      %6319 = vmatpush1.msra.mxu0 0.0
      %6320 = vmatprep.subr.mxu0 0.0
      %6321 = vmatpush1.msra.mxu0 0.0
      %6322 = vmatprep.mubr.f32.mxu0 0.0
      %6323 = vmatmul.mubr.f32.gmra.mrb[0].mxu0 %v6228
      %v6324 = vpop.f32.mrb[0].mxu0
      %v6325 = vadd.f32 %v6257, %v6324
      %v6326 = vpop.f32.mrb[0].mxu0
      %6327 = vmatprep.mubr.f32.mxu0 0.0
      %6328 = vmatmul.mubr.f32.gmra.mrb[0].mxu0 %v6229
      %v6329 = vpop.f32.mrb[0].mxu0
      %v6330 = vadd.f32 %v6257, %v6329
      %v6331 = vpop.f32.mrb[0].mxu0
      %6332 = vmatprep.mubr.f32.mxu0 0.0
      %6333 = vmatmul.mubr.f32.gmra.mrb[0].mxu0 %v6230
      %v6334 = vpop.f32.mrb[0].mxu0
      %v6335 = vadd.f32 %v6257, %v6334
      %v6336 = vpop.f32.mrb[0].mxu0
      %6337 = vmatprep.mubr.f32.mxu0 0.0
      %6338 = vmatmul.mubr.f32.gmra.mrb[0].mxu0 %v6231
      %v6339 = vpop.f32.mrb[0].mxu0
      %v6340 = vpop.f32.mrb[0].mxu0
      %6341 = vmatprep.mubr.f32.mxu0 0.0
      %6342 = vmatmul.mubr.f32.gmra.mrb[0].mxu0 %v6232
      %v6343 = vpop.f32.mrb[0].mxu0
      %v6344 = vpop.f32.mrb[0].mxu0
      %6345 = vmatprep.mubr.f32.mxu0 0.0
      %6346 = vmatmul.mubr.f32.gmra.mrb[0].mxu0 %v6233
      %v6347 = vpop.f32.mrb[0].mxu0
      %v6348 = vpop.f32.mrb[0].mxu0
      %6349 = vmatprep.mubr.f32.mxu0 0.0
      %6350 = vmatmul.mubr.f32.gmra.mrb[0].mxu0 %v6234
      %v6351 = vpop.f32.mrb[0].mxu0
      %v6352 = vpop.f32.mrb[0].mxu0
      %6353 = vmatprep.mubr.f32.mxu0 0.0
      %6354 = vmatmul.mubr.f32.gmra.mrb[0].mxu0 %v6235
      %v6355 = vpop.f32.mrb[0].mxu0
      %v6356 = vpop.f32.mrb[0].mxu0
      %6357 = vmatprep.mubr.f32.mxu0 0.0
      %6358 = vmatmul.mubr.f32.gmra.mrb[0].mxu0 %v6236
      %v6359 = vpop.f32.mrb[0].mxu0
      %v6360 = vpop.f32.mrb[0].mxu0
      %6361 = vdwg.mxu0
      %v6362 = vmul.f32 %v6325, %v6325
      %v6363 = vmul.f32 %v6330, %v6330
      %v6364 = vmul.f32 %v6335, %v6335
      %v6365 = vmul.f32 %v6325, %v6362
      %v6366 = vmul.f32 %v6330, %v6363
      %v6367 = vmul.f32 %v6335, %v6364
      %v6368 = vmul.f32 %v6365, 0.044715
      %v6369 = vmul.f32 %v6366, 0.044715
      %v6370 = vmul.f32 %v6367, 0.044715
      %v6371 = vadd.f32 %v6325, %v6368
      %v6372 = vadd.f32 %v6330, %v6369
      %v6373 = vadd.f32 %v6335, %v6370
      %v6374 = vmul.f32 %v6371, 0.7978846
      %v6375 = vmul.f32 %v6372, 0.7978846
      %v6376 = vmul.f32 %v6373, 0.7978846
      %v6377 = vtanh.pop %v6374
      %v6378 = vtanh.pop %v6375
      %v6379 = vtanh.pop %v6376
      %v6380 = vadd.f32 %v6377, 1.0
      %v6381 = vadd.f32 %v6378, 1.0
      %v6382 = vadd.f32 %v6379, 1.0
      %v6383 = vmul.f32 %v6380, 0.5
      %v6384 = vmul.f32 %v6381, 0.5
      %v6385 = vmul.f32 %v6382, 0.5
      %v6386 = vmul.f32 %v6325, %v6383
      %v6387 = vmul.f32 %v6330, %v6384
      %v6388 = vmul.f32 %v6335, %v6385
      %v6389 = vadd.f32 %v5858, %v6386
      %v6390 = vadd.f32 %v5859, %v6387
      %v6391 = vadd.f32 %v5860, %v6388
      %v6392 = vld [vmem:[%s9] sm:$0xff]
      %v6393 = vsel %vm555, %v6389, 0.0
      %6394 = vadd.xlane.f32.xlu0 %v6393
      %v6395 = vpop.xlane.xlu0 %6394
      %v6396 = vsel %vm555, %v6390, 0.0
      %6397 = vadd.xlane.f32.xlu0 %v6396
      %v6398 = vpop.xlane.xlu0 %6397
      %v6399 = vsel %vm555, %v6391, 0.0
      %6400 = vadd.xlane.f32.xlu0 %v6399
      %v6401 = vpop.xlane.xlu0 %6400
      %v6402 = vmul.f32 %v6395, %v583
      %v6403 = vmul.f32 %v6398, %v583
      %v6404 = vmul.f32 %v6401, %v583
      %v6405 = vsub.f32 %v6389, %v6402
      %v6406 = vsub.f32 %v6390, %v6403
      %v6407 = vsub.f32 %v6391, %v6404
      %v6408 = vmul.f32 %v6405, %v6405
      %v6409 = vmul.f32 %v6406, %v6406
      %v6410 = vmul.f32 %v6407, %v6407
      %v6411 = vsel %vm555, %v6408, 0.0
      %6412 = vadd.xlane.f32.xlu0 %v6411
      %v6413 = vpop.xlane.xlu0 %6412
      %v6414 = vsel %vm555, %v6409, 0.0
      %6415 = vadd.xlane.f32.xlu0 %v6414
      %v6416 = vpop.xlane.xlu0 %6415
      %v6417 = vsel %vm555, %v6410, 0.0
      %6418 = vadd.xlane.f32.xlu0 %v6417
      %v6419 = vpop.xlane.xlu0 %6418
      %v6420 = vmul.f32 %v6413, %v583
      %v6421 = vmul.f32 %v6416, %v583
      %v6422 = vmul.f32 %v6419, %v583
      %v6423 = vadd.f32 %v6420, 1e-05
      %v6424 = vadd.f32 %v6421, 1e-05
      %v6425 = vadd.f32 %v6422, 1e-05
      %v6426 = vrsqrt.pop %v6423
      %v6427 = vrsqrt.pop %v6424
      %v6428 = vrsqrt.pop %v6425
      %v6429 = vmul.f32 %v6405, %v6426
      %v6430 = vmul.f32 %v6406, %v6427
      %v6431 = vmul.f32 %v6407, %v6428
      %v6432 = vlaneseq
      %v6433 = vshrl.u32 %v6432, 7
      %v6434 = vsub.s32 0, %v6433
      %v6435 = vrot.slane %v6392, %v6434
      %v6436 = vmul.f32 %v6429, %v6435
      %v6437 = vmul.f32 %v6430, %v6435
      %v6438 = vmul.f32 %v6431, %v6435
      %v6439 = vlaneseq
      %v6440 = vshrl.u32 %v6439, 7
      %v6441 = vsub.s32 1, %v6440
      %v6442 = vrot.slane %v6392, %v6441
      %v6443 = vadd.f32 %v6436, %v6442
      %v6444 = vadd.f32 %v6437, %v6442
      %v6445 = vadd.f32 %v6438, %v6442
      %v6446 = vld [vmem:[%s10] sm:$0xff]
      %v6447 = vld [vmem:[%s10 + $0x8] sm:$0xff]
      %v6448 = vld [vmem:[%s10 + $0x10] sm:$0xff]
      %v6449 = vld [vmem:[%s10 + $0x18] sm:$0xff]
      %v6450 = vlaneseq
      %v6451 = vshrl.u32 %v6450, 7
      %v6452 = vsub.s32 2, %v6451
      %v6453 = vrot.slane %v6392, %v6452
      %v6455 = vsel %vm555, %v6443, 0
      %v6458 = vsel %vm555, %v6444, 0
      %v6461 = vsel %vm555, %v6445, 0
      %6463 = vmatprep.subr.mxu0 0.0
      %6464 = vmatpush1.msra.mxu0 %v6446
      %6465 = vmatprep.subr.mxu0 0.0
      %6466 = vmatpush1.msra.mxu0 %v6447
      %6467 = vmatprep.subr.mxu0 0.0
      %6468 = vmatpush1.msra.mxu0 %v6448
      %6469 = vmatprep.subr.mxu0 0.0
      %6470 = vmatpush1.msra.mxu0 %v6449
      %6471 = vmatprep.subr.mxu0 0.0
      %6472 = vmatpush1.msra.mxu0 0.0
      %6473 = vmatprep.subr.mxu0 0.0
      %6474 = vmatpush1.msra.mxu0 0.0
      %6475 = vmatprep.subr.mxu0 0.0
      %6476 = vmatpush1.msra.mxu0 0.0
      %6477 = vmatprep.subr.mxu0 0.0
      %6478 = vmatpush1.msra.mxu0 0.0
      %6479 = vmatprep.subr.mxu0 0.0
      %6480 = vmatpush1.msra.mxu0 0.0
      %6481 = vmatprep.subr.mxu0 0.0
      %6482 = vmatpush1.msra.mxu0 0.0
      %6483 = vmatprep.subr.mxu0 0.0
      %6484 = vmatpush1.msra.mxu0 0.0
      %6485 = vmatprep.subr.mxu0 0.0
      %6486 = vmatpush1.msra.mxu0 0.0
      %6487 = vmatprep.subr.mxu0 0.0
      %6488 = vmatpush1.msra.mxu0 0.0
      %6489 = vmatprep.subr.mxu0 0.0
      %6490 = vmatpush1.msra.mxu0 0.0
      %6491 = vmatprep.subr.mxu0 0.0
      %6492 = vmatpush1.msra.mxu0 0.0
      %6493 = vmatprep.subr.mxu0 0.0
      %6494 = vmatpush1.msra.mxu0 0.0
      %6495 = vmatprep.subr.mxu0 0.0
      %6496 = vmatpush1.msra.mxu0 0.0
      %6497 = vmatprep.subr.mxu0 0.0
      %6498 = vmatpush1.msra.mxu0 0.0
      %6499 = vmatprep.subr.mxu0 0.0
      %6500 = vmatpush1.msra.mxu0 0.0
      %6501 = vmatprep.subr.mxu0 0.0
      %6502 = vmatpush1.msra.mxu0 0.0
      %6503 = vmatprep.subr.mxu0 0.0
      %6504 = vmatpush1.msra.mxu0 0.0
      %6505 = vmatprep.subr.mxu0 0.0
      %6506 = vmatpush1.msra.mxu0 0.0
      %6507 = vmatprep.subr.mxu0 0.0
      %6508 = vmatpush1.msra.mxu0 0.0
      %6509 = vmatprep.subr.mxu0 0.0
      %6510 = vmatpush1.msra.mxu0 0.0
      %6511 = vmatprep.subr.mxu0 0.0
      %6512 = vmatpush1.msra.mxu0 0.0
      %6513 = vmatprep.subr.mxu0 0.0
      %6514 = vmatpush1.msra.mxu0 0.0
      %6515 = vmatprep.subr.mxu0 0.0
      %6516 = vmatpush1.msra.mxu0 0.0
      %6517 = vmatprep.subr.mxu0 0.0
      %6518 = vmatpush1.msra.mxu0 0.0
      %6519 = vmatprep.subr.mxu0 0.0
      %6520 = vmatpush1.msra.mxu0 0.0
      %6521 = vmatprep.subr.mxu0 0.0
      %6522 = vmatpush1.msra.mxu0 0.0
      %6523 = vmatprep.subr.mxu0 0.0
      %6524 = vmatpush1.msra.mxu0 0.0
      %6525 = vmatprep.subr.mxu0 0.0
      %6526 = vmatpush1.msra.mxu0 0.0
      %6527 = vmatprep.mubr.f32.mxu0 0.0
      %6528 = vmatmul.mubr.f32.gmra.mrb[0].mxu0 %v6455
      %v6529 = vpop.f32.mrb[0].mxu0
      %v6530 = vadd.f32 %v6453, %v6529
      %v6531 = vpop.f32.mrb[0].mxu0
      %6532 = vmatprep.mubr.f32.mxu0 0.0
      %6533 = vmatmul.mubr.f32.gmra.mrb[0].mxu0 %v6458
      %v6534 = vpop.f32.mrb[0].mxu0
      %v6535 = vadd.f32 %v6453, %v6534
      %v6536 = vpop.f32.mrb[0].mxu0
      %6537 = vmatprep.mubr.f32.mxu0 0.0
      %6538 = vmatmul.mubr.f32.gmra.mrb[0].mxu0 %v6461
      %v6539 = vpop.f32.mrb[0].mxu0
      %v6540 = vadd.f32 %v6453, %v6539
      %v6541 = vpop.f32.mrb[0].mxu0
      %6542 = vdwg.mxu0
      %6543 = vst [vmem:[%s386] sm:$0xff] %v6530
      %6544 = vst [vmem:[%s386 + $0x8] sm:$0xff] %v6535
      %6545 = vst [vmem:[%s386 + $0x10] sm:$0xff] %v6540
      %p6546 = scmp.lt.s32.totalorder %s22, 1
      %s6547 = scalar_select %p6546, %s22, 1
      %s6548 = smul.addr %s6547, 3
      %s6549 = smul.addr %s6548, 8
      %s6550 = scalar_lea.vmem %s11, %s6549
      // Predicated region
      $region65: #{depthwise_vit_forward.1} parent=63 // pred_check
        %p6551 = pneg %p276
      $region66: #{depthwise_vit_forward.1} parent=63 // pred_check_branch
        %6553 = sbr.rel (%p6551) target = $region68
      $region67: #{depthwise_vit_forward.1} parent=63 // pred_region
        _
      $region68: #{depthwise_vit_forward.1} parent=63 // pred_fallthru
        _
    $region64: #{depthwise_vit_forward.1} parent=5 // pred_fallthru
      _
    %p6554 = scmp.le.s32.totalorder 2, %s17
    // Predicated region
    $region69: #{depthwise_vit_forward.1} parent=5 // pred_check
      %p6555 = pneg %p6554
    $region70: #{depthwise_vit_forward.1} parent=5 // pred_check_branch
      %6557 = sbr.rel (%p6555) target = $region72
    $region71: #{depthwise_vit_forward.1} parent=5 // pred_region
      %s6558 = ssub.s32 %s17, 2
      // Predicated region
      $region73: #{depthwise_vit_forward.1} parent=71 // pred_check
        %p6559 = pneg %p282
      $region74: #{depthwise_vit_forward.1} parent=71 // pred_check_branch
        %6561 = sbr.rel (%p6559) target = $region76
      $region75: #{depthwise_vit_forward.1} parent=71 // pred_region
        %p6562 = scmp.lt.s32.totalorder %s23, 1
        %s6563 = scalar_select %p6562, %s23, 1
        %s6564 = smul.addr %s6563, 3
        %s6565 = smul.addr %s6564, 8
        %s6566 = scalar_lea.vmem %s11, %s6565
      $region76: #{depthwise_vit_forward.1} parent=71 // pred_fallthru
        _
    $region72: #{depthwise_vit_forward.1} parent=5 // pred_fallthru
      _
  $region6: #{depthwise_vit_forward.1} parent=0 // loop_footer
    %s21 = sadd.s32 1, %s17
  $region7: #{depthwise_vit_forward.1} parent=0 // loop_footer_branch
    %16 = sbr.rel target = $region3
  $region8: #{depthwise_vit_forward.1} parent=0 // loop_exit
    _

</llo_original>
